<compile_context>
chip_gen: v6e
topology: v6e:2x2x1
jax: 0.10.0
libtpu: 0.0.40
codegen_flags: <defaults>
</compile_context>

<pallas_src>
import functools

import jax
import jax.numpy as jnp
from jax.experimental import pallas as pl
from jax.experimental.pallas import tpu as pltpu

EPS_IN = 1e-5  # InstanceNorm eps (PyTorch default)
EPS_BN = 1e-5  # BatchNorm eps (PyTorch default)


# ---------------------------------------------------------------------------
# In-kernel helpers
# ---------------------------------------------------------------------------
def _in_bn_fused(y, scale, bias, relu):
    """Per-sample InstanceNorm over HW + folded eval-BatchNorm (one FMA).

    y: (B, HW, C) f32; scale/bias: (1, C) f32 (BN already folded).
    Two-pass variance for numerical safety.
    """
    inv_hw = 1.0 / y.shape[1]
    mean = jnp.sum(y, axis=1, keepdims=True) * inv_hw            # (B, 1, C)
    d = y - mean
    var = jnp.sum(d * d, axis=1, keepdims=True) * inv_hw         # >= 0
    s_eff = scale * jax.lax.rsqrt(var + EPS_IN)                  # EUP, ~free
    out = d * s_eff + bias
    return jnp.maximum(out, 0.0) if relu else out


# ---------------------------------------------------------------------------
# Fused Pallas kernel: B samples' whole bottleneck per grid step
# ---------------------------------------------------------------------------
def _gdn_fused_kernel(x_ref, w1_ref, w2_ref, w3_ref,
                      s1_ref, b1_ref, s2_ref, b2_ref, s3_ref, b3_ref,
                      o_ref, slab_ref, *, W, planes, col_stride):
    B, HW, Cin = x_ref.shape
    P = planes
    Cout = 4 * P
    _, _, Kpad = slab_ref.shape                                  # 9 * col_stride

    # ---- stage 1: conv1 (1x1) + IN + BN + ReLU ---------------------------
    y1 = jnp.dot(x_ref[...].reshape(B * HW, Cin), w1_ref[...],
                 preferred_element_type=jnp.float32)             # (B*HW, P) f32
    o1 = _in_bn_fused(y1.reshape(B, HW, P), s1_ref[...], b1_ref[...], relu=True)
    o1b = o1.astype(jnp.bfloat16)

    # ---- stage 2: 3x3 conv as ONE (B*HW, 9*col_stride) x (.., P) matmul --
    # Column edge masks applied to the SOURCE rows (hoisted out of the loop):
    #   dw = +1 taps must not read source column 0   (row wrap from next row)
    #   dw = -1 taps must not read source column W-1 (row wrap from prev row)
    col = jax.lax.broadcasted_iota(jnp.int32, (1, HW, 1), 1) % W
    zero = jnp.zeros_like(o1b)
    o1_dwp = jnp.where(col != 0, o1b, zero)
    o1_dwm = jnp.where(col != W - 1, o1b, zero)

    pad_cols = col_stride > P
    if pad_cols:
        # Zero every step (grid steps may run on different cores, scratch is
        # per-core): covers the K-padding lanes and all boundary rows.
        slab_ref[...] = jnp.zeros(slab_ref.shape, slab_ref.dtype)

    for t in range(9):
        dh = t // 3 - 1
        dw = t % 3 - 1
        ofs = dh * W + dw
        src = o1b if dw == 0 else (o1_dwp if dw == 1 else o1_dwm)
        cs = t * col_stride
        if ofs == 0:
            slab_ref[:, :, cs:cs + P] = src
        elif ofs > 0:
            slab_ref[:, 0:HW - ofs, cs:cs + P] = src[:, ofs:, :]
            if not pad_cols:
                slab_ref[:, HW - ofs:, cs:cs + P] = jnp.zeros(
                    (B, ofs, P), jnp.bfloat16)
        else:
            slab_ref[:, -ofs:, cs:cs + P] = src[:, :HW + ofs, :]
            if not pad_cols:
                slab_ref[:, 0:-ofs, cs:cs + P] = jnp.zeros(
                    (B, -ofs, P), jnp.bfloat16)

    y2 = jnp.dot(slab_ref[...].reshape(B * HW, Kpad), w2_ref[...],
                 preferred_element_type=jnp.float32)             # (B*HW, P)
    o2 = _in_bn_fused(y2.reshape(B, HW, P), s2_ref[...], b2_ref[...], relu=True)

    # ---- stage 3: conv3 (1x1) + IN + BN + residual + ReLU ----------------
    y3 = jnp.dot(o2.astype(jnp.bfloat16).reshape(B * HW, P), w3_ref[...],
                 preferred_element_type=jnp.float32)             # (B*HW, 4P)
    o3 = _in_bn_fused(y3.reshape(B, HW, Cout), s3_ref[...], b3_ref[...],
                      relu=False)
    residual = x_ref[...].astype(jnp.float32)     # re-read; don't pin x live
    o_ref[...] = jnp.maximum(o3 + residual, 0.0).astype(o_ref.dtype)


# ---------------------------------------------------------------------------
# Wrapper
# ---------------------------------------------------------------------------
def _fold_bn(gamma, beta, running_mean, running_var):
    scale = gamma / jnp.sqrt(running_var + EPS_BN)
    bias = beta - running_mean * scale
    return scale[None, :].astype(jnp.float32), bias[None, :].astype(jnp.float32)


def _vmem_limit_bytes(B, HW, Cin, P, col_stride):
    bf16, f32 = 2, 4
    Cout, Kpad = 4 * P, 9 * col_stride
    need = (
        2 * B * HW * Cin * bf16                        # x block (double-buffered)
        + 2 * B * HW * Cout * f32                      # out block (double-buffered)
        + 2 * (Cin * P + Kpad * P + P * Cout) * bf16   # weights (double-buffered)
        + 2 * (4 * P + 2 * Cout) * f32                 # folded scales/biases
        + B * HW * Kpad * bf16                         # im2col slab scratch
        + 4 * B * HW * Cout * f32                      # live f32 intermediates
    )
    try:
        cap = int(pltpu.get_tpu_info().vmem_capacity_bytes) * 3 // 4
    except Exception:
        cap = 48 << 20                                 # safe on v5e/v6e/v7x
    return int(min(max(need * 5 // 4, 16 << 20), cap))


def gdn_bottleneck_forward(x_nchw, params, *, batch_block=2):
    """Eval-mode GDN_Bottleneck forward. x_nchw: (N, inplanes, H, W) float32.

    Requires inplanes == planes * 4 and stride == 1 (identity residual,
    downsample=None), matching the PyTorch module in that configuration.
    """
    N, Cin, H, W = x_nchw.shape
    P = params["w1"].shape[1]
    if Cin != 4 * P:
        raise ValueError("identity residual requires inplanes == planes * 4")
    HW = H * W
    Cout = 4 * P

    # Batch block: largest divisor of N that is <= batch_block.
    B = max(1, min(batch_block, N))
    while N % B:
        B -= 1

    # Slab column stride: P rounded up to 128 so every tap's lane offset is
    # tile-aligned (no padding when P is already a multiple of 128).
    col_stride = -(-P // 128) * 128
    Kpad = 9 * col_stride

    x_flat = jnp.transpose(x_nchw, (0, 2, 3, 1)).reshape(N, HW, Cin)
    x_flat = x_flat.astype(jnp.bfloat16)            # halve input DMA / VMEM

    s1, b1 = _fold_bn(*params["bn1"])
    s2, b2 = _fold_bn(*params["bn2"])
    s3, b3 = _fold_bn(*params["bn3"])

    w1 = params["w1"].astype(jnp.bfloat16)                      # (Cin, P)
    w2 = params["w2"].astype(jnp.bfloat16)                      # (9, P, P)
    if col_stride != P:
        w2 = jnp.pad(w2, ((0, 0), (0, col_stride - P), (0, 0)))
    w2p = w2.reshape(Kpad, P)                                   # (9*col_stride, P)
    w3 = params["w3"].astype(jnp.bfloat16)                      # (P, 4P)

    kern = functools.partial(_gdn_fused_kernel, W=W, planes=P,
                             col_stride=col_stride)

    out_flat = pl.pallas_call(
        kern,
        out_shape=jax.ShapeDtypeStruct((N, HW, Cout), jnp.float32),
        grid_spec=pltpu.PrefetchScalarGridSpec(
            num_scalar_prefetch=0,
            grid=(N // B,),
            in_specs=[
                pl.BlockSpec((B, HW, Cin), lambda n: (n, 0, 0)),   # x
                pl.BlockSpec((Cin, P), lambda n: (0, 0)),          # w1
                pl.BlockSpec((Kpad, P), lambda n: (0, 0)),         # w2 (padded K)
                pl.BlockSpec((P, Cout), lambda n: (0, 0)),         # w3
                pl.BlockSpec((1, P), lambda n: (0, 0)),            # s1
                pl.BlockSpec((1, P), lambda n: (0, 0)),            # b1
                pl.BlockSpec((1, P), lambda n: (0, 0)),            # s2
                pl.BlockSpec((1, P), lambda n: (0, 0)),            # b2
                pl.BlockSpec((1, Cout), lambda n: (0, 0)),         # s3
                pl.BlockSpec((1, Cout), lambda n: (0, 0)),         # b3
            ],
            out_specs=pl.BlockSpec((B, HW, Cout), lambda n: (n, 0, 0)),
            scratch_shapes=[pltpu.VMEM((B, HW, Kpad), jnp.bfloat16)],
        ),
        compiler_params=pltpu.CompilerParams(
            dimension_semantics=("parallel",),
            vmem_limit_bytes=_vmem_limit_bytes(B, HW, Cin, P, col_stride),
        ),
    )(x_flat, w1, w2p, w3, s1, b1, s2, b2, s3, b3)

    return jnp.transpose(out_flat.reshape(N, H, W, Cout), (0, 3, 1, 2))


# ---------------------------------------------------------------------------
# Parameter init (eval-mode BN with running stats), matmul-ready conv weights
# ---------------------------------------------------------------------------
def init_params(key, inplanes, planes):
    ks = jax.random.split(key, 15)
    p = {}
    p["w1"] = 0.1 * jax.random.normal(ks[0], (inplanes, planes), jnp.float32)
    p["w2"] = 0.1 * jax.random.normal(ks[1], (9, planes, planes), jnp.float32)
    p["w3"] = 0.1 * jax.random.normal(ks[2], (planes, planes * 4), jnp.float32)

    def bn(kg, kb, km, kv, c):
        g = 1.0 + 0.1 * jax.random.normal(kg, (c,), jnp.float32)
        b = 0.1 * jax.random.normal(kb, (c,), jnp.float32)
        rm = 0.1 * jax.random.normal(km, (c,), jnp.float32)
        rv = 0.5 + jnp.abs(jax.random.normal(kv, (c,), jnp.float32))
        return g, b, rm, rv

    p["bn1"] = bn(ks[3], ks[4], ks[5], ks[6], planes)
    p["bn2"] = bn(ks[7], ks[8], ks[9], ks[10], planes)
    p["bn3"] = bn(ks[11], ks[12], ks[13], ks[14], planes * 4)
    return p


# ---------------------------------------------------------------------------
# Pure-JAX reference (eval path, same bf16 input / bf16-matmul discipline)
# ---------------------------------------------------------------------------
def _im2col_3x3(x_nhwc):
    N, H, W, C = x_nhwc.shape
    xp = jnp.pad(x_nhwc, ((0, 0), (1, 1), (1, 1), (0, 0)))
    patches = []
    for dh in range(3):
        for dw in range(3):
            patches.append(xp[:, dh:dh + H, dw:dw + W, :])
    return jnp.concatenate(patches, axis=-1).reshape(N, H * W, 9 * C)


def _reference(x_nchw, params):
    N, Cin, H, W = x_nchw.shape
    P = params["w1"].shape[1]
    x_nchw = x_nchw.astype(jnp.bfloat16).astype(jnp.float32)  # mirror kernel I/O
    xf = jnp.transpose(x_nchw, (0, 2, 3, 1)).reshape(N, H * W, Cin)

    def norm(y, bn_p, relu):
        s, b = _fold_bn(*bn_p)
        m = jnp.mean(y, axis=1, keepdims=True)
        d = y - m
        v = jnp.mean(d * d, axis=1, keepdims=True)
        out = d * (s * jax.lax.rsqrt(v + EPS_IN)) + b
        return jnp.maximum(out, 0.0) if relu else out

    def mm(a, w):
        return jnp.einsum("nsc,cd->nsd", a.astype(jnp.bfloat16),
                          w.astype(jnp.bfloat16),
                          preferred_element_type=jnp.float32)

    o1 = norm(mm(xf, params["w1"]), params["bn1"], True)
    patches = _im2col_3x3(o1.reshape(N, H, W, P))
    o2 = norm(mm(patches, params["w2"].reshape(9 * P, P)), params["bn2"], True)
    o3 = norm(mm(o2, params["w3"]), params["bn3"], False)
    out = jnp.maximum(o3 + xf, 0.0)
    return jnp.transpose(out.reshape(N, H, W, 4 * P), (0, 3, 1, 2))


# ---------------------------------------------------------------------------
if __name__ == "__main__":
    # planes=32 -> Cout=128 (lane-dense output tiles); inplanes=128, stride=1
    # -> identity residual (downsample=None).  N=4 with B=2 gives a 2-step
    # "parallel" grid (megacore-friendly).
    N, planes, H, W = 4, 32, 16, 16
    inplanes = planes * 4

    key = jax.random.PRNGKey(0)
    kx, kp = jax.random.split(key)
    x = jax.random.normal(kx, (N, inplanes, H, W), jnp.float32)
    params = init_params(kp, inplanes, planes)

    out = jax.block_until_ready(gdn_bottleneck_forward(x, params))
    ref = jax.block_until_ready(_reference(x, params))

    assert out.shape == (N, inplanes, H, W), out.shape
    err = float(jnp.max(jnp.abs(out - ref)))
    assert err < 2e-2, err

    print("KERNEL_OK")
</pallas_src>

<mosaic_0001>
module attributes {stable_mosaic.version = 11 : i64} {
  func.func @_gdn_fused_kernel(%arg0: i32, %arg1: memref<2x256x128xbf16, #tpu.memory_space<vmem>>, %arg2: memref<128x32xbf16, #tpu.memory_space<vmem>>, %arg3: memref<1152x32xbf16, #tpu.memory_space<vmem>>, %arg4: memref<32x128xbf16, #tpu.memory_space<vmem>>, %arg5: memref<1x32xf32, #tpu.memory_space<vmem>>, %arg6: memref<1x32xf32, #tpu.memory_space<vmem>>, %arg7: memref<1x32xf32, #tpu.memory_space<vmem>>, %arg8: memref<1x32xf32, #tpu.memory_space<vmem>>, %arg9: memref<1x128xf32, #tpu.memory_space<vmem>>, %arg10: memref<1x128xf32, #tpu.memory_space<vmem>>, %arg11: memref<2x256x128xf32, #tpu.memory_space<vmem>>, %arg12: memref<2x256x1152xbf16, #tpu.memory_space<vmem>>) attributes {dimension_semantics = [#tpu.dimension_semantics<parallel>], iteration_bounds = array<i64: 2>, scalar_prefetch = 0 : i64, scratch_operands = 1 : i64, tpu.core_type = #tpu.core_type<tc>, window_params = [{transform_indices = @transform_0, window_bounds = array<i64: 2, 256, 128>}, {pipeline_mode = #tpu.pipeline_mode<synchronous>, transform_indices = @transform_1, window_bounds = array<i64: 128, 32>}, {pipeline_mode = #tpu.pipeline_mode<synchronous>, transform_indices = @transform_2, window_bounds = array<i64: 1152, 32>}, {pipeline_mode = #tpu.pipeline_mode<synchronous>, transform_indices = @transform_3, window_bounds = array<i64: 32, 128>}, {pipeline_mode = #tpu.pipeline_mode<synchronous>, transform_indices = @transform_4, window_bounds = array<i64: 1, 32>}, {pipeline_mode = #tpu.pipeline_mode<synchronous>, transform_indices = @transform_5, window_bounds = array<i64: 1, 32>}, {pipeline_mode = #tpu.pipeline_mode<synchronous>, transform_indices = @transform_6, window_bounds = array<i64: 1, 32>}, {pipeline_mode = #tpu.pipeline_mode<synchronous>, transform_indices = @transform_7, window_bounds = array<i64: 1, 32>}, {pipeline_mode = #tpu.pipeline_mode<synchronous>, transform_indices = @transform_8, window_bounds = array<i64: 1, 128>}, {pipeline_mode = #tpu.pipeline_mode<synchronous>, transform_indices = @transform_9, window_bounds = array<i64: 1, 128>}, {transform_indices = @transform_10, window_bounds = array<i64: 2, 256, 128>}]} {
    %c0 = arith.constant 0 : index
    %c0_0 = arith.constant 0 : index
    %c0_1 = arith.constant 0 : index
    %0 = vector.load %arg1[%c0, %c0_0, %c0_1] : memref<2x256x128xbf16, #tpu.memory_space<vmem>>, vector<2x256x128xbf16>
    %1 = vector.shape_cast %0 : vector<2x256x128xbf16> to vector<512x128xbf16>
    %c0_2 = arith.constant 0 : index
    %c0_3 = arith.constant 0 : index
    %2 = vector.load %arg2[%c0_2, %c0_3] : memref<128x32xbf16, #tpu.memory_space<vmem>>, vector<128x32xbf16>
    %cst = arith.constant dense<0.000000e+00> : vector<512x32xf32>
    %3 = tpu.matmul %1, %2, %cst {dimension_numbers = #tpu.dot_dimension_numbers<[1], [0], [0], [1], [0, 0, 1, 1], [], []>} : vector<512x128xbf16>, vector<128x32xbf16>, vector<512x32xf32> -> vector<512x32xf32>
    %4 = vector.shape_cast %3 : vector<512x32xf32> to vector<2x256x32xf32>
    %c0_4 = arith.constant 0 : index
    %c0_5 = arith.constant 0 : index
    %5 = vector.load %arg5[%c0_4, %c0_5] : memref<1x32xf32, #tpu.memory_space<vmem>>, vector<1x32xf32>
    %c0_6 = arith.constant 0 : index
    %c0_7 = arith.constant 0 : index
    %6 = vector.load %arg6[%c0_6, %c0_7] : memref<1x32xf32, #tpu.memory_space<vmem>>, vector<1x32xf32>
    %cst_8 = arith.constant dense<0.000000e+00> : vector<2x32xf32>
    %7 = vector.multi_reduction <add>, %4, %cst_8 [1] : vector<2x256x32xf32> to vector<2x32xf32>
    %8 = vector.shape_cast %7 : vector<2x32xf32> to vector<2x1x32xf32>
    %cst_9 = arith.constant 3.906250e-03 : f32
    %9 = vector.broadcast %cst_9 : f32 to vector<2x1x32xf32>
    %10 = arith.mulf %8, %9 : vector<2x1x32xf32>
    %11 = vector.broadcast %10 : vector<2x1x32xf32> to vector<2x256x32xf32>
    %12 = arith.subf %4, %11 : vector<2x256x32xf32>
    %13 = arith.mulf %12, %12 : vector<2x256x32xf32>
    %cst_10 = arith.constant dense<0.000000e+00> : vector<2x32xf32>
    %14 = vector.multi_reduction <add>, %13, %cst_10 [1] : vector<2x256x32xf32> to vector<2x32xf32>
    %15 = vector.shape_cast %14 : vector<2x32xf32> to vector<2x1x32xf32>
    %cst_11 = arith.constant 3.906250e-03 : f32
    %16 = vector.broadcast %cst_11 : f32 to vector<2x1x32xf32>
    %17 = arith.mulf %15, %16 : vector<2x1x32xf32>
    %cst_12 = arith.constant 9.99999974E-6 : f32
    %18 = vector.broadcast %cst_12 : f32 to vector<2x1x32xf32>
    %19 = arith.addf %17, %18 : vector<2x1x32xf32>
    %20 = math.rsqrt %19 : vector<2x1x32xf32>
    %21 = vector.shape_cast %5 : vector<1x32xf32> to vector<1x1x32xf32>
    %22 = vector.broadcast %21 : vector<1x1x32xf32> to vector<2x1x32xf32>
    %23 = arith.mulf %22, %20 : vector<2x1x32xf32>
    %24 = vector.broadcast %23 : vector<2x1x32xf32> to vector<2x256x32xf32>
    %25 = arith.mulf %12, %24 : vector<2x256x32xf32>
    %26 = vector.shape_cast %6 : vector<1x32xf32> to vector<1x1x32xf32>
    %27 = vector.broadcast %26 : vector<1x1x32xf32> to vector<2x256x32xf32>
    %28 = arith.addf %25, %27 : vector<2x256x32xf32>
    %cst_13 = arith.constant 0.000000e+00 : f32
    %29 = vector.broadcast %cst_13 : f32 to vector<2x256x32xf32>
    %30 = arith.maximumf %28, %29 : vector<2x256x32xf32>
    %31 = arith.truncf %30 : vector<2x256x32xf32> to vector<2x256x32xbf16>
    %32 = tpu.iota {dimensions = array<i32: 1>} : vector<1x256x1xi32>
    %c16_i32 = arith.constant 16 : i32
    %c0_i32 = arith.constant 0 : i32
    %33 = arith.cmpi eq, %c16_i32, %c0_i32 : i32
    %c1_i32 = arith.constant 1 : i32
    %34 = arith.select %33, %c1_i32, %c16_i32 : i32
    %35 = vector.broadcast %34 : i32 to vector<1x256x1xi32>
    %36 = arith.remsi %32, %35 : vector<1x256x1xi32>
    %c0_i32_14 = arith.constant 0 : i32
    %37 = vector.broadcast %c0_i32_14 : i32 to vector<1x256x1xi32>
    %38 = arith.cmpi ne, %36, %37 : vector<1x256x1xi32>
    %c0_i32_15 = arith.constant 0 : i32
    %39 = vector.broadcast %c0_i32_15 : i32 to vector<1x256x1xi32>
    %40 = arith.cmpi slt, %36, %39 : vector<1x256x1xi32>
    %c0_i32_16 = arith.constant 0 : i32
    %41 = arith.cmpi slt, %34, %c0_i32_16 : i32
    %42 = vector.broadcast %41 : i1 to vector<1x256x1xi1>
    %43 = vector.broadcast %42 : vector<1x256x1xi1> to vector<1x256x1xi1>
    %44 = arith.xori %40, %43 : vector<1x256x1xi1>
    %45 = arith.andi %44, %38 : vector<1x256x1xi1>
    %46 = vector.broadcast %34 : i32 to vector<1x256x1xi32>
    %47 = arith.addi %36, %46 : vector<1x256x1xi32>
    %48 = arith.select %45, %47, %36 : vector<1x256x1xi1>, vector<1x256x1xi32>
    %cst_17 = arith.constant 0.000000e+00 : bf16
    %49 = vector.broadcast %cst_17 : bf16 to vector<2x256x32xbf16>
    %c0_i32_18 = arith.constant 0 : i32
    %50 = vector.broadcast %c0_i32_18 : i32 to vector<1x256x1xi32>
    %51 = arith.cmpi ne, %48, %50 : vector<1x256x1xi32>
    %52 = vector.shape_cast %51 : vector<1x256x1xi1> to vector<1x256x1xi1>
    %53 = vector.broadcast %52 : vector<1x256x1xi1> to vector<2x256x32xi1>
    %54 = arith.select %53, %31, %49 : vector<2x256x32xi1>, vector<2x256x32xbf16>
    %c15_i32 = arith.constant 15 : i32
    %55 = vector.broadcast %c15_i32 : i32 to vector<1x256x1xi32>
    %56 = arith.cmpi ne, %48, %55 : vector<1x256x1xi32>
    %57 = vector.shape_cast %56 : vector<1x256x1xi1> to vector<1x256x1xi1>
    %58 = vector.broadcast %57 : vector<1x256x1xi1> to vector<2x256x32xi1>
    %59 = arith.select %58, %31, %49 : vector<2x256x32xi1>, vector<2x256x32xbf16>
    %cst_19 = arith.constant 0.000000e+00 : bf16
    %60 = vector.broadcast %cst_19 : bf16 to vector<2x256x1152xbf16>
    %c0_20 = arith.constant 0 : index
    %c0_21 = arith.constant 0 : index
    %c0_22 = arith.constant 0 : index
    %61 = vector.load %arg12[%c0_20, %c0_21, %c0_22] : memref<2x256x1152xbf16, #tpu.memory_space<vmem>>, vector<2x256x1152xbf16>
    tpu.vector_store %arg12[%c0_20, %c0_21, %c0_22], %60 {strides = array<i32>} : memref<2x256x1152xbf16, #tpu.memory_space<vmem>>, vector<2x256x1152xbf16>,
    %62 = vector.extract_strided_slice %59 {offsets = [0, 0, 0], sizes = [2, 239, 32], strides = [1, 1, 1]} : vector<2x256x32xbf16> to vector<2x239x32xbf16>
    %c0_23 = arith.constant 0 : index
    %c17 = arith.constant 17 : index
    %c0_24 = arith.constant 0 : index
    %63 = vector.load %arg12[%c0_23, %c17, %c0_24] : memref<2x256x1152xbf16, #tpu.memory_space<vmem>>, vector<2x239x32xbf16>
    tpu.vector_store %arg12[%c0_23, %c17, %c0_24], %62 {strides = array<i32>} : memref<2x256x1152xbf16, #tpu.memory_space<vmem>>, vector<2x239x32xbf16>,
    %64 = vector.extract_strided_slice %31 {offsets = [0, 0, 0], sizes = [2, 240, 32], strides = [1, 1, 1]} : vector<2x256x32xbf16> to vector<2x240x32xbf16>
    %c0_25 = arith.constant 0 : index
    %c16 = arith.constant 16 : index
    %c128 = arith.constant 128 : index
    %65 = vector.load %arg12[%c0_25, %c16, %c128] : memref<2x256x1152xbf16, #tpu.memory_space<vmem>>, vector<2x240x32xbf16>
    tpu.vector_store %arg12[%c0_25, %c16, %c128], %64 {strides = array<i32>} : memref<2x256x1152xbf16, #tpu.memory_space<vmem>>, vector<2x240x32xbf16>,
    %66 = vector.extract_strided_slice %54 {offsets = [0, 0, 0], sizes = [2, 241, 32], strides = [1, 1, 1]} : vector<2x256x32xbf16> to vector<2x241x32xbf16>
    %c0_26 = arith.constant 0 : index
    %c15 = arith.constant 15 : index
    %c256 = arith.constant 256 : index
    %67 = vector.load %arg12[%c0_26, %c15, %c256] : memref<2x256x1152xbf16, #tpu.memory_space<vmem>>, vector<2x241x32xbf16>
    tpu.vector_store %arg12[%c0_26, %c15, %c256], %66 {strides = array<i32>} : memref<2x256x1152xbf16, #tpu.memory_space<vmem>>, vector<2x241x32xbf16>,
    %68 = vector.extract_strided_slice %59 {offsets = [0, 0, 0], sizes = [2, 255, 32], strides = [1, 1, 1]} : vector<2x256x32xbf16> to vector<2x255x32xbf16>
    %c0_27 = arith.constant 0 : index
    %c1 = arith.constant 1 : index
    %c384 = arith.constant 384 : index
    %69 = vector.load %arg12[%c0_27, %c1, %c384] : memref<2x256x1152xbf16, #tpu.memory_space<vmem>>, vector<2x255x32xbf16>
    tpu.vector_store %arg12[%c0_27, %c1, %c384], %68 {strides = array<i32>} : memref<2x256x1152xbf16, #tpu.memory_space<vmem>>, vector<2x255x32xbf16>,
    %c0_28 = arith.constant 0 : index
    %c0_29 = arith.constant 0 : index
    %c512 = arith.constant 512 : index
    %70 = vector.load %arg12[%c0_28, %c0_29, %c512] : memref<2x256x1152xbf16, #tpu.memory_space<vmem>>, vector<2x256x32xbf16>
    tpu.vector_store %arg12[%c0_28, %c0_29, %c512], %31 {strides = array<i32>} : memref<2x256x1152xbf16, #tpu.memory_space<vmem>>, vector<2x256x32xbf16>,
    %71 = vector.extract_strided_slice %54 {offsets = [0, 1, 0], sizes = [2, 255, 32], strides = [1, 1, 1]} : vector<2x256x32xbf16> to vector<2x255x32xbf16>
    %c0_30 = arith.constant 0 : index
    %c0_31 = arith.constant 0 : index
    %c640 = arith.constant 640 : index
    %72 = vector.load %arg12[%c0_30, %c0_31, %c640] : memref<2x256x1152xbf16, #tpu.memory_space<vmem>>, vector<2x255x32xbf16>
    tpu.vector_store %arg12[%c0_30, %c0_31, %c640], %71 {strides = array<i32>} : memref<2x256x1152xbf16, #tpu.memory_space<vmem>>, vector<2x255x32xbf16>,
    %73 = vector.extract_strided_slice %59 {offsets = [0, 15, 0], sizes = [2, 241, 32], strides = [1, 1, 1]} : vector<2x256x32xbf16> to vector<2x241x32xbf16>
    %c0_32 = arith.constant 0 : index
    %c0_33 = arith.constant 0 : index
    %c768 = arith.constant 768 : index
    %74 = vector.load %arg12[%c0_32, %c0_33, %c768] : memref<2x256x1152xbf16, #tpu.memory_space<vmem>>, vector<2x241x32xbf16>
    tpu.vector_store %arg12[%c0_32, %c0_33, %c768], %73 {strides = array<i32>} : memref<2x256x1152xbf16, #tpu.memory_space<vmem>>, vector<2x241x32xbf16>,
    %75 = vector.extract_strided_slice %31 {offsets = [0, 16, 0], sizes = [2, 240, 32], strides = [1, 1, 1]} : vector<2x256x32xbf16> to vector<2x240x32xbf16>
    %c0_34 = arith.constant 0 : index
    %c0_35 = arith.constant 0 : index
    %c896 = arith.constant 896 : index
    %76 = vector.load %arg12[%c0_34, %c0_35, %c896] : memref<2x256x1152xbf16, #tpu.memory_space<vmem>>, vector<2x240x32xbf16>
    tpu.vector_store %arg12[%c0_34, %c0_35, %c896], %75 {strides = array<i32>} : memref<2x256x1152xbf16, #tpu.memory_space<vmem>>, vector<2x240x32xbf16>,
    %77 = vector.extract_strided_slice %54 {offsets = [0, 17, 0], sizes = [2, 239, 32], strides = [1, 1, 1]} : vector<2x256x32xbf16> to vector<2x239x32xbf16>
    %c0_36 = arith.constant 0 : index
    %c0_37 = arith.constant 0 : index
    %c1024 = arith.constant 1024 : index
    %78 = vector.load %arg12[%c0_36, %c0_37, %c1024] : memref<2x256x1152xbf16, #tpu.memory_space<vmem>>, vector<2x239x32xbf16>
    tpu.vector_store %arg12[%c0_36, %c0_37, %c1024], %77 {strides = array<i32>} : memref<2x256x1152xbf16, #tpu.memory_space<vmem>>, vector<2x239x32xbf16>,
    %c0_38 = arith.constant 0 : index
    %c0_39 = arith.constant 0 : index
    %c0_40 = arith.constant 0 : index
    %79 = vector.load %arg12[%c0_38, %c0_39, %c0_40] : memref<2x256x1152xbf16, #tpu.memory_space<vmem>>, vector<2x256x1152xbf16>
    %80 = vector.shape_cast %79 : vector<2x256x1152xbf16> to vector<512x1152xbf16>
    %c0_41 = arith.constant 0 : index
    %c0_42 = arith.constant 0 : index
    %81 = vector.load %arg3[%c0_41, %c0_42] : memref<1152x32xbf16, #tpu.memory_space<vmem>>, vector<1152x32xbf16>
    %cst_43 = arith.constant dense<0.000000e+00> : vector<512x32xf32>
    %82 = tpu.matmul %80, %81, %cst_43 {dimension_numbers = #tpu.dot_dimension_numbers<[1], [0], [0], [1], [0, 0, 1, 1], [], []>} : vector<512x1152xbf16>, vector<1152x32xbf16>, vector<512x32xf32> -> vector<512x32xf32>
    %83 = vector.shape_cast %82 : vector<512x32xf32> to vector<2x256x32xf32>
    %c0_44 = arith.constant 0 : index
    %c0_45 = arith.constant 0 : index
    %84 = vector.load %arg7[%c0_44, %c0_45] : memref<1x32xf32, #tpu.memory_space<vmem>>, vector<1x32xf32>
    %c0_46 = arith.constant 0 : index
    %c0_47 = arith.constant 0 : index
    %85 = vector.load %arg8[%c0_46, %c0_47] : memref<1x32xf32, #tpu.memory_space<vmem>>, vector<1x32xf32>
    %cst_48 = arith.constant dense<0.000000e+00> : vector<2x32xf32>
    %86 = vector.multi_reduction <add>, %83, %cst_48 [1] : vector<2x256x32xf32> to vector<2x32xf32>
    %87 = vector.shape_cast %86 : vector<2x32xf32> to vector<2x1x32xf32>
    %cst_49 = arith.constant 3.906250e-03 : f32
    %88 = vector.broadcast %cst_49 : f32 to vector<2x1x32xf32>
    %89 = arith.mulf %87, %88 : vector<2x1x32xf32>
    %90 = vector.broadcast %89 : vector<2x1x32xf32> to vector<2x256x32xf32>
    %91 = arith.subf %83, %90 : vector<2x256x32xf32>
    %92 = arith.mulf %91, %91 : vector<2x256x32xf32>
    %cst_50 = arith.constant dense<0.000000e+00> : vector<2x32xf32>
    %93 = vector.multi_reduction <add>, %92, %cst_50 [1] : vector<2x256x32xf32> to vector<2x32xf32>
    %94 = vector.shape_cast %93 : vector<2x32xf32> to vector<2x1x32xf32>
    %cst_51 = arith.constant 3.906250e-03 : f32
    %95 = vector.broadcast %cst_51 : f32 to vector<2x1x32xf32>
    %96 = arith.mulf %94, %95 : vector<2x1x32xf32>
    %cst_52 = arith.constant 9.99999974E-6 : f32
    %97 = vector.broadcast %cst_52 : f32 to vector<2x1x32xf32>
    %98 = arith.addf %96, %97 : vector<2x1x32xf32>
    %99 = math.rsqrt %98 : vector<2x1x32xf32>
    %100 = vector.shape_cast %84 : vector<1x32xf32> to vector<1x1x32xf32>
    %101 = vector.broadcast %100 : vector<1x1x32xf32> to vector<2x1x32xf32>
    %102 = arith.mulf %101, %99 : vector<2x1x32xf32>
    %103 = vector.broadcast %102 : vector<2x1x32xf32> to vector<2x256x32xf32>
    %104 = arith.mulf %91, %103 : vector<2x256x32xf32>
    %105 = vector.shape_cast %85 : vector<1x32xf32> to vector<1x1x32xf32>
    %106 = vector.broadcast %105 : vector<1x1x32xf32> to vector<2x256x32xf32>
    %107 = arith.addf %104, %106 : vector<2x256x32xf32>
    %cst_53 = arith.constant 0.000000e+00 : f32
    %108 = vector.broadcast %cst_53 : f32 to vector<2x256x32xf32>
    %109 = arith.maximumf %107, %108 : vector<2x256x32xf32>
    %110 = arith.truncf %109 : vector<2x256x32xf32> to vector<2x256x32xbf16>
    %111 = vector.shape_cast %110 : vector<2x256x32xbf16> to vector<512x32xbf16>
    %c0_54 = arith.constant 0 : index
    %c0_55 = arith.constant 0 : index
    %112 = vector.load %arg4[%c0_54, %c0_55] : memref<32x128xbf16, #tpu.memory_space<vmem>>, vector<32x128xbf16>
    %cst_56 = arith.constant dense<0.000000e+00> : vector<512x128xf32>
    %113 = tpu.matmul %111, %112, %cst_56 {dimension_numbers = #tpu.dot_dimension_numbers<[1], [0], [0], [1], [0, 0, 1, 1], [], []>} : vector<512x32xbf16>, vector<32x128xbf16>, vector<512x128xf32> -> vector<512x128xf32>
    %114 = vector.shape_cast %113 : vector<512x128xf32> to vector<2x256x128xf32>
    %c0_57 = arith.constant 0 : index
    %c0_58 = arith.constant 0 : index
    %115 = vector.load %arg9[%c0_57, %c0_58] : memref<1x128xf32, #tpu.memory_space<vmem>>, vector<1x128xf32>
    %c0_59 = arith.constant 0 : index
    %c0_60 = arith.constant 0 : index
    %116 = vector.load %arg10[%c0_59, %c0_60] : memref<1x128xf32, #tpu.memory_space<vmem>>, vector<1x128xf32>
    %cst_61 = arith.constant dense<0.000000e+00> : vector<2x128xf32>
    %117 = vector.multi_reduction <add>, %114, %cst_61 [1] : vector<2x256x128xf32> to vector<2x128xf32>
    %118 = vector.shape_cast %117 : vector<2x128xf32> to vector<2x1x128xf32>
    %cst_62 = arith.constant 3.906250e-03 : f32
    %119 = vector.broadcast %cst_62 : f32 to vector<2x1x128xf32>
    %120 = arith.mulf %118, %119 : vector<2x1x128xf32>
    %121 = vector.broadcast %120 : vector<2x1x128xf32> to vector<2x256x128xf32>
    %122 = arith.subf %114, %121 : vector<2x256x128xf32>
    %123 = arith.mulf %122, %122 : vector<2x256x128xf32>
    %cst_63 = arith.constant dense<0.000000e+00> : vector<2x128xf32>
    %124 = vector.multi_reduction <add>, %123, %cst_63 [1] : vector<2x256x128xf32> to vector<2x128xf32>
    %125 = vector.shape_cast %124 : vector<2x128xf32> to vector<2x1x128xf32>
    %cst_64 = arith.constant 3.906250e-03 : f32
    %126 = vector.broadcast %cst_64 : f32 to vector<2x1x128xf32>
    %127 = arith.mulf %125, %126 : vector<2x1x128xf32>
    %cst_65 = arith.constant 9.99999974E-6 : f32
    %128 = vector.broadcast %cst_65 : f32 to vector<2x1x128xf32>
    %129 = arith.addf %127, %128 : vector<2x1x128xf32>
    %130 = math.rsqrt %129 : vector<2x1x128xf32>
    %131 = vector.shape_cast %115 : vector<1x128xf32> to vector<1x1x128xf32>
    %132 = vector.broadcast %131 : vector<1x1x128xf32> to vector<2x1x128xf32>
    %133 = arith.mulf %132, %130 : vector<2x1x128xf32>
    %134 = vector.broadcast %133 : vector<2x1x128xf32> to vector<2x256x128xf32>
    %135 = arith.mulf %122, %134 : vector<2x256x128xf32>
    %136 = vector.shape_cast %116 : vector<1x128xf32> to vector<1x1x128xf32>
    %137 = vector.broadcast %136 : vector<1x1x128xf32> to vector<2x256x128xf32>
    %138 = arith.addf %135, %137 : vector<2x256x128xf32>
    %c0_66 = arith.constant 0 : index
    %c0_67 = arith.constant 0 : index
    %c0_68 = arith.constant 0 : index
    %139 = vector.load %arg1[%c0_66, %c0_67, %c0_68] : memref<2x256x128xbf16, #tpu.memory_space<vmem>>, vector<2x256x128xbf16>
    %140 = arith.extf %139 : vector<2x256x128xbf16> to vector<2x256x128xf32>
    %141 = arith.addf %138, %140 : vector<2x256x128xf32>
    %cst_69 = arith.constant 0.000000e+00 : f32
    %142 = vector.broadcast %cst_69 : f32 to vector<2x256x128xf32>
    %143 = arith.maximumf %141, %142 : vector<2x256x128xf32>
    %c0_70 = arith.constant 0 : index
    %c0_71 = arith.constant 0 : index
    %c0_72 = arith.constant 0 : index
    %144 = vector.load %arg11[%c0_70, %c0_71, %c0_72] : memref<2x256x128xf32, #tpu.memory_space<vmem>>, vector<2x256x128xf32>
    tpu.vector_store %arg11[%c0_70, %c0_71, %c0_72], %143 {strides = array<i32>} : memref<2x256x128xf32, #tpu.memory_space<vmem>>, vector<2x256x128xf32>,
    return
  }
  func.func @transform_0(%arg0: i32) -> (i32, i32, i32) {
    %c0_i32 = arith.constant 0 : i32
    %c0_i32_0 = arith.constant 0 : i32
    %c0_i32_1 = arith.constant 0 : i32
    return %arg0, %c0_i32, %c0_i32_0 : i32, i32, i32
  }
  func.func @transform_1(%arg0: i32) -> (i32, i32) {
    %c0_i32 = arith.constant 0 : i32
    %c0_i32_0 = arith.constant 0 : i32
    %c0_i32_1 = arith.constant 0 : i32
    return %c0_i32, %c0_i32_0 : i32, i32
  }
  func.func @transform_2(%arg0: i32) -> (i32, i32) {
    %c0_i32 = arith.constant 0 : i32
    %c0_i32_0 = arith.constant 0 : i32
    %c0_i32_1 = arith.constant 0 : i32
    return %c0_i32, %c0_i32_0 : i32, i32
  }
  func.func @transform_3(%arg0: i32) -> (i32, i32) {
    %c0_i32 = arith.constant 0 : i32
    %c0_i32_0 = arith.constant 0 : i32
    %c0_i32_1 = arith.constant 0 : i32
    return %c0_i32, %c0_i32_0 : i32, i32
  }
  func.func @transform_4(%arg0: i32) -> (i32, i32) {
    %c0_i32 = arith.constant 0 : i32
    %c0_i32_0 = arith.constant 0 : i32
    %c0_i32_1 = arith.constant 0 : i32
    return %c0_i32, %c0_i32_0 : i32, i32
  }
  func.func @transform_5(%arg0: i32) -> (i32, i32) {
    %c0_i32 = arith.constant 0 : i32
    %c0_i32_0 = arith.constant 0 : i32
    %c0_i32_1 = arith.constant 0 : i32
    return %c0_i32, %c0_i32_0 : i32, i32
  }
  func.func @transform_6(%arg0: i32) -> (i32, i32) {
    %c0_i32 = arith.constant 0 : i32
    %c0_i32_0 = arith.constant 0 : i32
    %c0_i32_1 = arith.constant 0 : i32
    return %c0_i32, %c0_i32_0 : i32, i32
  }
  func.func @transform_7(%arg0: i32) -> (i32, i32) {
    %c0_i32 = arith.constant 0 : i32
    %c0_i32_0 = arith.constant 0 : i32
    %c0_i32_1 = arith.constant 0 : i32
    return %c0_i32, %c0_i32_0 : i32, i32
  }
  func.func @transform_8(%arg0: i32) -> (i32, i32) {
    %c0_i32 = arith.constant 0 : i32
    %c0_i32_0 = arith.constant 0 : i32
    %c0_i32_1 = arith.constant 0 : i32
    return %c0_i32, %c0_i32_0 : i32, i32
  }
  func.func @transform_9(%arg0: i32) -> (i32, i32) {
    %c0_i32 = arith.constant 0 : i32
    %c0_i32_0 = arith.constant 0 : i32
    %c0_i32_1 = arith.constant 0 : i32
    return %c0_i32, %c0_i32_0 : i32, i32
  }
  func.func @transform_10(%arg0: i32) -> (i32, i32, i32) {
    %c0_i32 = arith.constant 0 : i32
    %c0_i32_0 = arith.constant 0 : i32
    %c0_i32_1 = arith.constant 0 : i32
    return %arg0, %c0_i32, %c0_i32_0 : i32, i32, i32
  }
}

</mosaic_0001>

<llo_original>
// kernel: tpu_custom_call.1
$region0: #{tpu_custom_call.1}
  #allocation0 [shape = 'u32[]', space=smem, size = 0x4, offset = 0x4, fixed_abs, tag = 'smem constant byte address 0x4 - core index']
  #allocation1 [shape = 'u32[144,128]{1,0:T(1,128)}', space=vmem, size = 0x12000, scoped, tag = 'internal scratch']
  #allocation2 [shape = 'bf16[2,256,1152]{2,1,0:T(8,128)(2,1)}', space=vmem, size = 0x120000, scoped, tag = 'scratch operand']
  %s0 = inlined_call_operand.vmem [shape: bf16[4,256,128], index: 0, kind: input, shape index: {}]
  %s1 = inlined_call_operand.vmem [shape: bf16[128,32], index: 1, kind: input, shape index: {}]
  %s2 = inlined_call_operand.vmem [shape: bf16[1152,32], index: 2, kind: input, shape index: {}]
  %s3 = inlined_call_operand.vmem [shape: bf16[32,128], index: 3, kind: input, shape index: {}]
  %s4 = inlined_call_operand.vmem [shape: f32[1,32], index: 4, kind: input, shape index: {}]
  %s5 = inlined_call_operand.vmem [shape: f32[1,32], index: 5, kind: input, shape index: {}]
  %s6 = inlined_call_operand.vmem [shape: f32[1,32], index: 6, kind: input, shape index: {}]
  %s7 = inlined_call_operand.vmem [shape: f32[1,32], index: 7, kind: input, shape index: {}]
  %s8 = inlined_call_operand.vmem [shape: f32[1,128], index: 8, kind: input, shape index: {}]
  %s9 = inlined_call_operand.vmem [shape: f32[1,128], index: 9, kind: input, shape index: {}]
  %s10 = inlined_call_operand.hbm [shape: f32[4,256,128], index: 10, kind: output, shape index: {}]
  %s11 = sld [smem:[#allocation0]]
  $region73: #{tpu_custom_call.1} parent=0
    _
  %s13 = ssub.s32 1, %s11
  %s14 = scalar_select 0, %s13, %s11
  $region1: #{tpu_custom_call.1} parent=0
    #allocation3 [shape = 'u8[524288]{0}', space=vmem, size = 0x80000, scoped, tag = 'output window, operand 0']
    #allocation4 [shape = 's32[2]{0}', space=sflag, size = 0x8, scoped, tag = 'scoped memory for tpu_custom_call.1']
    %15 = vsyncpa [#allocation4], 0
    %s16 = scalar_lea.sflag [#allocation4], 1
    %17 = vsyncpa %s16, 0
    loop: start=0, step=1, limit=4
    $region2: #{tpu_custom_call.1} parent=1 // loop_pre_header
      _
    $region3: #{tpu_custom_call.1} parent=1 // loop_header
      %s19 = sphi 0, %s23
      %p20 = scmp.ge.s32.totalorder %s19, 4
      %s29 = sphi 0, %s31
      %s32 = sphi 0, %s29
      %s33 = sphi 0, %s32
      %s49 = sphi 0, %s33
      %s53 = sphi 0, %s53
      %s55 = sphi 0, %s53
      %s56 = sphi 0, %s55
      %s70 = sphi 0, %s56
      %s74 = sphi 0, %s74
      %s76 = sphi 0, %s74
      %s77 = sphi 0, %s76
      %s91 = sphi 0, %s77
      %s95 = sphi 0, %s95
      %s97 = sphi 0, %s95
      %s98 = sphi 0, %s97
      %s112 = sphi 0, %s98
      %s116 = sphi 0, %s116
      %s118 = sphi 0, %s116
      %s119 = sphi 0, %s118
      %s133 = sphi 0, %s119
      %s137 = sphi 0, %s137
      %s139 = sphi 0, %s137
      %s140 = sphi 0, %s139
      %s154 = sphi 0, %s140
      %s158 = sphi 0, %s158
      %s160 = sphi 0, %s158
      %s161 = sphi 0, %s160
      %s175 = sphi 0, %s161
      %s179 = sphi 0, %s179
      %s181 = sphi 0, %s179
      %s182 = sphi 0, %s181
      %s196 = sphi 0, %s182
      %s200 = sphi 0, %s200
      %s202 = sphi 0, %s200
      %s203 = sphi 0, %s202
      %s217 = sphi 0, %s203
      %s221 = sphi 0, %s221
      %s223 = sphi 0, %s221
      %s224 = sphi 0, %s223
      %s238 = sphi 0, %s224
      %s244 = sphi 0, %s246
      %s247 = sphi 0, %s244
      %s248 = sphi 0, %s247
      %s264 = sphi 0, %s248
    $region4: #{tpu_custom_call.1} parent=1 // loop_header_branch
      %22 = sbr.rel (%p20) target = $region8
    $region5: #{tpu_custom_call.1} parent=1 // loop_body
      %s24 = ssub.s32 %s19, 1
      %s25 = ssub.s32 %s19, 2
      %s26 = sadd.s32 %s19, 1
      %s27 = ssub.s32 %s19, %s26
      %p28 = scmp.eq.s32.totalorder %s27, 0
      %s30 = sadd.s32 %s29, 1
      %s31 = scalar_select %p28, %s29, %s30
      %p34 = pneg %p28
      %p35 = scmp.eq.s32.totalorder %s19, 1
      %p36 = por %p34, %p35
      %p37 = scmp.ne.s32.totalorder %s29, %s32
      %p38 = scmp.eq.s32.totalorder %s19, 0
      %p39 = por %p37, %p38
      %p40 = scmp.ne.s32.totalorder %s29, %s32
      %p41 = scmp.eq.s32.totalorder %s24, 1
      %p42 = por %p40, %p41
      %p43 = scmp.ne.s32.totalorder %s32, %s33
      %p44 = scmp.eq.s32.totalorder %s24, 0
      %p45 = por %p43, %p44
      %p46 = scmp.ne.s32.totalorder %s32, %s33
      %p47 = scmp.eq.s32.totalorder %s25, 1
      %p48 = por %p46, %p47
      %p50 = scmp.ne.s32.totalorder %s33, %s49
      %p51 = scmp.eq.s32.totalorder %s25, 0
      %p52 = por %p50, %p51
      %s54 = sadd.s32 %s53, 1
      %p57 = scmp.eq.s32.totalorder %s19, 1
      %p58 = scmp.ne.s32.totalorder %s53, %s55
      %p59 = scmp.eq.s32.totalorder %s19, 0
      %p60 = por %p58, %p59
      %p61 = scmp.ne.s32.totalorder %s53, %s55
      %p62 = scmp.eq.s32.totalorder %s24, 1
      %p63 = por %p61, %p62
      %p64 = scmp.ne.s32.totalorder %s55, %s56
      %p65 = scmp.eq.s32.totalorder %s24, 0
      %p66 = por %p64, %p65
      %p67 = scmp.ne.s32.totalorder %s55, %s56
      %p68 = scmp.eq.s32.totalorder %s25, 1
      %p69 = por %p67, %p68
      %p71 = scmp.ne.s32.totalorder %s56, %s70
      %p72 = scmp.eq.s32.totalorder %s25, 0
      %p73 = por %p71, %p72
      %s75 = sadd.s32 %s74, 1
      %p78 = scmp.eq.s32.totalorder %s19, 1
      %p79 = scmp.ne.s32.totalorder %s74, %s76
      %p80 = scmp.eq.s32.totalorder %s19, 0
      %p81 = por %p79, %p80
      %p82 = scmp.ne.s32.totalorder %s74, %s76
      %p83 = scmp.eq.s32.totalorder %s24, 1
      %p84 = por %p82, %p83
      %p85 = scmp.ne.s32.totalorder %s76, %s77
      %p86 = scmp.eq.s32.totalorder %s24, 0
      %p87 = por %p85, %p86
      %p88 = scmp.ne.s32.totalorder %s76, %s77
      %p89 = scmp.eq.s32.totalorder %s25, 1
      %p90 = por %p88, %p89
      %p92 = scmp.ne.s32.totalorder %s77, %s91
      %p93 = scmp.eq.s32.totalorder %s25, 0
      %p94 = por %p92, %p93
      %s96 = sadd.s32 %s95, 1
      %p99 = scmp.eq.s32.totalorder %s19, 1
      %p100 = scmp.ne.s32.totalorder %s95, %s97
      %p101 = scmp.eq.s32.totalorder %s19, 0
      %p102 = por %p100, %p101
      %p103 = scmp.ne.s32.totalorder %s95, %s97
      %p104 = scmp.eq.s32.totalorder %s24, 1
      %p105 = por %p103, %p104
      %p106 = scmp.ne.s32.totalorder %s97, %s98
      %p107 = scmp.eq.s32.totalorder %s24, 0
      %p108 = por %p106, %p107
      %p109 = scmp.ne.s32.totalorder %s97, %s98
      %p110 = scmp.eq.s32.totalorder %s25, 1
      %p111 = por %p109, %p110
      %p113 = scmp.ne.s32.totalorder %s98, %s112
      %p114 = scmp.eq.s32.totalorder %s25, 0
      %p115 = por %p113, %p114
      %s117 = sadd.s32 %s116, 1
      %p120 = scmp.eq.s32.totalorder %s19, 1
      %p121 = scmp.ne.s32.totalorder %s116, %s118
      %p122 = scmp.eq.s32.totalorder %s19, 0
      %p123 = por %p121, %p122
      %p124 = scmp.ne.s32.totalorder %s116, %s118
      %p125 = scmp.eq.s32.totalorder %s24, 1
      %p126 = por %p124, %p125
      %p127 = scmp.ne.s32.totalorder %s118, %s119
      %p128 = scmp.eq.s32.totalorder %s24, 0
      %p129 = por %p127, %p128
      %p130 = scmp.ne.s32.totalorder %s118, %s119
      %p131 = scmp.eq.s32.totalorder %s25, 1
      %p132 = por %p130, %p131
      %p134 = scmp.ne.s32.totalorder %s119, %s133
      %p135 = scmp.eq.s32.totalorder %s25, 0
      %p136 = por %p134, %p135
      %s138 = sadd.s32 %s137, 1
      %p141 = scmp.eq.s32.totalorder %s19, 1
      %p142 = scmp.ne.s32.totalorder %s137, %s139
      %p143 = scmp.eq.s32.totalorder %s19, 0
      %p144 = por %p142, %p143
      %p145 = scmp.ne.s32.totalorder %s137, %s139
      %p146 = scmp.eq.s32.totalorder %s24, 1
      %p147 = por %p145, %p146
      %p148 = scmp.ne.s32.totalorder %s139, %s140
      %p149 = scmp.eq.s32.totalorder %s24, 0
      %p150 = por %p148, %p149
      %p151 = scmp.ne.s32.totalorder %s139, %s140
      %p152 = scmp.eq.s32.totalorder %s25, 1
      %p153 = por %p151, %p152
      %p155 = scmp.ne.s32.totalorder %s140, %s154
      %p156 = scmp.eq.s32.totalorder %s25, 0
      %p157 = por %p155, %p156
      %s159 = sadd.s32 %s158, 1
      %p162 = scmp.eq.s32.totalorder %s19, 1
      %p163 = scmp.ne.s32.totalorder %s158, %s160
      %p164 = scmp.eq.s32.totalorder %s19, 0
      %p165 = por %p163, %p164
      %p166 = scmp.ne.s32.totalorder %s158, %s160
      %p167 = scmp.eq.s32.totalorder %s24, 1
      %p168 = por %p166, %p167
      %p169 = scmp.ne.s32.totalorder %s160, %s161
      %p170 = scmp.eq.s32.totalorder %s24, 0
      %p171 = por %p169, %p170
      %p172 = scmp.ne.s32.totalorder %s160, %s161
      %p173 = scmp.eq.s32.totalorder %s25, 1
      %p174 = por %p172, %p173
      %p176 = scmp.ne.s32.totalorder %s161, %s175
      %p177 = scmp.eq.s32.totalorder %s25, 0
      %p178 = por %p176, %p177
      %s180 = sadd.s32 %s179, 1
      %p183 = scmp.eq.s32.totalorder %s19, 1
      %p184 = scmp.ne.s32.totalorder %s179, %s181
      %p185 = scmp.eq.s32.totalorder %s19, 0
      %p186 = por %p184, %p185
      %p187 = scmp.ne.s32.totalorder %s179, %s181
      %p188 = scmp.eq.s32.totalorder %s24, 1
      %p189 = por %p187, %p188
      %p190 = scmp.ne.s32.totalorder %s181, %s182
      %p191 = scmp.eq.s32.totalorder %s24, 0
      %p192 = por %p190, %p191
      %p193 = scmp.ne.s32.totalorder %s181, %s182
      %p194 = scmp.eq.s32.totalorder %s25, 1
      %p195 = por %p193, %p194
      %p197 = scmp.ne.s32.totalorder %s182, %s196
      %p198 = scmp.eq.s32.totalorder %s25, 0
      %p199 = por %p197, %p198
      %s201 = sadd.s32 %s200, 1
      %p204 = scmp.eq.s32.totalorder %s19, 1
      %p205 = scmp.ne.s32.totalorder %s200, %s202
      %p206 = scmp.eq.s32.totalorder %s19, 0
      %p207 = por %p205, %p206
      %p208 = scmp.ne.s32.totalorder %s200, %s202
      %p209 = scmp.eq.s32.totalorder %s24, 1
      %p210 = por %p208, %p209
      %p211 = scmp.ne.s32.totalorder %s202, %s203
      %p212 = scmp.eq.s32.totalorder %s24, 0
      %p213 = por %p211, %p212
      %p214 = scmp.ne.s32.totalorder %s202, %s203
      %p215 = scmp.eq.s32.totalorder %s25, 1
      %p216 = por %p214, %p215
      %p218 = scmp.ne.s32.totalorder %s203, %s217
      %p219 = scmp.eq.s32.totalorder %s25, 0
      %p220 = por %p218, %p219
      %s222 = sadd.s32 %s221, 1
      %p225 = scmp.eq.s32.totalorder %s19, 1
      %p226 = scmp.ne.s32.totalorder %s221, %s223
      %p227 = scmp.eq.s32.totalorder %s19, 0
      %p228 = por %p226, %p227
      %p229 = scmp.ne.s32.totalorder %s221, %s223
      %p230 = scmp.eq.s32.totalorder %s24, 1
      %p231 = por %p229, %p230
      %p232 = scmp.ne.s32.totalorder %s223, %s224
      %p233 = scmp.eq.s32.totalorder %s24, 0
      %p234 = por %p232, %p233
      %p235 = scmp.ne.s32.totalorder %s223, %s224
      %p236 = scmp.eq.s32.totalorder %s25, 1
      %p237 = por %p235, %p236
      %p239 = scmp.ne.s32.totalorder %s224, %s238
      %p240 = scmp.eq.s32.totalorder %s25, 0
      %p241 = por %p239, %p240
      %s242 = ssub.s32 %s19, %s26
      %p243 = scmp.eq.s32.totalorder %s242, 0
      %s245 = sadd.s32 %s244, 1
      %s246 = scalar_select %p243, %s244, %s245
      %p249 = pneg %p243
      %p250 = scmp.eq.s32.totalorder %s19, 1
      %p251 = por %p249, %p250
      %p252 = scmp.ne.s32.totalorder %s244, %s247
      %p253 = scmp.eq.s32.totalorder %s19, 0
      %p254 = por %p252, %p253
      %p255 = scmp.ne.s32.totalorder %s244, %s247
      %p256 = scmp.eq.s32.totalorder %s24, 1
      %p257 = por %p255, %p256
      %p258 = scmp.ne.s32.totalorder %s247, %s248
      %p259 = scmp.eq.s32.totalorder %s24, 0
      %p260 = por %p258, %p259
      %p261 = scmp.ne.s32.totalorder %s247, %s248
      %p262 = scmp.eq.s32.totalorder %s25, 1
      %p263 = por %p261, %p262
      %p265 = scmp.ne.s32.totalorder %s248, %s264
      %p266 = scmp.eq.s32.totalorder %s25, 0
      %p267 = por %p265, %p266
      %p268 = scmp.le.s32.totalorder 1, %s19
      %p269 = scmp.lt.s32.totalorder %s19, 3
      %p270 = pnand %p268, %p269
      %p271 = pneg %p270
      // Predicated region
      $region9: #{tpu_custom_call.1} parent=5 // pred_check
        _
      $region10: #{tpu_custom_call.1} parent=5 // pred_check_branch
        %273 = sbr.rel (%p270) target = $region12
      $region11: #{tpu_custom_call.1} parent=5 // pred_region
        %s274 = ssub.s32 %s19, 1
        // Predicated region
        $region13: #{tpu_custom_call.1} parent=11 // pred_check
          %p275 = pneg %p66
        $region14: #{tpu_custom_call.1} parent=11 // pred_check_branch
          %277 = sbr.rel (%p275) target = $region16
        $region15: #{tpu_custom_call.1} parent=11 // pred_region
          _
        $region16: #{tpu_custom_call.1} parent=11 // pred_fallthru
          _
        // Predicated region
        $region17: #{tpu_custom_call.1} parent=11 // pred_check
          %p278 = pneg %p87
        $region18: #{tpu_custom_call.1} parent=11 // pred_check_branch
          %280 = sbr.rel (%p278) target = $region20
        $region19: #{tpu_custom_call.1} parent=11 // pred_region
          _
        $region20: #{tpu_custom_call.1} parent=11 // pred_fallthru
          _
        // Predicated region
        $region21: #{tpu_custom_call.1} parent=11 // pred_check
          %p281 = pneg %p108
        $region22: #{tpu_custom_call.1} parent=11 // pred_check_branch
          %283 = sbr.rel (%p281) target = $region24
        $region23: #{tpu_custom_call.1} parent=11 // pred_region
          _
        $region24: #{tpu_custom_call.1} parent=11 // pred_fallthru
          _
        // Predicated region
        $region25: #{tpu_custom_call.1} parent=11 // pred_check
          %p284 = pneg %p129
        $region26: #{tpu_custom_call.1} parent=11 // pred_check_branch
          %286 = sbr.rel (%p284) target = $region28
        $region27: #{tpu_custom_call.1} parent=11 // pred_region
          _
        $region28: #{tpu_custom_call.1} parent=11 // pred_fallthru
          _
        // Predicated region
        $region29: #{tpu_custom_call.1} parent=11 // pred_check
          %p287 = pneg %p150
        $region30: #{tpu_custom_call.1} parent=11 // pred_check_branch
          %289 = sbr.rel (%p287) target = $region32
        $region31: #{tpu_custom_call.1} parent=11 // pred_region
          _
        $region32: #{tpu_custom_call.1} parent=11 // pred_fallthru
          _
        // Predicated region
        $region33: #{tpu_custom_call.1} parent=11 // pred_check
          %p290 = pneg %p171
        $region34: #{tpu_custom_call.1} parent=11 // pred_check_branch
          %292 = sbr.rel (%p290) target = $region36
        $region35: #{tpu_custom_call.1} parent=11 // pred_region
          _
        $region36: #{tpu_custom_call.1} parent=11 // pred_fallthru
          _
        // Predicated region
        $region37: #{tpu_custom_call.1} parent=11 // pred_check
          %p293 = pneg %p192
        $region38: #{tpu_custom_call.1} parent=11 // pred_check_branch
          %295 = sbr.rel (%p293) target = $region40
        $region39: #{tpu_custom_call.1} parent=11 // pred_region
          _
        $region40: #{tpu_custom_call.1} parent=11 // pred_fallthru
          _
        // Predicated region
        $region41: #{tpu_custom_call.1} parent=11 // pred_check
          %p296 = pneg %p213
        $region42: #{tpu_custom_call.1} parent=11 // pred_check_branch
          %298 = sbr.rel (%p296) target = $region44
        $region43: #{tpu_custom_call.1} parent=11 // pred_region
          _
        $region44: #{tpu_custom_call.1} parent=11 // pred_fallthru
          _
        // Predicated region
        $region45: #{tpu_custom_call.1} parent=11 // pred_check
          %p299 = pneg %p234
        $region46: #{tpu_custom_call.1} parent=11 // pred_check_branch
          %301 = sbr.rel (%p299) target = $region48
        $region47: #{tpu_custom_call.1} parent=11 // pred_region
          _
        $region48: #{tpu_custom_call.1} parent=11 // pred_fallthru
          _
      $region12: #{tpu_custom_call.1} parent=5 // pred_fallthru
        _
      %p302 = scmp.lt.s32.totalorder %s19, 2
      // Predicated region
      $region49: #{tpu_custom_call.1} parent=5 // pred_check
        %p303 = pneg %p302
      $region50: #{tpu_custom_call.1} parent=5 // pred_check_branch
        %305 = sbr.rel (%p303) target = $region52
      $region51: #{tpu_custom_call.1} parent=5 // pred_region
        // Predicated region
        $region53: #{tpu_custom_call.1} parent=51 // pred_check
          %p306 = pneg %p39
        $region54: #{tpu_custom_call.1} parent=51 // pred_check_branch
          %308 = sbr.rel (%p306) target = $region56
        $region55: #{tpu_custom_call.1} parent=51 // pred_region
          %s309 = smul.u32 2, %s19
          %p310 = scmp.lt.s32.totalorder %s309, 3
          %s311 = scalar_select %p310, %s309, 3
          %s312 = smul.addr %s311, 32
          %s313 = smul.addr %s312, 4
          %s314 = scalar_lea.vmem %s0, %s313
          %s315 = smul.u32 2, %s19
        $region56: #{tpu_custom_call.1} parent=51 // pred_fallthru
          _
      $region52: #{tpu_custom_call.1} parent=5 // pred_fallthru
        _
      %p316 = scmp.le.s32.totalorder 1, %s19
      %p317 = scmp.lt.s32.totalorder %s19, 3
      %p318 = pnand %p316, %p317
      %p319 = pneg %p318
      // Predicated region
      $region57: #{tpu_custom_call.1} parent=5 // pred_check
        _
      $region58: #{tpu_custom_call.1} parent=5 // pred_check_branch
        %321 = sbr.rel (%p318) target = $region60
      $region59: #{tpu_custom_call.1} parent=5 // pred_region
        %s322 = ssub.s32 %s19, 1
        %s323 = smul.u32 2, %s24
        %p324 = scmp.lt.s32.totalorder %s323, 3
        %s325 = scalar_select %p324, %s323, 3
        %s326 = smul.addr %s325, 32
        %s327 = smul.addr %s326, 4
        %s328 = scalar_lea.vmem %s0, %s327
        %p329 = pneg %p45
        %p330 = pneg %p42
        %p331 = pneg %p66
        %p332 = pneg %p63
        %p333 = pneg %p87
        %p334 = pneg %p84
        %p335 = pneg %p108
        %p336 = pneg %p105
        %p337 = pneg %p129
        %p338 = pneg %p126
        %p339 = pneg %p150
        %p340 = pneg %p147
        %p341 = pneg %p171
        %p342 = pneg %p168
        %p343 = pneg %p192
        %p344 = pneg %p189
        %p345 = pneg %p213
        %p346 = pneg %p210
        %p347 = pneg %p234
        %p348 = pneg %p231
        %p349 = pneg %p260
        %p350 = pneg %p257
        %s351 = sand.u32 %s247, 1
        %s352 = scalar_lea.sflag [#allocation4], %s351
        %s353 = sand.u32 %s247, 1
        %s354 = smul.addr %s353, 512
        %s355 = scalar_lea.vmem [#allocation3], %s354
        %s356 = smul.u32 2, %s24
        %p357 = scmp.lt.s32.totalorder %s356, 3
        %s358 = scalar_select %p357, %s356, 3
        %s359 = smul.addr %s358, 32
        %s360 = smul.addr %s359, 4
        %s361 = scalar_lea.vmem %s0, %s360
        %s362 = smul.u32 2, %s24
        %s363 = smul.u32 2, %s24
        %v367 = vld [vmem:[%s361] sm:$0xf]
        %v368 = vld [vmem:[%s361 + $0x4] sm:$0xf]
        %v369 = vld [vmem:[%s361 + $0x8] sm:$0xf]
        %v370 = vld [vmem:[%s361 + $0xc] sm:$0xf]
        %v371 = vld [vmem:[%s361 + $0x10] sm:$0xf]
        %v372 = vld [vmem:[%s361 + $0x14] sm:$0xf]
        %v373 = vld [vmem:[%s361 + $0x18] sm:$0xf]
        %v374 = vld [vmem:[%s361 + $0x1c] sm:$0xf]
        %v375 = vld [vmem:[%s361 + $0x20] sm:$0xf]
        %v376 = vld [vmem:[%s361 + $0x24] sm:$0xf]
        %v377 = vld [vmem:[%s361 + $0x28] sm:$0xf]
        %v378 = vld [vmem:[%s361 + $0x2c] sm:$0xf]
        %v379 = vld [vmem:[%s361 + $0x30] sm:$0xf]
        %v380 = vld [vmem:[%s361 + $0x34] sm:$0xf]
        %v381 = vld [vmem:[%s361 + $0x38] sm:$0xf]
        %v382 = vld [vmem:[%s361 + $0x3c] sm:$0xf]
        %v383 = vld [vmem:[%s361 + $0x40] sm:$0xf]
        %v384 = vld [vmem:[%s361 + $0x44] sm:$0xf]
        %v385 = vld [vmem:[%s361 + $0x48] sm:$0xf]
        %v386 = vld [vmem:[%s361 + $0x4c] sm:$0xf]
        %v387 = vld [vmem:[%s361 + $0x50] sm:$0xf]
        %v388 = vld [vmem:[%s361 + $0x54] sm:$0xf]
        %v389 = vld [vmem:[%s361 + $0x58] sm:$0xf]
        %v390 = vld [vmem:[%s361 + $0x5c] sm:$0xf]
        %v391 = vld [vmem:[%s361 + $0x60] sm:$0xf]
        %v392 = vld [vmem:[%s361 + $0x64] sm:$0xf]
        %v393 = vld [vmem:[%s361 + $0x68] sm:$0xf]
        %v394 = vld [vmem:[%s361 + $0x6c] sm:$0xf]
        %v395 = vld [vmem:[%s361 + $0x70] sm:$0xf]
        %v396 = vld [vmem:[%s361 + $0x74] sm:$0xf]
        %v397 = vld [vmem:[%s361 + $0x78] sm:$0xf]
        %v398 = vld [vmem:[%s361 + $0x7c] sm:$0xf]
        %v399 = vld [vmem:[%s361 + $0x80] sm:$0xf]
        %v400 = vld [vmem:[%s361 + $0x84] sm:$0xf]
        %v401 = vld [vmem:[%s361 + $0x88] sm:$0xf]
        %v402 = vld [vmem:[%s361 + $0x8c] sm:$0xf]
        %v403 = vld [vmem:[%s361 + $0x90] sm:$0xf]
        %v404 = vld [vmem:[%s361 + $0x94] sm:$0xf]
        %v405 = vld [vmem:[%s361 + $0x98] sm:$0xf]
        %v406 = vld [vmem:[%s361 + $0x9c] sm:$0xf]
        %v407 = vld [vmem:[%s361 + $0xa0] sm:$0xf]
        %v408 = vld [vmem:[%s361 + $0xa4] sm:$0xf]
        %v409 = vld [vmem:[%s361 + $0xa8] sm:$0xf]
        %v410 = vld [vmem:[%s361 + $0xac] sm:$0xf]
        %v411 = vld [vmem:[%s361 + $0xb0] sm:$0xf]
        %v412 = vld [vmem:[%s361 + $0xb4] sm:$0xf]
        %v413 = vld [vmem:[%s361 + $0xb8] sm:$0xf]
        %v414 = vld [vmem:[%s361 + $0xbc] sm:$0xf]
        %v415 = vld [vmem:[%s361 + $0xc0] sm:$0xf]
        %v416 = vld [vmem:[%s361 + $0xc4] sm:$0xf]
        %v417 = vld [vmem:[%s361 + $0xc8] sm:$0xf]
        %v418 = vld [vmem:[%s361 + $0xcc] sm:$0xf]
        %v419 = vld [vmem:[%s361 + $0xd0] sm:$0xf]
        %v420 = vld [vmem:[%s361 + $0xd4] sm:$0xf]
        %v421 = vld [vmem:[%s361 + $0xd8] sm:$0xf]
        %v422 = vld [vmem:[%s361 + $0xdc] sm:$0xf]
        %v423 = vld [vmem:[%s361 + $0xe0] sm:$0xf]
        %v424 = vld [vmem:[%s361 + $0xe4] sm:$0xf]
        %v425 = vld [vmem:[%s361 + $0xe8] sm:$0xf]
        %v426 = vld [vmem:[%s361 + $0xec] sm:$0xf]
        %v427 = vld [vmem:[%s361 + $0xf0] sm:$0xf]
        %v428 = vld [vmem:[%s361 + $0xf4] sm:$0xf]
        %v429 = vld [vmem:[%s361 + $0xf8] sm:$0xf]
        %v430 = vld [vmem:[%s361 + $0xfc] sm:$0xf]
        %v431 = vld [vmem:[%s1] sm:$0xf]
        %v432 = vld [vmem:[%s1 + $0x4] sm:$0xf]
        %v433 = vld [vmem:[%s1 + $0x8] sm:$0xf]
        %v434 = vld [vmem:[%s1 + $0xc] sm:$0xf]
        %v435 = vld [vmem:[%s1 + $0x10] sm:$0xf]
        %v436 = vld [vmem:[%s1 + $0x14] sm:$0xf]
        %v437 = vld [vmem:[%s1 + $0x18] sm:$0xf]
        %v438 = vld [vmem:[%s1 + $0x1c] sm:$0xf]
        %v439 = vld [vmem:[%s1 + $0x20] sm:$0xf]
        %v440 = vld [vmem:[%s1 + $0x24] sm:$0xf]
        %v441 = vld [vmem:[%s1 + $0x28] sm:$0xf]
        %v442 = vld [vmem:[%s1 + $0x2c] sm:$0xf]
        %v443 = vld [vmem:[%s1 + $0x30] sm:$0xf]
        %v444 = vld [vmem:[%s1 + $0x34] sm:$0xf]
        %v445 = vld [vmem:[%s1 + $0x38] sm:$0xf]
        %v446 = vld [vmem:[%s1 + $0x3c] sm:$0xf]
        %v511 = vunpack.c.l.b16 %v367
        %v512 = vunpack.c.l.b16 %v368
        %v513 = vunpack.c.l.b16 %v369
        %v514 = vunpack.c.l.b16 %v370
        %v515 = vunpack.c.l.b16 %v371
        %v516 = vunpack.c.l.b16 %v372
        %v517 = vunpack.c.l.b16 %v373
        %v518 = vunpack.c.l.b16 %v374
        %v519 = vunpack.c.l.b16 %v375
        %v520 = vunpack.c.l.b16 %v376
        %v521 = vunpack.c.l.b16 %v377
        %v522 = vunpack.c.l.b16 %v378
        %v523 = vunpack.c.l.b16 %v379
        %v524 = vunpack.c.l.b16 %v380
        %v525 = vunpack.c.l.b16 %v381
        %v526 = vunpack.c.l.b16 %v382
        %v527 = vunpack.c.l.b16 %v383
        %v528 = vunpack.c.l.b16 %v384
        %v529 = vunpack.c.l.b16 %v385
        %v530 = vunpack.c.l.b16 %v386
        %v531 = vunpack.c.l.b16 %v387
        %v532 = vunpack.c.l.b16 %v388
        %v533 = vunpack.c.l.b16 %v389
        %v534 = vunpack.c.l.b16 %v390
        %v535 = vunpack.c.l.b16 %v391
        %v536 = vunpack.c.l.b16 %v392
        %v537 = vunpack.c.l.b16 %v393
        %v538 = vunpack.c.l.b16 %v394
        %v539 = vunpack.c.l.b16 %v395
        %v540 = vunpack.c.l.b16 %v396
        %v541 = vunpack.c.l.b16 %v397
        %v542 = vunpack.c.l.b16 %v398
        %v543 = vunpack.c.l.b16 %v399
        %v544 = vunpack.c.l.b16 %v400
        %v545 = vunpack.c.l.b16 %v401
        %v546 = vunpack.c.l.b16 %v402
        %v547 = vunpack.c.l.b16 %v403
        %v548 = vunpack.c.l.b16 %v404
        %v549 = vunpack.c.l.b16 %v405
        %v550 = vunpack.c.l.b16 %v406
        %v551 = vunpack.c.l.b16 %v407
        %v552 = vunpack.c.l.b16 %v408
        %v553 = vunpack.c.l.b16 %v409
        %v554 = vunpack.c.l.b16 %v410
        %v555 = vunpack.c.l.b16 %v411
        %v556 = vunpack.c.l.b16 %v412
        %v557 = vunpack.c.l.b16 %v413
        %v558 = vunpack.c.l.b16 %v414
        %v559 = vunpack.c.l.b16 %v415
        %v560 = vunpack.c.l.b16 %v416
        %v561 = vunpack.c.l.b16 %v417
        %v562 = vunpack.c.l.b16 %v418
        %v563 = vunpack.c.l.b16 %v419
        %v564 = vunpack.c.l.b16 %v420
        %v565 = vunpack.c.l.b16 %v421
        %v566 = vunpack.c.l.b16 %v422
        %v567 = vunpack.c.l.b16 %v423
        %v568 = vunpack.c.l.b16 %v424
        %v569 = vunpack.c.l.b16 %v425
        %v570 = vunpack.c.l.b16 %v426
        %v571 = vunpack.c.l.b16 %v427
        %v572 = vunpack.c.l.b16 %v428
        %v573 = vunpack.c.l.b16 %v429
        %v574 = vunpack.c.l.b16 %v430
        %v575 = vpack.c.b16 %v512, %v511
        %v576 = vpack.c.b16 %v514, %v513
        %v577 = vpack.c.b16 %v516, %v515
        %v578 = vpack.c.b16 %v518, %v517
        %v579 = vpack.c.b16 %v520, %v519
        %v580 = vpack.c.b16 %v522, %v521
        %v581 = vpack.c.b16 %v524, %v523
        %v582 = vpack.c.b16 %v526, %v525
        %v583 = vpack.c.b16 %v528, %v527
        %v584 = vpack.c.b16 %v530, %v529
        %v585 = vpack.c.b16 %v532, %v531
        %v586 = vpack.c.b16 %v534, %v533
        %v587 = vpack.c.b16 %v536, %v535
        %v588 = vpack.c.b16 %v538, %v537
        %v589 = vpack.c.b16 %v540, %v539
        %v590 = vpack.c.b16 %v542, %v541
        %v591 = vpack.c.b16 %v544, %v543
        %v592 = vpack.c.b16 %v546, %v545
        %v593 = vpack.c.b16 %v548, %v547
        %v594 = vpack.c.b16 %v550, %v549
        %v595 = vpack.c.b16 %v552, %v551
        %v596 = vpack.c.b16 %v554, %v553
        %v597 = vpack.c.b16 %v556, %v555
        %v598 = vpack.c.b16 %v558, %v557
        %v599 = vpack.c.b16 %v560, %v559
        %v600 = vpack.c.b16 %v562, %v561
        %v601 = vpack.c.b16 %v564, %v563
        %v602 = vpack.c.b16 %v566, %v565
        %v603 = vpack.c.b16 %v568, %v567
        %v604 = vpack.c.b16 %v570, %v569
        %v605 = vpack.c.b16 %v572, %v571
        %v606 = vpack.c.b16 %v574, %v573
        %v655 = vunpack.c.l.b16 %v431
        %v656 = vunpack.c.l.b16 %v432
        %v657 = vunpack.c.l.b16 %v433
        %v658 = vunpack.c.l.b16 %v434
        %v659 = vunpack.c.l.b16 %v435
        %v660 = vunpack.c.l.b16 %v436
        %v661 = vunpack.c.l.b16 %v437
        %v662 = vunpack.c.l.b16 %v438
        %v663 = vunpack.c.l.b16 %v439
        %v664 = vunpack.c.l.b16 %v440
        %v665 = vunpack.c.l.b16 %v441
        %v666 = vunpack.c.l.b16 %v442
        %v667 = vunpack.c.l.b16 %v443
        %v668 = vunpack.c.l.b16 %v444
        %v669 = vunpack.c.l.b16 %v445
        %v670 = vunpack.c.l.b16 %v446
        %v671 = vpack.c.b16 %v656, %v655
        %v672 = vpack.c.b16 %v658, %v657
        %v673 = vpack.c.b16 %v660, %v659
        %v674 = vpack.c.b16 %v662, %v661
        %v675 = vpack.c.b16 %v664, %v663
        %v676 = vpack.c.b16 %v666, %v665
        %v677 = vpack.c.b16 %v668, %v667
        %v678 = vpack.c.b16 %v670, %v669
        %687 = vmatprep.subr.bf16.mxu0 0
        %688 = vmatpush1.bf16.msra.mxu0 %v678
        %689 = vmatprep.subr.bf16.mxu0 0
        %690 = vmatpush1.bf16.msra.mxu0 %v677
        %691 = vmatprep.subr.bf16.mxu0 0
        %692 = vmatpush1.bf16.msra.mxu0 %v676
        %693 = vmatprep.subr.bf16.mxu0 0
        %694 = vmatpush1.bf16.msra.mxu0 %v675
        %695 = vmatprep.subr.bf16.mxu0 0
        %696 = vmatpush1.bf16.msra.mxu0 %v674
        %697 = vmatprep.subr.bf16.mxu0 0
        %698 = vmatpush1.bf16.msra.mxu0 %v673
        %699 = vmatprep.subr.bf16.mxu0 0
        %700 = vmatpush1.bf16.msra.mxu0 %v672
        %701 = vmatprep.subr.bf16.mxu0 0
        %702 = vmatpush1.bf16.msra.mxu0 %v671
        %703 = vmatprep.subr.bf16.mxu0 0
        %704 = vmatpush2.bf16.msra.mxu0 0
        %705 = vmatprep.subr.bf16.mxu0 0
        %706 = vmatpush2.bf16.msra.mxu0 0
        %707 = vmatprep.subr.bf16.mxu0 0
        %708 = vmatpush2.bf16.msra.mxu0 0
        %709 = vmatprep.subr.bf16.mxu0 0
        %710 = vmatpush2.bf16.msra.mxu0 0
        %711 = vmatprep.subr.bf16.mxu0 0
        %712 = vmatpush2.bf16.msra.mxu0 0
        %713 = vmatprep.subr.bf16.mxu0 0
        %714 = vmatpush2.bf16.msra.mxu0 0
        %715 = vmatprep.subr.bf16.mxu0 0
        %716 = vmatpush2.bf16.msra.mxu0 0
        %717 = vmatprep.subr.bf16.mxu0 0
        %718 = vmatpush2.bf16.msra.mxu0 0
        %719 = vmatprep.mubr.bf16.mxu0 0
        %720 = vmatmul.mubr.bf16.gmra.mxu0 %v575
        %v721 = vpop.f32.mrf.mxu0
        %v722 = vadd.f32 0.0, %v721
        %v723 = vpop.f32.mrf.mxu0
        %v724 = vpop.f32.mrf.mxu0
        %v725 = vadd.f32 0.0, %v724
        %v726 = vpop.f32.mrf.mxu0
        %727 = vmatprep.mubr.bf16.mxu0 0
        %728 = vmatmul.mubr.bf16.gmra.mxu0 %v576
        %v729 = vpop.f32.mrf.mxu0
        %v730 = vadd.f32 0.0, %v729
        %v731 = vpop.f32.mrf.mxu0
        %v732 = vpop.f32.mrf.mxu0
        %v733 = vadd.f32 0.0, %v732
        %v734 = vpop.f32.mrf.mxu0
        %735 = vmatprep.mubr.bf16.mxu0 0
        %736 = vmatmul.mubr.bf16.gmra.mxu0 %v577
        %v737 = vpop.f32.mrf.mxu0
        %v738 = vadd.f32 0.0, %v737
        %v739 = vpop.f32.mrf.mxu0
        %v740 = vpop.f32.mrf.mxu0
        %v741 = vadd.f32 0.0, %v740
        %v742 = vpop.f32.mrf.mxu0
        %743 = vmatprep.mubr.bf16.mxu0 0
        %744 = vmatmul.mubr.bf16.gmra.mxu0 %v578
        %v745 = vpop.f32.mrf.mxu0
        %v746 = vadd.f32 0.0, %v745
        %v747 = vpop.f32.mrf.mxu0
        %v748 = vpop.f32.mrf.mxu0
        %v749 = vadd.f32 0.0, %v748
        %v750 = vpop.f32.mrf.mxu0
        %751 = vmatprep.mubr.bf16.mxu0 0
        %752 = vmatmul.mubr.bf16.gmra.mxu0 %v579
        %v753 = vpop.f32.mrf.mxu0
        %v754 = vadd.f32 0.0, %v753
        %v755 = vpop.f32.mrf.mxu0
        %v756 = vpop.f32.mrf.mxu0
        %v757 = vadd.f32 0.0, %v756
        %v758 = vpop.f32.mrf.mxu0
        %759 = vmatprep.mubr.bf16.mxu0 0
        %760 = vmatmul.mubr.bf16.gmra.mxu0 %v580
        %v761 = vpop.f32.mrf.mxu0
        %v762 = vadd.f32 0.0, %v761
        %v763 = vpop.f32.mrf.mxu0
        %v764 = vpop.f32.mrf.mxu0
        %v765 = vadd.f32 0.0, %v764
        %v766 = vpop.f32.mrf.mxu0
        %767 = vmatprep.mubr.bf16.mxu0 0
        %768 = vmatmul.mubr.bf16.gmra.mxu0 %v581
        %v769 = vpop.f32.mrf.mxu0
        %v770 = vadd.f32 0.0, %v769
        %v771 = vpop.f32.mrf.mxu0
        %v772 = vpop.f32.mrf.mxu0
        %v773 = vadd.f32 0.0, %v772
        %v774 = vpop.f32.mrf.mxu0
        %775 = vmatprep.mubr.bf16.mxu0 0
        %776 = vmatmul.mubr.bf16.gmra.mxu0 %v582
        %v777 = vpop.f32.mrf.mxu0
        %v778 = vadd.f32 0.0, %v777
        %v779 = vpop.f32.mrf.mxu0
        %v780 = vpop.f32.mrf.mxu0
        %v781 = vadd.f32 0.0, %v780
        %v782 = vpop.f32.mrf.mxu0
        %783 = vmatprep.mubr.bf16.mxu0 0
        %784 = vmatmul.mubr.bf16.gmra.mxu0 %v583
        %v785 = vpop.f32.mrf.mxu0
        %v786 = vadd.f32 0.0, %v785
        %v787 = vpop.f32.mrf.mxu0
        %v788 = vpop.f32.mrf.mxu0
        %v789 = vadd.f32 0.0, %v788
        %v790 = vpop.f32.mrf.mxu0
        %791 = vmatprep.mubr.bf16.mxu0 0
        %792 = vmatmul.mubr.bf16.gmra.mxu0 %v584
        %v793 = vpop.f32.mrf.mxu0
        %v794 = vadd.f32 0.0, %v793
        %v795 = vpop.f32.mrf.mxu0
        %v796 = vpop.f32.mrf.mxu0
        %v797 = vadd.f32 0.0, %v796
        %v798 = vpop.f32.mrf.mxu0
        %799 = vmatprep.mubr.bf16.mxu0 0
        %800 = vmatmul.mubr.bf16.gmra.mxu0 %v585
        %v801 = vpop.f32.mrf.mxu0
        %v802 = vadd.f32 0.0, %v801
        %v803 = vpop.f32.mrf.mxu0
        %v804 = vpop.f32.mrf.mxu0
        %v805 = vadd.f32 0.0, %v804
        %v806 = vpop.f32.mrf.mxu0
        %807 = vmatprep.mubr.bf16.mxu0 0
        %808 = vmatmul.mubr.bf16.gmra.mxu0 %v586
        %v809 = vpop.f32.mrf.mxu0
        %v810 = vadd.f32 0.0, %v809
        %v811 = vpop.f32.mrf.mxu0
        %v812 = vpop.f32.mrf.mxu0
        %v813 = vadd.f32 0.0, %v812
        %v814 = vpop.f32.mrf.mxu0
        %815 = vmatprep.mubr.bf16.mxu0 0
        %816 = vmatmul.mubr.bf16.gmra.mxu0 %v587
        %v817 = vpop.f32.mrf.mxu0
        %v818 = vadd.f32 0.0, %v817
        %v819 = vpop.f32.mrf.mxu0
        %v820 = vpop.f32.mrf.mxu0
        %v821 = vadd.f32 0.0, %v820
        %v822 = vpop.f32.mrf.mxu0
        %823 = vmatprep.mubr.bf16.mxu0 0
        %824 = vmatmul.mubr.bf16.gmra.mxu0 %v588
        %v825 = vpop.f32.mrf.mxu0
        %v826 = vadd.f32 0.0, %v825
        %v827 = vpop.f32.mrf.mxu0
        %v828 = vpop.f32.mrf.mxu0
        %v829 = vadd.f32 0.0, %v828
        %v830 = vpop.f32.mrf.mxu0
        %831 = vmatprep.mubr.bf16.mxu0 0
        %832 = vmatmul.mubr.bf16.gmra.mxu0 %v589
        %v833 = vpop.f32.mrf.mxu0
        %v834 = vadd.f32 0.0, %v833
        %v835 = vpop.f32.mrf.mxu0
        %v836 = vpop.f32.mrf.mxu0
        %v837 = vadd.f32 0.0, %v836
        %v838 = vpop.f32.mrf.mxu0
        %839 = vmatprep.mubr.bf16.mxu0 0
        %840 = vmatmul.mubr.bf16.gmra.mxu0 %v590
        %v841 = vpop.f32.mrf.mxu0
        %v842 = vadd.f32 0.0, %v841
        %v843 = vpop.f32.mrf.mxu0
        %v844 = vpop.f32.mrf.mxu0
        %v845 = vadd.f32 0.0, %v844
        %v846 = vpop.f32.mrf.mxu0
        %847 = vmatprep.mubr.bf16.mxu0 0
        %848 = vmatmul.mubr.bf16.gmra.mxu0 %v591
        %v849 = vpop.f32.mrf.mxu0
        %v850 = vadd.f32 0.0, %v849
        %v851 = vpop.f32.mrf.mxu0
        %v852 = vpop.f32.mrf.mxu0
        %v853 = vadd.f32 0.0, %v852
        %v854 = vpop.f32.mrf.mxu0
        %855 = vmatprep.mubr.bf16.mxu0 0
        %856 = vmatmul.mubr.bf16.gmra.mxu0 %v592
        %v857 = vpop.f32.mrf.mxu0
        %v858 = vadd.f32 0.0, %v857
        %v859 = vpop.f32.mrf.mxu0
        %v860 = vpop.f32.mrf.mxu0
        %v861 = vadd.f32 0.0, %v860
        %v862 = vpop.f32.mrf.mxu0
        %863 = vmatprep.mubr.bf16.mxu0 0
        %864 = vmatmul.mubr.bf16.gmra.mxu0 %v593
        %v865 = vpop.f32.mrf.mxu0
        %v866 = vadd.f32 0.0, %v865
        %v867 = vpop.f32.mrf.mxu0
        %v868 = vpop.f32.mrf.mxu0
        %v869 = vadd.f32 0.0, %v868
        %v870 = vpop.f32.mrf.mxu0
        %871 = vmatprep.mubr.bf16.mxu0 0
        %872 = vmatmul.mubr.bf16.gmra.mxu0 %v594
        %v873 = vpop.f32.mrf.mxu0
        %v874 = vadd.f32 0.0, %v873
        %v875 = vpop.f32.mrf.mxu0
        %v876 = vpop.f32.mrf.mxu0
        %v877 = vadd.f32 0.0, %v876
        %v878 = vpop.f32.mrf.mxu0
        %879 = vmatprep.mubr.bf16.mxu0 0
        %880 = vmatmul.mubr.bf16.gmra.mxu0 %v595
        %v881 = vpop.f32.mrf.mxu0
        %v882 = vadd.f32 0.0, %v881
        %v883 = vpop.f32.mrf.mxu0
        %v884 = vpop.f32.mrf.mxu0
        %v885 = vadd.f32 0.0, %v884
        %v886 = vpop.f32.mrf.mxu0
        %887 = vmatprep.mubr.bf16.mxu0 0
        %888 = vmatmul.mubr.bf16.gmra.mxu0 %v596
        %v889 = vpop.f32.mrf.mxu0
        %v890 = vadd.f32 0.0, %v889
        %v891 = vpop.f32.mrf.mxu0
        %v892 = vpop.f32.mrf.mxu0
        %v893 = vadd.f32 0.0, %v892
        %v894 = vpop.f32.mrf.mxu0
        %895 = vmatprep.mubr.bf16.mxu0 0
        %896 = vmatmul.mubr.bf16.gmra.mxu0 %v597
        %v897 = vpop.f32.mrf.mxu0
        %v898 = vadd.f32 0.0, %v897
        %v899 = vpop.f32.mrf.mxu0
        %v900 = vpop.f32.mrf.mxu0
        %v901 = vadd.f32 0.0, %v900
        %v902 = vpop.f32.mrf.mxu0
        %903 = vmatprep.mubr.bf16.mxu0 0
        %904 = vmatmul.mubr.bf16.gmra.mxu0 %v598
        %v905 = vpop.f32.mrf.mxu0
        %v906 = vadd.f32 0.0, %v905
        %v907 = vpop.f32.mrf.mxu0
        %v908 = vpop.f32.mrf.mxu0
        %v909 = vadd.f32 0.0, %v908
        %v910 = vpop.f32.mrf.mxu0
        %911 = vmatprep.mubr.bf16.mxu0 0
        %912 = vmatmul.mubr.bf16.gmra.mxu0 %v599
        %v913 = vpop.f32.mrf.mxu0
        %v914 = vadd.f32 0.0, %v913
        %v915 = vpop.f32.mrf.mxu0
        %v916 = vpop.f32.mrf.mxu0
        %v917 = vadd.f32 0.0, %v916
        %v918 = vpop.f32.mrf.mxu0
        %919 = vmatprep.mubr.bf16.mxu0 0
        %920 = vmatmul.mubr.bf16.gmra.mxu0 %v600
        %v921 = vpop.f32.mrf.mxu0
        %v922 = vadd.f32 0.0, %v921
        %v923 = vpop.f32.mrf.mxu0
        %v924 = vpop.f32.mrf.mxu0
        %v925 = vadd.f32 0.0, %v924
        %v926 = vpop.f32.mrf.mxu0
        %927 = vmatprep.mubr.bf16.mxu0 0
        %928 = vmatmul.mubr.bf16.gmra.mxu0 %v601
        %v929 = vpop.f32.mrf.mxu0
        %v930 = vadd.f32 0.0, %v929
        %v931 = vpop.f32.mrf.mxu0
        %v932 = vpop.f32.mrf.mxu0
        %v933 = vadd.f32 0.0, %v932
        %v934 = vpop.f32.mrf.mxu0
        %935 = vmatprep.mubr.bf16.mxu0 0
        %936 = vmatmul.mubr.bf16.gmra.mxu0 %v602
        %v937 = vpop.f32.mrf.mxu0
        %v938 = vadd.f32 0.0, %v937
        %v939 = vpop.f32.mrf.mxu0
        %v940 = vpop.f32.mrf.mxu0
        %v941 = vadd.f32 0.0, %v940
        %v942 = vpop.f32.mrf.mxu0
        %943 = vmatprep.mubr.bf16.mxu0 0
        %944 = vmatmul.mubr.bf16.gmra.mxu0 %v603
        %v945 = vpop.f32.mrf.mxu0
        %v946 = vadd.f32 0.0, %v945
        %v947 = vpop.f32.mrf.mxu0
        %v948 = vpop.f32.mrf.mxu0
        %v949 = vadd.f32 0.0, %v948
        %v950 = vpop.f32.mrf.mxu0
        %951 = vmatprep.mubr.bf16.mxu0 0
        %952 = vmatmul.mubr.bf16.gmra.mxu0 %v604
        %v953 = vpop.f32.mrf.mxu0
        %v954 = vadd.f32 0.0, %v953
        %v955 = vpop.f32.mrf.mxu0
        %v956 = vpop.f32.mrf.mxu0
        %v957 = vadd.f32 0.0, %v956
        %v958 = vpop.f32.mrf.mxu0
        %959 = vmatprep.mubr.bf16.mxu0 0
        %960 = vmatmul.mubr.bf16.gmra.mxu0 %v605
        %v961 = vpop.f32.mrf.mxu0
        %v962 = vadd.f32 0.0, %v961
        %v963 = vpop.f32.mrf.mxu0
        %v964 = vpop.f32.mrf.mxu0
        %v965 = vadd.f32 0.0, %v964
        %v966 = vpop.f32.mrf.mxu0
        %967 = vmatprep.mubr.bf16.mxu0 0
        %968 = vmatmul.mubr.bf16.gmra.mxu0 %v606
        %v969 = vpop.f32.mrf.mxu0
        %v970 = vadd.f32 0.0, %v969
        %v971 = vpop.f32.mrf.mxu0
        %v972 = vpop.f32.mrf.mxu0
        %v973 = vadd.f32 0.0, %v972
        %v974 = vpop.f32.mrf.mxu0
        %975 = vdwg.mxu0
        %v976 = vld [vmem:[%s4] sm:$0x1]
        %v977 = vld [vmem:[%s5] sm:$0x1]
        %vm978 = vcmask 261120
        %v979 = vsel %vm978, %v722, 0.0
        %v980 = vsel %vm978, %v725, 0.0
        %v981 = vadd.f32 %v979, %v980
        %v982 = vsel %vm978, %v730, 0.0
        %v983 = vadd.f32 %v981, %v982
        %v984 = vsel %vm978, %v733, 0.0
        %v985 = vadd.f32 %v983, %v984
        %v986 = vsel %vm978, %v738, 0.0
        %v987 = vadd.f32 %v985, %v986
        %v988 = vsel %vm978, %v741, 0.0
        %v989 = vadd.f32 %v987, %v988
        %v990 = vsel %vm978, %v746, 0.0
        %v991 = vadd.f32 %v989, %v990
        %v992 = vsel %vm978, %v749, 0.0
        %v993 = vadd.f32 %v991, %v992
        %v994 = vsel %vm978, %v754, 0.0
        %v995 = vadd.f32 %v993, %v994
        %v996 = vsel %vm978, %v757, 0.0
        %v997 = vadd.f32 %v995, %v996
        %v998 = vsel %vm978, %v762, 0.0
        %v999 = vadd.f32 %v997, %v998
        %v1000 = vsel %vm978, %v765, 0.0
        %v1001 = vadd.f32 %v999, %v1000
        %v1002 = vsel %vm978, %v770, 0.0
        %v1003 = vadd.f32 %v1001, %v1002
        %v1004 = vsel %vm978, %v773, 0.0
        %v1005 = vadd.f32 %v1003, %v1004
        %v1006 = vsel %vm978, %v778, 0.0
        %v1007 = vadd.f32 %v1005, %v1006
        %v1008 = vsel %vm978, %v781, 0.0
        %v1009 = vadd.f32 %v1007, %v1008
        %v1010 = vsel %vm978, %v786, 0.0
        %v1011 = vadd.f32 %v1009, %v1010
        %v1012 = vsel %vm978, %v789, 0.0
        %v1013 = vadd.f32 %v1011, %v1012
        %v1014 = vsel %vm978, %v794, 0.0
        %v1015 = vadd.f32 %v1013, %v1014
        %v1016 = vsel %vm978, %v797, 0.0
        %v1017 = vadd.f32 %v1015, %v1016
        %v1018 = vsel %vm978, %v802, 0.0
        %v1019 = vadd.f32 %v1017, %v1018
        %v1020 = vsel %vm978, %v805, 0.0
        %v1021 = vadd.f32 %v1019, %v1020
        %v1022 = vsel %vm978, %v810, 0.0
        %v1023 = vadd.f32 %v1021, %v1022
        %v1024 = vsel %vm978, %v813, 0.0
        %v1025 = vadd.f32 %v1023, %v1024
        %v1026 = vsel %vm978, %v818, 0.0
        %v1027 = vadd.f32 %v1025, %v1026
        %v1028 = vsel %vm978, %v821, 0.0
        %v1029 = vadd.f32 %v1027, %v1028
        %v1030 = vsel %vm978, %v826, 0.0
        %v1031 = vadd.f32 %v1029, %v1030
        %v1032 = vsel %vm978, %v829, 0.0
        %v1033 = vadd.f32 %v1031, %v1032
        %v1034 = vsel %vm978, %v834, 0.0
        %v1035 = vadd.f32 %v1033, %v1034
        %v1036 = vsel %vm978, %v837, 0.0
        %v1037 = vadd.f32 %v1035, %v1036
        %v1038 = vsel %vm978, %v842, 0.0
        %v1039 = vadd.f32 %v1037, %v1038
        %v1040 = vsel %vm978, %v845, 0.0
        %v1041 = vadd.f32 %v1039, %v1040
        %v1042 = vrot.slane %v1041, 4
        %v1043 = vadd.f32 %v1041, %v1042
        %v1044 = vrot.slane %v1043, 2
        %v1045 = vadd.f32 %v1043, %v1044
        %v1046 = vrot.slane %v1045, 1
        %v1047 = vadd.f32 %v1045, %v1046
        %v1048 = vsel %vm978, %v850, 0.0
        %v1049 = vsel %vm978, %v853, 0.0
        %v1050 = vadd.f32 %v1048, %v1049
        %v1051 = vsel %vm978, %v858, 0.0
        %v1052 = vadd.f32 %v1050, %v1051
        %v1053 = vsel %vm978, %v861, 0.0
        %v1054 = vadd.f32 %v1052, %v1053
        %v1055 = vsel %vm978, %v866, 0.0
        %v1056 = vadd.f32 %v1054, %v1055
        %v1057 = vsel %vm978, %v869, 0.0
        %v1058 = vadd.f32 %v1056, %v1057
        %v1059 = vsel %vm978, %v874, 0.0
        %v1060 = vadd.f32 %v1058, %v1059
        %v1061 = vsel %vm978, %v877, 0.0
        %v1062 = vadd.f32 %v1060, %v1061
        %v1063 = vsel %vm978, %v882, 0.0
        %v1064 = vadd.f32 %v1062, %v1063
        %v1065 = vsel %vm978, %v885, 0.0
        %v1066 = vadd.f32 %v1064, %v1065
        %v1067 = vsel %vm978, %v890, 0.0
        %v1068 = vadd.f32 %v1066, %v1067
        %v1069 = vsel %vm978, %v893, 0.0
        %v1070 = vadd.f32 %v1068, %v1069
        %v1071 = vsel %vm978, %v898, 0.0
        %v1072 = vadd.f32 %v1070, %v1071
        %v1073 = vsel %vm978, %v901, 0.0
        %v1074 = vadd.f32 %v1072, %v1073
        %v1075 = vsel %vm978, %v906, 0.0
        %v1076 = vadd.f32 %v1074, %v1075
        %v1077 = vsel %vm978, %v909, 0.0
        %v1078 = vadd.f32 %v1076, %v1077
        %v1079 = vsel %vm978, %v914, 0.0
        %v1080 = vadd.f32 %v1078, %v1079
        %v1081 = vsel %vm978, %v917, 0.0
        %v1082 = vadd.f32 %v1080, %v1081
        %v1083 = vsel %vm978, %v922, 0.0
        %v1084 = vadd.f32 %v1082, %v1083
        %v1085 = vsel %vm978, %v925, 0.0
        %v1086 = vadd.f32 %v1084, %v1085
        %v1087 = vsel %vm978, %v930, 0.0
        %v1088 = vadd.f32 %v1086, %v1087
        %v1089 = vsel %vm978, %v933, 0.0
        %v1090 = vadd.f32 %v1088, %v1089
        %v1091 = vsel %vm978, %v938, 0.0
        %v1092 = vadd.f32 %v1090, %v1091
        %v1093 = vsel %vm978, %v941, 0.0
        %v1094 = vadd.f32 %v1092, %v1093
        %v1095 = vsel %vm978, %v946, 0.0
        %v1096 = vadd.f32 %v1094, %v1095
        %v1097 = vsel %vm978, %v949, 0.0
        %v1098 = vadd.f32 %v1096, %v1097
        %v1099 = vsel %vm978, %v954, 0.0
        %v1100 = vadd.f32 %v1098, %v1099
        %v1101 = vsel %vm978, %v957, 0.0
        %v1102 = vadd.f32 %v1100, %v1101
        %v1103 = vsel %vm978, %v962, 0.0
        %v1104 = vadd.f32 %v1102, %v1103
        %v1105 = vsel %vm978, %v965, 0.0
        %v1106 = vadd.f32 %v1104, %v1105
        %v1107 = vsel %vm978, %v970, 0.0
        %v1108 = vadd.f32 %v1106, %v1107
        %v1109 = vsel %vm978, %v973, 0.0
        %v1110 = vadd.f32 %v1108, %v1109
        %v1111 = vrot.slane %v1110, 4
        %v1112 = vadd.f32 %v1110, %v1111
        %v1113 = vrot.slane %v1112, 2
        %v1114 = vadd.f32 %v1112, %v1113
        %v1115 = vrot.slane %v1114, 1
        %v1116 = vadd.f32 %v1114, %v1115
        %v1117 = vmul.f32 %v1047, 0.00390625
        %v1118 = vmul.f32 %v1116, 0.00390625
        %v1119 = vsub.f32 %v722, %v1117
        %v1120 = vsub.f32 %v725, %v1117
        %v1121 = vsub.f32 %v730, %v1117
        %v1122 = vsub.f32 %v733, %v1117
        %v1123 = vsub.f32 %v738, %v1117
        %v1124 = vsub.f32 %v741, %v1117
        %v1125 = vsub.f32 %v746, %v1117
        %v1126 = vsub.f32 %v749, %v1117
        %v1127 = vsub.f32 %v754, %v1117
        %v1128 = vsub.f32 %v757, %v1117
        %v1129 = vsub.f32 %v762, %v1117
        %v1130 = vsub.f32 %v765, %v1117
        %v1131 = vsub.f32 %v770, %v1117
        %v1132 = vsub.f32 %v773, %v1117
        %v1133 = vsub.f32 %v778, %v1117
        %v1134 = vsub.f32 %v781, %v1117
        %v1135 = vsub.f32 %v786, %v1117
        %v1136 = vsub.f32 %v789, %v1117
        %v1137 = vsub.f32 %v794, %v1117
        %v1138 = vsub.f32 %v797, %v1117
        %v1139 = vsub.f32 %v802, %v1117
        %v1140 = vsub.f32 %v805, %v1117
        %v1141 = vsub.f32 %v810, %v1117
        %v1142 = vsub.f32 %v813, %v1117
        %v1143 = vsub.f32 %v818, %v1117
        %v1144 = vsub.f32 %v821, %v1117
        %v1145 = vsub.f32 %v826, %v1117
        %v1146 = vsub.f32 %v829, %v1117
        %v1147 = vsub.f32 %v834, %v1117
        %v1148 = vsub.f32 %v837, %v1117
        %v1149 = vsub.f32 %v842, %v1117
        %v1150 = vsub.f32 %v845, %v1117
        %v1151 = vsub.f32 %v850, %v1118
        %v1152 = vsub.f32 %v853, %v1118
        %v1153 = vsub.f32 %v858, %v1118
        %v1154 = vsub.f32 %v861, %v1118
        %v1155 = vsub.f32 %v866, %v1118
        %v1156 = vsub.f32 %v869, %v1118
        %v1157 = vsub.f32 %v874, %v1118
        %v1158 = vsub.f32 %v877, %v1118
        %v1159 = vsub.f32 %v882, %v1118
        %v1160 = vsub.f32 %v885, %v1118
        %v1161 = vsub.f32 %v890, %v1118
        %v1162 = vsub.f32 %v893, %v1118
        %v1163 = vsub.f32 %v898, %v1118
        %v1164 = vsub.f32 %v901, %v1118
        %v1165 = vsub.f32 %v906, %v1118
        %v1166 = vsub.f32 %v909, %v1118
        %v1167 = vsub.f32 %v914, %v1118
        %v1168 = vsub.f32 %v917, %v1118
        %v1169 = vsub.f32 %v922, %v1118
        %v1170 = vsub.f32 %v925, %v1118
        %v1171 = vsub.f32 %v930, %v1118
        %v1172 = vsub.f32 %v933, %v1118
        %v1173 = vsub.f32 %v938, %v1118
        %v1174 = vsub.f32 %v941, %v1118
        %v1175 = vsub.f32 %v946, %v1118
        %v1176 = vsub.f32 %v949, %v1118
        %v1177 = vsub.f32 %v954, %v1118
        %v1178 = vsub.f32 %v957, %v1118
        %v1179 = vsub.f32 %v962, %v1118
        %v1180 = vsub.f32 %v965, %v1118
        %v1181 = vsub.f32 %v970, %v1118
        %v1182 = vsub.f32 %v973, %v1118
        %v1183 = vmul.f32 %v1119, %v1119
        %v1184 = vmul.f32 %v1120, %v1120
        %v1185 = vmul.f32 %v1121, %v1121
        %v1186 = vmul.f32 %v1122, %v1122
        %v1187 = vmul.f32 %v1123, %v1123
        %v1188 = vmul.f32 %v1124, %v1124
        %v1189 = vmul.f32 %v1125, %v1125
        %v1190 = vmul.f32 %v1126, %v1126
        %v1191 = vmul.f32 %v1127, %v1127
        %v1192 = vmul.f32 %v1128, %v1128
        %v1193 = vmul.f32 %v1129, %v1129
        %v1194 = vmul.f32 %v1130, %v1130
        %v1195 = vmul.f32 %v1131, %v1131
        %v1196 = vmul.f32 %v1132, %v1132
        %v1197 = vmul.f32 %v1133, %v1133
        %v1198 = vmul.f32 %v1134, %v1134
        %v1199 = vmul.f32 %v1135, %v1135
        %v1200 = vmul.f32 %v1136, %v1136
        %v1201 = vmul.f32 %v1137, %v1137
        %v1202 = vmul.f32 %v1138, %v1138
        %v1203 = vmul.f32 %v1139, %v1139
        %v1204 = vmul.f32 %v1140, %v1140
        %v1205 = vmul.f32 %v1141, %v1141
        %v1206 = vmul.f32 %v1142, %v1142
        %v1207 = vmul.f32 %v1143, %v1143
        %v1208 = vmul.f32 %v1144, %v1144
        %v1209 = vmul.f32 %v1145, %v1145
        %v1210 = vmul.f32 %v1146, %v1146
        %v1211 = vmul.f32 %v1147, %v1147
        %v1212 = vmul.f32 %v1148, %v1148
        %v1213 = vmul.f32 %v1149, %v1149
        %v1214 = vmul.f32 %v1150, %v1150
        %v1215 = vmul.f32 %v1151, %v1151
        %v1216 = vmul.f32 %v1152, %v1152
        %v1217 = vmul.f32 %v1153, %v1153
        %v1218 = vmul.f32 %v1154, %v1154
        %v1219 = vmul.f32 %v1155, %v1155
        %v1220 = vmul.f32 %v1156, %v1156
        %v1221 = vmul.f32 %v1157, %v1157
        %v1222 = vmul.f32 %v1158, %v1158
        %v1223 = vmul.f32 %v1159, %v1159
        %v1224 = vmul.f32 %v1160, %v1160
        %v1225 = vmul.f32 %v1161, %v1161
        %v1226 = vmul.f32 %v1162, %v1162
        %v1227 = vmul.f32 %v1163, %v1163
        %v1228 = vmul.f32 %v1164, %v1164
        %v1229 = vmul.f32 %v1165, %v1165
        %v1230 = vmul.f32 %v1166, %v1166
        %v1231 = vmul.f32 %v1167, %v1167
        %v1232 = vmul.f32 %v1168, %v1168
        %v1233 = vmul.f32 %v1169, %v1169
        %v1234 = vmul.f32 %v1170, %v1170
        %v1235 = vmul.f32 %v1171, %v1171
        %v1236 = vmul.f32 %v1172, %v1172
        %v1237 = vmul.f32 %v1173, %v1173
        %v1238 = vmul.f32 %v1174, %v1174
        %v1239 = vmul.f32 %v1175, %v1175
        %v1240 = vmul.f32 %v1176, %v1176
        %v1241 = vmul.f32 %v1177, %v1177
        %v1242 = vmul.f32 %v1178, %v1178
        %v1243 = vmul.f32 %v1179, %v1179
        %v1244 = vmul.f32 %v1180, %v1180
        %v1245 = vmul.f32 %v1181, %v1181
        %v1246 = vmul.f32 %v1182, %v1182
        %v1247 = vsel %vm978, %v1183, 0.0
        %v1248 = vsel %vm978, %v1184, 0.0
        %v1249 = vadd.f32 %v1247, %v1248
        %v1250 = vsel %vm978, %v1185, 0.0
        %v1251 = vadd.f32 %v1249, %v1250
        %v1252 = vsel %vm978, %v1186, 0.0
        %v1253 = vadd.f32 %v1251, %v1252
        %v1254 = vsel %vm978, %v1187, 0.0
        %v1255 = vadd.f32 %v1253, %v1254
        %v1256 = vsel %vm978, %v1188, 0.0
        %v1257 = vadd.f32 %v1255, %v1256
        %v1258 = vsel %vm978, %v1189, 0.0
        %v1259 = vadd.f32 %v1257, %v1258
        %v1260 = vsel %vm978, %v1190, 0.0
        %v1261 = vadd.f32 %v1259, %v1260
        %v1262 = vsel %vm978, %v1191, 0.0
        %v1263 = vadd.f32 %v1261, %v1262
        %v1264 = vsel %vm978, %v1192, 0.0
        %v1265 = vadd.f32 %v1263, %v1264
        %v1266 = vsel %vm978, %v1193, 0.0
        %v1267 = vadd.f32 %v1265, %v1266
        %v1268 = vsel %vm978, %v1194, 0.0
        %v1269 = vadd.f32 %v1267, %v1268
        %v1270 = vsel %vm978, %v1195, 0.0
        %v1271 = vadd.f32 %v1269, %v1270
        %v1272 = vsel %vm978, %v1196, 0.0
        %v1273 = vadd.f32 %v1271, %v1272
        %v1274 = vsel %vm978, %v1197, 0.0
        %v1275 = vadd.f32 %v1273, %v1274
        %v1276 = vsel %vm978, %v1198, 0.0
        %v1277 = vadd.f32 %v1275, %v1276
        %v1278 = vsel %vm978, %v1199, 0.0
        %v1279 = vadd.f32 %v1277, %v1278
        %v1280 = vsel %vm978, %v1200, 0.0
        %v1281 = vadd.f32 %v1279, %v1280
        %v1282 = vsel %vm978, %v1201, 0.0
        %v1283 = vadd.f32 %v1281, %v1282
        %v1284 = vsel %vm978, %v1202, 0.0
        %v1285 = vadd.f32 %v1283, %v1284
        %v1286 = vsel %vm978, %v1203, 0.0
        %v1287 = vadd.f32 %v1285, %v1286
        %v1288 = vsel %vm978, %v1204, 0.0
        %v1289 = vadd.f32 %v1287, %v1288
        %v1290 = vsel %vm978, %v1205, 0.0
        %v1291 = vadd.f32 %v1289, %v1290
        %v1292 = vsel %vm978, %v1206, 0.0
        %v1293 = vadd.f32 %v1291, %v1292
        %v1294 = vsel %vm978, %v1207, 0.0
        %v1295 = vadd.f32 %v1293, %v1294
        %v1296 = vsel %vm978, %v1208, 0.0
        %v1297 = vadd.f32 %v1295, %v1296
        %v1298 = vsel %vm978, %v1209, 0.0
        %v1299 = vadd.f32 %v1297, %v1298
        %v1300 = vsel %vm978, %v1210, 0.0
        %v1301 = vadd.f32 %v1299, %v1300
        %v1302 = vsel %vm978, %v1211, 0.0
        %v1303 = vadd.f32 %v1301, %v1302
        %v1304 = vsel %vm978, %v1212, 0.0
        %v1305 = vadd.f32 %v1303, %v1304
        %v1306 = vsel %vm978, %v1213, 0.0
        %v1307 = vadd.f32 %v1305, %v1306
        %v1308 = vsel %vm978, %v1214, 0.0
        %v1309 = vadd.f32 %v1307, %v1308
        %v1310 = vrot.slane %v1309, 4
        %v1311 = vadd.f32 %v1309, %v1310
        %v1312 = vrot.slane %v1311, 2
        %v1313 = vadd.f32 %v1311, %v1312
        %v1314 = vrot.slane %v1313, 1
        %v1315 = vadd.f32 %v1313, %v1314
        %v1316 = vsel %vm978, %v1215, 0.0
        %v1317 = vsel %vm978, %v1216, 0.0
        %v1318 = vadd.f32 %v1316, %v1317
        %v1319 = vsel %vm978, %v1217, 0.0
        %v1320 = vadd.f32 %v1318, %v1319
        %v1321 = vsel %vm978, %v1218, 0.0
        %v1322 = vadd.f32 %v1320, %v1321
        %v1323 = vsel %vm978, %v1219, 0.0
        %v1324 = vadd.f32 %v1322, %v1323
        %v1325 = vsel %vm978, %v1220, 0.0
        %v1326 = vadd.f32 %v1324, %v1325
        %v1327 = vsel %vm978, %v1221, 0.0
        %v1328 = vadd.f32 %v1326, %v1327
        %v1329 = vsel %vm978, %v1222, 0.0
        %v1330 = vadd.f32 %v1328, %v1329
        %v1331 = vsel %vm978, %v1223, 0.0
        %v1332 = vadd.f32 %v1330, %v1331
        %v1333 = vsel %vm978, %v1224, 0.0
        %v1334 = vadd.f32 %v1332, %v1333
        %v1335 = vsel %vm978, %v1225, 0.0
        %v1336 = vadd.f32 %v1334, %v1335
        %v1337 = vsel %vm978, %v1226, 0.0
        %v1338 = vadd.f32 %v1336, %v1337
        %v1339 = vsel %vm978, %v1227, 0.0
        %v1340 = vadd.f32 %v1338, %v1339
        %v1341 = vsel %vm978, %v1228, 0.0
        %v1342 = vadd.f32 %v1340, %v1341
        %v1343 = vsel %vm978, %v1229, 0.0
        %v1344 = vadd.f32 %v1342, %v1343
        %v1345 = vsel %vm978, %v1230, 0.0
        %v1346 = vadd.f32 %v1344, %v1345
        %v1347 = vsel %vm978, %v1231, 0.0
        %v1348 = vadd.f32 %v1346, %v1347
        %v1349 = vsel %vm978, %v1232, 0.0
        %v1350 = vadd.f32 %v1348, %v1349
        %v1351 = vsel %vm978, %v1233, 0.0
        %v1352 = vadd.f32 %v1350, %v1351
        %v1353 = vsel %vm978, %v1234, 0.0
        %v1354 = vadd.f32 %v1352, %v1353
        %v1355 = vsel %vm978, %v1235, 0.0
        %v1356 = vadd.f32 %v1354, %v1355
        %v1357 = vsel %vm978, %v1236, 0.0
        %v1358 = vadd.f32 %v1356, %v1357
        %v1359 = vsel %vm978, %v1237, 0.0
        %v1360 = vadd.f32 %v1358, %v1359
        %v1361 = vsel %vm978, %v1238, 0.0
        %v1362 = vadd.f32 %v1360, %v1361
        %v1363 = vsel %vm978, %v1239, 0.0
        %v1364 = vadd.f32 %v1362, %v1363
        %v1365 = vsel %vm978, %v1240, 0.0
        %v1366 = vadd.f32 %v1364, %v1365
        %v1367 = vsel %vm978, %v1241, 0.0
        %v1368 = vadd.f32 %v1366, %v1367
        %v1369 = vsel %vm978, %v1242, 0.0
        %v1370 = vadd.f32 %v1368, %v1369
        %v1371 = vsel %vm978, %v1243, 0.0
        %v1372 = vadd.f32 %v1370, %v1371
        %v1373 = vsel %vm978, %v1244, 0.0
        %v1374 = vadd.f32 %v1372, %v1373
        %v1375 = vsel %vm978, %v1245, 0.0
        %v1376 = vadd.f32 %v1374, %v1375
        %v1377 = vsel %vm978, %v1246, 0.0
        %v1378 = vadd.f32 %v1376, %v1377
        %v1379 = vrot.slane %v1378, 4
        %v1380 = vadd.f32 %v1378, %v1379
        %v1381 = vrot.slane %v1380, 2
        %v1382 = vadd.f32 %v1380, %v1381
        %v1383 = vrot.slane %v1382, 1
        %v1384 = vadd.f32 %v1382, %v1383
        %v1385 = vmul.f32 %v1315, 0.00390625
        %v1386 = vmul.f32 %v1384, 0.00390625
        %v1387 = vadd.f32 %v1385, 1e-05
        %v1388 = vadd.f32 %v1386, 1e-05
        %v1389 = vrsqrt.pop %v1387
        %v1390 = vrsqrt.pop %v1388
        %v1391 = vmul.f32 %v976, %v1389
        %v1392 = vmul.f32 %v976, %v1390
        %v1395 = vlaneseq
        %v1396 = vshrl.u32 %v1395, 7
        %v1397 = vsub.s32 0, %v1396
        %v1398 = vrot.slane %v1391, %v1397
        %v1399 = vlaneseq
        %v1400 = vshrl.u32 %v1399, 7
        %v1401 = vsub.s32 0, %v1400
        %v1402 = vrot.slane %v1392, %v1401
        %v1405 = vmul.f32 %v1119, %v1398
        %v1406 = vmul.f32 %v1120, %v1398
        %v1407 = vmul.f32 %v1121, %v1398
        %v1408 = vmul.f32 %v1122, %v1398
        %v1409 = vmul.f32 %v1123, %v1398
        %v1410 = vmul.f32 %v1124, %v1398
        %v1411 = vmul.f32 %v1125, %v1398
        %v1412 = vmul.f32 %v1126, %v1398
        %v1413 = vmul.f32 %v1127, %v1398
        %v1414 = vmul.f32 %v1128, %v1398
        %v1415 = vmul.f32 %v1129, %v1398
        %v1416 = vmul.f32 %v1130, %v1398
        %v1417 = vmul.f32 %v1131, %v1398
        %v1418 = vmul.f32 %v1132, %v1398
        %v1419 = vmul.f32 %v1133, %v1398
        %v1420 = vmul.f32 %v1134, %v1398
        %v1421 = vmul.f32 %v1135, %v1398
        %v1422 = vmul.f32 %v1136, %v1398
        %v1423 = vmul.f32 %v1137, %v1398
        %v1424 = vmul.f32 %v1138, %v1398
        %v1425 = vmul.f32 %v1139, %v1398
        %v1426 = vmul.f32 %v1140, %v1398
        %v1427 = vmul.f32 %v1141, %v1398
        %v1428 = vmul.f32 %v1142, %v1398
        %v1429 = vmul.f32 %v1143, %v1398
        %v1430 = vmul.f32 %v1144, %v1398
        %v1431 = vmul.f32 %v1145, %v1398
        %v1432 = vmul.f32 %v1146, %v1398
        %v1433 = vmul.f32 %v1147, %v1398
        %v1434 = vmul.f32 %v1148, %v1398
        %v1435 = vmul.f32 %v1149, %v1398
        %v1436 = vmul.f32 %v1150, %v1398
        %v1437 = vmul.f32 %v1151, %v1402
        %v1438 = vmul.f32 %v1152, %v1402
        %v1439 = vmul.f32 %v1153, %v1402
        %v1440 = vmul.f32 %v1154, %v1402
        %v1441 = vmul.f32 %v1155, %v1402
        %v1442 = vmul.f32 %v1156, %v1402
        %v1443 = vmul.f32 %v1157, %v1402
        %v1444 = vmul.f32 %v1158, %v1402
        %v1445 = vmul.f32 %v1159, %v1402
        %v1446 = vmul.f32 %v1160, %v1402
        %v1447 = vmul.f32 %v1161, %v1402
        %v1448 = vmul.f32 %v1162, %v1402
        %v1449 = vmul.f32 %v1163, %v1402
        %v1450 = vmul.f32 %v1164, %v1402
        %v1451 = vmul.f32 %v1165, %v1402
        %v1452 = vmul.f32 %v1166, %v1402
        %v1453 = vmul.f32 %v1167, %v1402
        %v1454 = vmul.f32 %v1168, %v1402
        %v1455 = vmul.f32 %v1169, %v1402
        %v1456 = vmul.f32 %v1170, %v1402
        %v1457 = vmul.f32 %v1171, %v1402
        %v1458 = vmul.f32 %v1172, %v1402
        %v1459 = vmul.f32 %v1173, %v1402
        %v1460 = vmul.f32 %v1174, %v1402
        %v1461 = vmul.f32 %v1175, %v1402
        %v1462 = vmul.f32 %v1176, %v1402
        %v1463 = vmul.f32 %v1177, %v1402
        %v1464 = vmul.f32 %v1178, %v1402
        %v1465 = vmul.f32 %v1179, %v1402
        %v1466 = vmul.f32 %v1180, %v1402
        %v1467 = vmul.f32 %v1181, %v1402
        %v1468 = vmul.f32 %v1182, %v1402
        %v1470 = vlaneseq
        %v1471 = vshrl.u32 %v1470, 7
        %v1472 = vsub.s32 0, %v1471
        %v1473 = vrot.slane %v977, %v1472
        %v1475 = vadd.f32 %v1405, %v1473
        %v1476 = vadd.f32 %v1406, %v1473
        %v1477 = vadd.f32 %v1407, %v1473
        %v1478 = vadd.f32 %v1408, %v1473
        %v1479 = vadd.f32 %v1409, %v1473
        %v1480 = vadd.f32 %v1410, %v1473
        %v1481 = vadd.f32 %v1411, %v1473
        %v1482 = vadd.f32 %v1412, %v1473
        %v1483 = vadd.f32 %v1413, %v1473
        %v1484 = vadd.f32 %v1414, %v1473
        %v1485 = vadd.f32 %v1415, %v1473
        %v1486 = vadd.f32 %v1416, %v1473
        %v1487 = vadd.f32 %v1417, %v1473
        %v1488 = vadd.f32 %v1418, %v1473
        %v1489 = vadd.f32 %v1419, %v1473
        %v1490 = vadd.f32 %v1420, %v1473
        %v1491 = vadd.f32 %v1421, %v1473
        %v1492 = vadd.f32 %v1422, %v1473
        %v1493 = vadd.f32 %v1423, %v1473
        %v1494 = vadd.f32 %v1424, %v1473
        %v1495 = vadd.f32 %v1425, %v1473
        %v1496 = vadd.f32 %v1426, %v1473
        %v1497 = vadd.f32 %v1427, %v1473
        %v1498 = vadd.f32 %v1428, %v1473
        %v1499 = vadd.f32 %v1429, %v1473
        %v1500 = vadd.f32 %v1430, %v1473
        %v1501 = vadd.f32 %v1431, %v1473
        %v1502 = vadd.f32 %v1432, %v1473
        %v1503 = vadd.f32 %v1433, %v1473
        %v1504 = vadd.f32 %v1434, %v1473
        %v1505 = vadd.f32 %v1435, %v1473
        %v1506 = vadd.f32 %v1436, %v1473
        %v1507 = vadd.f32 %v1437, %v1473
        %v1508 = vadd.f32 %v1438, %v1473
        %v1509 = vadd.f32 %v1439, %v1473
        %v1510 = vadd.f32 %v1440, %v1473
        %v1511 = vadd.f32 %v1441, %v1473
        %v1512 = vadd.f32 %v1442, %v1473
        %v1513 = vadd.f32 %v1443, %v1473
        %v1514 = vadd.f32 %v1444, %v1473
        %v1515 = vadd.f32 %v1445, %v1473
        %v1516 = vadd.f32 %v1446, %v1473
        %v1517 = vadd.f32 %v1447, %v1473
        %v1518 = vadd.f32 %v1448, %v1473
        %v1519 = vadd.f32 %v1449, %v1473
        %v1520 = vadd.f32 %v1450, %v1473
        %v1521 = vadd.f32 %v1451, %v1473
        %v1522 = vadd.f32 %v1452, %v1473
        %v1523 = vadd.f32 %v1453, %v1473
        %v1524 = vadd.f32 %v1454, %v1473
        %v1525 = vadd.f32 %v1455, %v1473
        %v1526 = vadd.f32 %v1456, %v1473
        %v1527 = vadd.f32 %v1457, %v1473
        %v1528 = vadd.f32 %v1458, %v1473
        %v1529 = vadd.f32 %v1459, %v1473
        %v1530 = vadd.f32 %v1460, %v1473
        %v1531 = vadd.f32 %v1461, %v1473
        %v1532 = vadd.f32 %v1462, %v1473
        %v1533 = vadd.f32 %v1463, %v1473
        %v1534 = vadd.f32 %v1464, %v1473
        %v1535 = vadd.f32 %v1465, %v1473
        %v1536 = vadd.f32 %v1466, %v1473
        %v1537 = vadd.f32 %v1467, %v1473
        %v1538 = vadd.f32 %v1468, %v1473
        %v1539 = vmax.f32 %v1475, 0.0
        %v1540 = vmax.f32 %v1476, 0.0
        %v1541 = vmax.f32 %v1477, 0.0
        %v1542 = vmax.f32 %v1478, 0.0
        %v1543 = vmax.f32 %v1479, 0.0
        %v1544 = vmax.f32 %v1480, 0.0
        %v1545 = vmax.f32 %v1481, 0.0
        %v1546 = vmax.f32 %v1482, 0.0
        %v1547 = vmax.f32 %v1483, 0.0
        %v1548 = vmax.f32 %v1484, 0.0
        %v1549 = vmax.f32 %v1485, 0.0
        %v1550 = vmax.f32 %v1486, 0.0
        %v1551 = vmax.f32 %v1487, 0.0
        %v1552 = vmax.f32 %v1488, 0.0
        %v1553 = vmax.f32 %v1489, 0.0
        %v1554 = vmax.f32 %v1490, 0.0
        %v1555 = vmax.f32 %v1491, 0.0
        %v1556 = vmax.f32 %v1492, 0.0
        %v1557 = vmax.f32 %v1493, 0.0
        %v1558 = vmax.f32 %v1494, 0.0
        %v1559 = vmax.f32 %v1495, 0.0
        %v1560 = vmax.f32 %v1496, 0.0
        %v1561 = vmax.f32 %v1497, 0.0
        %v1562 = vmax.f32 %v1498, 0.0
        %v1563 = vmax.f32 %v1499, 0.0
        %v1564 = vmax.f32 %v1500, 0.0
        %v1565 = vmax.f32 %v1501, 0.0
        %v1566 = vmax.f32 %v1502, 0.0
        %v1567 = vmax.f32 %v1503, 0.0
        %v1568 = vmax.f32 %v1504, 0.0
        %v1569 = vmax.f32 %v1505, 0.0
        %v1570 = vmax.f32 %v1506, 0.0
        %v1571 = vmax.f32 %v1507, 0.0
        %v1572 = vmax.f32 %v1508, 0.0
        %v1573 = vmax.f32 %v1509, 0.0
        %v1574 = vmax.f32 %v1510, 0.0
        %v1575 = vmax.f32 %v1511, 0.0
        %v1576 = vmax.f32 %v1512, 0.0
        %v1577 = vmax.f32 %v1513, 0.0
        %v1578 = vmax.f32 %v1514, 0.0
        %v1579 = vmax.f32 %v1515, 0.0
        %v1580 = vmax.f32 %v1516, 0.0
        %v1581 = vmax.f32 %v1517, 0.0
        %v1582 = vmax.f32 %v1518, 0.0
        %v1583 = vmax.f32 %v1519, 0.0
        %v1584 = vmax.f32 %v1520, 0.0
        %v1585 = vmax.f32 %v1521, 0.0
        %v1586 = vmax.f32 %v1522, 0.0
        %v1587 = vmax.f32 %v1523, 0.0
        %v1588 = vmax.f32 %v1524, 0.0
        %v1589 = vmax.f32 %v1525, 0.0
        %v1590 = vmax.f32 %v1526, 0.0
        %v1591 = vmax.f32 %v1527, 0.0
        %v1592 = vmax.f32 %v1528, 0.0
        %v1593 = vmax.f32 %v1529, 0.0
        %v1594 = vmax.f32 %v1530, 0.0
        %v1595 = vmax.f32 %v1531, 0.0
        %v1596 = vmax.f32 %v1532, 0.0
        %v1597 = vmax.f32 %v1533, 0.0
        %v1598 = vmax.f32 %v1534, 0.0
        %v1599 = vmax.f32 %v1535, 0.0
        %v1600 = vmax.f32 %v1536, 0.0
        %v1601 = vmax.f32 %v1537, 0.0
        %v1602 = vmax.f32 %v1538, 0.0
        %v1603 = vpack.c.bf16 %v1540, %v1539
        %v1604 = vpack.c.bf16 %v1542, %v1541
        %v1605 = vpack.c.bf16 %v1544, %v1543
        %v1606 = vpack.c.bf16 %v1546, %v1545
        %v1607 = vpack.c.bf16 %v1548, %v1547
        %v1608 = vpack.c.bf16 %v1550, %v1549
        %v1609 = vpack.c.bf16 %v1552, %v1551
        %v1610 = vpack.c.bf16 %v1554, %v1553
        %v1611 = vpack.c.bf16 %v1556, %v1555
        %v1612 = vpack.c.bf16 %v1558, %v1557
        %v1613 = vpack.c.bf16 %v1560, %v1559
        %v1614 = vpack.c.bf16 %v1562, %v1561
        %v1615 = vpack.c.bf16 %v1564, %v1563
        %v1616 = vpack.c.bf16 %v1566, %v1565
        %v1617 = vpack.c.bf16 %v1568, %v1567
        %v1618 = vpack.c.bf16 %v1570, %v1569
        %v1619 = vpack.c.bf16 %v1572, %v1571
        %v1620 = vpack.c.bf16 %v1574, %v1573
        %v1621 = vpack.c.bf16 %v1576, %v1575
        %v1622 = vpack.c.bf16 %v1578, %v1577
        %v1623 = vpack.c.bf16 %v1580, %v1579
        %v1624 = vpack.c.bf16 %v1582, %v1581
        %v1625 = vpack.c.bf16 %v1584, %v1583
        %v1626 = vpack.c.bf16 %v1586, %v1585
        %v1627 = vpack.c.bf16 %v1588, %v1587
        %v1628 = vpack.c.bf16 %v1590, %v1589
        %v1629 = vpack.c.bf16 %v1592, %v1591
        %v1630 = vpack.c.bf16 %v1594, %v1593
        %v1631 = vpack.c.bf16 %v1596, %v1595
        %v1632 = vpack.c.bf16 %v1598, %v1597
        %v1633 = vpack.c.bf16 %v1600, %v1599
        %v1634 = vpack.c.bf16 %v1602, %v1601
        %v1635 = vlaneseq
        %v1636 = vshrl.u32 %v1635, 7
        %v1637 = vadd.s32 %v1636, 8
        %v1638 = vadd.s32 %v1636, 16
        %v1639 = vadd.s32 %v1636, 24
        %v1640 = vadd.s32 %v1636, 32
        %v1641 = vadd.s32 %v1636, 40
        %v1642 = vadd.s32 %v1636, 48
        %v1643 = vadd.s32 %v1636, 56
        %v1644 = vadd.s32 %v1636, 64
        %v1645 = vadd.s32 %v1636, 72
        %v1646 = vadd.s32 %v1636, 80
        %v1647 = vadd.s32 %v1636, 88
        %v1648 = vadd.s32 %v1636, 96
        %v1649 = vadd.s32 %v1636, 104
        %v1650 = vadd.s32 %v1636, 112
        %v1651 = vadd.s32 %v1636, 120
        %v1652 = vadd.s32 %v1636, 128
        %v1653 = vadd.s32 %v1636, 136
        %v1654 = vadd.s32 %v1636, 144
        %v1655 = vadd.s32 %v1636, 152
        %v1656 = vadd.s32 %v1636, 160
        %v1657 = vadd.s32 %v1636, 168
        %v1658 = vadd.s32 %v1636, 176
        %v1659 = vadd.s32 %v1636, 184
        %v1660 = vadd.s32 %v1636, 192
        %v1661 = vadd.s32 %v1636, 200
        %v1662 = vadd.s32 %v1636, 208
        %v1663 = vadd.s32 %v1636, 216
        %v1664 = vadd.s32 %v1636, 224
        %v1665 = vadd.s32 %v1636, 232
        %v1666 = vadd.s32 %v1636, 240
        %v1667 = vadd.s32 %v1636, 248
        %vm1668 = vcmp.lt.s32.totalorder %v1636, 0
        %v1669 = vsub.s32 0, %v1636
        %v1670 = vsel %vm1668, %v1669, %v1636
        %v1671 = vshrl.u32 %v1670, 4
        %v1672 = vand.u32 %v1670, 15
        %v1673 = vsub.s32 0, %v1672
        %v1674 = vsel %vm1668, %v1673, %v1672
        %vm1675 = vcmp.lt.s32.totalorder %v1637, 0
        %v1676 = vsub.s32 0, %v1637
        %v1677 = vsel %vm1675, %v1676, %v1637
        %v1678 = vshrl.u32 %v1677, 4
        %v1679 = vand.u32 %v1677, 15
        %v1680 = vsub.s32 0, %v1679
        %v1681 = vsel %vm1675, %v1680, %v1679
        %vm1682 = vcmp.lt.s32.totalorder %v1638, 0
        %v1683 = vsub.s32 0, %v1638
        %v1684 = vsel %vm1682, %v1683, %v1638
        %v1685 = vshrl.u32 %v1684, 4
        %v1686 = vand.u32 %v1684, 15
        %v1687 = vsub.s32 0, %v1686
        %v1688 = vsel %vm1682, %v1687, %v1686
        %vm1689 = vcmp.lt.s32.totalorder %v1639, 0
        %v1690 = vsub.s32 0, %v1639
        %v1691 = vsel %vm1689, %v1690, %v1639
        %v1692 = vshrl.u32 %v1691, 4
        %v1693 = vand.u32 %v1691, 15
        %v1694 = vsub.s32 0, %v1693
        %v1695 = vsel %vm1689, %v1694, %v1693
        %vm1696 = vcmp.lt.s32.totalorder %v1640, 0
        %v1697 = vsub.s32 0, %v1640
        %v1698 = vsel %vm1696, %v1697, %v1640
        %v1699 = vshrl.u32 %v1698, 4
        %v1700 = vand.u32 %v1698, 15
        %v1701 = vsub.s32 0, %v1700
        %v1702 = vsel %vm1696, %v1701, %v1700
        %vm1703 = vcmp.lt.s32.totalorder %v1641, 0
        %v1704 = vsub.s32 0, %v1641
        %v1705 = vsel %vm1703, %v1704, %v1641
        %v1706 = vshrl.u32 %v1705, 4
        %v1707 = vand.u32 %v1705, 15
        %v1708 = vsub.s32 0, %v1707
        %v1709 = vsel %vm1703, %v1708, %v1707
        %vm1710 = vcmp.lt.s32.totalorder %v1642, 0
        %v1711 = vsub.s32 0, %v1642
        %v1712 = vsel %vm1710, %v1711, %v1642
        %v1713 = vshrl.u32 %v1712, 4
        %v1714 = vand.u32 %v1712, 15
        %v1715 = vsub.s32 0, %v1714
        %v1716 = vsel %vm1710, %v1715, %v1714
        %vm1717 = vcmp.lt.s32.totalorder %v1643, 0
        %v1718 = vsub.s32 0, %v1643
        %v1719 = vsel %vm1717, %v1718, %v1643
        %v1720 = vshrl.u32 %v1719, 4
        %v1721 = vand.u32 %v1719, 15
        %v1722 = vsub.s32 0, %v1721
        %v1723 = vsel %vm1717, %v1722, %v1721
        %vm1724 = vcmp.lt.s32.totalorder %v1644, 0
        %v1725 = vsub.s32 0, %v1644
        %v1726 = vsel %vm1724, %v1725, %v1644
        %v1727 = vshrl.u32 %v1726, 4
        %v1728 = vand.u32 %v1726, 15
        %v1729 = vsub.s32 0, %v1728
        %v1730 = vsel %vm1724, %v1729, %v1728
        %vm1731 = vcmp.lt.s32.totalorder %v1645, 0
        %v1732 = vsub.s32 0, %v1645
        %v1733 = vsel %vm1731, %v1732, %v1645
        %v1734 = vshrl.u32 %v1733, 4
        %v1735 = vand.u32 %v1733, 15
        %v1736 = vsub.s32 0, %v1735
        %v1737 = vsel %vm1731, %v1736, %v1735
        %vm1738 = vcmp.lt.s32.totalorder %v1646, 0
        %v1739 = vsub.s32 0, %v1646
        %v1740 = vsel %vm1738, %v1739, %v1646
        %v1741 = vshrl.u32 %v1740, 4
        %v1742 = vand.u32 %v1740, 15
        %v1743 = vsub.s32 0, %v1742
        %v1744 = vsel %vm1738, %v1743, %v1742
        %vm1745 = vcmp.lt.s32.totalorder %v1647, 0
        %v1746 = vsub.s32 0, %v1647
        %v1747 = vsel %vm1745, %v1746, %v1647
        %v1748 = vshrl.u32 %v1747, 4
        %v1749 = vand.u32 %v1747, 15
        %v1750 = vsub.s32 0, %v1749
        %v1751 = vsel %vm1745, %v1750, %v1749
        %vm1752 = vcmp.lt.s32.totalorder %v1648, 0
        %v1753 = vsub.s32 0, %v1648
        %v1754 = vsel %vm1752, %v1753, %v1648
        %v1755 = vshrl.u32 %v1754, 4
        %v1756 = vand.u32 %v1754, 15
        %v1757 = vsub.s32 0, %v1756
        %v1758 = vsel %vm1752, %v1757, %v1756
        %vm1759 = vcmp.lt.s32.totalorder %v1649, 0
        %v1760 = vsub.s32 0, %v1649
        %v1761 = vsel %vm1759, %v1760, %v1649
        %v1762 = vshrl.u32 %v1761, 4
        %v1763 = vand.u32 %v1761, 15
        %v1764 = vsub.s32 0, %v1763
        %v1765 = vsel %vm1759, %v1764, %v1763
        %vm1766 = vcmp.lt.s32.totalorder %v1650, 0
        %v1767 = vsub.s32 0, %v1650
        %v1768 = vsel %vm1766, %v1767, %v1650
        %v1769 = vshrl.u32 %v1768, 4
        %v1770 = vand.u32 %v1768, 15
        %v1771 = vsub.s32 0, %v1770
        %v1772 = vsel %vm1766, %v1771, %v1770
        %vm1773 = vcmp.lt.s32.totalorder %v1651, 0
        %v1774 = vsub.s32 0, %v1651
        %v1775 = vsel %vm1773, %v1774, %v1651
        %v1776 = vshrl.u32 %v1775, 4
        %v1777 = vand.u32 %v1775, 15
        %v1778 = vsub.s32 0, %v1777
        %v1779 = vsel %vm1773, %v1778, %v1777
        %vm1780 = vcmp.lt.s32.totalorder %v1652, 0
        %v1781 = vsub.s32 0, %v1652
        %v1782 = vsel %vm1780, %v1781, %v1652
        %v1783 = vshrl.u32 %v1782, 4
        %v1784 = vand.u32 %v1782, 15
        %v1785 = vsub.s32 0, %v1784
        %v1786 = vsel %vm1780, %v1785, %v1784
        %vm1787 = vcmp.lt.s32.totalorder %v1653, 0
        %v1788 = vsub.s32 0, %v1653
        %v1789 = vsel %vm1787, %v1788, %v1653
        %v1790 = vshrl.u32 %v1789, 4
        %v1791 = vand.u32 %v1789, 15
        %v1792 = vsub.s32 0, %v1791
        %v1793 = vsel %vm1787, %v1792, %v1791
        %vm1794 = vcmp.lt.s32.totalorder %v1654, 0
        %v1795 = vsub.s32 0, %v1654
        %v1796 = vsel %vm1794, %v1795, %v1654
        %v1797 = vshrl.u32 %v1796, 4
        %v1798 = vand.u32 %v1796, 15
        %v1799 = vsub.s32 0, %v1798
        %v1800 = vsel %vm1794, %v1799, %v1798
        %vm1801 = vcmp.lt.s32.totalorder %v1655, 0
        %v1802 = vsub.s32 0, %v1655
        %v1803 = vsel %vm1801, %v1802, %v1655
        %v1804 = vshrl.u32 %v1803, 4
        %v1805 = vand.u32 %v1803, 15
        %v1806 = vsub.s32 0, %v1805
        %v1807 = vsel %vm1801, %v1806, %v1805
        %vm1808 = vcmp.lt.s32.totalorder %v1656, 0
        %v1809 = vsub.s32 0, %v1656
        %v1810 = vsel %vm1808, %v1809, %v1656
        %v1811 = vshrl.u32 %v1810, 4
        %v1812 = vand.u32 %v1810, 15
        %v1813 = vsub.s32 0, %v1812
        %v1814 = vsel %vm1808, %v1813, %v1812
        %vm1815 = vcmp.lt.s32.totalorder %v1657, 0
        %v1816 = vsub.s32 0, %v1657
        %v1817 = vsel %vm1815, %v1816, %v1657
        %v1818 = vshrl.u32 %v1817, 4
        %v1819 = vand.u32 %v1817, 15
        %v1820 = vsub.s32 0, %v1819
        %v1821 = vsel %vm1815, %v1820, %v1819
        %vm1822 = vcmp.lt.s32.totalorder %v1658, 0
        %v1823 = vsub.s32 0, %v1658
        %v1824 = vsel %vm1822, %v1823, %v1658
        %v1825 = vshrl.u32 %v1824, 4
        %v1826 = vand.u32 %v1824, 15
        %v1827 = vsub.s32 0, %v1826
        %v1828 = vsel %vm1822, %v1827, %v1826
        %vm1829 = vcmp.lt.s32.totalorder %v1659, 0
        %v1830 = vsub.s32 0, %v1659
        %v1831 = vsel %vm1829, %v1830, %v1659
        %v1832 = vshrl.u32 %v1831, 4
        %v1833 = vand.u32 %v1831, 15
        %v1834 = vsub.s32 0, %v1833
        %v1835 = vsel %vm1829, %v1834, %v1833
        %vm1836 = vcmp.lt.s32.totalorder %v1660, 0
        %v1837 = vsub.s32 0, %v1660
        %v1838 = vsel %vm1836, %v1837, %v1660
        %v1839 = vshrl.u32 %v1838, 4
        %v1840 = vand.u32 %v1838, 15
        %v1841 = vsub.s32 0, %v1840
        %v1842 = vsel %vm1836, %v1841, %v1840
        %vm1843 = vcmp.lt.s32.totalorder %v1661, 0
        %v1844 = vsub.s32 0, %v1661
        %v1845 = vsel %vm1843, %v1844, %v1661
        %v1846 = vshrl.u32 %v1845, 4
        %v1847 = vand.u32 %v1845, 15
        %v1848 = vsub.s32 0, %v1847
        %v1849 = vsel %vm1843, %v1848, %v1847
        %vm1850 = vcmp.lt.s32.totalorder %v1662, 0
        %v1851 = vsub.s32 0, %v1662
        %v1852 = vsel %vm1850, %v1851, %v1662
        %v1853 = vshrl.u32 %v1852, 4
        %v1854 = vand.u32 %v1852, 15
        %v1855 = vsub.s32 0, %v1854
        %v1856 = vsel %vm1850, %v1855, %v1854
        %vm1857 = vcmp.lt.s32.totalorder %v1663, 0
        %v1858 = vsub.s32 0, %v1663
        %v1859 = vsel %vm1857, %v1858, %v1663
        %v1860 = vshrl.u32 %v1859, 4
        %v1861 = vand.u32 %v1859, 15
        %v1862 = vsub.s32 0, %v1861
        %v1863 = vsel %vm1857, %v1862, %v1861
        %vm1864 = vcmp.lt.s32.totalorder %v1664, 0
        %v1865 = vsub.s32 0, %v1664
        %v1866 = vsel %vm1864, %v1865, %v1664
        %v1867 = vshrl.u32 %v1866, 4
        %v1868 = vand.u32 %v1866, 15
        %v1869 = vsub.s32 0, %v1868
        %v1870 = vsel %vm1864, %v1869, %v1868
        %vm1871 = vcmp.lt.s32.totalorder %v1665, 0
        %v1872 = vsub.s32 0, %v1665
        %v1873 = vsel %vm1871, %v1872, %v1665
        %v1874 = vshrl.u32 %v1873, 4
        %v1875 = vand.u32 %v1873, 15
        %v1876 = vsub.s32 0, %v1875
        %v1877 = vsel %vm1871, %v1876, %v1875
        %vm1878 = vcmp.lt.s32.totalorder %v1666, 0
        %v1879 = vsub.s32 0, %v1666
        %v1880 = vsel %vm1878, %v1879, %v1666
        %v1881 = vshrl.u32 %v1880, 4
        %v1882 = vand.u32 %v1880, 15
        %v1883 = vsub.s32 0, %v1882
        %v1884 = vsel %vm1878, %v1883, %v1882
        %vm1885 = vcmp.lt.s32.totalorder %v1667, 0
        %v1886 = vsub.s32 0, %v1667
        %v1887 = vsel %vm1885, %v1886, %v1667
        %v1888 = vshrl.u32 %v1887, 4
        %v1889 = vand.u32 %v1887, 15
        %v1890 = vsub.s32 0, %v1889
        %v1891 = vsel %vm1885, %v1890, %v1889
        %vm1892 = vcmp.ne.s32.totalorder %v1674, 0
        %vm1893 = vcmp.ne.s32.totalorder %v1681, 0
        %vm1894 = vcmp.ne.s32.totalorder %v1688, 0
        %vm1895 = vcmp.ne.s32.totalorder %v1695, 0
        %vm1896 = vcmp.ne.s32.totalorder %v1702, 0
        %vm1897 = vcmp.ne.s32.totalorder %v1709, 0
        %vm1898 = vcmp.ne.s32.totalorder %v1716, 0
        %vm1899 = vcmp.ne.s32.totalorder %v1723, 0
        %vm1900 = vcmp.ne.s32.totalorder %v1730, 0
        %vm1901 = vcmp.ne.s32.totalorder %v1737, 0
        %vm1902 = vcmp.ne.s32.totalorder %v1744, 0
        %vm1903 = vcmp.ne.s32.totalorder %v1751, 0
        %vm1904 = vcmp.ne.s32.totalorder %v1758, 0
        %vm1905 = vcmp.ne.s32.totalorder %v1765, 0
        %vm1906 = vcmp.ne.s32.totalorder %v1772, 0
        %vm1907 = vcmp.ne.s32.totalorder %v1779, 0
        %vm1908 = vcmp.ne.s32.totalorder %v1786, 0
        %vm1909 = vcmp.ne.s32.totalorder %v1793, 0
        %vm1910 = vcmp.ne.s32.totalorder %v1800, 0
        %vm1911 = vcmp.ne.s32.totalorder %v1807, 0
        %vm1912 = vcmp.ne.s32.totalorder %v1814, 0
        %vm1913 = vcmp.ne.s32.totalorder %v1821, 0
        %vm1914 = vcmp.ne.s32.totalorder %v1828, 0
        %vm1915 = vcmp.ne.s32.totalorder %v1835, 0
        %vm1916 = vcmp.ne.s32.totalorder %v1842, 0
        %vm1917 = vcmp.ne.s32.totalorder %v1849, 0
        %vm1918 = vcmp.ne.s32.totalorder %v1856, 0
        %vm1919 = vcmp.ne.s32.totalorder %v1863, 0
        %vm1920 = vcmp.ne.s32.totalorder %v1870, 0
        %vm1921 = vcmp.ne.s32.totalorder %v1877, 0
        %vm1922 = vcmp.ne.s32.totalorder %v1884, 0
        %vm1923 = vcmp.ne.s32.totalorder %v1891, 0
        %vm1924 = vcmp.lt.s32.totalorder %v1674, 0
        %vm1925 = vcmp.lt.s32.totalorder %v1681, 0
        %vm1926 = vcmp.lt.s32.totalorder %v1688, 0
        %vm1927 = vcmp.lt.s32.totalorder %v1695, 0
        %vm1928 = vcmp.lt.s32.totalorder %v1702, 0
        %vm1929 = vcmp.lt.s32.totalorder %v1709, 0
        %vm1930 = vcmp.lt.s32.totalorder %v1716, 0
        %vm1931 = vcmp.lt.s32.totalorder %v1723, 0
        %vm1932 = vcmp.lt.s32.totalorder %v1730, 0
        %vm1933 = vcmp.lt.s32.totalorder %v1737, 0
        %vm1934 = vcmp.lt.s32.totalorder %v1744, 0
        %vm1935 = vcmp.lt.s32.totalorder %v1751, 0
        %vm1936 = vcmp.lt.s32.totalorder %v1758, 0
        %vm1937 = vcmp.lt.s32.totalorder %v1765, 0
        %vm1938 = vcmp.lt.s32.totalorder %v1772, 0
        %vm1939 = vcmp.lt.s32.totalorder %v1779, 0
        %vm1940 = vcmp.lt.s32.totalorder %v1786, 0
        %vm1941 = vcmp.lt.s32.totalorder %v1793, 0
        %vm1942 = vcmp.lt.s32.totalorder %v1800, 0
        %vm1943 = vcmp.lt.s32.totalorder %v1807, 0
        %vm1944 = vcmp.lt.s32.totalorder %v1814, 0
        %vm1945 = vcmp.lt.s32.totalorder %v1821, 0
        %vm1946 = vcmp.lt.s32.totalorder %v1828, 0
        %vm1947 = vcmp.lt.s32.totalorder %v1835, 0
        %vm1948 = vcmp.lt.s32.totalorder %v1842, 0
        %vm1949 = vcmp.lt.s32.totalorder %v1849, 0
        %vm1950 = vcmp.lt.s32.totalorder %v1856, 0
        %vm1951 = vcmp.lt.s32.totalorder %v1863, 0
        %vm1952 = vcmp.lt.s32.totalorder %v1870, 0
        %vm1953 = vcmp.lt.s32.totalorder %v1877, 0
        %vm1954 = vcmp.lt.s32.totalorder %v1884, 0
        %vm1955 = vcmp.lt.s32.totalorder %v1891, 0
        %vm1956 = vmand %vm1924, %vm1892
        %vm1957 = vmand %vm1925, %vm1893
        %vm1958 = vmand %vm1926, %vm1894
        %vm1959 = vmand %vm1927, %vm1895
        %vm1960 = vmand %vm1928, %vm1896
        %vm1961 = vmand %vm1929, %vm1897
        %vm1962 = vmand %vm1930, %vm1898
        %vm1963 = vmand %vm1931, %vm1899
        %vm1964 = vmand %vm1932, %vm1900
        %vm1965 = vmand %vm1933, %vm1901
        %vm1966 = vmand %vm1934, %vm1902
        %vm1967 = vmand %vm1935, %vm1903
        %vm1968 = vmand %vm1936, %vm1904
        %vm1969 = vmand %vm1937, %vm1905
        %vm1970 = vmand %vm1938, %vm1906
        %vm1971 = vmand %vm1939, %vm1907
        %vm1972 = vmand %vm1940, %vm1908
        %vm1973 = vmand %vm1941, %vm1909
        %vm1974 = vmand %vm1942, %vm1910
        %vm1975 = vmand %vm1943, %vm1911
        %vm1976 = vmand %vm1944, %vm1912
        %vm1977 = vmand %vm1945, %vm1913
        %vm1978 = vmand %vm1946, %vm1914
        %vm1979 = vmand %vm1947, %vm1915
        %vm1980 = vmand %vm1948, %vm1916
        %vm1981 = vmand %vm1949, %vm1917
        %vm1982 = vmand %vm1950, %vm1918
        %vm1983 = vmand %vm1951, %vm1919
        %vm1984 = vmand %vm1952, %vm1920
        %vm1985 = vmand %vm1953, %vm1921
        %vm1986 = vmand %vm1954, %vm1922
        %vm1987 = vmand %vm1955, %vm1923
        %v1988 = vadd.s32 %v1674, 16
        %v1989 = vadd.s32 %v1681, 16
        %v1990 = vadd.s32 %v1688, 16
        %v1991 = vadd.s32 %v1695, 16
        %v1992 = vadd.s32 %v1702, 16
        %v1993 = vadd.s32 %v1709, 16
        %v1994 = vadd.s32 %v1716, 16
        %v1995 = vadd.s32 %v1723, 16
        %v1996 = vadd.s32 %v1730, 16
        %v1997 = vadd.s32 %v1737, 16
        %v1998 = vadd.s32 %v1744, 16
        %v1999 = vadd.s32 %v1751, 16
        %v2000 = vadd.s32 %v1758, 16
        %v2001 = vadd.s32 %v1765, 16
        %v2002 = vadd.s32 %v1772, 16
        %v2003 = vadd.s32 %v1779, 16
        %v2004 = vadd.s32 %v1786, 16
        %v2005 = vadd.s32 %v1793, 16
        %v2006 = vadd.s32 %v1800, 16
        %v2007 = vadd.s32 %v1807, 16
        %v2008 = vadd.s32 %v1814, 16
        %v2009 = vadd.s32 %v1821, 16
        %v2010 = vadd.s32 %v1828, 16
        %v2011 = vadd.s32 %v1835, 16
        %v2012 = vadd.s32 %v1842, 16
        %v2013 = vadd.s32 %v1849, 16
        %v2014 = vadd.s32 %v1856, 16
        %v2015 = vadd.s32 %v1863, 16
        %v2016 = vadd.s32 %v1870, 16
        %v2017 = vadd.s32 %v1877, 16
        %v2018 = vadd.s32 %v1884, 16
        %v2019 = vadd.s32 %v1891, 16
        %v2020 = vsel %vm1956, %v1988, %v1674
        %v2021 = vsel %vm1957, %v1989, %v1681
        %v2022 = vsel %vm1958, %v1990, %v1688
        %v2023 = vsel %vm1959, %v1991, %v1695
        %v2024 = vsel %vm1960, %v1992, %v1702
        %v2025 = vsel %vm1961, %v1993, %v1709
        %v2026 = vsel %vm1962, %v1994, %v1716
        %v2027 = vsel %vm1963, %v1995, %v1723
        %v2028 = vsel %vm1964, %v1996, %v1730
        %v2029 = vsel %vm1965, %v1997, %v1737
        %v2030 = vsel %vm1966, %v1998, %v1744
        %v2031 = vsel %vm1967, %v1999, %v1751
        %v2032 = vsel %vm1968, %v2000, %v1758
        %v2033 = vsel %vm1969, %v2001, %v1765
        %v2034 = vsel %vm1970, %v2002, %v1772
        %v2035 = vsel %vm1971, %v2003, %v1779
        %v2036 = vsel %vm1972, %v2004, %v1786
        %v2037 = vsel %vm1973, %v2005, %v1793
        %v2038 = vsel %vm1974, %v2006, %v1800
        %v2039 = vsel %vm1975, %v2007, %v1807
        %v2040 = vsel %vm1976, %v2008, %v1814
        %v2041 = vsel %vm1977, %v2009, %v1821
        %v2042 = vsel %vm1978, %v2010, %v1828
        %v2043 = vsel %vm1979, %v2011, %v1835
        %v2044 = vsel %vm1980, %v2012, %v1842
        %v2045 = vsel %vm1981, %v2013, %v1849
        %v2046 = vsel %vm1982, %v2014, %v1856
        %v2047 = vsel %vm1983, %v2015, %v1863
        %v2048 = vsel %vm1984, %v2016, %v1870
        %v2049 = vsel %vm1985, %v2017, %v1877
        %v2050 = vsel %vm1986, %v2018, %v1884
        %v2051 = vsel %vm1987, %v2019, %v1891
        %vm2052 = vcmp.ne.s32.totalorder %v2020, 0
        %vm2053 = vcmp.ne.s32.totalorder %v2021, 0
        %vm2054 = vcmp.ne.s32.totalorder %v2022, 0
        %vm2055 = vcmp.ne.s32.totalorder %v2023, 0
        %vm2056 = vcmp.ne.s32.totalorder %v2024, 0
        %vm2057 = vcmp.ne.s32.totalorder %v2025, 0
        %vm2058 = vcmp.ne.s32.totalorder %v2026, 0
        %vm2059 = vcmp.ne.s32.totalorder %v2027, 0
        %vm2060 = vcmp.ne.s32.totalorder %v2028, 0
        %vm2061 = vcmp.ne.s32.totalorder %v2029, 0
        %vm2062 = vcmp.ne.s32.totalorder %v2030, 0
        %vm2063 = vcmp.ne.s32.totalorder %v2031, 0
        %vm2064 = vcmp.ne.s32.totalorder %v2032, 0
        %vm2065 = vcmp.ne.s32.totalorder %v2033, 0
        %vm2066 = vcmp.ne.s32.totalorder %v2034, 0
        %vm2067 = vcmp.ne.s32.totalorder %v2035, 0
        %vm2068 = vcmp.ne.s32.totalorder %v2036, 0
        %vm2069 = vcmp.ne.s32.totalorder %v2037, 0
        %vm2070 = vcmp.ne.s32.totalorder %v2038, 0
        %vm2071 = vcmp.ne.s32.totalorder %v2039, 0
        %vm2072 = vcmp.ne.s32.totalorder %v2040, 0
        %vm2073 = vcmp.ne.s32.totalorder %v2041, 0
        %vm2074 = vcmp.ne.s32.totalorder %v2042, 0
        %vm2075 = vcmp.ne.s32.totalorder %v2043, 0
        %vm2076 = vcmp.ne.s32.totalorder %v2044, 0
        %vm2077 = vcmp.ne.s32.totalorder %v2045, 0
        %vm2078 = vcmp.ne.s32.totalorder %v2046, 0
        %vm2079 = vcmp.ne.s32.totalorder %v2047, 0
        %vm2080 = vcmp.ne.s32.totalorder %v2048, 0
        %vm2081 = vcmp.ne.s32.totalorder %v2049, 0
        %vm2082 = vcmp.ne.s32.totalorder %v2050, 0
        %vm2083 = vcmp.ne.s32.totalorder %v2051, 0
        %v2084 = vsel %vm2052, 1, 0
        %v2085 = vsel %vm2053, 1, 0
        %v2086 = vsel %vm2054, 1, 0
        %v2087 = vsel %vm2055, 1, 0
        %v2088 = vsel %vm2056, 1, 0
        %v2089 = vsel %vm2057, 1, 0
        %v2090 = vsel %vm2058, 1, 0
        %v2091 = vsel %vm2059, 1, 0
        %v2092 = vsel %vm2060, 1, 0
        %v2093 = vsel %vm2061, 1, 0
        %v2094 = vsel %vm2062, 1, 0
        %v2095 = vsel %vm2063, 1, 0
        %v2096 = vsel %vm2064, 1, 0
        %v2097 = vsel %vm2065, 1, 0
        %v2098 = vsel %vm2066, 1, 0
        %v2099 = vsel %vm2067, 1, 0
        %v2100 = vsel %vm2068, 1, 0
        %v2101 = vsel %vm2069, 1, 0
        %v2102 = vsel %vm2070, 1, 0
        %v2103 = vsel %vm2071, 1, 0
        %v2104 = vsel %vm2072, 1, 0
        %v2105 = vsel %vm2073, 1, 0
        %v2106 = vsel %vm2074, 1, 0
        %v2107 = vsel %vm2075, 1, 0
        %v2108 = vsel %vm2076, 1, 0
        %v2109 = vsel %vm2077, 1, 0
        %v2110 = vsel %vm2078, 1, 0
        %v2111 = vsel %vm2079, 1, 0
        %v2112 = vsel %vm2080, 1, 0
        %v2113 = vsel %vm2081, 1, 0
        %v2114 = vsel %vm2082, 1, 0
        %v2115 = vsel %vm2083, 1, 0
        %vm2116 = vcmp.eq.s32.totalorder %v2084, 1
        %vm2117 = vcmp.eq.s32.totalorder %v2085, 1
        %vm2118 = vcmp.eq.s32.totalorder %v2086, 1
        %vm2119 = vcmp.eq.s32.totalorder %v2087, 1
        %vm2120 = vcmp.eq.s32.totalorder %v2088, 1
        %vm2121 = vcmp.eq.s32.totalorder %v2089, 1
        %vm2122 = vcmp.eq.s32.totalorder %v2090, 1
        %vm2123 = vcmp.eq.s32.totalorder %v2091, 1
        %vm2124 = vcmp.eq.s32.totalorder %v2092, 1
        %vm2125 = vcmp.eq.s32.totalorder %v2093, 1
        %vm2126 = vcmp.eq.s32.totalorder %v2094, 1
        %vm2127 = vcmp.eq.s32.totalorder %v2095, 1
        %vm2128 = vcmp.eq.s32.totalorder %v2096, 1
        %vm2129 = vcmp.eq.s32.totalorder %v2097, 1
        %vm2130 = vcmp.eq.s32.totalorder %v2098, 1
        %vm2131 = vcmp.eq.s32.totalorder %v2099, 1
        %vm2132 = vcmp.eq.s32.totalorder %v2100, 1
        %vm2133 = vcmp.eq.s32.totalorder %v2101, 1
        %vm2134 = vcmp.eq.s32.totalorder %v2102, 1
        %vm2135 = vcmp.eq.s32.totalorder %v2103, 1
        %vm2136 = vcmp.eq.s32.totalorder %v2104, 1
        %vm2137 = vcmp.eq.s32.totalorder %v2105, 1
        %vm2138 = vcmp.eq.s32.totalorder %v2106, 1
        %vm2139 = vcmp.eq.s32.totalorder %v2107, 1
        %vm2140 = vcmp.eq.s32.totalorder %v2108, 1
        %vm2141 = vcmp.eq.s32.totalorder %v2109, 1
        %vm2142 = vcmp.eq.s32.totalorder %v2110, 1
        %vm2143 = vcmp.eq.s32.totalorder %v2111, 1
        %vm2144 = vcmp.eq.s32.totalorder %v2112, 1
        %vm2145 = vcmp.eq.s32.totalorder %v2113, 1
        %vm2146 = vcmp.eq.s32.totalorder %v2114, 1
        %vm2147 = vcmp.eq.s32.totalorder %v2115, 1
        %vm2148 = vmpackc.low %vm2116, %vm2116
        %vm2149 = vmpackc.low %vm2117, %vm2117
        %vm2150 = vmpackc.low %vm2118, %vm2118
        %vm2151 = vmpackc.low %vm2119, %vm2119
        %vm2152 = vmpackc.low %vm2120, %vm2120
        %vm2153 = vmpackc.low %vm2121, %vm2121
        %vm2154 = vmpackc.low %vm2122, %vm2122
        %vm2155 = vmpackc.low %vm2123, %vm2123
        %vm2156 = vmpackc.low %vm2124, %vm2124
        %vm2157 = vmpackc.low %vm2125, %vm2125
        %vm2158 = vmpackc.low %vm2126, %vm2126
        %vm2159 = vmpackc.low %vm2127, %vm2127
        %vm2160 = vmpackc.low %vm2128, %vm2128
        %vm2161 = vmpackc.low %vm2129, %vm2129
        %vm2162 = vmpackc.low %vm2130, %vm2130
        %vm2163 = vmpackc.low %vm2131, %vm2131
        %vm2164 = vmpackc.low %vm2132, %vm2132
        %vm2165 = vmpackc.low %vm2133, %vm2133
        %vm2166 = vmpackc.low %vm2134, %vm2134
        %vm2167 = vmpackc.low %vm2135, %vm2135
        %vm2168 = vmpackc.low %vm2136, %vm2136
        %vm2169 = vmpackc.low %vm2137, %vm2137
        %vm2170 = vmpackc.low %vm2138, %vm2138
        %vm2171 = vmpackc.low %vm2139, %vm2139
        %vm2172 = vmpackc.low %vm2140, %vm2140
        %vm2173 = vmpackc.low %vm2141, %vm2141
        %vm2174 = vmpackc.low %vm2142, %vm2142
        %vm2175 = vmpackc.low %vm2143, %vm2143
        %vm2176 = vmpackc.low %vm2144, %vm2144
        %vm2177 = vmpackc.low %vm2145, %vm2145
        %vm2178 = vmpackc.low %vm2146, %vm2146
        %vm2179 = vmpackc.low %vm2147, %vm2147
        %v2180 = vsel %vm2148, 65537, 0
        %v2181 = vsel %vm2149, 65537, 0
        %v2182 = vsel %vm2150, 65537, 0
        %v2183 = vsel %vm2151, 65537, 0
        %v2184 = vsel %vm2152, 65537, 0
        %v2185 = vsel %vm2153, 65537, 0
        %v2186 = vsel %vm2154, 65537, 0
        %v2187 = vsel %vm2155, 65537, 0
        %v2188 = vsel %vm2156, 65537, 0
        %v2189 = vsel %vm2157, 65537, 0
        %v2190 = vsel %vm2158, 65537, 0
        %v2191 = vsel %vm2159, 65537, 0
        %v2192 = vsel %vm2160, 65537, 0
        %v2193 = vsel %vm2161, 65537, 0
        %v2194 = vsel %vm2162, 65537, 0
        %v2195 = vsel %vm2163, 65537, 0
        %v2196 = vsel %vm2164, 65537, 0
        %v2197 = vsel %vm2165, 65537, 0
        %v2198 = vsel %vm2166, 65537, 0
        %v2199 = vsel %vm2167, 65537, 0
        %v2200 = vsel %vm2168, 65537, 0
        %v2201 = vsel %vm2169, 65537, 0
        %v2202 = vsel %vm2170, 65537, 0
        %v2203 = vsel %vm2171, 65537, 0
        %v2204 = vsel %vm2172, 65537, 0
        %v2205 = vsel %vm2173, 65537, 0
        %v2206 = vsel %vm2174, 65537, 0
        %v2207 = vsel %vm2175, 65537, 0
        %v2208 = vsel %vm2176, 65537, 0
        %v2209 = vsel %vm2177, 65537, 0
        %v2210 = vsel %vm2178, 65537, 0
        %v2211 = vsel %vm2179, 65537, 0
        %v2212 = vunpack.c.l.b16 %v2180
        %v2213 = vunpack.c.l.b16 %v2181
        %v2214 = vunpack.c.l.b16 %v2182
        %v2215 = vunpack.c.l.b16 %v2183
        %v2216 = vunpack.c.l.b16 %v2184
        %v2217 = vunpack.c.l.b16 %v2185
        %v2218 = vunpack.c.l.b16 %v2186
        %v2219 = vunpack.c.l.b16 %v2187
        %v2220 = vunpack.c.l.b16 %v2188
        %v2221 = vunpack.c.l.b16 %v2189
        %v2222 = vunpack.c.l.b16 %v2190
        %v2223 = vunpack.c.l.b16 %v2191
        %v2224 = vunpack.c.l.b16 %v2192
        %v2225 = vunpack.c.l.b16 %v2193
        %v2226 = vunpack.c.l.b16 %v2194
        %v2227 = vunpack.c.l.b16 %v2195
        %v2228 = vunpack.c.l.b16 %v2196
        %v2229 = vunpack.c.l.b16 %v2197
        %v2230 = vunpack.c.l.b16 %v2198
        %v2231 = vunpack.c.l.b16 %v2199
        %v2232 = vunpack.c.l.b16 %v2200
        %v2233 = vunpack.c.l.b16 %v2201
        %v2234 = vunpack.c.l.b16 %v2202
        %v2235 = vunpack.c.l.b16 %v2203
        %v2236 = vunpack.c.l.b16 %v2204
        %v2237 = vunpack.c.l.b16 %v2205
        %v2238 = vunpack.c.l.b16 %v2206
        %v2239 = vunpack.c.l.b16 %v2207
        %v2240 = vunpack.c.l.b16 %v2208
        %v2241 = vunpack.c.l.b16 %v2209
        %v2242 = vunpack.c.l.b16 %v2210
        %v2243 = vunpack.c.l.b16 %v2211
        %v2244 = vpack.c.b16 %v2213, %v2212
        %v2245 = vpack.c.b16 %v2215, %v2214
        %v2246 = vpack.c.b16 %v2217, %v2216
        %v2247 = vpack.c.b16 %v2219, %v2218
        %v2248 = vpack.c.b16 %v2221, %v2220
        %v2249 = vpack.c.b16 %v2223, %v2222
        %v2250 = vpack.c.b16 %v2225, %v2224
        %v2251 = vpack.c.b16 %v2227, %v2226
        %v2252 = vpack.c.b16 %v2229, %v2228
        %v2253 = vpack.c.b16 %v2231, %v2230
        %v2254 = vpack.c.b16 %v2233, %v2232
        %v2255 = vpack.c.b16 %v2235, %v2234
        %v2256 = vpack.c.b16 %v2237, %v2236
        %v2257 = vpack.c.b16 %v2239, %v2238
        %v2258 = vpack.c.b16 %v2241, %v2240
        %v2259 = vpack.c.b16 %v2243, %v2242
        %vm2260 = vcmp.ne.s16.totalorder %v2244, 0
        %vm2261 = vcmp.ne.s16.totalorder %v2245, 0
        %vm2262 = vcmp.ne.s16.totalorder %v2246, 0
        %vm2263 = vcmp.ne.s16.totalorder %v2247, 0
        %vm2264 = vcmp.ne.s16.totalorder %v2248, 0
        %vm2265 = vcmp.ne.s16.totalorder %v2249, 0
        %vm2266 = vcmp.ne.s16.totalorder %v2250, 0
        %vm2267 = vcmp.ne.s16.totalorder %v2251, 0
        %vm2268 = vcmp.ne.s16.totalorder %v2252, 0
        %vm2269 = vcmp.ne.s16.totalorder %v2253, 0
        %vm2270 = vcmp.ne.s16.totalorder %v2254, 0
        %vm2271 = vcmp.ne.s16.totalorder %v2255, 0
        %vm2272 = vcmp.ne.s16.totalorder %v2256, 0
        %vm2273 = vcmp.ne.s16.totalorder %v2257, 0
        %vm2274 = vcmp.ne.s16.totalorder %v2258, 0
        %vm2275 = vcmp.ne.s16.totalorder %v2259, 0
        %v2276 = vsel %vm2260, %v1603, 0
        %v2277 = vsel %vm2261, %v1604, 0
        %v2278 = vsel %vm2262, %v1605, 0
        %v2279 = vsel %vm2263, %v1606, 0
        %v2280 = vsel %vm2264, %v1607, 0
        %v2281 = vsel %vm2265, %v1608, 0
        %v2282 = vsel %vm2266, %v1609, 0
        %v2283 = vsel %vm2267, %v1610, 0
        %v2284 = vsel %vm2268, %v1611, 0
        %v2285 = vsel %vm2269, %v1612, 0
        %v2286 = vsel %vm2270, %v1613, 0
        %v2287 = vsel %vm2271, %v1614, 0
        %v2288 = vsel %vm2272, %v1615, 0
        %v2289 = vsel %vm2273, %v1616, 0
        %v2290 = vsel %vm2274, %v1617, 0
        %v2291 = vsel %vm2275, %v1618, 0
        %v2292 = vsel %vm2260, %v1619, 0
        %v2293 = vsel %vm2261, %v1620, 0
        %v2294 = vsel %vm2262, %v1621, 0
        %v2295 = vsel %vm2263, %v1622, 0
        %v2296 = vsel %vm2264, %v1623, 0
        %v2297 = vsel %vm2265, %v1624, 0
        %v2298 = vsel %vm2266, %v1625, 0
        %v2299 = vsel %vm2267, %v1626, 0
        %v2300 = vsel %vm2268, %v1627, 0
        %v2301 = vsel %vm2269, %v1628, 0
        %v2302 = vsel %vm2270, %v1629, 0
        %v2303 = vsel %vm2271, %v1630, 0
        %v2304 = vsel %vm2272, %v1631, 0
        %v2305 = vsel %vm2273, %v1632, 0
        %v2306 = vsel %vm2274, %v1633, 0
        %v2307 = vsel %vm2275, %v1634, 0
        %vm2308 = vcmp.ne.s32.totalorder %v2020, 15
        %vm2309 = vcmp.ne.s32.totalorder %v2021, 15
        %vm2310 = vcmp.ne.s32.totalorder %v2022, 15
        %vm2311 = vcmp.ne.s32.totalorder %v2023, 15
        %vm2312 = vcmp.ne.s32.totalorder %v2024, 15
        %vm2313 = vcmp.ne.s32.totalorder %v2025, 15
        %vm2314 = vcmp.ne.s32.totalorder %v2026, 15
        %vm2315 = vcmp.ne.s32.totalorder %v2027, 15
        %vm2316 = vcmp.ne.s32.totalorder %v2028, 15
        %vm2317 = vcmp.ne.s32.totalorder %v2029, 15
        %vm2318 = vcmp.ne.s32.totalorder %v2030, 15
        %vm2319 = vcmp.ne.s32.totalorder %v2031, 15
        %vm2320 = vcmp.ne.s32.totalorder %v2032, 15
        %vm2321 = vcmp.ne.s32.totalorder %v2033, 15
        %vm2322 = vcmp.ne.s32.totalorder %v2034, 15
        %vm2323 = vcmp.ne.s32.totalorder %v2035, 15
        %vm2324 = vcmp.ne.s32.totalorder %v2036, 15
        %vm2325 = vcmp.ne.s32.totalorder %v2037, 15
        %vm2326 = vcmp.ne.s32.totalorder %v2038, 15
        %vm2327 = vcmp.ne.s32.totalorder %v2039, 15
        %vm2328 = vcmp.ne.s32.totalorder %v2040, 15
        %vm2329 = vcmp.ne.s32.totalorder %v2041, 15
        %vm2330 = vcmp.ne.s32.totalorder %v2042, 15
        %vm2331 = vcmp.ne.s32.totalorder %v2043, 15
        %vm2332 = vcmp.ne.s32.totalorder %v2044, 15
        %vm2333 = vcmp.ne.s32.totalorder %v2045, 15
        %vm2334 = vcmp.ne.s32.totalorder %v2046, 15
        %vm2335 = vcmp.ne.s32.totalorder %v2047, 15
        %vm2336 = vcmp.ne.s32.totalorder %v2048, 15
        %vm2337 = vcmp.ne.s32.totalorder %v2049, 15
        %vm2338 = vcmp.ne.s32.totalorder %v2050, 15
        %vm2339 = vcmp.ne.s32.totalorder %v2051, 15
        %v2340 = vsel %vm2308, 1, 0
        %v2341 = vsel %vm2309, 1, 0
        %v2342 = vsel %vm2310, 1, 0
        %v2343 = vsel %vm2311, 1, 0
        %v2344 = vsel %vm2312, 1, 0
        %v2345 = vsel %vm2313, 1, 0
        %v2346 = vsel %vm2314, 1, 0
        %v2347 = vsel %vm2315, 1, 0
        %v2348 = vsel %vm2316, 1, 0
        %v2349 = vsel %vm2317, 1, 0
        %v2350 = vsel %vm2318, 1, 0
        %v2351 = vsel %vm2319, 1, 0
        %v2352 = vsel %vm2320, 1, 0
        %v2353 = vsel %vm2321, 1, 0
        %v2354 = vsel %vm2322, 1, 0
        %v2355 = vsel %vm2323, 1, 0
        %v2356 = vsel %vm2324, 1, 0
        %v2357 = vsel %vm2325, 1, 0
        %v2358 = vsel %vm2326, 1, 0
        %v2359 = vsel %vm2327, 1, 0
        %v2360 = vsel %vm2328, 1, 0
        %v2361 = vsel %vm2329, 1, 0
        %v2362 = vsel %vm2330, 1, 0
        %v2363 = vsel %vm2331, 1, 0
        %v2364 = vsel %vm2332, 1, 0
        %v2365 = vsel %vm2333, 1, 0
        %v2366 = vsel %vm2334, 1, 0
        %v2367 = vsel %vm2335, 1, 0
        %v2368 = vsel %vm2336, 1, 0
        %v2369 = vsel %vm2337, 1, 0
        %v2370 = vsel %vm2338, 1, 0
        %v2371 = vsel %vm2339, 1, 0
        %vm2372 = vcmp.eq.s32.totalorder %v2340, 1
        %vm2373 = vcmp.eq.s32.totalorder %v2341, 1
        %vm2374 = vcmp.eq.s32.totalorder %v2342, 1
        %vm2375 = vcmp.eq.s32.totalorder %v2343, 1
        %vm2376 = vcmp.eq.s32.totalorder %v2344, 1
        %vm2377 = vcmp.eq.s32.totalorder %v2345, 1
        %vm2378 = vcmp.eq.s32.totalorder %v2346, 1
        %vm2379 = vcmp.eq.s32.totalorder %v2347, 1
        %vm2380 = vcmp.eq.s32.totalorder %v2348, 1
        %vm2381 = vcmp.eq.s32.totalorder %v2349, 1
        %vm2382 = vcmp.eq.s32.totalorder %v2350, 1
        %vm2383 = vcmp.eq.s32.totalorder %v2351, 1
        %vm2384 = vcmp.eq.s32.totalorder %v2352, 1
        %vm2385 = vcmp.eq.s32.totalorder %v2353, 1
        %vm2386 = vcmp.eq.s32.totalorder %v2354, 1
        %vm2387 = vcmp.eq.s32.totalorder %v2355, 1
        %vm2388 = vcmp.eq.s32.totalorder %v2356, 1
        %vm2389 = vcmp.eq.s32.totalorder %v2357, 1
        %vm2390 = vcmp.eq.s32.totalorder %v2358, 1
        %vm2391 = vcmp.eq.s32.totalorder %v2359, 1
        %vm2392 = vcmp.eq.s32.totalorder %v2360, 1
        %vm2393 = vcmp.eq.s32.totalorder %v2361, 1
        %vm2394 = vcmp.eq.s32.totalorder %v2362, 1
        %vm2395 = vcmp.eq.s32.totalorder %v2363, 1
        %vm2396 = vcmp.eq.s32.totalorder %v2364, 1
        %vm2397 = vcmp.eq.s32.totalorder %v2365, 1
        %vm2398 = vcmp.eq.s32.totalorder %v2366, 1
        %vm2399 = vcmp.eq.s32.totalorder %v2367, 1
        %vm2400 = vcmp.eq.s32.totalorder %v2368, 1
        %vm2401 = vcmp.eq.s32.totalorder %v2369, 1
        %vm2402 = vcmp.eq.s32.totalorder %v2370, 1
        %vm2403 = vcmp.eq.s32.totalorder %v2371, 1
        %vm2404 = vmpackc.low %vm2372, %vm2372
        %vm2405 = vmpackc.low %vm2373, %vm2373
        %vm2406 = vmpackc.low %vm2374, %vm2374
        %vm2407 = vmpackc.low %vm2375, %vm2375
        %vm2408 = vmpackc.low %vm2376, %vm2376
        %vm2409 = vmpackc.low %vm2377, %vm2377
        %vm2410 = vmpackc.low %vm2378, %vm2378
        %vm2411 = vmpackc.low %vm2379, %vm2379
        %vm2412 = vmpackc.low %vm2380, %vm2380
        %vm2413 = vmpackc.low %vm2381, %vm2381
        %vm2414 = vmpackc.low %vm2382, %vm2382
        %vm2415 = vmpackc.low %vm2383, %vm2383
        %vm2416 = vmpackc.low %vm2384, %vm2384
        %vm2417 = vmpackc.low %vm2385, %vm2385
        %vm2418 = vmpackc.low %vm2386, %vm2386
        %vm2419 = vmpackc.low %vm2387, %vm2387
        %vm2420 = vmpackc.low %vm2388, %vm2388
        %vm2421 = vmpackc.low %vm2389, %vm2389
        %vm2422 = vmpackc.low %vm2390, %vm2390
        %vm2423 = vmpackc.low %vm2391, %vm2391
        %vm2424 = vmpackc.low %vm2392, %vm2392
        %vm2425 = vmpackc.low %vm2393, %vm2393
        %vm2426 = vmpackc.low %vm2394, %vm2394
        %vm2427 = vmpackc.low %vm2395, %vm2395
        %vm2428 = vmpackc.low %vm2396, %vm2396
        %vm2429 = vmpackc.low %vm2397, %vm2397
        %vm2430 = vmpackc.low %vm2398, %vm2398
        %vm2431 = vmpackc.low %vm2399, %vm2399
        %vm2432 = vmpackc.low %vm2400, %vm2400
        %vm2433 = vmpackc.low %vm2401, %vm2401
        %vm2434 = vmpackc.low %vm2402, %vm2402
        %vm2435 = vmpackc.low %vm2403, %vm2403
        %v2436 = vsel %vm2404, 65537, 0
        %v2437 = vsel %vm2405, 65537, 0
        %v2438 = vsel %vm2406, 65537, 0
        %v2439 = vsel %vm2407, 65537, 0
        %v2440 = vsel %vm2408, 65537, 0
        %v2441 = vsel %vm2409, 65537, 0
        %v2442 = vsel %vm2410, 65537, 0
        %v2443 = vsel %vm2411, 65537, 0
        %v2444 = vsel %vm2412, 65537, 0
        %v2445 = vsel %vm2413, 65537, 0
        %v2446 = vsel %vm2414, 65537, 0
        %v2447 = vsel %vm2415, 65537, 0
        %v2448 = vsel %vm2416, 65537, 0
        %v2449 = vsel %vm2417, 65537, 0
        %v2450 = vsel %vm2418, 65537, 0
        %v2451 = vsel %vm2419, 65537, 0
        %v2452 = vsel %vm2420, 65537, 0
        %v2453 = vsel %vm2421, 65537, 0
        %v2454 = vsel %vm2422, 65537, 0
        %v2455 = vsel %vm2423, 65537, 0
        %v2456 = vsel %vm2424, 65537, 0
        %v2457 = vsel %vm2425, 65537, 0
        %v2458 = vsel %vm2426, 65537, 0
        %v2459 = vsel %vm2427, 65537, 0
        %v2460 = vsel %vm2428, 65537, 0
        %v2461 = vsel %vm2429, 65537, 0
        %v2462 = vsel %vm2430, 65537, 0
        %v2463 = vsel %vm2431, 65537, 0
        %v2464 = vsel %vm2432, 65537, 0
        %v2465 = vsel %vm2433, 65537, 0
        %v2466 = vsel %vm2434, 65537, 0
        %v2467 = vsel %vm2435, 65537, 0
        %v2468 = vunpack.c.l.b16 %v2436
        %v2469 = vunpack.c.l.b16 %v2437
        %v2470 = vunpack.c.l.b16 %v2438
        %v2471 = vunpack.c.l.b16 %v2439
        %v2472 = vunpack.c.l.b16 %v2440
        %v2473 = vunpack.c.l.b16 %v2441
        %v2474 = vunpack.c.l.b16 %v2442
        %v2475 = vunpack.c.l.b16 %v2443
        %v2476 = vunpack.c.l.b16 %v2444
        %v2477 = vunpack.c.l.b16 %v2445
        %v2478 = vunpack.c.l.b16 %v2446
        %v2479 = vunpack.c.l.b16 %v2447
        %v2480 = vunpack.c.l.b16 %v2448
        %v2481 = vunpack.c.l.b16 %v2449
        %v2482 = vunpack.c.l.b16 %v2450
        %v2483 = vunpack.c.l.b16 %v2451
        %v2484 = vunpack.c.l.b16 %v2452
        %v2485 = vunpack.c.l.b16 %v2453
        %v2486 = vunpack.c.l.b16 %v2454
        %v2487 = vunpack.c.l.b16 %v2455
        %v2488 = vunpack.c.l.b16 %v2456
        %v2489 = vunpack.c.l.b16 %v2457
        %v2490 = vunpack.c.l.b16 %v2458
        %v2491 = vunpack.c.l.b16 %v2459
        %v2492 = vunpack.c.l.b16 %v2460
        %v2493 = vunpack.c.l.b16 %v2461
        %v2494 = vunpack.c.l.b16 %v2462
        %v2495 = vunpack.c.l.b16 %v2463
        %v2496 = vunpack.c.l.b16 %v2464
        %v2497 = vunpack.c.l.b16 %v2465
        %v2498 = vunpack.c.l.b16 %v2466
        %v2499 = vunpack.c.l.b16 %v2467
        %v2500 = vpack.c.b16 %v2469, %v2468
        %v2501 = vpack.c.b16 %v2471, %v2470
        %v2502 = vpack.c.b16 %v2473, %v2472
        %v2503 = vpack.c.b16 %v2475, %v2474
        %v2504 = vpack.c.b16 %v2477, %v2476
        %v2505 = vpack.c.b16 %v2479, %v2478
        %v2506 = vpack.c.b16 %v2481, %v2480
        %v2507 = vpack.c.b16 %v2483, %v2482
        %v2508 = vpack.c.b16 %v2485, %v2484
        %v2509 = vpack.c.b16 %v2487, %v2486
        %v2510 = vpack.c.b16 %v2489, %v2488
        %v2511 = vpack.c.b16 %v2491, %v2490
        %v2512 = vpack.c.b16 %v2493, %v2492
        %v2513 = vpack.c.b16 %v2495, %v2494
        %v2514 = vpack.c.b16 %v2497, %v2496
        %v2515 = vpack.c.b16 %v2499, %v2498
        %vm2516 = vcmp.ne.s16.totalorder %v2500, 0
        %vm2517 = vcmp.ne.s16.totalorder %v2501, 0
        %vm2518 = vcmp.ne.s16.totalorder %v2502, 0
        %vm2519 = vcmp.ne.s16.totalorder %v2503, 0
        %vm2520 = vcmp.ne.s16.totalorder %v2504, 0
        %vm2521 = vcmp.ne.s16.totalorder %v2505, 0
        %vm2522 = vcmp.ne.s16.totalorder %v2506, 0
        %vm2523 = vcmp.ne.s16.totalorder %v2507, 0
        %vm2524 = vcmp.ne.s16.totalorder %v2508, 0
        %vm2525 = vcmp.ne.s16.totalorder %v2509, 0
        %vm2526 = vcmp.ne.s16.totalorder %v2510, 0
        %vm2527 = vcmp.ne.s16.totalorder %v2511, 0
        %vm2528 = vcmp.ne.s16.totalorder %v2512, 0
        %vm2529 = vcmp.ne.s16.totalorder %v2513, 0
        %vm2530 = vcmp.ne.s16.totalorder %v2514, 0
        %vm2531 = vcmp.ne.s16.totalorder %v2515, 0
        %v2532 = vsel %vm2516, %v1603, 0
        %v2533 = vsel %vm2517, %v1604, 0
        %v2534 = vsel %vm2518, %v1605, 0
        %v2535 = vsel %vm2519, %v1606, 0
        %v2536 = vsel %vm2520, %v1607, 0
        %v2537 = vsel %vm2521, %v1608, 0
        %v2538 = vsel %vm2522, %v1609, 0
        %v2539 = vsel %vm2523, %v1610, 0
        %v2540 = vsel %vm2524, %v1611, 0
        %v2541 = vsel %vm2525, %v1612, 0
        %v2542 = vsel %vm2526, %v1613, 0
        %v2543 = vsel %vm2527, %v1614, 0
        %v2544 = vsel %vm2528, %v1615, 0
        %v2545 = vsel %vm2529, %v1616, 0
        %v2546 = vsel %vm2530, %v1617, 0
        %v2547 = vsel %vm2531, %v1618, 0
        %v2548 = vsel %vm2516, %v1619, 0
        %v2549 = vsel %vm2517, %v1620, 0
        %v2550 = vsel %vm2518, %v1621, 0
        %v2551 = vsel %vm2519, %v1622, 0
        %v2552 = vsel %vm2520, %v1623, 0
        %v2553 = vsel %vm2521, %v1624, 0
        %v2554 = vsel %vm2522, %v1625, 0
        %v2555 = vsel %vm2523, %v1626, 0
        %v2556 = vsel %vm2524, %v1627, 0
        %v2557 = vsel %vm2525, %v1628, 0
        %v2558 = vsel %vm2526, %v1629, 0
        %v2559 = vsel %vm2527, %v1630, 0
        %v2560 = vsel %vm2528, %v1631, 0
        %v2561 = vsel %vm2529, %v1632, 0
        %v2562 = vsel %vm2530, %v1633, 0
        %v2563 = vsel %vm2531, %v1634, 0
        %2564 = vst [vmem:[#allocation2] sm:$0xff] 0
        %2565 = vst [vmem:[#allocation2 + $0x8] sm:$0xff] 0
        %2566 = vst [vmem:[#allocation2 + $0x10] sm:$0xff] 0
        %2567 = vst [vmem:[#allocation2 + $0x18] sm:$0xff] 0
        %2568 = vst [vmem:[#allocation2 + $0x20] sm:$0xf] 0
        %2569 = vst [vmem:[#allocation2 + $0x24] sm:$0xff] 0
        %2570 = vst [vmem:[#allocation2 + $0x2c] sm:$0xff] 0
        %2571 = vst [vmem:[#allocation2 + $0x34] sm:$0xff] 0
        %2572 = vst [vmem:[#allocation2 + $0x3c] sm:$0xff] 0
        %2573 = vst [vmem:[#allocation2 + $0x44] sm:$0xf] 0
        %2574 = vst [vmem:[#allocation2 + $0x48] sm:$0xff] 0
        %2575 = vst [vmem:[#allocation2 + $0x50] sm:$0xff] 0
        %2576 = vst [vmem:[#allocation2 + $0x58] sm:$0xff] 0
        %2577 = vst [vmem:[#allocation2 + $0x60] sm:$0xff] 0
        %2578 = vst [vmem:[#allocation2 + $0x68] sm:$0xf] 0
        %2579 = vst [vmem:[#allocation2 + $0x6c] sm:$0xff] 0
        %2580 = vst [vmem:[#allocation2 + $0x74] sm:$0xff] 0
        %2581 = vst [vmem:[#allocation2 + $0x7c] sm:$0xff] 0
        %2582 = vst [vmem:[#allocation2 + $0x84] sm:$0xff] 0
        %2583 = vst [vmem:[#allocation2 + $0x8c] sm:$0xf] 0
        %2584 = vst [vmem:[#allocation2 + $0x90] sm:$0xff] 0
        %2585 = vst [vmem:[#allocation2 + $0x98] sm:$0xff] 0
        %2586 = vst [vmem:[#allocation2 + $0xa0] sm:$0xff] 0
        %2587 = vst [vmem:[#allocation2 + $0xa8] sm:$0xff] 0
        %2588 = vst [vmem:[#allocation2 + $0xb0] sm:$0xf] 0
        %2589 = vst [vmem:[#allocation2 + $0xb4] sm:$0xff] 0
        %2590 = vst [vmem:[#allocation2 + $0xbc] sm:$0xff] 0
        %2591 = vst [vmem:[#allocation2 + $0xc4] sm:$0xff] 0
        %2592 = vst [vmem:[#allocation2 + $0xcc] sm:$0xff] 0
        %2593 = vst [vmem:[#allocation2 + $0xd4] sm:$0xf] 0
        %2594 = vst [vmem:[#allocation2 + $0xd8] sm:$0xff] 0
        %2595 = vst [vmem:[#allocation2 + $0xe0] sm:$0xff] 0
        %2596 = vst [vmem:[#allocation2 + $0xe8] sm:$0xff] 0
        %2597 = vst [vmem:[#allocation2 + $0xf0] sm:$0xff] 0
        %2598 = vst [vmem:[#allocation2 + $0xf8] sm:$0xf] 0
        %2599 = vst [vmem:[#allocation2 + $0xfc] sm:$0xff] 0
        %2600 = vst [vmem:[#allocation2 + $0x104] sm:$0xff] 0
        %2601 = vst [vmem:[#allocation2 + $0x10c] sm:$0xff] 0
        %2602 = vst [vmem:[#allocation2 + $0x114] sm:$0xff] 0
        %2603 = vst [vmem:[#allocation2 + $0x11c] sm:$0xf] 0
        %2604 = vst [vmem:[#allocation2 + $0x120] sm:$0xff] 0
        %2605 = vst [vmem:[#allocation2 + $0x128] sm:$0xff] 0
        %2606 = vst [vmem:[#allocation2 + $0x130] sm:$0xff] 0
        %2607 = vst [vmem:[#allocation2 + $0x138] sm:$0xff] 0
        %2608 = vst [vmem:[#allocation2 + $0x140] sm:$0xf] 0
        %2609 = vst [vmem:[#allocation2 + $0x144] sm:$0xff] 0
        %2610 = vst [vmem:[#allocation2 + $0x14c] sm:$0xff] 0
        %2611 = vst [vmem:[#allocation2 + $0x154] sm:$0xff] 0
        %2612 = vst [vmem:[#allocation2 + $0x15c] sm:$0xff] 0
        %2613 = vst [vmem:[#allocation2 + $0x164] sm:$0xf] 0
        %2614 = vst [vmem:[#allocation2 + $0x168] sm:$0xff] 0
        %2615 = vst [vmem:[#allocation2 + $0x170] sm:$0xff] 0
        %2616 = vst [vmem:[#allocation2 + $0x178] sm:$0xff] 0
        %2617 = vst [vmem:[#allocation2 + $0x180] sm:$0xff] 0
        %2618 = vst [vmem:[#allocation2 + $0x188] sm:$0xf] 0
        %2619 = vst [vmem:[#allocation2 + $0x18c] sm:$0xff] 0
        %2620 = vst [vmem:[#allocation2 + $0x194] sm:$0xff] 0
        %2621 = vst [vmem:[#allocation2 + $0x19c] sm:$0xff] 0
        %2622 = vst [vmem:[#allocation2 + $0x1a4] sm:$0xff] 0
        %2623 = vst [vmem:[#allocation2 + $0x1ac] sm:$0xf] 0
        %2624 = vst [vmem:[#allocation2 + $0x1b0] sm:$0xff] 0
        %2625 = vst [vmem:[#allocation2 + $0x1b8] sm:$0xff] 0
        %2626 = vst [vmem:[#allocation2 + $0x1c0] sm:$0xff] 0
        %2627 = vst [vmem:[#allocation2 + $0x1c8] sm:$0xff] 0
        %2628 = vst [vmem:[#allocation2 + $0x1d0] sm:$0xf] 0
        %2629 = vst [vmem:[#allocation2 + $0x1d4] sm:$0xff] 0
        %2630 = vst [vmem:[#allocation2 + $0x1dc] sm:$0xff] 0
        %2631 = vst [vmem:[#allocation2 + $0x1e4] sm:$0xff] 0
        %2632 = vst [vmem:[#allocation2 + $0x1ec] sm:$0xff] 0
        %2633 = vst [vmem:[#allocation2 + $0x1f4] sm:$0xf] 0
        %2634 = vst [vmem:[#allocation2 + $0x1f8] sm:$0xff] 0
        %2635 = vst [vmem:[#allocation2 + $0x200] sm:$0xff] 0
        %2636 = vst [vmem:[#allocation2 + $0x208] sm:$0xff] 0
        %2637 = vst [vmem:[#allocation2 + $0x210] sm:$0xff] 0
        %2638 = vst [vmem:[#allocation2 + $0x218] sm:$0xf] 0
        %2639 = vst [vmem:[#allocation2 + $0x21c] sm:$0xff] 0
        %2640 = vst [vmem:[#allocation2 + $0x224] sm:$0xff] 0
        %2641 = vst [vmem:[#allocation2 + $0x22c] sm:$0xff] 0
        %2642 = vst [vmem:[#allocation2 + $0x234] sm:$0xff] 0
        %2643 = vst [vmem:[#allocation2 + $0x23c] sm:$0xf] 0
        %2644 = vst [vmem:[#allocation2 + $0x240] sm:$0xff] 0
        %2645 = vst [vmem:[#allocation2 + $0x248] sm:$0xff] 0
        %2646 = vst [vmem:[#allocation2 + $0x250] sm:$0xff] 0
        %2647 = vst [vmem:[#allocation2 + $0x258] sm:$0xff] 0
        %2648 = vst [vmem:[#allocation2 + $0x260] sm:$0xf] 0
        %2649 = vst [vmem:[#allocation2 + $0x264] sm:$0xff] 0
        %2650 = vst [vmem:[#allocation2 + $0x26c] sm:$0xff] 0
        %2651 = vst [vmem:[#allocation2 + $0x274] sm:$0xff] 0
        %2652 = vst [vmem:[#allocation2 + $0x27c] sm:$0xff] 0
        %2653 = vst [vmem:[#allocation2 + $0x284] sm:$0xf] 0
        %2654 = vst [vmem:[#allocation2 + $0x288] sm:$0xff] 0
        %2655 = vst [vmem:[#allocation2 + $0x290] sm:$0xff] 0
        %2656 = vst [vmem:[#allocation2 + $0x298] sm:$0xff] 0
        %2657 = vst [vmem:[#allocation2 + $0x2a0] sm:$0xff] 0
        %2658 = vst [vmem:[#allocation2 + $0x2a8] sm:$0xf] 0
        %2659 = vst [vmem:[#allocation2 + $0x2ac] sm:$0xff] 0
        %2660 = vst [vmem:[#allocation2 + $0x2b4] sm:$0xff] 0
        %2661 = vst [vmem:[#allocation2 + $0x2bc] sm:$0xff] 0
        %2662 = vst [vmem:[#allocation2 + $0x2c4] sm:$0xff] 0
        %2663 = vst [vmem:[#allocation2 + $0x2cc] sm:$0xf] 0
        %2664 = vst [vmem:[#allocation2 + $0x2d0] sm:$0xff] 0
        %2665 = vst [vmem:[#allocation2 + $0x2d8] sm:$0xff] 0
        %2666 = vst [vmem:[#allocation2 + $0x2e0] sm:$0xff] 0
        %2667 = vst [vmem:[#allocation2 + $0x2e8] sm:$0xff] 0
        %2668 = vst [vmem:[#allocation2 + $0x2f0] sm:$0xf] 0
        %2669 = vst [vmem:[#allocation2 + $0x2f4] sm:$0xff] 0
        %2670 = vst [vmem:[#allocation2 + $0x2fc] sm:$0xff] 0
        %2671 = vst [vmem:[#allocation2 + $0x304] sm:$0xff] 0
        %2672 = vst [vmem:[#allocation2 + $0x30c] sm:$0xff] 0
        %2673 = vst [vmem:[#allocation2 + $0x314] sm:$0xf] 0
        %2674 = vst [vmem:[#allocation2 + $0x318] sm:$0xff] 0
        %2675 = vst [vmem:[#allocation2 + $0x320] sm:$0xff] 0
        %2676 = vst [vmem:[#allocation2 + $0x328] sm:$0xff] 0
        %2677 = vst [vmem:[#allocation2 + $0x330] sm:$0xff] 0
        %2678 = vst [vmem:[#allocation2 + $0x338] sm:$0xf] 0
        %2679 = vst [vmem:[#allocation2 + $0x33c] sm:$0xff] 0
        %2680 = vst [vmem:[#allocation2 + $0x344] sm:$0xff] 0
        %2681 = vst [vmem:[#allocation2 + $0x34c] sm:$0xff] 0
        %2682 = vst [vmem:[#allocation2 + $0x354] sm:$0xff] 0
        %2683 = vst [vmem:[#allocation2 + $0x35c] sm:$0xf] 0
        %2684 = vst [vmem:[#allocation2 + $0x360] sm:$0xff] 0
        %2685 = vst [vmem:[#allocation2 + $0x368] sm:$0xff] 0
        %2686 = vst [vmem:[#allocation2 + $0x370] sm:$0xff] 0
        %2687 = vst [vmem:[#allocation2 + $0x378] sm:$0xff] 0
        %2688 = vst [vmem:[#allocation2 + $0x380] sm:$0xf] 0
        %2689 = vst [vmem:[#allocation2 + $0x384] sm:$0xff] 0
        %2690 = vst [vmem:[#allocation2 + $0x38c] sm:$0xff] 0
        %2691 = vst [vmem:[#allocation2 + $0x394] sm:$0xff] 0
        %2692 = vst [vmem:[#allocation2 + $0x39c] sm:$0xff] 0
        %2693 = vst [vmem:[#allocation2 + $0x3a4] sm:$0xf] 0
        %2694 = vst [vmem:[#allocation2 + $0x3a8] sm:$0xff] 0
        %2695 = vst [vmem:[#allocation2 + $0x3b0] sm:$0xff] 0
        %2696 = vst [vmem:[#allocation2 + $0x3b8] sm:$0xff] 0
        %2697 = vst [vmem:[#allocation2 + $0x3c0] sm:$0xff] 0
        %2698 = vst [vmem:[#allocation2 + $0x3c8] sm:$0xf] 0
        %2699 = vst [vmem:[#allocation2 + $0x3cc] sm:$0xff] 0
        %2700 = vst [vmem:[#allocation2 + $0x3d4] sm:$0xff] 0
        %2701 = vst [vmem:[#allocation2 + $0x3dc] sm:$0xff] 0
        %2702 = vst [vmem:[#allocation2 + $0x3e4] sm:$0xff] 0
        %2703 = vst [vmem:[#allocation2 + $0x3ec] sm:$0xf] 0
        %2704 = vst [vmem:[#allocation2 + $0x3f0] sm:$0xff] 0
        %2705 = vst [vmem:[#allocation2 + $0x3f8] sm:$0xff] 0
        %2706 = vst [vmem:[#allocation2 + $0x400] sm:$0xff] 0
        %2707 = vst [vmem:[#allocation2 + $0x408] sm:$0xff] 0
        %2708 = vst [vmem:[#allocation2 + $0x410] sm:$0xf] 0
        %2709 = vst [vmem:[#allocation2 + $0x414] sm:$0xff] 0
        %2710 = vst [vmem:[#allocation2 + $0x41c] sm:$0xff] 0
        %2711 = vst [vmem:[#allocation2 + $0x424] sm:$0xff] 0
        %2712 = vst [vmem:[#allocation2 + $0x42c] sm:$0xff] 0
        %2713 = vst [vmem:[#allocation2 + $0x434] sm:$0xf] 0
        %2714 = vst [vmem:[#allocation2 + $0x438] sm:$0xff] 0
        %2715 = vst [vmem:[#allocation2 + $0x440] sm:$0xff] 0
        %2716 = vst [vmem:[#allocation2 + $0x448] sm:$0xff] 0
        %2717 = vst [vmem:[#allocation2 + $0x450] sm:$0xff] 0
        %2718 = vst [vmem:[#allocation2 + $0x458] sm:$0xf] 0
        %2719 = vst [vmem:[#allocation2 + $0x45c] sm:$0xff] 0
        %2720 = vst [vmem:[#allocation2 + $0x464] sm:$0xff] 0
        %2721 = vst [vmem:[#allocation2 + $0x46c] sm:$0xff] 0
        %2722 = vst [vmem:[#allocation2 + $0x474] sm:$0xff] 0
        %2723 = vst [vmem:[#allocation2 + $0x47c] sm:$0xf] 0
        %2724 = vst [vmem:[#allocation2 + $0x480] sm:$0xff] 0
        %2725 = vst [vmem:[#allocation2 + $0x488] sm:$0xff] 0
        %2726 = vst [vmem:[#allocation2 + $0x490] sm:$0xff] 0
        %2727 = vst [vmem:[#allocation2 + $0x498] sm:$0xff] 0
        %2728 = vst [vmem:[#allocation2 + $0x4a0] sm:$0xf] 0
        %2729 = vst [vmem:[#allocation2 + $0x4a4] sm:$0xff] 0
        %2730 = vst [vmem:[#allocation2 + $0x4ac] sm:$0xff] 0
        %2731 = vst [vmem:[#allocation2 + $0x4b4] sm:$0xff] 0
        %2732 = vst [vmem:[#allocation2 + $0x4bc] sm:$0xff] 0
        %2733 = vst [vmem:[#allocation2 + $0x4c4] sm:$0xf] 0
        %2734 = vst [vmem:[#allocation2 + $0x4c8] sm:$0xff] 0
        %2735 = vst [vmem:[#allocation2 + $0x4d0] sm:$0xff] 0
        %2736 = vst [vmem:[#allocation2 + $0x4d8] sm:$0xff] 0
        %2737 = vst [vmem:[#allocation2 + $0x4e0] sm:$0xff] 0
        %2738 = vst [vmem:[#allocation2 + $0x4e8] sm:$0xf] 0
        %2739 = vst [vmem:[#allocation2 + $0x4ec] sm:$0xff] 0
        %2740 = vst [vmem:[#allocation2 + $0x4f4] sm:$0xff] 0
        %2741 = vst [vmem:[#allocation2 + $0x4fc] sm:$0xff] 0
        %2742 = vst [vmem:[#allocation2 + $0x504] sm:$0xff] 0
        %2743 = vst [vmem:[#allocation2 + $0x50c] sm:$0xf] 0
        %2744 = vst [vmem:[#allocation2 + $0x510] sm:$0xff] 0
        %2745 = vst [vmem:[#allocation2 + $0x518] sm:$0xff] 0
        %2746 = vst [vmem:[#allocation2 + $0x520] sm:$0xff] 0
        %2747 = vst [vmem:[#allocation2 + $0x528] sm:$0xff] 0
        %2748 = vst [vmem:[#allocation2 + $0x530] sm:$0xf] 0
        %2749 = vst [vmem:[#allocation2 + $0x534] sm:$0xff] 0
        %2750 = vst [vmem:[#allocation2 + $0x53c] sm:$0xff] 0
        %2751 = vst [vmem:[#allocation2 + $0x544] sm:$0xff] 0
        %2752 = vst [vmem:[#allocation2 + $0x54c] sm:$0xff] 0
        %2753 = vst [vmem:[#allocation2 + $0x554] sm:$0xf] 0
        %2754 = vst [vmem:[#allocation2 + $0x558] sm:$0xff] 0
        %2755 = vst [vmem:[#allocation2 + $0x560] sm:$0xff] 0
        %2756 = vst [vmem:[#allocation2 + $0x568] sm:$0xff] 0
        %2757 = vst [vmem:[#allocation2 + $0x570] sm:$0xff] 0
        %2758 = vst [vmem:[#allocation2 + $0x578] sm:$0xf] 0
        %2759 = vst [vmem:[#allocation2 + $0x57c] sm:$0xff] 0
        %2760 = vst [vmem:[#allocation2 + $0x584] sm:$0xff] 0
        %2761 = vst [vmem:[#allocation2 + $0x58c] sm:$0xff] 0
        %2762 = vst [vmem:[#allocation2 + $0x594] sm:$0xff] 0
        %2763 = vst [vmem:[#allocation2 + $0x59c] sm:$0xf] 0
        %2764 = vst [vmem:[#allocation2 + $0x5a0] sm:$0xff] 0
        %2765 = vst [vmem:[#allocation2 + $0x5a8] sm:$0xff] 0
        %2766 = vst [vmem:[#allocation2 + $0x5b0] sm:$0xff] 0
        %2767 = vst [vmem:[#allocation2 + $0x5b8] sm:$0xff] 0
        %2768 = vst [vmem:[#allocation2 + $0x5c0] sm:$0xf] 0
        %2769 = vst [vmem:[#allocation2 + $0x5c4] sm:$0xff] 0
        %2770 = vst [vmem:[#allocation2 + $0x5cc] sm:$0xff] 0
        %2771 = vst [vmem:[#allocation2 + $0x5d4] sm:$0xff] 0
        %2772 = vst [vmem:[#allocation2 + $0x5dc] sm:$0xff] 0
        %2773 = vst [vmem:[#allocation2 + $0x5e4] sm:$0xf] 0
        %2774 = vst [vmem:[#allocation2 + $0x5e8] sm:$0xff] 0
        %2775 = vst [vmem:[#allocation2 + $0x5f0] sm:$0xff] 0
        %2776 = vst [vmem:[#allocation2 + $0x5f8] sm:$0xff] 0
        %2777 = vst [vmem:[#allocation2 + $0x600] sm:$0xff] 0
        %2778 = vst [vmem:[#allocation2 + $0x608] sm:$0xf] 0
        %2779 = vst [vmem:[#allocation2 + $0x60c] sm:$0xff] 0
        %2780 = vst [vmem:[#allocation2 + $0x614] sm:$0xff] 0
        %2781 = vst [vmem:[#allocation2 + $0x61c] sm:$0xff] 0
        %2782 = vst [vmem:[#allocation2 + $0x624] sm:$0xff] 0
        %2783 = vst [vmem:[#allocation2 + $0x62c] sm:$0xf] 0
        %2784 = vst [vmem:[#allocation2 + $0x630] sm:$0xff] 0
        %2785 = vst [vmem:[#allocation2 + $0x638] sm:$0xff] 0
        %2786 = vst [vmem:[#allocation2 + $0x640] sm:$0xff] 0
        %2787 = vst [vmem:[#allocation2 + $0x648] sm:$0xff] 0
        %2788 = vst [vmem:[#allocation2 + $0x650] sm:$0xf] 0
        %2789 = vst [vmem:[#allocation2 + $0x654] sm:$0xff] 0
        %2790 = vst [vmem:[#allocation2 + $0x65c] sm:$0xff] 0
        %2791 = vst [vmem:[#allocation2 + $0x664] sm:$0xff] 0
        %2792 = vst [vmem:[#allocation2 + $0x66c] sm:$0xff] 0
        %2793 = vst [vmem:[#allocation2 + $0x674] sm:$0xf] 0
        %2794 = vst [vmem:[#allocation2 + $0x678] sm:$0xff] 0
        %2795 = vst [vmem:[#allocation2 + $0x680] sm:$0xff] 0
        %2796 = vst [vmem:[#allocation2 + $0x688] sm:$0xff] 0
        %2797 = vst [vmem:[#allocation2 + $0x690] sm:$0xff] 0
        %2798 = vst [vmem:[#allocation2 + $0x698] sm:$0xf] 0
        %2799 = vst [vmem:[#allocation2 + $0x69c] sm:$0xff] 0
        %2800 = vst [vmem:[#allocation2 + $0x6a4] sm:$0xff] 0
        %2801 = vst [vmem:[#allocation2 + $0x6ac] sm:$0xff] 0
        %2802 = vst [vmem:[#allocation2 + $0x6b4] sm:$0xff] 0
        %2803 = vst [vmem:[#allocation2 + $0x6bc] sm:$0xf] 0
        %2804 = vst [vmem:[#allocation2 + $0x6c0] sm:$0xff] 0
        %2805 = vst [vmem:[#allocation2 + $0x6c8] sm:$0xff] 0
        %2806 = vst [vmem:[#allocation2 + $0x6d0] sm:$0xff] 0
        %2807 = vst [vmem:[#allocation2 + $0x6d8] sm:$0xff] 0
        %2808 = vst [vmem:[#allocation2 + $0x6e0] sm:$0xf] 0
        %2809 = vst [vmem:[#allocation2 + $0x6e4] sm:$0xff] 0
        %2810 = vst [vmem:[#allocation2 + $0x6ec] sm:$0xff] 0
        %2811 = vst [vmem:[#allocation2 + $0x6f4] sm:$0xff] 0
        %2812 = vst [vmem:[#allocation2 + $0x6fc] sm:$0xff] 0
        %2813 = vst [vmem:[#allocation2 + $0x704] sm:$0xf] 0
        %2814 = vst [vmem:[#allocation2 + $0x708] sm:$0xff] 0
        %2815 = vst [vmem:[#allocation2 + $0x710] sm:$0xff] 0
        %2816 = vst [vmem:[#allocation2 + $0x718] sm:$0xff] 0
        %2817 = vst [vmem:[#allocation2 + $0x720] sm:$0xff] 0
        %2818 = vst [vmem:[#allocation2 + $0x728] sm:$0xf] 0
        %2819 = vst [vmem:[#allocation2 + $0x72c] sm:$0xff] 0
        %2820 = vst [vmem:[#allocation2 + $0x734] sm:$0xff] 0
        %2821 = vst [vmem:[#allocation2 + $0x73c] sm:$0xff] 0
        %2822 = vst [vmem:[#allocation2 + $0x744] sm:$0xff] 0
        %2823 = vst [vmem:[#allocation2 + $0x74c] sm:$0xf] 0
        %2824 = vst [vmem:[#allocation2 + $0x750] sm:$0xff] 0
        %2825 = vst [vmem:[#allocation2 + $0x758] sm:$0xff] 0
        %2826 = vst [vmem:[#allocation2 + $0x760] sm:$0xff] 0
        %2827 = vst [vmem:[#allocation2 + $0x768] sm:$0xff] 0
        %2828 = vst [vmem:[#allocation2 + $0x770] sm:$0xf] 0
        %2829 = vst [vmem:[#allocation2 + $0x774] sm:$0xff] 0
        %2830 = vst [vmem:[#allocation2 + $0x77c] sm:$0xff] 0
        %2831 = vst [vmem:[#allocation2 + $0x784] sm:$0xff] 0
        %2832 = vst [vmem:[#allocation2 + $0x78c] sm:$0xff] 0
        %2833 = vst [vmem:[#allocation2 + $0x794] sm:$0xf] 0
        %2834 = vst [vmem:[#allocation2 + $0x798] sm:$0xff] 0
        %2835 = vst [vmem:[#allocation2 + $0x7a0] sm:$0xff] 0
        %2836 = vst [vmem:[#allocation2 + $0x7a8] sm:$0xff] 0
        %2837 = vst [vmem:[#allocation2 + $0x7b0] sm:$0xff] 0
        %2838 = vst [vmem:[#allocation2 + $0x7b8] sm:$0xf] 0
        %2839 = vst [vmem:[#allocation2 + $0x7bc] sm:$0xff] 0
        %2840 = vst [vmem:[#allocation2 + $0x7c4] sm:$0xff] 0
        %2841 = vst [vmem:[#allocation2 + $0x7cc] sm:$0xff] 0
        %2842 = vst [vmem:[#allocation2 + $0x7d4] sm:$0xff] 0
        %2843 = vst [vmem:[#allocation2 + $0x7dc] sm:$0xf] 0
        %2844 = vst [vmem:[#allocation2 + $0x7e0] sm:$0xff] 0
        %2845 = vst [vmem:[#allocation2 + $0x7e8] sm:$0xff] 0
        %2846 = vst [vmem:[#allocation2 + $0x7f0] sm:$0xff] 0
        %2847 = vst [vmem:[#allocation2 + $0x7f8] sm:$0xff] 0
        %2848 = vst [vmem:[#allocation2 + $0x800] sm:$0xf] 0
        %2849 = vst [vmem:[#allocation2 + $0x804] sm:$0xff] 0
        %2850 = vst [vmem:[#allocation2 + $0x80c] sm:$0xff] 0
        %2851 = vst [vmem:[#allocation2 + $0x814] sm:$0xff] 0
        %2852 = vst [vmem:[#allocation2 + $0x81c] sm:$0xff] 0
        %2853 = vst [vmem:[#allocation2 + $0x824] sm:$0xf] 0
        %2854 = vst [vmem:[#allocation2 + $0x828] sm:$0xff] 0
        %2855 = vst [vmem:[#allocation2 + $0x830] sm:$0xff] 0
        %2856 = vst [vmem:[#allocation2 + $0x838] sm:$0xff] 0
        %2857 = vst [vmem:[#allocation2 + $0x840] sm:$0xff] 0
        %2858 = vst [vmem:[#allocation2 + $0x848] sm:$0xf] 0
        %2859 = vst [vmem:[#allocation2 + $0x84c] sm:$0xff] 0
        %2860 = vst [vmem:[#allocation2 + $0x854] sm:$0xff] 0
        %2861 = vst [vmem:[#allocation2 + $0x85c] sm:$0xff] 0
        %2862 = vst [vmem:[#allocation2 + $0x864] sm:$0xff] 0
        %2863 = vst [vmem:[#allocation2 + $0x86c] sm:$0xf] 0
        %2864 = vst [vmem:[#allocation2 + $0x870] sm:$0xff] 0
        %2865 = vst [vmem:[#allocation2 + $0x878] sm:$0xff] 0
        %2866 = vst [vmem:[#allocation2 + $0x880] sm:$0xff] 0
        %2867 = vst [vmem:[#allocation2 + $0x888] sm:$0xff] 0
        %2868 = vst [vmem:[#allocation2 + $0x890] sm:$0xf] 0
        %2869 = vst [vmem:[#allocation2 + $0x894] sm:$0xff] 0
        %2870 = vst [vmem:[#allocation2 + $0x89c] sm:$0xff] 0
        %2871 = vst [vmem:[#allocation2 + $0x8a4] sm:$0xff] 0
        %2872 = vst [vmem:[#allocation2 + $0x8ac] sm:$0xff] 0
        %2873 = vst [vmem:[#allocation2 + $0x8b4] sm:$0xf] 0
        %2874 = vst [vmem:[#allocation2 + $0x8b8] sm:$0xff] 0
        %2875 = vst [vmem:[#allocation2 + $0x8c0] sm:$0xff] 0
        %2876 = vst [vmem:[#allocation2 + $0x8c8] sm:$0xff] 0
        %2877 = vst [vmem:[#allocation2 + $0x8d0] sm:$0xff] 0
        %2878 = vst [vmem:[#allocation2 + $0x8d8] sm:$0xf] 0
        %2879 = vst [vmem:[#allocation2 + $0x8dc] sm:$0xff] 0
        %2880 = vst [vmem:[#allocation2 + $0x8e4] sm:$0xff] 0
        %2881 = vst [vmem:[#allocation2 + $0x8ec] sm:$0xff] 0
        %2882 = vst [vmem:[#allocation2 + $0x8f4] sm:$0xff] 0
        %2883 = vst [vmem:[#allocation2 + $0x8fc] sm:$0xf] 0
        %v2914 = vunpack.c.l.b16 %v2532
        %v2915 = vunpack.c.h.b16 %v2532
        %v2916 = vunpack.c.l.b16 %v2533
        %v2917 = vunpack.c.h.b16 %v2533
        %v2918 = vunpack.c.l.b16 %v2534
        %v2919 = vunpack.c.h.b16 %v2534
        %v2920 = vunpack.c.l.b16 %v2535
        %v2921 = vunpack.c.h.b16 %v2535
        %v2922 = vunpack.c.l.b16 %v2536
        %v2923 = vunpack.c.h.b16 %v2536
        %v2924 = vunpack.c.l.b16 %v2537
        %v2925 = vunpack.c.h.b16 %v2537
        %v2926 = vunpack.c.l.b16 %v2538
        %v2927 = vunpack.c.h.b16 %v2538
        %v2928 = vunpack.c.l.b16 %v2539
        %v2929 = vunpack.c.h.b16 %v2539
        %v2930 = vunpack.c.l.b16 %v2540
        %v2931 = vunpack.c.h.b16 %v2540
        %v2932 = vunpack.c.l.b16 %v2541
        %v2933 = vunpack.c.h.b16 %v2541
        %v2934 = vunpack.c.l.b16 %v2542
        %v2935 = vunpack.c.h.b16 %v2542
        %v2936 = vunpack.c.l.b16 %v2543
        %v2937 = vunpack.c.h.b16 %v2543
        %v2938 = vunpack.c.l.b16 %v2544
        %v2939 = vunpack.c.h.b16 %v2544
        %v2940 = vunpack.c.l.b16 %v2545
        %v2941 = vunpack.c.h.b16 %v2545
        %v2942 = vunpack.c.l.b16 %v2546
        %v2943 = vunpack.c.h.b16 %v2546
        %v2944 = vunpack.c.l.b16 %v2548
        %v2945 = vunpack.c.h.b16 %v2548
        %v2946 = vunpack.c.l.b16 %v2549
        %v2947 = vunpack.c.h.b16 %v2549
        %v2948 = vunpack.c.l.b16 %v2550
        %v2949 = vunpack.c.h.b16 %v2550
        %v2950 = vunpack.c.l.b16 %v2551
        %v2951 = vunpack.c.h.b16 %v2551
        %v2952 = vunpack.c.l.b16 %v2552
        %v2953 = vunpack.c.h.b16 %v2552
        %v2954 = vunpack.c.l.b16 %v2553
        %v2955 = vunpack.c.h.b16 %v2553
        %v2956 = vunpack.c.l.b16 %v2554
        %v2957 = vunpack.c.h.b16 %v2554
        %v2958 = vunpack.c.l.b16 %v2555
        %v2959 = vunpack.c.h.b16 %v2555
        %v2960 = vunpack.c.l.b16 %v2556
        %v2961 = vunpack.c.h.b16 %v2556
        %v2962 = vunpack.c.l.b16 %v2557
        %v2963 = vunpack.c.h.b16 %v2557
        %v2964 = vunpack.c.l.b16 %v2558
        %v2965 = vunpack.c.h.b16 %v2558
        %v2966 = vunpack.c.l.b16 %v2559
        %v2967 = vunpack.c.h.b16 %v2559
        %v2968 = vunpack.c.l.b16 %v2560
        %v2969 = vunpack.c.h.b16 %v2560
        %v2970 = vunpack.c.l.b16 %v2561
        %v2971 = vunpack.c.h.b16 %v2561
        %v2972 = vunpack.c.l.b16 %v2562
        %v2973 = vunpack.c.h.b16 %v2562
        %v2974 = vpack.c.b16 %v2914, %v2914
        %v2975 = vpack.c.b16 %v2915, %v2915
        %v2976 = vpack.c.b16 %v2916, %v2916
        %v2977 = vpack.c.b16 %v2917, %v2917
        %v2978 = vpack.c.b16 %v2918, %v2918
        %v2979 = vpack.c.b16 %v2919, %v2919
        %v2980 = vpack.c.b16 %v2920, %v2920
        %v2981 = vpack.c.b16 %v2921, %v2921
        %v2982 = vpack.c.b16 %v2922, %v2922
        %v2983 = vpack.c.b16 %v2923, %v2923
        %v2984 = vpack.c.b16 %v2924, %v2924
        %v2985 = vpack.c.b16 %v2925, %v2925
        %v2986 = vpack.c.b16 %v2926, %v2926
        %v2987 = vpack.c.b16 %v2927, %v2927
        %v2988 = vpack.c.b16 %v2928, %v2928
        %v2989 = vpack.c.b16 %v2929, %v2929
        %v2990 = vpack.c.b16 %v2930, %v2930
        %v2991 = vpack.c.b16 %v2931, %v2931
        %v2992 = vpack.c.b16 %v2932, %v2932
        %v2993 = vpack.c.b16 %v2933, %v2933
        %v2994 = vpack.c.b16 %v2934, %v2934
        %v2995 = vpack.c.b16 %v2935, %v2935
        %v2996 = vpack.c.b16 %v2936, %v2936
        %v2997 = vpack.c.b16 %v2937, %v2937
        %v2998 = vpack.c.b16 %v2938, %v2938
        %v2999 = vpack.c.b16 %v2939, %v2939
        %v3000 = vpack.c.b16 %v2940, %v2940
        %v3001 = vpack.c.b16 %v2941, %v2941
        %v3002 = vpack.c.b16 %v2942, %v2942
        %v3003 = vpack.c.b16 %v2943, %v2943
        %v3004 = vpack.c.b16 %v2944, %v2944
        %v3005 = vpack.c.b16 %v2945, %v2945
        %v3006 = vpack.c.b16 %v2946, %v2946
        %v3007 = vpack.c.b16 %v2947, %v2947
        %v3008 = vpack.c.b16 %v2948, %v2948
        %v3009 = vpack.c.b16 %v2949, %v2949
        %v3010 = vpack.c.b16 %v2950, %v2950
        %v3011 = vpack.c.b16 %v2951, %v2951
        %v3012 = vpack.c.b16 %v2952, %v2952
        %v3013 = vpack.c.b16 %v2953, %v2953
        %v3014 = vpack.c.b16 %v2954, %v2954
        %v3015 = vpack.c.b16 %v2955, %v2955
        %v3016 = vpack.c.b16 %v2956, %v2956
        %v3017 = vpack.c.b16 %v2957, %v2957
        %v3018 = vpack.c.b16 %v2958, %v2958
        %v3019 = vpack.c.b16 %v2959, %v2959
        %v3020 = vpack.c.b16 %v2960, %v2960
        %v3021 = vpack.c.b16 %v2961, %v2961
        %v3022 = vpack.c.b16 %v2962, %v2962
        %v3023 = vpack.c.b16 %v2963, %v2963
        %v3024 = vpack.c.b16 %v2964, %v2964
        %v3025 = vpack.c.b16 %v2965, %v2965
        %v3026 = vpack.c.b16 %v2966, %v2966
        %v3027 = vpack.c.b16 %v2967, %v2967
        %v3028 = vpack.c.b16 %v2968, %v2968
        %v3029 = vpack.c.b16 %v2969, %v2969
        %v3030 = vpack.c.b16 %v2970, %v2970
        %v3031 = vpack.c.b16 %v2971, %v2971
        %v3032 = vpack.c.b16 %v2972, %v2972
        %v3033 = vpack.c.b16 %v2973, %v2973
        %vm3034 = vsmask.f32 256
        %vm3035 = vsmask.f32 4368
        %vm3036 = vmor %vm3034, %vm3035
        %v3038 = vshrl.u32 %v2974, 16
        %v3040 = vrot.slane %v3038, 7
        %v3041 = vshll.u32 %v2974, 16
        %v3043 = vor.u32 %v3040, %v3041
        %v3044 = vrot.slane %v3040, 4
        %v3046 = vshrl.u32 %v2975, 16
        %v3048 = vrot.slane %v3046, 7
        %v3049 = vshll.u32 %v2975, 16
        %v3051 = vor.u32 %v3048, %v3049
        %v3052 = vsel %vm3036, %v3044, %v3051
        %v3053 = vrot.slane %v3048, 4
        %v3055 = vshrl.u32 %v2976, 16
        %v3057 = vrot.slane %v3055, 7
        %v3058 = vshll.u32 %v2976, 16
        %v3060 = vor.u32 %v3057, %v3058
        %v3061 = vsel %vm3036, %v3053, %v3060
        %v3062 = vrot.slane %v3057, 4
        %v3064 = vshrl.u32 %v2977, 16
        %v3066 = vrot.slane %v3064, 7
        %v3067 = vshll.u32 %v2977, 16
        %v3069 = vor.u32 %v3066, %v3067
        %v3070 = vsel %vm3036, %v3062, %v3069
        %v3071 = vrot.slane %v3066, 4
        %v3073 = vshrl.u32 %v2978, 16
        %v3075 = vrot.slane %v3073, 7
        %v3076 = vshll.u32 %v2978, 16
        %v3078 = vor.u32 %v3075, %v3076
        %v3079 = vsel %vm3036, %v3071, %v3078
        %v3080 = vrot.slane %v3075, 4
        %v3082 = vshrl.u32 %v2979, 16
        %v3084 = vrot.slane %v3082, 7
        %v3085 = vshll.u32 %v2979, 16
        %v3087 = vor.u32 %v3084, %v3085
        %v3088 = vsel %vm3036, %v3080, %v3087
        %v3089 = vrot.slane %v3084, 4
        %v3091 = vshrl.u32 %v2980, 16
        %v3093 = vrot.slane %v3091, 7
        %v3094 = vshll.u32 %v2980, 16
        %v3096 = vor.u32 %v3093, %v3094
        %v3097 = vsel %vm3036, %v3089, %v3096
        %v3098 = vrot.slane %v3093, 4
        %v3100 = vshrl.u32 %v2981, 16
        %v3102 = vrot.slane %v3100, 7
        %v3103 = vshll.u32 %v2981, 16
        %v3105 = vor.u32 %v3102, %v3103
        %v3106 = vsel %vm3036, %v3098, %v3105
        %v3107 = vrot.slane %v3102, 4
        %v3109 = vshrl.u32 %v2982, 16
        %v3111 = vrot.slane %v3109, 7
        %v3112 = vshll.u32 %v2982, 16
        %v3114 = vor.u32 %v3111, %v3112
        %v3115 = vsel %vm3036, %v3107, %v3114
        %v3116 = vrot.slane %v3111, 4
        %v3118 = vshrl.u32 %v2983, 16
        %v3120 = vrot.slane %v3118, 7
        %v3121 = vshll.u32 %v2983, 16
        %v3123 = vor.u32 %v3120, %v3121
        %v3124 = vsel %vm3036, %v3116, %v3123
        %v3125 = vrot.slane %v3120, 4
        %v3127 = vshrl.u32 %v2984, 16
        %v3129 = vrot.slane %v3127, 7
        %v3130 = vshll.u32 %v2984, 16
        %v3132 = vor.u32 %v3129, %v3130
        %v3133 = vsel %vm3036, %v3125, %v3132
        %v3134 = vrot.slane %v3129, 4
        %v3136 = vshrl.u32 %v2985, 16
        %v3138 = vrot.slane %v3136, 7
        %v3139 = vshll.u32 %v2985, 16
        %v3141 = vor.u32 %v3138, %v3139
        %v3142 = vsel %vm3036, %v3134, %v3141
        %v3143 = vrot.slane %v3138, 4
        %v3145 = vshrl.u32 %v2986, 16
        %v3147 = vrot.slane %v3145, 7
        %v3148 = vshll.u32 %v2986, 16
        %v3150 = vor.u32 %v3147, %v3148
        %v3151 = vsel %vm3036, %v3143, %v3150
        %v3152 = vrot.slane %v3147, 4
        %v3154 = vshrl.u32 %v2987, 16
        %v3156 = vrot.slane %v3154, 7
        %v3157 = vshll.u32 %v2987, 16
        %v3159 = vor.u32 %v3156, %v3157
        %v3160 = vsel %vm3036, %v3152, %v3159
        %v3161 = vrot.slane %v3156, 4
        %v3163 = vshrl.u32 %v2988, 16
        %v3165 = vrot.slane %v3163, 7
        %v3166 = vshll.u32 %v2988, 16
        %v3168 = vor.u32 %v3165, %v3166
        %v3169 = vsel %vm3036, %v3161, %v3168
        %v3170 = vrot.slane %v3165, 4
        %v3172 = vshrl.u32 %v2989, 16
        %v3174 = vrot.slane %v3172, 7
        %v3175 = vshll.u32 %v2989, 16
        %v3177 = vor.u32 %v3174, %v3175
        %v3178 = vsel %vm3036, %v3170, %v3177
        %v3179 = vrot.slane %v3174, 4
        %v3181 = vshrl.u32 %v2990, 16
        %v3183 = vrot.slane %v3181, 7
        %v3184 = vshll.u32 %v2990, 16
        %v3186 = vor.u32 %v3183, %v3184
        %v3187 = vsel %vm3036, %v3179, %v3186
        %v3188 = vrot.slane %v3183, 4
        %v3190 = vshrl.u32 %v2991, 16
        %v3192 = vrot.slane %v3190, 7
        %v3193 = vshll.u32 %v2991, 16
        %v3195 = vor.u32 %v3192, %v3193
        %v3196 = vsel %vm3036, %v3188, %v3195
        %v3197 = vrot.slane %v3192, 4
        %v3199 = vshrl.u32 %v2992, 16
        %v3201 = vrot.slane %v3199, 7
        %v3202 = vshll.u32 %v2992, 16
        %v3204 = vor.u32 %v3201, %v3202
        %v3205 = vsel %vm3036, %v3197, %v3204
        %v3206 = vrot.slane %v3201, 4
        %v3208 = vshrl.u32 %v2993, 16
        %v3210 = vrot.slane %v3208, 7
        %v3211 = vshll.u32 %v2993, 16
        %v3213 = vor.u32 %v3210, %v3211
        %v3214 = vsel %vm3036, %v3206, %v3213
        %v3215 = vrot.slane %v3210, 4
        %v3217 = vshrl.u32 %v2994, 16
        %v3219 = vrot.slane %v3217, 7
        %v3220 = vshll.u32 %v2994, 16
        %v3222 = vor.u32 %v3219, %v3220
        %v3223 = vsel %vm3036, %v3215, %v3222
        %v3224 = vrot.slane %v3219, 4
        %v3226 = vshrl.u32 %v2995, 16
        %v3228 = vrot.slane %v3226, 7
        %v3229 = vshll.u32 %v2995, 16
        %v3231 = vor.u32 %v3228, %v3229
        %v3232 = vsel %vm3036, %v3224, %v3231
        %v3233 = vrot.slane %v3228, 4
        %v3235 = vshrl.u32 %v2996, 16
        %v3237 = vrot.slane %v3235, 7
        %v3238 = vshll.u32 %v2996, 16
        %v3240 = vor.u32 %v3237, %v3238
        %v3241 = vsel %vm3036, %v3233, %v3240
        %v3242 = vrot.slane %v3237, 4
        %v3244 = vshrl.u32 %v2997, 16
        %v3246 = vrot.slane %v3244, 7
        %v3247 = vshll.u32 %v2997, 16
        %v3249 = vor.u32 %v3246, %v3247
        %v3250 = vsel %vm3036, %v3242, %v3249
        %v3251 = vrot.slane %v3246, 4
        %v3253 = vshrl.u32 %v2998, 16
        %v3255 = vrot.slane %v3253, 7
        %v3256 = vshll.u32 %v2998, 16
        %v3258 = vor.u32 %v3255, %v3256
        %v3259 = vsel %vm3036, %v3251, %v3258
        %v3260 = vrot.slane %v3255, 4
        %v3262 = vshrl.u32 %v2999, 16
        %v3264 = vrot.slane %v3262, 7
        %v3265 = vshll.u32 %v2999, 16
        %v3267 = vor.u32 %v3264, %v3265
        %v3268 = vsel %vm3036, %v3260, %v3267
        %v3269 = vrot.slane %v3264, 4
        %v3271 = vshrl.u32 %v3000, 16
        %v3273 = vrot.slane %v3271, 7
        %v3274 = vshll.u32 %v3000, 16
        %v3276 = vor.u32 %v3273, %v3274
        %v3277 = vsel %vm3036, %v3269, %v3276
        %v3278 = vrot.slane %v3273, 4
        %v3280 = vshrl.u32 %v3001, 16
        %v3282 = vrot.slane %v3280, 7
        %v3283 = vshll.u32 %v3001, 16
        %v3285 = vor.u32 %v3282, %v3283
        %v3286 = vsel %vm3036, %v3278, %v3285
        %v3287 = vrot.slane %v3282, 4
        %v3289 = vshrl.u32 %v3002, 16
        %v3291 = vrot.slane %v3289, 7
        %v3292 = vshll.u32 %v3002, 16
        %v3294 = vor.u32 %v3291, %v3292
        %v3295 = vsel %vm3036, %v3287, %v3294
        %v3296 = vrot.slane %v3291, 4
        %v3298 = vshrl.u32 %v3003, 16
        %v3300 = vrot.slane %v3298, 7
        %v3301 = vshll.u32 %v3003, 16
        %v3303 = vor.u32 %v3300, %v3301
        %v3304 = vsel %vm3036, %v3296, %v3303
        %v3306 = vshrl.u32 %v3004, 16
        %v3308 = vrot.slane %v3306, 7
        %v3309 = vshll.u32 %v3004, 16
        %v3311 = vor.u32 %v3308, %v3309
        %v3312 = vrot.slane %v3308, 4
        %v3314 = vshrl.u32 %v3005, 16
        %v3316 = vrot.slane %v3314, 7
        %v3317 = vshll.u32 %v3005, 16
        %v3319 = vor.u32 %v3316, %v3317
        %v3320 = vsel %vm3036, %v3312, %v3319
        %v3321 = vrot.slane %v3316, 4
        %v3323 = vshrl.u32 %v3006, 16
        %v3325 = vrot.slane %v3323, 7
        %v3326 = vshll.u32 %v3006, 16
        %v3328 = vor.u32 %v3325, %v3326
        %v3329 = vsel %vm3036, %v3321, %v3328
        %v3330 = vrot.slane %v3325, 4
        %v3332 = vshrl.u32 %v3007, 16
        %v3334 = vrot.slane %v3332, 7
        %v3335 = vshll.u32 %v3007, 16
        %v3337 = vor.u32 %v3334, %v3335
        %v3338 = vsel %vm3036, %v3330, %v3337
        %v3339 = vrot.slane %v3334, 4
        %v3341 = vshrl.u32 %v3008, 16
        %v3343 = vrot.slane %v3341, 7
        %v3344 = vshll.u32 %v3008, 16
        %v3346 = vor.u32 %v3343, %v3344
        %v3347 = vsel %vm3036, %v3339, %v3346
        %v3348 = vrot.slane %v3343, 4
        %v3350 = vshrl.u32 %v3009, 16
        %v3352 = vrot.slane %v3350, 7
        %v3353 = vshll.u32 %v3009, 16
        %v3355 = vor.u32 %v3352, %v3353
        %v3356 = vsel %vm3036, %v3348, %v3355
        %v3357 = vrot.slane %v3352, 4
        %v3359 = vshrl.u32 %v3010, 16
        %v3361 = vrot.slane %v3359, 7
        %v3362 = vshll.u32 %v3010, 16
        %v3364 = vor.u32 %v3361, %v3362
        %v3365 = vsel %vm3036, %v3357, %v3364
        %v3366 = vrot.slane %v3361, 4
        %v3368 = vshrl.u32 %v3011, 16
        %v3370 = vrot.slane %v3368, 7
        %v3371 = vshll.u32 %v3011, 16
        %v3373 = vor.u32 %v3370, %v3371
        %v3374 = vsel %vm3036, %v3366, %v3373
        %v3375 = vrot.slane %v3370, 4
        %v3377 = vshrl.u32 %v3012, 16
        %v3379 = vrot.slane %v3377, 7
        %v3380 = vshll.u32 %v3012, 16
        %v3382 = vor.u32 %v3379, %v3380
        %v3383 = vsel %vm3036, %v3375, %v3382
        %v3384 = vrot.slane %v3379, 4
        %v3386 = vshrl.u32 %v3013, 16
        %v3388 = vrot.slane %v3386, 7
        %v3389 = vshll.u32 %v3013, 16
        %v3391 = vor.u32 %v3388, %v3389
        %v3392 = vsel %vm3036, %v3384, %v3391
        %v3393 = vrot.slane %v3388, 4
        %v3395 = vshrl.u32 %v3014, 16
        %v3397 = vrot.slane %v3395, 7
        %v3398 = vshll.u32 %v3014, 16
        %v3400 = vor.u32 %v3397, %v3398
        %v3401 = vsel %vm3036, %v3393, %v3400
        %v3402 = vrot.slane %v3397, 4
        %v3404 = vshrl.u32 %v3015, 16
        %v3406 = vrot.slane %v3404, 7
        %v3407 = vshll.u32 %v3015, 16
        %v3409 = vor.u32 %v3406, %v3407
        %v3410 = vsel %vm3036, %v3402, %v3409
        %v3411 = vrot.slane %v3406, 4
        %v3413 = vshrl.u32 %v3016, 16
        %v3415 = vrot.slane %v3413, 7
        %v3416 = vshll.u32 %v3016, 16
        %v3418 = vor.u32 %v3415, %v3416
        %v3419 = vsel %vm3036, %v3411, %v3418
        %v3420 = vrot.slane %v3415, 4
        %v3422 = vshrl.u32 %v3017, 16
        %v3424 = vrot.slane %v3422, 7
        %v3425 = vshll.u32 %v3017, 16
        %v3427 = vor.u32 %v3424, %v3425
        %v3428 = vsel %vm3036, %v3420, %v3427
        %v3429 = vrot.slane %v3424, 4
        %v3431 = vshrl.u32 %v3018, 16
        %v3433 = vrot.slane %v3431, 7
        %v3434 = vshll.u32 %v3018, 16
        %v3436 = vor.u32 %v3433, %v3434
        %v3437 = vsel %vm3036, %v3429, %v3436
        %v3438 = vrot.slane %v3433, 4
        %v3440 = vshrl.u32 %v3019, 16
        %v3442 = vrot.slane %v3440, 7
        %v3443 = vshll.u32 %v3019, 16
        %v3445 = vor.u32 %v3442, %v3443
        %v3446 = vsel %vm3036, %v3438, %v3445
        %v3447 = vrot.slane %v3442, 4
        %v3449 = vshrl.u32 %v3020, 16
        %v3451 = vrot.slane %v3449, 7
        %v3452 = vshll.u32 %v3020, 16
        %v3454 = vor.u32 %v3451, %v3452
        %v3455 = vsel %vm3036, %v3447, %v3454
        %v3456 = vrot.slane %v3451, 4
        %v3458 = vshrl.u32 %v3021, 16
        %v3460 = vrot.slane %v3458, 7
        %v3461 = vshll.u32 %v3021, 16
        %v3463 = vor.u32 %v3460, %v3461
        %v3464 = vsel %vm3036, %v3456, %v3463
        %v3465 = vrot.slane %v3460, 4
        %v3467 = vshrl.u32 %v3022, 16
        %v3469 = vrot.slane %v3467, 7
        %v3470 = vshll.u32 %v3022, 16
        %v3472 = vor.u32 %v3469, %v3470
        %v3473 = vsel %vm3036, %v3465, %v3472
        %v3474 = vrot.slane %v3469, 4
        %v3476 = vshrl.u32 %v3023, 16
        %v3478 = vrot.slane %v3476, 7
        %v3479 = vshll.u32 %v3023, 16
        %v3481 = vor.u32 %v3478, %v3479
        %v3482 = vsel %vm3036, %v3474, %v3481
        %v3483 = vrot.slane %v3478, 4
        %v3485 = vshrl.u32 %v3024, 16
        %v3487 = vrot.slane %v3485, 7
        %v3488 = vshll.u32 %v3024, 16
        %v3490 = vor.u32 %v3487, %v3488
        %v3491 = vsel %vm3036, %v3483, %v3490
        %v3492 = vrot.slane %v3487, 4
        %v3494 = vshrl.u32 %v3025, 16
        %v3496 = vrot.slane %v3494, 7
        %v3497 = vshll.u32 %v3025, 16
        %v3499 = vor.u32 %v3496, %v3497
        %v3500 = vsel %vm3036, %v3492, %v3499
        %v3501 = vrot.slane %v3496, 4
        %v3503 = vshrl.u32 %v3026, 16
        %v3505 = vrot.slane %v3503, 7
        %v3506 = vshll.u32 %v3026, 16
        %v3508 = vor.u32 %v3505, %v3506
        %v3509 = vsel %vm3036, %v3501, %v3508
        %v3510 = vrot.slane %v3505, 4
        %v3512 = vshrl.u32 %v3027, 16
        %v3514 = vrot.slane %v3512, 7
        %v3515 = vshll.u32 %v3027, 16
        %v3517 = vor.u32 %v3514, %v3515
        %v3518 = vsel %vm3036, %v3510, %v3517
        %v3519 = vrot.slane %v3514, 4
        %v3521 = vshrl.u32 %v3028, 16
        %v3523 = vrot.slane %v3521, 7
        %v3524 = vshll.u32 %v3028, 16
        %v3526 = vor.u32 %v3523, %v3524
        %v3527 = vsel %vm3036, %v3519, %v3526
        %v3528 = vrot.slane %v3523, 4
        %v3530 = vshrl.u32 %v3029, 16
        %v3532 = vrot.slane %v3530, 7
        %v3533 = vshll.u32 %v3029, 16
        %v3535 = vor.u32 %v3532, %v3533
        %v3536 = vsel %vm3036, %v3528, %v3535
        %v3537 = vrot.slane %v3532, 4
        %v3539 = vshrl.u32 %v3030, 16
        %v3541 = vrot.slane %v3539, 7
        %v3542 = vshll.u32 %v3030, 16
        %v3544 = vor.u32 %v3541, %v3542
        %v3545 = vsel %vm3036, %v3537, %v3544
        %v3546 = vrot.slane %v3541, 4
        %v3548 = vshrl.u32 %v3031, 16
        %v3550 = vrot.slane %v3548, 7
        %v3551 = vshll.u32 %v3031, 16
        %v3553 = vor.u32 %v3550, %v3551
        %v3554 = vsel %vm3036, %v3546, %v3553
        %v3555 = vrot.slane %v3550, 4
        %v3557 = vshrl.u32 %v3032, 16
        %v3559 = vrot.slane %v3557, 7
        %v3560 = vshll.u32 %v3032, 16
        %v3562 = vor.u32 %v3559, %v3560
        %v3563 = vsel %vm3036, %v3555, %v3562
        %v3564 = vrot.slane %v3559, 4
        %v3566 = vshrl.u32 %v3033, 16
        %v3568 = vrot.slane %v3566, 7
        %v3569 = vshll.u32 %v3033, 16
        %v3571 = vor.u32 %v3568, %v3569
        %v3572 = vsel %vm3036, %v3564, %v3571
        %vm3633 = vcmask 257024
        %vm3634 = vsmask.f32 7938
        %vm3635 = vmand %vm3633, %vm3634
        %v3636 = vld [vmem:[#allocation2 + $0x48] sm:$0xf]
        %v3637 = vsel %vm3635, %v3043, %v3636
        %3638 = vst [vmem:[#allocation2 + $0x48] sm:$0xf] %v3637
        %vm3639 = vcmask 257024
        %3640 = vst.msk [vmem:[#allocation2 + $0x6c] sm:$0xf] %vm3639, %v3052
        %3641 = vst.msk [vmem:[#allocation2 + $0x90] sm:$0xf] %vm3639, %v3061
        %3642 = vst.msk [vmem:[#allocation2 + $0xb4] sm:$0xf] %vm3639, %v3070
        %3643 = vst.msk [vmem:[#allocation2 + $0xd8] sm:$0xf] %vm3639, %v3079
        %3644 = vst.msk [vmem:[#allocation2 + $0xfc] sm:$0xf] %vm3639, %v3088
        %3645 = vst.msk [vmem:[#allocation2 + $0x120] sm:$0xf] %vm3639, %v3097
        %3646 = vst.msk [vmem:[#allocation2 + $0x144] sm:$0xf] %vm3639, %v3106
        %3647 = vst.msk [vmem:[#allocation2 + $0x168] sm:$0xf] %vm3639, %v3115
        %3648 = vst.msk [vmem:[#allocation2 + $0x18c] sm:$0xf] %vm3639, %v3124
        %3649 = vst.msk [vmem:[#allocation2 + $0x1b0] sm:$0xf] %vm3639, %v3133
        %3650 = vst.msk [vmem:[#allocation2 + $0x1d4] sm:$0xf] %vm3639, %v3142
        %3651 = vst.msk [vmem:[#allocation2 + $0x1f8] sm:$0xf] %vm3639, %v3151
        %3652 = vst.msk [vmem:[#allocation2 + $0x21c] sm:$0xf] %vm3639, %v3160
        %3653 = vst.msk [vmem:[#allocation2 + $0x240] sm:$0xf] %vm3639, %v3169
        %3654 = vst.msk [vmem:[#allocation2 + $0x264] sm:$0xf] %vm3639, %v3178
        %3655 = vst.msk [vmem:[#allocation2 + $0x288] sm:$0xf] %vm3639, %v3187
        %3656 = vst.msk [vmem:[#allocation2 + $0x2ac] sm:$0xf] %vm3639, %v3196
        %3657 = vst.msk [vmem:[#allocation2 + $0x2d0] sm:$0xf] %vm3639, %v3205
        %3658 = vst.msk [vmem:[#allocation2 + $0x2f4] sm:$0xf] %vm3639, %v3214
        %3659 = vst.msk [vmem:[#allocation2 + $0x318] sm:$0xf] %vm3639, %v3223
        %3660 = vst.msk [vmem:[#allocation2 + $0x33c] sm:$0xf] %vm3639, %v3232
        %3661 = vst.msk [vmem:[#allocation2 + $0x360] sm:$0xf] %vm3639, %v3241
        %3662 = vst.msk [vmem:[#allocation2 + $0x384] sm:$0xf] %vm3639, %v3250
        %3663 = vst.msk [vmem:[#allocation2 + $0x3a8] sm:$0xf] %vm3639, %v3259
        %3664 = vst.msk [vmem:[#allocation2 + $0x3cc] sm:$0xf] %vm3639, %v3268
        %3665 = vst.msk [vmem:[#allocation2 + $0x3f0] sm:$0xf] %vm3639, %v3277
        %3666 = vst.msk [vmem:[#allocation2 + $0x414] sm:$0xf] %vm3639, %v3286
        %3667 = vst.msk [vmem:[#allocation2 + $0x438] sm:$0xf] %vm3639, %v3295
        %3668 = vst.msk [vmem:[#allocation2 + $0x45c] sm:$0xf] %vm3639, %v3304
        %v3669 = vld [vmem:[#allocation2 + $0x4c8] sm:$0xf]
        %v3670 = vsel %vm3635, %v3311, %v3669
        %3671 = vst [vmem:[#allocation2 + $0x4c8] sm:$0xf] %v3670
        %3672 = vst.msk [vmem:[#allocation2 + $0x4ec] sm:$0xf] %vm3639, %v3320
        %3673 = vst.msk [vmem:[#allocation2 + $0x510] sm:$0xf] %vm3639, %v3329
        %3674 = vst.msk [vmem:[#allocation2 + $0x534] sm:$0xf] %vm3639, %v3338
        %3675 = vst.msk [vmem:[#allocation2 + $0x558] sm:$0xf] %vm3639, %v3347
        %3676 = vst.msk [vmem:[#allocation2 + $0x57c] sm:$0xf] %vm3639, %v3356
        %3677 = vst.msk [vmem:[#allocation2 + $0x5a0] sm:$0xf] %vm3639, %v3365
        %3678 = vst.msk [vmem:[#allocation2 + $0x5c4] sm:$0xf] %vm3639, %v3374
        %3679 = vst.msk [vmem:[#allocation2 + $0x5e8] sm:$0xf] %vm3639, %v3383
        %3680 = vst.msk [vmem:[#allocation2 + $0x60c] sm:$0xf] %vm3639, %v3392
        %3681 = vst.msk [vmem:[#allocation2 + $0x630] sm:$0xf] %vm3639, %v3401
        %3682 = vst.msk [vmem:[#allocation2 + $0x654] sm:$0xf] %vm3639, %v3410
        %3683 = vst.msk [vmem:[#allocation2 + $0x678] sm:$0xf] %vm3639, %v3419
        %3684 = vst.msk [vmem:[#allocation2 + $0x69c] sm:$0xf] %vm3639, %v3428
        %3685 = vst.msk [vmem:[#allocation2 + $0x6c0] sm:$0xf] %vm3639, %v3437
        %3686 = vst.msk [vmem:[#allocation2 + $0x6e4] sm:$0xf] %vm3639, %v3446
        %3687 = vst.msk [vmem:[#allocation2 + $0x708] sm:$0xf] %vm3639, %v3455
        %3688 = vst.msk [vmem:[#allocation2 + $0x72c] sm:$0xf] %vm3639, %v3464
        %3689 = vst.msk [vmem:[#allocation2 + $0x750] sm:$0xf] %vm3639, %v3473
        %3690 = vst.msk [vmem:[#allocation2 + $0x774] sm:$0xf] %vm3639, %v3482
        %3691 = vst.msk [vmem:[#allocation2 + $0x798] sm:$0xf] %vm3639, %v3491
        %3692 = vst.msk [vmem:[#allocation2 + $0x7bc] sm:$0xf] %vm3639, %v3500
        %3693 = vst.msk [vmem:[#allocation2 + $0x7e0] sm:$0xf] %vm3639, %v3509
        %3694 = vst.msk [vmem:[#allocation2 + $0x804] sm:$0xf] %vm3639, %v3518
        %3695 = vst.msk [vmem:[#allocation2 + $0x828] sm:$0xf] %vm3639, %v3527
        %3696 = vst.msk [vmem:[#allocation2 + $0x84c] sm:$0xf] %vm3639, %v3536
        %3697 = vst.msk [vmem:[#allocation2 + $0x870] sm:$0xf] %vm3639, %v3545
        %3698 = vst.msk [vmem:[#allocation2 + $0x894] sm:$0xf] %vm3639, %v3554
        %3699 = vst.msk [vmem:[#allocation2 + $0x8b8] sm:$0xf] %vm3639, %v3563
        %3700 = vst.msk [vmem:[#allocation2 + $0x8dc] sm:$0xf] %vm3639, %v3572
        %v3731 = vunpack.c.l.b16 %v1603
        %v3732 = vunpack.c.h.b16 %v1603
        %v3733 = vunpack.c.l.b16 %v1604
        %v3734 = vunpack.c.h.b16 %v1604
        %v3735 = vunpack.c.l.b16 %v1605
        %v3736 = vunpack.c.h.b16 %v1605
        %v3737 = vunpack.c.l.b16 %v1606
        %v3738 = vunpack.c.h.b16 %v1606
        %v3739 = vunpack.c.l.b16 %v1607
        %v3740 = vunpack.c.h.b16 %v1607
        %v3741 = vunpack.c.l.b16 %v1608
        %v3742 = vunpack.c.h.b16 %v1608
        %v3743 = vunpack.c.l.b16 %v1609
        %v3744 = vunpack.c.h.b16 %v1609
        %v3745 = vunpack.c.l.b16 %v1610
        %v3746 = vunpack.c.h.b16 %v1610
        %v3747 = vunpack.c.l.b16 %v1611
        %v3748 = vunpack.c.h.b16 %v1611
        %v3749 = vunpack.c.l.b16 %v1612
        %v3750 = vunpack.c.h.b16 %v1612
        %v3751 = vunpack.c.l.b16 %v1613
        %v3752 = vunpack.c.h.b16 %v1613
        %v3753 = vunpack.c.l.b16 %v1614
        %v3754 = vunpack.c.h.b16 %v1614
        %v3755 = vunpack.c.l.b16 %v1615
        %v3756 = vunpack.c.h.b16 %v1615
        %v3757 = vunpack.c.l.b16 %v1616
        %v3758 = vunpack.c.h.b16 %v1616
        %v3759 = vunpack.c.l.b16 %v1617
        %v3760 = vunpack.c.h.b16 %v1617
        %v3761 = vunpack.c.l.b16 %v1619
        %v3762 = vunpack.c.h.b16 %v1619
        %v3763 = vunpack.c.l.b16 %v1620
        %v3764 = vunpack.c.h.b16 %v1620
        %v3765 = vunpack.c.l.b16 %v1621
        %v3766 = vunpack.c.h.b16 %v1621
        %v3767 = vunpack.c.l.b16 %v1622
        %v3768 = vunpack.c.h.b16 %v1622
        %v3769 = vunpack.c.l.b16 %v1623
        %v3770 = vunpack.c.h.b16 %v1623
        %v3771 = vunpack.c.l.b16 %v1624
        %v3772 = vunpack.c.h.b16 %v1624
        %v3773 = vunpack.c.l.b16 %v1625
        %v3774 = vunpack.c.h.b16 %v1625
        %v3775 = vunpack.c.l.b16 %v1626
        %v3776 = vunpack.c.h.b16 %v1626
        %v3777 = vunpack.c.l.b16 %v1627
        %v3778 = vunpack.c.h.b16 %v1627
        %v3779 = vunpack.c.l.b16 %v1628
        %v3780 = vunpack.c.h.b16 %v1628
        %v3781 = vunpack.c.l.b16 %v1629
        %v3782 = vunpack.c.h.b16 %v1629
        %v3783 = vunpack.c.l.b16 %v1630
        %v3784 = vunpack.c.h.b16 %v1630
        %v3785 = vunpack.c.l.b16 %v1631
        %v3786 = vunpack.c.h.b16 %v1631
        %v3787 = vunpack.c.l.b16 %v1632
        %v3788 = vunpack.c.h.b16 %v1632
        %v3789 = vunpack.c.l.b16 %v1633
        %v3790 = vunpack.c.h.b16 %v1633
        %v3791 = vpack.c.b16 %v3731, %v3731
        %v3792 = vpack.c.b16 %v3732, %v3732
        %v3793 = vpack.c.b16 %v3733, %v3733
        %v3794 = vpack.c.b16 %v3734, %v3734
        %v3795 = vpack.c.b16 %v3735, %v3735
        %v3796 = vpack.c.b16 %v3736, %v3736
        %v3797 = vpack.c.b16 %v3737, %v3737
        %v3798 = vpack.c.b16 %v3738, %v3738
        %v3799 = vpack.c.b16 %v3739, %v3739
        %v3800 = vpack.c.b16 %v3740, %v3740
        %v3801 = vpack.c.b16 %v3741, %v3741
        %v3802 = vpack.c.b16 %v3742, %v3742
        %v3803 = vpack.c.b16 %v3743, %v3743
        %v3804 = vpack.c.b16 %v3744, %v3744
        %v3805 = vpack.c.b16 %v3745, %v3745
        %v3806 = vpack.c.b16 %v3746, %v3746
        %v3807 = vpack.c.b16 %v3747, %v3747
        %v3808 = vpack.c.b16 %v3748, %v3748
        %v3809 = vpack.c.b16 %v3749, %v3749
        %v3810 = vpack.c.b16 %v3750, %v3750
        %v3811 = vpack.c.b16 %v3751, %v3751
        %v3812 = vpack.c.b16 %v3752, %v3752
        %v3813 = vpack.c.b16 %v3753, %v3753
        %v3814 = vpack.c.b16 %v3754, %v3754
        %v3815 = vpack.c.b16 %v3755, %v3755
        %v3816 = vpack.c.b16 %v3756, %v3756
        %v3817 = vpack.c.b16 %v3757, %v3757
        %v3818 = vpack.c.b16 %v3758, %v3758
        %v3819 = vpack.c.b16 %v3759, %v3759
        %v3820 = vpack.c.b16 %v3760, %v3760
        %v3821 = vpack.c.b16 %v3761, %v3761
        %v3822 = vpack.c.b16 %v3762, %v3762
        %v3823 = vpack.c.b16 %v3763, %v3763
        %v3824 = vpack.c.b16 %v3764, %v3764
        %v3825 = vpack.c.b16 %v3765, %v3765
        %v3826 = vpack.c.b16 %v3766, %v3766
        %v3827 = vpack.c.b16 %v3767, %v3767
        %v3828 = vpack.c.b16 %v3768, %v3768
        %v3829 = vpack.c.b16 %v3769, %v3769
        %v3830 = vpack.c.b16 %v3770, %v3770
        %v3831 = vpack.c.b16 %v3771, %v3771
        %v3832 = vpack.c.b16 %v3772, %v3772
        %v3833 = vpack.c.b16 %v3773, %v3773
        %v3834 = vpack.c.b16 %v3774, %v3774
        %v3835 = vpack.c.b16 %v3775, %v3775
        %v3836 = vpack.c.b16 %v3776, %v3776
        %v3837 = vpack.c.b16 %v3777, %v3777
        %v3838 = vpack.c.b16 %v3778, %v3778
        %v3839 = vpack.c.b16 %v3779, %v3779
        %v3840 = vpack.c.b16 %v3780, %v3780
        %v3841 = vpack.c.b16 %v3781, %v3781
        %v3842 = vpack.c.b16 %v3782, %v3782
        %v3843 = vpack.c.b16 %v3783, %v3783
        %v3844 = vpack.c.b16 %v3784, %v3784
        %v3845 = vpack.c.b16 %v3785, %v3785
        %v3846 = vpack.c.b16 %v3786, %v3786
        %v3847 = vpack.c.b16 %v3787, %v3787
        %v3848 = vpack.c.b16 %v3788, %v3788
        %v3849 = vpack.c.b16 %v3789, %v3789
        %v3850 = vpack.c.b16 %v3790, %v3790
        %3911 = vst.msk [vmem:[#allocation2 + $0x4c] sm:$0xf] %vm3639, %v3791
        %3912 = vst.msk [vmem:[#allocation2 + $0x70] sm:$0xf] %vm3639, %v3792
        %3913 = vst.msk [vmem:[#allocation2 + $0x94] sm:$0xf] %vm3639, %v3793
        %3914 = vst.msk [vmem:[#allocation2 + $0xb8] sm:$0xf] %vm3639, %v3794
        %3915 = vst.msk [vmem:[#allocation2 + $0xdc] sm:$0xf] %vm3639, %v3795
        %3916 = vst.msk [vmem:[#allocation2 + $0x100] sm:$0xf] %vm3639, %v3796
        %3917 = vst.msk [vmem:[#allocation2 + $0x124] sm:$0xf] %vm3639, %v3797
        %3918 = vst.msk [vmem:[#allocation2 + $0x148] sm:$0xf] %vm3639, %v3798
        %3919 = vst.msk [vmem:[#allocation2 + $0x16c] sm:$0xf] %vm3639, %v3799
        %3920 = vst.msk [vmem:[#allocation2 + $0x190] sm:$0xf] %vm3639, %v3800
        %3921 = vst.msk [vmem:[#allocation2 + $0x1b4] sm:$0xf] %vm3639, %v3801
        %3922 = vst.msk [vmem:[#allocation2 + $0x1d8] sm:$0xf] %vm3639, %v3802
        %3923 = vst.msk [vmem:[#allocation2 + $0x1fc] sm:$0xf] %vm3639, %v3803
        %3924 = vst.msk [vmem:[#allocation2 + $0x220] sm:$0xf] %vm3639, %v3804
        %3925 = vst.msk [vmem:[#allocation2 + $0x244] sm:$0xf] %vm3639, %v3805
        %3926 = vst.msk [vmem:[#allocation2 + $0x268] sm:$0xf] %vm3639, %v3806
        %3927 = vst.msk [vmem:[#allocation2 + $0x28c] sm:$0xf] %vm3639, %v3807
        %3928 = vst.msk [vmem:[#allocation2 + $0x2b0] sm:$0xf] %vm3639, %v3808
        %3929 = vst.msk [vmem:[#allocation2 + $0x2d4] sm:$0xf] %vm3639, %v3809
        %3930 = vst.msk [vmem:[#allocation2 + $0x2f8] sm:$0xf] %vm3639, %v3810
        %3931 = vst.msk [vmem:[#allocation2 + $0x31c] sm:$0xf] %vm3639, %v3811
        %3932 = vst.msk [vmem:[#allocation2 + $0x340] sm:$0xf] %vm3639, %v3812
        %3933 = vst.msk [vmem:[#allocation2 + $0x364] sm:$0xf] %vm3639, %v3813
        %3934 = vst.msk [vmem:[#allocation2 + $0x388] sm:$0xf] %vm3639, %v3814
        %3935 = vst.msk [vmem:[#allocation2 + $0x3ac] sm:$0xf] %vm3639, %v3815
        %3936 = vst.msk [vmem:[#allocation2 + $0x3d0] sm:$0xf] %vm3639, %v3816
        %3937 = vst.msk [vmem:[#allocation2 + $0x3f4] sm:$0xf] %vm3639, %v3817
        %3938 = vst.msk [vmem:[#allocation2 + $0x418] sm:$0xf] %vm3639, %v3818
        %3939 = vst.msk [vmem:[#allocation2 + $0x43c] sm:$0xf] %vm3639, %v3819
        %3940 = vst.msk [vmem:[#allocation2 + $0x460] sm:$0xf] %vm3639, %v3820
        %3941 = vst.msk [vmem:[#allocation2 + $0x4cc] sm:$0xf] %vm3639, %v3821
        %3942 = vst.msk [vmem:[#allocation2 + $0x4f0] sm:$0xf] %vm3639, %v3822
        %3943 = vst.msk [vmem:[#allocation2 + $0x514] sm:$0xf] %vm3639, %v3823
        %3944 = vst.msk [vmem:[#allocation2 + $0x538] sm:$0xf] %vm3639, %v3824
        %3945 = vst.msk [vmem:[#allocation2 + $0x55c] sm:$0xf] %vm3639, %v3825
        %3946 = vst.msk [vmem:[#allocation2 + $0x580] sm:$0xf] %vm3639, %v3826
        %3947 = vst.msk [vmem:[#allocation2 + $0x5a4] sm:$0xf] %vm3639, %v3827
        %3948 = vst.msk [vmem:[#allocation2 + $0x5c8] sm:$0xf] %vm3639, %v3828
        %3949 = vst.msk [vmem:[#allocation2 + $0x5ec] sm:$0xf] %vm3639, %v3829
        %3950 = vst.msk [vmem:[#allocation2 + $0x610] sm:$0xf] %vm3639, %v3830
        %3951 = vst.msk [vmem:[#allocation2 + $0x634] sm:$0xf] %vm3639, %v3831
        %3952 = vst.msk [vmem:[#allocation2 + $0x658] sm:$0xf] %vm3639, %v3832
        %3953 = vst.msk [vmem:[#allocation2 + $0x67c] sm:$0xf] %vm3639, %v3833
        %3954 = vst.msk [vmem:[#allocation2 + $0x6a0] sm:$0xf] %vm3639, %v3834
        %3955 = vst.msk [vmem:[#allocation2 + $0x6c4] sm:$0xf] %vm3639, %v3835
        %3956 = vst.msk [vmem:[#allocation2 + $0x6e8] sm:$0xf] %vm3639, %v3836
        %3957 = vst.msk [vmem:[#allocation2 + $0x70c] sm:$0xf] %vm3639, %v3837
        %3958 = vst.msk [vmem:[#allocation2 + $0x730] sm:$0xf] %vm3639, %v3838
        %3959 = vst.msk [vmem:[#allocation2 + $0x754] sm:$0xf] %vm3639, %v3839
        %3960 = vst.msk [vmem:[#allocation2 + $0x778] sm:$0xf] %vm3639, %v3840
        %3961 = vst.msk [vmem:[#allocation2 + $0x79c] sm:$0xf] %vm3639, %v3841
        %3962 = vst.msk [vmem:[#allocation2 + $0x7c0] sm:$0xf] %vm3639, %v3842
        %3963 = vst.msk [vmem:[#allocation2 + $0x7e4] sm:$0xf] %vm3639, %v3843
        %3964 = vst.msk [vmem:[#allocation2 + $0x808] sm:$0xf] %vm3639, %v3844
        %3965 = vst.msk [vmem:[#allocation2 + $0x82c] sm:$0xf] %vm3639, %v3845
        %3966 = vst.msk [vmem:[#allocation2 + $0x850] sm:$0xf] %vm3639, %v3846
        %3967 = vst.msk [vmem:[#allocation2 + $0x874] sm:$0xf] %vm3639, %v3847
        %3968 = vst.msk [vmem:[#allocation2 + $0x898] sm:$0xf] %vm3639, %v3848
        %3969 = vst.msk [vmem:[#allocation2 + $0x8bc] sm:$0xf] %vm3639, %v3849
        %3970 = vst.msk [vmem:[#allocation2 + $0x8e0] sm:$0xf] %vm3639, %v3850
        %v4003 = vunpack.c.l.b16 %v2276
        %v4004 = vunpack.c.h.b16 %v2276
        %v4005 = vunpack.c.l.b16 %v2277
        %v4006 = vunpack.c.h.b16 %v2277
        %v4007 = vunpack.c.l.b16 %v2278
        %v4008 = vunpack.c.h.b16 %v2278
        %v4009 = vunpack.c.l.b16 %v2279
        %v4010 = vunpack.c.h.b16 %v2279
        %v4011 = vunpack.c.l.b16 %v2280
        %v4012 = vunpack.c.h.b16 %v2280
        %v4013 = vunpack.c.l.b16 %v2281
        %v4014 = vunpack.c.h.b16 %v2281
        %v4015 = vunpack.c.l.b16 %v2282
        %v4016 = vunpack.c.h.b16 %v2282
        %v4017 = vunpack.c.l.b16 %v2283
        %v4018 = vunpack.c.h.b16 %v2283
        %v4019 = vunpack.c.l.b16 %v2284
        %v4020 = vunpack.c.h.b16 %v2284
        %v4021 = vunpack.c.l.b16 %v2285
        %v4022 = vunpack.c.h.b16 %v2285
        %v4023 = vunpack.c.l.b16 %v2286
        %v4024 = vunpack.c.h.b16 %v2286
        %v4025 = vunpack.c.l.b16 %v2287
        %v4026 = vunpack.c.h.b16 %v2287
        %v4027 = vunpack.c.l.b16 %v2288
        %v4028 = vunpack.c.h.b16 %v2288
        %v4029 = vunpack.c.l.b16 %v2289
        %v4030 = vunpack.c.h.b16 %v2289
        %v4031 = vunpack.c.l.b16 %v2290
        %v4032 = vunpack.c.h.b16 %v2290
        %v4033 = vunpack.c.l.b16 %v2291
        %v4034 = vunpack.c.l.b16 %v2292
        %v4035 = vunpack.c.h.b16 %v2292
        %v4036 = vunpack.c.l.b16 %v2293
        %v4037 = vunpack.c.h.b16 %v2293
        %v4038 = vunpack.c.l.b16 %v2294
        %v4039 = vunpack.c.h.b16 %v2294
        %v4040 = vunpack.c.l.b16 %v2295
        %v4041 = vunpack.c.h.b16 %v2295
        %v4042 = vunpack.c.l.b16 %v2296
        %v4043 = vunpack.c.h.b16 %v2296
        %v4044 = vunpack.c.l.b16 %v2297
        %v4045 = vunpack.c.h.b16 %v2297
        %v4046 = vunpack.c.l.b16 %v2298
        %v4047 = vunpack.c.h.b16 %v2298
        %v4048 = vunpack.c.l.b16 %v2299
        %v4049 = vunpack.c.h.b16 %v2299
        %v4050 = vunpack.c.l.b16 %v2300
        %v4051 = vunpack.c.h.b16 %v2300
        %v4052 = vunpack.c.l.b16 %v2301
        %v4053 = vunpack.c.h.b16 %v2301
        %v4054 = vunpack.c.l.b16 %v2302
        %v4055 = vunpack.c.h.b16 %v2302
        %v4056 = vunpack.c.l.b16 %v2303
        %v4057 = vunpack.c.h.b16 %v2303
        %v4058 = vunpack.c.l.b16 %v2304
        %v4059 = vunpack.c.h.b16 %v2304
        %v4060 = vunpack.c.l.b16 %v2305
        %v4061 = vunpack.c.h.b16 %v2305
        %v4062 = vunpack.c.l.b16 %v2306
        %v4063 = vunpack.c.h.b16 %v2306
        %v4064 = vunpack.c.l.b16 %v2307
        %v4065 = vpack.c.b16 %v4003, %v4003
        %v4066 = vpack.c.b16 %v4004, %v4004
        %v4067 = vpack.c.b16 %v4005, %v4005
        %v4068 = vpack.c.b16 %v4006, %v4006
        %v4069 = vpack.c.b16 %v4007, %v4007
        %v4070 = vpack.c.b16 %v4008, %v4008
        %v4071 = vpack.c.b16 %v4009, %v4009
        %v4072 = vpack.c.b16 %v4010, %v4010
        %v4073 = vpack.c.b16 %v4011, %v4011
        %v4074 = vpack.c.b16 %v4012, %v4012
        %v4075 = vpack.c.b16 %v4013, %v4013
        %v4076 = vpack.c.b16 %v4014, %v4014
        %v4077 = vpack.c.b16 %v4015, %v4015
        %v4078 = vpack.c.b16 %v4016, %v4016
        %v4079 = vpack.c.b16 %v4017, %v4017
        %v4080 = vpack.c.b16 %v4018, %v4018
        %v4081 = vpack.c.b16 %v4019, %v4019
        %v4082 = vpack.c.b16 %v4020, %v4020
        %v4083 = vpack.c.b16 %v4021, %v4021
        %v4084 = vpack.c.b16 %v4022, %v4022
        %v4085 = vpack.c.b16 %v4023, %v4023
        %v4086 = vpack.c.b16 %v4024, %v4024
        %v4087 = vpack.c.b16 %v4025, %v4025
        %v4088 = vpack.c.b16 %v4026, %v4026
        %v4089 = vpack.c.b16 %v4027, %v4027
        %v4090 = vpack.c.b16 %v4028, %v4028
        %v4091 = vpack.c.b16 %v4029, %v4029
        %v4092 = vpack.c.b16 %v4030, %v4030
        %v4093 = vpack.c.b16 %v4031, %v4031
        %v4094 = vpack.c.b16 %v4032, %v4032
        %v4095 = vpack.c.b16 %v4033, %v4033
        %v4096 = vpack.c.b16 %v4034, %v4034
        %v4097 = vpack.c.b16 %v4035, %v4035
        %v4098 = vpack.c.b16 %v4036, %v4036
        %v4099 = vpack.c.b16 %v4037, %v4037
        %v4100 = vpack.c.b16 %v4038, %v4038
        %v4101 = vpack.c.b16 %v4039, %v4039
        %v4102 = vpack.c.b16 %v4040, %v4040
        %v4103 = vpack.c.b16 %v4041, %v4041
        %v4104 = vpack.c.b16 %v4042, %v4042
        %v4105 = vpack.c.b16 %v4043, %v4043
        %v4106 = vpack.c.b16 %v4044, %v4044
        %v4107 = vpack.c.b16 %v4045, %v4045
        %v4108 = vpack.c.b16 %v4046, %v4046
        %v4109 = vpack.c.b16 %v4047, %v4047
        %v4110 = vpack.c.b16 %v4048, %v4048
        %v4111 = vpack.c.b16 %v4049, %v4049
        %v4112 = vpack.c.b16 %v4050, %v4050
        %v4113 = vpack.c.b16 %v4051, %v4051
        %v4114 = vpack.c.b16 %v4052, %v4052
        %v4115 = vpack.c.b16 %v4053, %v4053
        %v4116 = vpack.c.b16 %v4054, %v4054
        %v4117 = vpack.c.b16 %v4055, %v4055
        %v4118 = vpack.c.b16 %v4056, %v4056
        %v4119 = vpack.c.b16 %v4057, %v4057
        %v4120 = vpack.c.b16 %v4058, %v4058
        %v4121 = vpack.c.b16 %v4059, %v4059
        %v4122 = vpack.c.b16 %v4060, %v4060
        %v4123 = vpack.c.b16 %v4061, %v4061
        %v4124 = vpack.c.b16 %v4062, %v4062
        %v4125 = vpack.c.b16 %v4063, %v4063
        %v4126 = vpack.c.b16 %v4064, %v4064
        %vm4127 = vsmask.f32 3328
        %vm4128 = vsmask.f32 7440
        %vm4129 = vmor %vm4127, %vm4128
        %v4131 = vshll.u32 %v4065, 16
        %v4133 = vrot.slane %v4131, 5
        %v4134 = vshrl.u32 %v4065, 16
        %v4136 = vrot.slane %v4134, 4
        %v4137 = vor.u32 %v4136, %v4133
        %v4138 = vrot.slane %v4137, 4
        %v4140 = vshll.u32 %v4066, 16
        %v4142 = vrot.slane %v4140, 5
        %v4143 = vsel %vm4129, %v4138, %v4142
        %v4144 = vshrl.u32 %v4066, 16
        %v4146 = vrot.slane %v4144, 4
        %v4147 = vor.u32 %v4146, %v4142
        %v4148 = vrot.slane %v4147, 4
        %v4150 = vshll.u32 %v4067, 16
        %v4152 = vrot.slane %v4150, 5
        %v4153 = vsel %vm4129, %v4148, %v4152
        %v4154 = vshrl.u32 %v4067, 16
        %v4156 = vrot.slane %v4154, 4
        %v4157 = vor.u32 %v4156, %v4152
        %v4158 = vrot.slane %v4157, 4
        %v4160 = vshll.u32 %v4068, 16
        %v4162 = vrot.slane %v4160, 5
        %v4163 = vsel %vm4129, %v4158, %v4162
        %v4164 = vshrl.u32 %v4068, 16
        %v4166 = vrot.slane %v4164, 4
        %v4167 = vor.u32 %v4166, %v4162
        %v4168 = vrot.slane %v4167, 4
        %v4170 = vshll.u32 %v4069, 16
        %v4172 = vrot.slane %v4170, 5
        %v4173 = vsel %vm4129, %v4168, %v4172
        %v4174 = vshrl.u32 %v4069, 16
        %v4176 = vrot.slane %v4174, 4
        %v4177 = vor.u32 %v4176, %v4172
        %v4178 = vrot.slane %v4177, 4
        %v4180 = vshll.u32 %v4070, 16
        %v4182 = vrot.slane %v4180, 5
        %v4183 = vsel %vm4129, %v4178, %v4182
        %v4184 = vshrl.u32 %v4070, 16
        %v4186 = vrot.slane %v4184, 4
        %v4187 = vor.u32 %v4186, %v4182
        %v4188 = vrot.slane %v4187, 4
        %v4190 = vshll.u32 %v4071, 16
        %v4192 = vrot.slane %v4190, 5
        %v4193 = vsel %vm4129, %v4188, %v4192
        %v4194 = vshrl.u32 %v4071, 16
        %v4196 = vrot.slane %v4194, 4
        %v4197 = vor.u32 %v4196, %v4192
        %v4198 = vrot.slane %v4197, 4
        %v4200 = vshll.u32 %v4072, 16
        %v4202 = vrot.slane %v4200, 5
        %v4203 = vsel %vm4129, %v4198, %v4202
        %v4204 = vshrl.u32 %v4072, 16
        %v4206 = vrot.slane %v4204, 4
        %v4207 = vor.u32 %v4206, %v4202
        %v4208 = vrot.slane %v4207, 4
        %v4210 = vshll.u32 %v4073, 16
        %v4212 = vrot.slane %v4210, 5
        %v4213 = vsel %vm4129, %v4208, %v4212
        %v4214 = vshrl.u32 %v4073, 16
        %v4216 = vrot.slane %v4214, 4
        %v4217 = vor.u32 %v4216, %v4212
        %v4218 = vrot.slane %v4217, 4
        %v4220 = vshll.u32 %v4074, 16
        %v4222 = vrot.slane %v4220, 5
        %v4223 = vsel %vm4129, %v4218, %v4222
        %v4224 = vshrl.u32 %v4074, 16
        %v4226 = vrot.slane %v4224, 4
        %v4227 = vor.u32 %v4226, %v4222
        %v4228 = vrot.slane %v4227, 4
        %v4230 = vshll.u32 %v4075, 16
        %v4232 = vrot.slane %v4230, 5
        %v4233 = vsel %vm4129, %v4228, %v4232
        %v4234 = vshrl.u32 %v4075, 16
        %v4236 = vrot.slane %v4234, 4
        %v4237 = vor.u32 %v4236, %v4232
        %v4238 = vrot.slane %v4237, 4
        %v4240 = vshll.u32 %v4076, 16
        %v4242 = vrot.slane %v4240, 5
        %v4243 = vsel %vm4129, %v4238, %v4242
        %v4244 = vshrl.u32 %v4076, 16
        %v4246 = vrot.slane %v4244, 4
        %v4247 = vor.u32 %v4246, %v4242
        %v4248 = vrot.slane %v4247, 4
        %v4250 = vshll.u32 %v4077, 16
        %v4252 = vrot.slane %v4250, 5
        %v4253 = vsel %vm4129, %v4248, %v4252
        %v4254 = vshrl.u32 %v4077, 16
        %v4256 = vrot.slane %v4254, 4
        %v4257 = vor.u32 %v4256, %v4252
        %v4258 = vrot.slane %v4257, 4
        %v4260 = vshll.u32 %v4078, 16
        %v4262 = vrot.slane %v4260, 5
        %v4263 = vsel %vm4129, %v4258, %v4262
        %v4264 = vshrl.u32 %v4078, 16
        %v4266 = vrot.slane %v4264, 4
        %v4267 = vor.u32 %v4266, %v4262
        %v4268 = vrot.slane %v4267, 4
        %v4270 = vshll.u32 %v4079, 16
        %v4272 = vrot.slane %v4270, 5
        %v4273 = vsel %vm4129, %v4268, %v4272
        %v4274 = vshrl.u32 %v4079, 16
        %v4276 = vrot.slane %v4274, 4
        %v4277 = vor.u32 %v4276, %v4272
        %v4278 = vrot.slane %v4277, 4
        %v4280 = vshll.u32 %v4080, 16
        %v4282 = vrot.slane %v4280, 5
        %v4283 = vsel %vm4129, %v4278, %v4282
        %v4284 = vshrl.u32 %v4080, 16
        %v4286 = vrot.slane %v4284, 4
        %v4287 = vor.u32 %v4286, %v4282
        %v4288 = vrot.slane %v4287, 4
        %v4290 = vshll.u32 %v4081, 16
        %v4292 = vrot.slane %v4290, 5
        %v4293 = vsel %vm4129, %v4288, %v4292
        %v4294 = vshrl.u32 %v4081, 16
        %v4296 = vrot.slane %v4294, 4
        %v4297 = vor.u32 %v4296, %v4292
        %v4298 = vrot.slane %v4297, 4
        %v4300 = vshll.u32 %v4082, 16
        %v4302 = vrot.slane %v4300, 5
        %v4303 = vsel %vm4129, %v4298, %v4302
        %v4304 = vshrl.u32 %v4082, 16
        %v4306 = vrot.slane %v4304, 4
        %v4307 = vor.u32 %v4306, %v4302
        %v4308 = vrot.slane %v4307, 4
        %v4310 = vshll.u32 %v4083, 16
        %v4312 = vrot.slane %v4310, 5
        %v4313 = vsel %vm4129, %v4308, %v4312
        %v4314 = vshrl.u32 %v4083, 16
        %v4316 = vrot.slane %v4314, 4
        %v4317 = vor.u32 %v4316, %v4312
        %v4318 = vrot.slane %v4317, 4
        %v4320 = vshll.u32 %v4084, 16
        %v4322 = vrot.slane %v4320, 5
        %v4323 = vsel %vm4129, %v4318, %v4322
        %v4324 = vshrl.u32 %v4084, 16
        %v4326 = vrot.slane %v4324, 4
        %v4327 = vor.u32 %v4326, %v4322
        %v4328 = vrot.slane %v4327, 4
        %v4330 = vshll.u32 %v4085, 16
        %v4332 = vrot.slane %v4330, 5
        %v4333 = vsel %vm4129, %v4328, %v4332
        %v4334 = vshrl.u32 %v4085, 16
        %v4336 = vrot.slane %v4334, 4
        %v4337 = vor.u32 %v4336, %v4332
        %v4338 = vrot.slane %v4337, 4
        %v4340 = vshll.u32 %v4086, 16
        %v4342 = vrot.slane %v4340, 5
        %v4343 = vsel %vm4129, %v4338, %v4342
        %v4344 = vshrl.u32 %v4086, 16
        %v4346 = vrot.slane %v4344, 4
        %v4347 = vor.u32 %v4346, %v4342
        %v4348 = vrot.slane %v4347, 4
        %v4350 = vshll.u32 %v4087, 16
        %v4352 = vrot.slane %v4350, 5
        %v4353 = vsel %vm4129, %v4348, %v4352
        %v4354 = vshrl.u32 %v4087, 16
        %v4356 = vrot.slane %v4354, 4
        %v4357 = vor.u32 %v4356, %v4352
        %v4358 = vrot.slane %v4357, 4
        %v4360 = vshll.u32 %v4088, 16
        %v4362 = vrot.slane %v4360, 5
        %v4363 = vsel %vm4129, %v4358, %v4362
        %v4364 = vshrl.u32 %v4088, 16
        %v4366 = vrot.slane %v4364, 4
        %v4367 = vor.u32 %v4366, %v4362
        %v4368 = vrot.slane %v4367, 4
        %v4370 = vshll.u32 %v4089, 16
        %v4372 = vrot.slane %v4370, 5
        %v4373 = vsel %vm4129, %v4368, %v4372
        %v4374 = vshrl.u32 %v4089, 16
        %v4376 = vrot.slane %v4374, 4
        %v4377 = vor.u32 %v4376, %v4372
        %v4378 = vrot.slane %v4377, 4
        %v4380 = vshll.u32 %v4090, 16
        %v4382 = vrot.slane %v4380, 5
        %v4383 = vsel %vm4129, %v4378, %v4382
        %v4384 = vshrl.u32 %v4090, 16
        %v4386 = vrot.slane %v4384, 4
        %v4387 = vor.u32 %v4386, %v4382
        %v4388 = vrot.slane %v4387, 4
        %v4390 = vshll.u32 %v4091, 16
        %v4392 = vrot.slane %v4390, 5
        %v4393 = vsel %vm4129, %v4388, %v4392
        %v4394 = vshrl.u32 %v4091, 16
        %v4396 = vrot.slane %v4394, 4
        %v4397 = vor.u32 %v4396, %v4392
        %v4398 = vrot.slane %v4397, 4
        %v4400 = vshll.u32 %v4092, 16
        %v4402 = vrot.slane %v4400, 5
        %v4403 = vsel %vm4129, %v4398, %v4402
        %v4404 = vshrl.u32 %v4092, 16
        %v4406 = vrot.slane %v4404, 4
        %v4407 = vor.u32 %v4406, %v4402
        %v4408 = vrot.slane %v4407, 4
        %v4410 = vshll.u32 %v4093, 16
        %v4412 = vrot.slane %v4410, 5
        %v4413 = vsel %vm4129, %v4408, %v4412
        %v4414 = vshrl.u32 %v4093, 16
        %v4416 = vrot.slane %v4414, 4
        %v4417 = vor.u32 %v4416, %v4412
        %v4418 = vrot.slane %v4417, 4
        %v4420 = vshll.u32 %v4094, 16
        %v4422 = vrot.slane %v4420, 5
        %v4423 = vsel %vm4129, %v4418, %v4422
        %v4424 = vshrl.u32 %v4094, 16
        %v4426 = vrot.slane %v4424, 4
        %v4427 = vor.u32 %v4426, %v4422
        %v4428 = vrot.slane %v4427, 4
        %v4430 = vshll.u32 %v4095, 16
        %v4432 = vrot.slane %v4430, 5
        %v4433 = vsel %vm4129, %v4428, %v4432
        %v4435 = vshll.u32 %v4096, 16
        %v4437 = vrot.slane %v4435, 5
        %v4438 = vshrl.u32 %v4096, 16
        %v4440 = vrot.slane %v4438, 4
        %v4441 = vor.u32 %v4440, %v4437
        %v4442 = vrot.slane %v4441, 4
        %v4444 = vshll.u32 %v4097, 16
        %v4446 = vrot.slane %v4444, 5
        %v4447 = vsel %vm4129, %v4442, %v4446
        %v4448 = vshrl.u32 %v4097, 16
        %v4450 = vrot.slane %v4448, 4
        %v4451 = vor.u32 %v4450, %v4446
        %v4452 = vrot.slane %v4451, 4
        %v4454 = vshll.u32 %v4098, 16
        %v4456 = vrot.slane %v4454, 5
        %v4457 = vsel %vm4129, %v4452, %v4456
        %v4458 = vshrl.u32 %v4098, 16
        %v4460 = vrot.slane %v4458, 4
        %v4461 = vor.u32 %v4460, %v4456
        %v4462 = vrot.slane %v4461, 4
        %v4464 = vshll.u32 %v4099, 16
        %v4466 = vrot.slane %v4464, 5
        %v4467 = vsel %vm4129, %v4462, %v4466
        %v4468 = vshrl.u32 %v4099, 16
        %v4470 = vrot.slane %v4468, 4
        %v4471 = vor.u32 %v4470, %v4466
        %v4472 = vrot.slane %v4471, 4
        %v4474 = vshll.u32 %v4100, 16
        %v4476 = vrot.slane %v4474, 5
        %v4477 = vsel %vm4129, %v4472, %v4476
        %v4478 = vshrl.u32 %v4100, 16
        %v4480 = vrot.slane %v4478, 4
        %v4481 = vor.u32 %v4480, %v4476
        %v4482 = vrot.slane %v4481, 4
        %v4484 = vshll.u32 %v4101, 16
        %v4486 = vrot.slane %v4484, 5
        %v4487 = vsel %vm4129, %v4482, %v4486
        %v4488 = vshrl.u32 %v4101, 16
        %v4490 = vrot.slane %v4488, 4
        %v4491 = vor.u32 %v4490, %v4486
        %v4492 = vrot.slane %v4491, 4
        %v4494 = vshll.u32 %v4102, 16
        %v4496 = vrot.slane %v4494, 5
        %v4497 = vsel %vm4129, %v4492, %v4496
        %v4498 = vshrl.u32 %v4102, 16
        %v4500 = vrot.slane %v4498, 4
        %v4501 = vor.u32 %v4500, %v4496
        %v4502 = vrot.slane %v4501, 4
        %v4504 = vshll.u32 %v4103, 16
        %v4506 = vrot.slane %v4504, 5
        %v4507 = vsel %vm4129, %v4502, %v4506
        %v4508 = vshrl.u32 %v4103, 16
        %v4510 = vrot.slane %v4508, 4
        %v4511 = vor.u32 %v4510, %v4506
        %v4512 = vrot.slane %v4511, 4
        %v4514 = vshll.u32 %v4104, 16
        %v4516 = vrot.slane %v4514, 5
        %v4517 = vsel %vm4129, %v4512, %v4516
        %v4518 = vshrl.u32 %v4104, 16
        %v4520 = vrot.slane %v4518, 4
        %v4521 = vor.u32 %v4520, %v4516
        %v4522 = vrot.slane %v4521, 4
        %v4524 = vshll.u32 %v4105, 16
        %v4526 = vrot.slane %v4524, 5
        %v4527 = vsel %vm4129, %v4522, %v4526
        %v4528 = vshrl.u32 %v4105, 16
        %v4530 = vrot.slane %v4528, 4
        %v4531 = vor.u32 %v4530, %v4526
        %v4532 = vrot.slane %v4531, 4
        %v4534 = vshll.u32 %v4106, 16
        %v4536 = vrot.slane %v4534, 5
        %v4537 = vsel %vm4129, %v4532, %v4536
        %v4538 = vshrl.u32 %v4106, 16
        %v4540 = vrot.slane %v4538, 4
        %v4541 = vor.u32 %v4540, %v4536
        %v4542 = vrot.slane %v4541, 4
        %v4544 = vshll.u32 %v4107, 16
        %v4546 = vrot.slane %v4544, 5
        %v4547 = vsel %vm4129, %v4542, %v4546
        %v4548 = vshrl.u32 %v4107, 16
        %v4550 = vrot.slane %v4548, 4
        %v4551 = vor.u32 %v4550, %v4546
        %v4552 = vrot.slane %v4551, 4
        %v4554 = vshll.u32 %v4108, 16
        %v4556 = vrot.slane %v4554, 5
        %v4557 = vsel %vm4129, %v4552, %v4556
        %v4558 = vshrl.u32 %v4108, 16
        %v4560 = vrot.slane %v4558, 4
        %v4561 = vor.u32 %v4560, %v4556
        %v4562 = vrot.slane %v4561, 4
        %v4564 = vshll.u32 %v4109, 16
        %v4566 = vrot.slane %v4564, 5
        %v4567 = vsel %vm4129, %v4562, %v4566
        %v4568 = vshrl.u32 %v4109, 16
        %v4570 = vrot.slane %v4568, 4
        %v4571 = vor.u32 %v4570, %v4566
        %v4572 = vrot.slane %v4571, 4
        %v4574 = vshll.u32 %v4110, 16
        %v4576 = vrot.slane %v4574, 5
        %v4577 = vsel %vm4129, %v4572, %v4576
        %v4578 = vshrl.u32 %v4110, 16
        %v4580 = vrot.slane %v4578, 4
        %v4581 = vor.u32 %v4580, %v4576
        %v4582 = vrot.slane %v4581, 4
        %v4584 = vshll.u32 %v4111, 16
        %v4586 = vrot.slane %v4584, 5
        %v4587 = vsel %vm4129, %v4582, %v4586
        %v4588 = vshrl.u32 %v4111, 16
        %v4590 = vrot.slane %v4588, 4
        %v4591 = vor.u32 %v4590, %v4586
        %v4592 = vrot.slane %v4591, 4
        %v4594 = vshll.u32 %v4112, 16
        %v4596 = vrot.slane %v4594, 5
        %v4597 = vsel %vm4129, %v4592, %v4596
        %v4598 = vshrl.u32 %v4112, 16
        %v4600 = vrot.slane %v4598, 4
        %v4601 = vor.u32 %v4600, %v4596
        %v4602 = vrot.slane %v4601, 4
        %v4604 = vshll.u32 %v4113, 16
        %v4606 = vrot.slane %v4604, 5
        %v4607 = vsel %vm4129, %v4602, %v4606
        %v4608 = vshrl.u32 %v4113, 16
        %v4610 = vrot.slane %v4608, 4
        %v4611 = vor.u32 %v4610, %v4606
        %v4612 = vrot.slane %v4611, 4
        %v4614 = vshll.u32 %v4114, 16
        %v4616 = vrot.slane %v4614, 5
        %v4617 = vsel %vm4129, %v4612, %v4616
        %v4618 = vshrl.u32 %v4114, 16
        %v4620 = vrot.slane %v4618, 4
        %v4621 = vor.u32 %v4620, %v4616
        %v4622 = vrot.slane %v4621, 4
        %v4624 = vshll.u32 %v4115, 16
        %v4626 = vrot.slane %v4624, 5
        %v4627 = vsel %vm4129, %v4622, %v4626
        %v4628 = vshrl.u32 %v4115, 16
        %v4630 = vrot.slane %v4628, 4
        %v4631 = vor.u32 %v4630, %v4626
        %v4632 = vrot.slane %v4631, 4
        %v4634 = vshll.u32 %v4116, 16
        %v4636 = vrot.slane %v4634, 5
        %v4637 = vsel %vm4129, %v4632, %v4636
        %v4638 = vshrl.u32 %v4116, 16
        %v4640 = vrot.slane %v4638, 4
        %v4641 = vor.u32 %v4640, %v4636
        %v4642 = vrot.slane %v4641, 4
        %v4644 = vshll.u32 %v4117, 16
        %v4646 = vrot.slane %v4644, 5
        %v4647 = vsel %vm4129, %v4642, %v4646
        %v4648 = vshrl.u32 %v4117, 16
        %v4650 = vrot.slane %v4648, 4
        %v4651 = vor.u32 %v4650, %v4646
        %v4652 = vrot.slane %v4651, 4
        %v4654 = vshll.u32 %v4118, 16
        %v4656 = vrot.slane %v4654, 5
        %v4657 = vsel %vm4129, %v4652, %v4656
        %v4658 = vshrl.u32 %v4118, 16
        %v4660 = vrot.slane %v4658, 4
        %v4661 = vor.u32 %v4660, %v4656
        %v4662 = vrot.slane %v4661, 4
        %v4664 = vshll.u32 %v4119, 16
        %v4666 = vrot.slane %v4664, 5
        %v4667 = vsel %vm4129, %v4662, %v4666
        %v4668 = vshrl.u32 %v4119, 16
        %v4670 = vrot.slane %v4668, 4
        %v4671 = vor.u32 %v4670, %v4666
        %v4672 = vrot.slane %v4671, 4
        %v4674 = vshll.u32 %v4120, 16
        %v4676 = vrot.slane %v4674, 5
        %v4677 = vsel %vm4129, %v4672, %v4676
        %v4678 = vshrl.u32 %v4120, 16
        %v4680 = vrot.slane %v4678, 4
        %v4681 = vor.u32 %v4680, %v4676
        %v4682 = vrot.slane %v4681, 4
        %v4684 = vshll.u32 %v4121, 16
        %v4686 = vrot.slane %v4684, 5
        %v4687 = vsel %vm4129, %v4682, %v4686
        %v4688 = vshrl.u32 %v4121, 16
        %v4690 = vrot.slane %v4688, 4
        %v4691 = vor.u32 %v4690, %v4686
        %v4692 = vrot.slane %v4691, 4
        %v4694 = vshll.u32 %v4122, 16
        %v4696 = vrot.slane %v4694, 5
        %v4697 = vsel %vm4129, %v4692, %v4696
        %v4698 = vshrl.u32 %v4122, 16
        %v4700 = vrot.slane %v4698, 4
        %v4701 = vor.u32 %v4700, %v4696
        %v4702 = vrot.slane %v4701, 4
        %v4704 = vshll.u32 %v4123, 16
        %v4706 = vrot.slane %v4704, 5
        %v4707 = vsel %vm4129, %v4702, %v4706
        %v4708 = vshrl.u32 %v4123, 16
        %v4710 = vrot.slane %v4708, 4
        %v4711 = vor.u32 %v4710, %v4706
        %v4712 = vrot.slane %v4711, 4
        %v4714 = vshll.u32 %v4124, 16
        %v4716 = vrot.slane %v4714, 5
        %v4717 = vsel %vm4129, %v4712, %v4716
        %v4718 = vshrl.u32 %v4124, 16
        %v4720 = vrot.slane %v4718, 4
        %v4721 = vor.u32 %v4720, %v4716
        %v4722 = vrot.slane %v4721, 4
        %v4724 = vshll.u32 %v4125, 16
        %v4726 = vrot.slane %v4724, 5
        %v4727 = vsel %vm4129, %v4722, %v4726
        %v4728 = vshrl.u32 %v4125, 16
        %v4730 = vrot.slane %v4728, 4
        %v4731 = vor.u32 %v4730, %v4726
        %v4732 = vrot.slane %v4731, 4
        %v4734 = vshll.u32 %v4126, 16
        %v4736 = vrot.slane %v4734, 5
        %v4737 = vsel %vm4129, %v4732, %v4736
        %vm4800 = vcmask 257027
        %vm4801 = vsmask.f32 7950
        %vm4802 = vmand %vm4800, %vm4801
        %v4803 = vld [vmem:[#allocation2 + $0x2c] sm:$0x8]
        %v4804 = vsel %vm4802, %v4133, %v4803
        %4805 = vst [vmem:[#allocation2 + $0x2c] sm:$0x8] %v4804
        %4806 = vst.msk [vmem:[#allocation2 + $0x50] sm:$0xf] %vm3639, %v4143
        %4807 = vst.msk [vmem:[#allocation2 + $0x74] sm:$0xf] %vm3639, %v4153
        %4808 = vst.msk [vmem:[#allocation2 + $0x98] sm:$0xf] %vm3639, %v4163
        %4809 = vst.msk [vmem:[#allocation2 + $0xbc] sm:$0xf] %vm3639, %v4173
        %4810 = vst.msk [vmem:[#allocation2 + $0xe0] sm:$0xf] %vm3639, %v4183
        %4811 = vst.msk [vmem:[#allocation2 + $0x104] sm:$0xf] %vm3639, %v4193
        %4812 = vst.msk [vmem:[#allocation2 + $0x128] sm:$0xf] %vm3639, %v4203
        %4813 = vst.msk [vmem:[#allocation2 + $0x14c] sm:$0xf] %vm3639, %v4213
        %4814 = vst.msk [vmem:[#allocation2 + $0x170] sm:$0xf] %vm3639, %v4223
        %4815 = vst.msk [vmem:[#allocation2 + $0x194] sm:$0xf] %vm3639, %v4233
        %4816 = vst.msk [vmem:[#allocation2 + $0x1b8] sm:$0xf] %vm3639, %v4243
        %4817 = vst.msk [vmem:[#allocation2 + $0x1dc] sm:$0xf] %vm3639, %v4253
        %4818 = vst.msk [vmem:[#allocation2 + $0x200] sm:$0xf] %vm3639, %v4263
        %4819 = vst.msk [vmem:[#allocation2 + $0x224] sm:$0xf] %vm3639, %v4273
        %4820 = vst.msk [vmem:[#allocation2 + $0x248] sm:$0xf] %vm3639, %v4283
        %4821 = vst.msk [vmem:[#allocation2 + $0x26c] sm:$0xf] %vm3639, %v4293
        %4822 = vst.msk [vmem:[#allocation2 + $0x290] sm:$0xf] %vm3639, %v4303
        %4823 = vst.msk [vmem:[#allocation2 + $0x2b4] sm:$0xf] %vm3639, %v4313
        %4824 = vst.msk [vmem:[#allocation2 + $0x2d8] sm:$0xf] %vm3639, %v4323
        %4825 = vst.msk [vmem:[#allocation2 + $0x2fc] sm:$0xf] %vm3639, %v4333
        %4826 = vst.msk [vmem:[#allocation2 + $0x320] sm:$0xf] %vm3639, %v4343
        %4827 = vst.msk [vmem:[#allocation2 + $0x344] sm:$0xf] %vm3639, %v4353
        %4828 = vst.msk [vmem:[#allocation2 + $0x368] sm:$0xf] %vm3639, %v4363
        %4829 = vst.msk [vmem:[#allocation2 + $0x38c] sm:$0xf] %vm3639, %v4373
        %4830 = vst.msk [vmem:[#allocation2 + $0x3b0] sm:$0xf] %vm3639, %v4383
        %4831 = vst.msk [vmem:[#allocation2 + $0x3d4] sm:$0xf] %vm3639, %v4393
        %4832 = vst.msk [vmem:[#allocation2 + $0x3f8] sm:$0xf] %vm3639, %v4403
        %4833 = vst.msk [vmem:[#allocation2 + $0x41c] sm:$0xf] %vm3639, %v4413
        %4834 = vst.msk [vmem:[#allocation2 + $0x440] sm:$0xf] %vm3639, %v4423
        %4835 = vst.msk [vmem:[#allocation2 + $0x464] sm:$0xf] %vm3639, %v4433
        %v4836 = vld [vmem:[#allocation2 + $0x4ac] sm:$0x8]
        %v4837 = vsel %vm4802, %v4437, %v4836
        %4838 = vst [vmem:[#allocation2 + $0x4ac] sm:$0x8] %v4837
        %4839 = vst.msk [vmem:[#allocation2 + $0x4d0] sm:$0xf] %vm3639, %v4447
        %4840 = vst.msk [vmem:[#allocation2 + $0x4f4] sm:$0xf] %vm3639, %v4457
        %4841 = vst.msk [vmem:[#allocation2 + $0x518] sm:$0xf] %vm3639, %v4467
        %4842 = vst.msk [vmem:[#allocation2 + $0x53c] sm:$0xf] %vm3639, %v4477
        %4843 = vst.msk [vmem:[#allocation2 + $0x560] sm:$0xf] %vm3639, %v4487
        %4844 = vst.msk [vmem:[#allocation2 + $0x584] sm:$0xf] %vm3639, %v4497
        %4845 = vst.msk [vmem:[#allocation2 + $0x5a8] sm:$0xf] %vm3639, %v4507
        %4846 = vst.msk [vmem:[#allocation2 + $0x5cc] sm:$0xf] %vm3639, %v4517
        %4847 = vst.msk [vmem:[#allocation2 + $0x5f0] sm:$0xf] %vm3639, %v4527
        %4848 = vst.msk [vmem:[#allocation2 + $0x614] sm:$0xf] %vm3639, %v4537
        %4849 = vst.msk [vmem:[#allocation2 + $0x638] sm:$0xf] %vm3639, %v4547
        %4850 = vst.msk [vmem:[#allocation2 + $0x65c] sm:$0xf] %vm3639, %v4557
        %4851 = vst.msk [vmem:[#allocation2 + $0x680] sm:$0xf] %vm3639, %v4567
        %4852 = vst.msk [vmem:[#allocation2 + $0x6a4] sm:$0xf] %vm3639, %v4577
        %4853 = vst.msk [vmem:[#allocation2 + $0x6c8] sm:$0xf] %vm3639, %v4587
        %4854 = vst.msk [vmem:[#allocation2 + $0x6ec] sm:$0xf] %vm3639, %v4597
        %4855 = vst.msk [vmem:[#allocation2 + $0x710] sm:$0xf] %vm3639, %v4607
        %4856 = vst.msk [vmem:[#allocation2 + $0x734] sm:$0xf] %vm3639, %v4617
        %4857 = vst.msk [vmem:[#allocation2 + $0x758] sm:$0xf] %vm3639, %v4627
        %4858 = vst.msk [vmem:[#allocation2 + $0x77c] sm:$0xf] %vm3639, %v4637
        %4859 = vst.msk [vmem:[#allocation2 + $0x7a0] sm:$0xf] %vm3639, %v4647
        %4860 = vst.msk [vmem:[#allocation2 + $0x7c4] sm:$0xf] %vm3639, %v4657
        %4861 = vst.msk [vmem:[#allocation2 + $0x7e8] sm:$0xf] %vm3639, %v4667
        %4862 = vst.msk [vmem:[#allocation2 + $0x80c] sm:$0xf] %vm3639, %v4677
        %4863 = vst.msk [vmem:[#allocation2 + $0x830] sm:$0xf] %vm3639, %v4687
        %4864 = vst.msk [vmem:[#allocation2 + $0x854] sm:$0xf] %vm3639, %v4697
        %4865 = vst.msk [vmem:[#allocation2 + $0x878] sm:$0xf] %vm3639, %v4707
        %4866 = vst.msk [vmem:[#allocation2 + $0x89c] sm:$0xf] %vm3639, %v4717
        %4867 = vst.msk [vmem:[#allocation2 + $0x8c0] sm:$0xf] %vm3639, %v4727
        %4868 = vst.msk [vmem:[#allocation2 + $0x8e4] sm:$0xf] %vm3639, %v4737
        %v4871 = vunpack.c.l.b16 %v2547
        %v4872 = vunpack.c.h.b16 %v2547
        %v4873 = vunpack.c.l.b16 %v2563
        %v4874 = vunpack.c.h.b16 %v2563
        %v4875 = vpack.c.b16 %v4871, %v4871
        %v4876 = vpack.c.b16 %v4872, %v4872
        %v4877 = vpack.c.b16 %v4873, %v4873
        %v4878 = vpack.c.b16 %v4874, %v4874
        %v4879 = vrot.slane %v3300, 4
        %v4881 = vshrl.u32 %v4875, 16
        %v4883 = vrot.slane %v4881, 7
        %v4884 = vshll.u32 %v4875, 16
        %v4886 = vor.u32 %v4883, %v4884
        %v4887 = vsel %vm3036, %v4879, %v4886
        %v4888 = vrot.slane %v4883, 4
        %v4890 = vshrl.u32 %v4876, 16
        %v4892 = vrot.slane %v4890, 7
        %v4893 = vshll.u32 %v4876, 16
        %v4895 = vor.u32 %v4892, %v4893
        %v4896 = vsel %vm3036, %v4888, %v4895
        %v4897 = vrot.slane %v3568, 4
        %v4899 = vshrl.u32 %v4877, 16
        %v4901 = vrot.slane %v4899, 7
        %v4902 = vshll.u32 %v4877, 16
        %v4904 = vor.u32 %v4901, %v4902
        %v4905 = vsel %vm3036, %v4897, %v4904
        %v4906 = vrot.slane %v4901, 4
        %v4908 = vshrl.u32 %v4878, 16
        %v4910 = vrot.slane %v4908, 7
        %v4911 = vshll.u32 %v4878, 16
        %v4913 = vor.u32 %v4910, %v4911
        %v4914 = vsel %vm3036, %v4906, %v4913
        %v4919 = vld [vmem:[#allocation2 + $0xc] sm:$0xf]
        %v4920 = vsel %vm3635, %v3043, %v4919
        %4921 = vst [vmem:[#allocation2 + $0xc] sm:$0xf] %v4920
        %4922 = vst.msk [vmem:[#allocation2 + $0x30] sm:$0xf] %vm3639, %v3052
        %4923 = vst.msk [vmem:[#allocation2 + $0x54] sm:$0xf] %vm3639, %v3061
        %4924 = vst.msk [vmem:[#allocation2 + $0x78] sm:$0xf] %vm3639, %v3070
        %4925 = vst.msk [vmem:[#allocation2 + $0x9c] sm:$0xf] %vm3639, %v3079
        %4926 = vst.msk [vmem:[#allocation2 + $0xc0] sm:$0xf] %vm3639, %v3088
        %4927 = vst.msk [vmem:[#allocation2 + $0xe4] sm:$0xf] %vm3639, %v3097
        %4928 = vst.msk [vmem:[#allocation2 + $0x108] sm:$0xf] %vm3639, %v3106
        %4929 = vst.msk [vmem:[#allocation2 + $0x12c] sm:$0xf] %vm3639, %v3115
        %4930 = vst.msk [vmem:[#allocation2 + $0x150] sm:$0xf] %vm3639, %v3124
        %4931 = vst.msk [vmem:[#allocation2 + $0x174] sm:$0xf] %vm3639, %v3133
        %4932 = vst.msk [vmem:[#allocation2 + $0x198] sm:$0xf] %vm3639, %v3142
        %4933 = vst.msk [vmem:[#allocation2 + $0x1bc] sm:$0xf] %vm3639, %v3151
        %4934 = vst.msk [vmem:[#allocation2 + $0x1e0] sm:$0xf] %vm3639, %v3160
        %4935 = vst.msk [vmem:[#allocation2 + $0x204] sm:$0xf] %vm3639, %v3169
        %4936 = vst.msk [vmem:[#allocation2 + $0x228] sm:$0xf] %vm3639, %v3178
        %4937 = vst.msk [vmem:[#allocation2 + $0x24c] sm:$0xf] %vm3639, %v3187
        %4938 = vst.msk [vmem:[#allocation2 + $0x270] sm:$0xf] %vm3639, %v3196
        %4939 = vst.msk [vmem:[#allocation2 + $0x294] sm:$0xf] %vm3639, %v3205
        %4940 = vst.msk [vmem:[#allocation2 + $0x2b8] sm:$0xf] %vm3639, %v3214
        %4941 = vst.msk [vmem:[#allocation2 + $0x2dc] sm:$0xf] %vm3639, %v3223
        %4942 = vst.msk [vmem:[#allocation2 + $0x300] sm:$0xf] %vm3639, %v3232
        %4943 = vst.msk [vmem:[#allocation2 + $0x324] sm:$0xf] %vm3639, %v3241
        %4944 = vst.msk [vmem:[#allocation2 + $0x348] sm:$0xf] %vm3639, %v3250
        %4945 = vst.msk [vmem:[#allocation2 + $0x36c] sm:$0xf] %vm3639, %v3259
        %4946 = vst.msk [vmem:[#allocation2 + $0x390] sm:$0xf] %vm3639, %v3268
        %4947 = vst.msk [vmem:[#allocation2 + $0x3b4] sm:$0xf] %vm3639, %v3277
        %4948 = vst.msk [vmem:[#allocation2 + $0x3d8] sm:$0xf] %vm3639, %v3286
        %4949 = vst.msk [vmem:[#allocation2 + $0x3fc] sm:$0xf] %vm3639, %v3295
        %4950 = vst.msk [vmem:[#allocation2 + $0x420] sm:$0xf] %vm3639, %v3304
        %4951 = vst.msk [vmem:[#allocation2 + $0x444] sm:$0xf] %vm3639, %v4887
        %4952 = vst.msk [vmem:[#allocation2 + $0x468] sm:$0xf] %vm3639, %v4896
        %v4953 = vld [vmem:[#allocation2 + $0x48c] sm:$0xf]
        %v4954 = vsel %vm3635, %v3311, %v4953
        %4955 = vst [vmem:[#allocation2 + $0x48c] sm:$0xf] %v4954
        %4956 = vst.msk [vmem:[#allocation2 + $0x4b0] sm:$0xf] %vm3639, %v3320
        %4957 = vst.msk [vmem:[#allocation2 + $0x4d4] sm:$0xf] %vm3639, %v3329
        %4958 = vst.msk [vmem:[#allocation2 + $0x4f8] sm:$0xf] %vm3639, %v3338
        %4959 = vst.msk [vmem:[#allocation2 + $0x51c] sm:$0xf] %vm3639, %v3347
        %4960 = vst.msk [vmem:[#allocation2 + $0x540] sm:$0xf] %vm3639, %v3356
        %4961 = vst.msk [vmem:[#allocation2 + $0x564] sm:$0xf] %vm3639, %v3365
        %4962 = vst.msk [vmem:[#allocation2 + $0x588] sm:$0xf] %vm3639, %v3374
        %4963 = vst.msk [vmem:[#allocation2 + $0x5ac] sm:$0xf] %vm3639, %v3383
        %4964 = vst.msk [vmem:[#allocation2 + $0x5d0] sm:$0xf] %vm3639, %v3392
        %4965 = vst.msk [vmem:[#allocation2 + $0x5f4] sm:$0xf] %vm3639, %v3401
        %4966 = vst.msk [vmem:[#allocation2 + $0x618] sm:$0xf] %vm3639, %v3410
        %4967 = vst.msk [vmem:[#allocation2 + $0x63c] sm:$0xf] %vm3639, %v3419
        %4968 = vst.msk [vmem:[#allocation2 + $0x660] sm:$0xf] %vm3639, %v3428
        %4969 = vst.msk [vmem:[#allocation2 + $0x684] sm:$0xf] %vm3639, %v3437
        %4970 = vst.msk [vmem:[#allocation2 + $0x6a8] sm:$0xf] %vm3639, %v3446
        %4971 = vst.msk [vmem:[#allocation2 + $0x6cc] sm:$0xf] %vm3639, %v3455
        %4972 = vst.msk [vmem:[#allocation2 + $0x6f0] sm:$0xf] %vm3639, %v3464
        %4973 = vst.msk [vmem:[#allocation2 + $0x714] sm:$0xf] %vm3639, %v3473
        %4974 = vst.msk [vmem:[#allocation2 + $0x738] sm:$0xf] %vm3639, %v3482
        %4975 = vst.msk [vmem:[#allocation2 + $0x75c] sm:$0xf] %vm3639, %v3491
        %4976 = vst.msk [vmem:[#allocation2 + $0x780] sm:$0xf] %vm3639, %v3500
        %4977 = vst.msk [vmem:[#allocation2 + $0x7a4] sm:$0xf] %vm3639, %v3509
        %4978 = vst.msk [vmem:[#allocation2 + $0x7c8] sm:$0xf] %vm3639, %v3518
        %4979 = vst.msk [vmem:[#allocation2 + $0x7ec] sm:$0xf] %vm3639, %v3527
        %4980 = vst.msk [vmem:[#allocation2 + $0x810] sm:$0xf] %vm3639, %v3536
        %4981 = vst.msk [vmem:[#allocation2 + $0x834] sm:$0xf] %vm3639, %v3545
        %4982 = vst.msk [vmem:[#allocation2 + $0x858] sm:$0xf] %vm3639, %v3554
        %4983 = vst.msk [vmem:[#allocation2 + $0x87c] sm:$0xf] %vm3639, %v3563
        %4984 = vst.msk [vmem:[#allocation2 + $0x8a0] sm:$0xf] %vm3639, %v3572
        %4985 = vst.msk [vmem:[#allocation2 + $0x8c4] sm:$0xf] %vm3639, %v4905
        %4986 = vst.msk [vmem:[#allocation2 + $0x8e8] sm:$0xf] %vm3639, %v4914
        %v4989 = vunpack.c.l.b16 %v1618
        %v4990 = vunpack.c.h.b16 %v1618
        %v4991 = vunpack.c.l.b16 %v1634
        %v4992 = vunpack.c.h.b16 %v1634
        %v4993 = vpack.c.b16 %v4989, %v4989
        %v4994 = vpack.c.b16 %v4990, %v4990
        %v4995 = vpack.c.b16 %v4991, %v4991
        %v4996 = vpack.c.b16 %v4992, %v4992
        %5001 = vst.msk [vmem:[#allocation2 + $0x10] sm:$0xf] %vm3639, %v3791
        %5002 = vst.msk [vmem:[#allocation2 + $0x34] sm:$0xf] %vm3639, %v3792
        %5003 = vst.msk [vmem:[#allocation2 + $0x58] sm:$0xf] %vm3639, %v3793
        %5004 = vst.msk [vmem:[#allocation2 + $0x7c] sm:$0xf] %vm3639, %v3794
        %5005 = vst.msk [vmem:[#allocation2 + $0xa0] sm:$0xf] %vm3639, %v3795
        %5006 = vst.msk [vmem:[#allocation2 + $0xc4] sm:$0xf] %vm3639, %v3796
        %5007 = vst.msk [vmem:[#allocation2 + $0xe8] sm:$0xf] %vm3639, %v3797
        %5008 = vst.msk [vmem:[#allocation2 + $0x10c] sm:$0xf] %vm3639, %v3798
        %5009 = vst.msk [vmem:[#allocation2 + $0x130] sm:$0xf] %vm3639, %v3799
        %5010 = vst.msk [vmem:[#allocation2 + $0x154] sm:$0xf] %vm3639, %v3800
        %5011 = vst.msk [vmem:[#allocation2 + $0x178] sm:$0xf] %vm3639, %v3801
        %5012 = vst.msk [vmem:[#allocation2 + $0x19c] sm:$0xf] %vm3639, %v3802
        %5013 = vst.msk [vmem:[#allocation2 + $0x1c0] sm:$0xf] %vm3639, %v3803
        %5014 = vst.msk [vmem:[#allocation2 + $0x1e4] sm:$0xf] %vm3639, %v3804
        %5015 = vst.msk [vmem:[#allocation2 + $0x208] sm:$0xf] %vm3639, %v3805
        %5016 = vst.msk [vmem:[#allocation2 + $0x22c] sm:$0xf] %vm3639, %v3806
        %5017 = vst.msk [vmem:[#allocation2 + $0x250] sm:$0xf] %vm3639, %v3807
        %5018 = vst.msk [vmem:[#allocation2 + $0x274] sm:$0xf] %vm3639, %v3808
        %5019 = vst.msk [vmem:[#allocation2 + $0x298] sm:$0xf] %vm3639, %v3809
        %5020 = vst.msk [vmem:[#allocation2 + $0x2bc] sm:$0xf] %vm3639, %v3810
        %5021 = vst.msk [vmem:[#allocation2 + $0x2e0] sm:$0xf] %vm3639, %v3811
        %5022 = vst.msk [vmem:[#allocation2 + $0x304] sm:$0xf] %vm3639, %v3812
        %5023 = vst.msk [vmem:[#allocation2 + $0x328] sm:$0xf] %vm3639, %v3813
        %5024 = vst.msk [vmem:[#allocation2 + $0x34c] sm:$0xf] %vm3639, %v3814
        %5025 = vst.msk [vmem:[#allocation2 + $0x370] sm:$0xf] %vm3639, %v3815
        %5026 = vst.msk [vmem:[#allocation2 + $0x394] sm:$0xf] %vm3639, %v3816
        %5027 = vst.msk [vmem:[#allocation2 + $0x3b8] sm:$0xf] %vm3639, %v3817
        %5028 = vst.msk [vmem:[#allocation2 + $0x3dc] sm:$0xf] %vm3639, %v3818
        %5029 = vst.msk [vmem:[#allocation2 + $0x400] sm:$0xf] %vm3639, %v3819
        %5030 = vst.msk [vmem:[#allocation2 + $0x424] sm:$0xf] %vm3639, %v3820
        %5031 = vst.msk [vmem:[#allocation2 + $0x448] sm:$0xf] %vm3639, %v4993
        %5032 = vst.msk [vmem:[#allocation2 + $0x46c] sm:$0xf] %vm3639, %v4994
        %5033 = vst.msk [vmem:[#allocation2 + $0x490] sm:$0xf] %vm3639, %v3821
        %5034 = vst.msk [vmem:[#allocation2 + $0x4b4] sm:$0xf] %vm3639, %v3822
        %5035 = vst.msk [vmem:[#allocation2 + $0x4d8] sm:$0xf] %vm3639, %v3823
        %5036 = vst.msk [vmem:[#allocation2 + $0x4fc] sm:$0xf] %vm3639, %v3824
        %5037 = vst.msk [vmem:[#allocation2 + $0x520] sm:$0xf] %vm3639, %v3825
        %5038 = vst.msk [vmem:[#allocation2 + $0x544] sm:$0xf] %vm3639, %v3826
        %5039 = vst.msk [vmem:[#allocation2 + $0x568] sm:$0xf] %vm3639, %v3827
        %5040 = vst.msk [vmem:[#allocation2 + $0x58c] sm:$0xf] %vm3639, %v3828
        %5041 = vst.msk [vmem:[#allocation2 + $0x5b0] sm:$0xf] %vm3639, %v3829
        %5042 = vst.msk [vmem:[#allocation2 + $0x5d4] sm:$0xf] %vm3639, %v3830
        %5043 = vst.msk [vmem:[#allocation2 + $0x5f8] sm:$0xf] %vm3639, %v3831
        %5044 = vst.msk [vmem:[#allocation2 + $0x61c] sm:$0xf] %vm3639, %v3832
        %5045 = vst.msk [vmem:[#allocation2 + $0x640] sm:$0xf] %vm3639, %v3833
        %5046 = vst.msk [vmem:[#allocation2 + $0x664] sm:$0xf] %vm3639, %v3834
        %5047 = vst.msk [vmem:[#allocation2 + $0x688] sm:$0xf] %vm3639, %v3835
        %5048 = vst.msk [vmem:[#allocation2 + $0x6ac] sm:$0xf] %vm3639, %v3836
        %5049 = vst.msk [vmem:[#allocation2 + $0x6d0] sm:$0xf] %vm3639, %v3837
        %5050 = vst.msk [vmem:[#allocation2 + $0x6f4] sm:$0xf] %vm3639, %v3838
        %5051 = vst.msk [vmem:[#allocation2 + $0x718] sm:$0xf] %vm3639, %v3839
        %5052 = vst.msk [vmem:[#allocation2 + $0x73c] sm:$0xf] %vm3639, %v3840
        %5053 = vst.msk [vmem:[#allocation2 + $0x760] sm:$0xf] %vm3639, %v3841
        %5054 = vst.msk [vmem:[#allocation2 + $0x784] sm:$0xf] %vm3639, %v3842
        %5055 = vst.msk [vmem:[#allocation2 + $0x7a8] sm:$0xf] %vm3639, %v3843
        %5056 = vst.msk [vmem:[#allocation2 + $0x7cc] sm:$0xf] %vm3639, %v3844
        %5057 = vst.msk [vmem:[#allocation2 + $0x7f0] sm:$0xf] %vm3639, %v3845
        %5058 = vst.msk [vmem:[#allocation2 + $0x814] sm:$0xf] %vm3639, %v3846
        %5059 = vst.msk [vmem:[#allocation2 + $0x838] sm:$0xf] %vm3639, %v3847
        %5060 = vst.msk [vmem:[#allocation2 + $0x85c] sm:$0xf] %vm3639, %v3848
        %5061 = vst.msk [vmem:[#allocation2 + $0x880] sm:$0xf] %vm3639, %v3849
        %5062 = vst.msk [vmem:[#allocation2 + $0x8a4] sm:$0xf] %vm3639, %v3850
        %5063 = vst.msk [vmem:[#allocation2 + $0x8c8] sm:$0xf] %vm3639, %v4995
        %5064 = vst.msk [vmem:[#allocation2 + $0x8ec] sm:$0xf] %vm3639, %v4996
        %v5065 = vunpack.c.h.b16 %v2291
        %v5066 = vunpack.c.h.b16 %v2307
        %v5067 = vpack.c.b16 %v5065, %v5065
        %v5068 = vpack.c.b16 %v5066, %v5066
        %v5069 = vshrl.u32 %v4095, 16
        %v5071 = vrot.slane %v5069, 4
        %v5072 = vor.u32 %v5071, %v4432
        %v5073 = vrot.slane %v5072, 4
        %v5075 = vshll.u32 %v5067, 16
        %v5077 = vrot.slane %v5075, 5
        %v5078 = vsel %vm4129, %v5073, %v5077
        %v5079 = vshrl.u32 %v5067, 16
        %v5081 = vrot.slane %v5079, 4
        %v5082 = vor.u32 %v5081, %v5077
        %v5083 = vrot.slane %v5082, 4
        %v5084 = vshrl.u32 %v4126, 16
        %v5086 = vrot.slane %v5084, 4
        %v5087 = vor.u32 %v5086, %v4736
        %v5088 = vrot.slane %v5087, 4
        %v5090 = vshll.u32 %v5068, 16
        %v5092 = vrot.slane %v5090, 5
        %v5093 = vsel %vm4129, %v5088, %v5092
        %v5094 = vshrl.u32 %v5068, 16
        %v5096 = vrot.slane %v5094, 4
        %v5097 = vor.u32 %v5096, %v5092
        %v5098 = vrot.slane %v5097, 4
        %5103 = vst.msk [vmem:[#allocation2 + $0x14] sm:$0xf] %vm3639, %v4143
        %5104 = vst.msk [vmem:[#allocation2 + $0x38] sm:$0xf] %vm3639, %v4153
        %5105 = vst.msk [vmem:[#allocation2 + $0x5c] sm:$0xf] %vm3639, %v4163
        %5106 = vst.msk [vmem:[#allocation2 + $0x80] sm:$0xf] %vm3639, %v4173
        %5107 = vst.msk [vmem:[#allocation2 + $0xa4] sm:$0xf] %vm3639, %v4183
        %5108 = vst.msk [vmem:[#allocation2 + $0xc8] sm:$0xf] %vm3639, %v4193
        %5109 = vst.msk [vmem:[#allocation2 + $0xec] sm:$0xf] %vm3639, %v4203
        %5110 = vst.msk [vmem:[#allocation2 + $0x110] sm:$0xf] %vm3639, %v4213
        %5111 = vst.msk [vmem:[#allocation2 + $0x134] sm:$0xf] %vm3639, %v4223
        %5112 = vst.msk [vmem:[#allocation2 + $0x158] sm:$0xf] %vm3639, %v4233
        %5113 = vst.msk [vmem:[#allocation2 + $0x17c] sm:$0xf] %vm3639, %v4243
        %5114 = vst.msk [vmem:[#allocation2 + $0x1a0] sm:$0xf] %vm3639, %v4253
        %5115 = vst.msk [vmem:[#allocation2 + $0x1c4] sm:$0xf] %vm3639, %v4263
        %5116 = vst.msk [vmem:[#allocation2 + $0x1e8] sm:$0xf] %vm3639, %v4273
        %5117 = vst.msk [vmem:[#allocation2 + $0x20c] sm:$0xf] %vm3639, %v4283
        %5118 = vst.msk [vmem:[#allocation2 + $0x230] sm:$0xf] %vm3639, %v4293
        %5119 = vst.msk [vmem:[#allocation2 + $0x254] sm:$0xf] %vm3639, %v4303
        %5120 = vst.msk [vmem:[#allocation2 + $0x278] sm:$0xf] %vm3639, %v4313
        %5121 = vst.msk [vmem:[#allocation2 + $0x29c] sm:$0xf] %vm3639, %v4323
        %5122 = vst.msk [vmem:[#allocation2 + $0x2c0] sm:$0xf] %vm3639, %v4333
        %5123 = vst.msk [vmem:[#allocation2 + $0x2e4] sm:$0xf] %vm3639, %v4343
        %5124 = vst.msk [vmem:[#allocation2 + $0x308] sm:$0xf] %vm3639, %v4353
        %5125 = vst.msk [vmem:[#allocation2 + $0x32c] sm:$0xf] %vm3639, %v4363
        %5126 = vst.msk [vmem:[#allocation2 + $0x350] sm:$0xf] %vm3639, %v4373
        %5127 = vst.msk [vmem:[#allocation2 + $0x374] sm:$0xf] %vm3639, %v4383
        %5128 = vst.msk [vmem:[#allocation2 + $0x398] sm:$0xf] %vm3639, %v4393
        %5129 = vst.msk [vmem:[#allocation2 + $0x3bc] sm:$0xf] %vm3639, %v4403
        %5130 = vst.msk [vmem:[#allocation2 + $0x3e0] sm:$0xf] %vm3639, %v4413
        %5131 = vst.msk [vmem:[#allocation2 + $0x404] sm:$0xf] %vm3639, %v4423
        %5132 = vst.msk [vmem:[#allocation2 + $0x428] sm:$0xf] %vm3639, %v4433
        %5133 = vst.msk [vmem:[#allocation2 + $0x44c] sm:$0xf] %vm3639, %v5078
        %vm5134 = vmand %vm3633, %vm4127
        %v5135 = vld [vmem:[#allocation2 + $0x470] sm:$0xf]
        %v5136 = vsel %vm5134, %v5083, %v5135
        %5137 = vst [vmem:[#allocation2 + $0x470] sm:$0xf] %v5136
        %5138 = vst.msk [vmem:[#allocation2 + $0x494] sm:$0xf] %vm3639, %v4447
        %5139 = vst.msk [vmem:[#allocation2 + $0x4b8] sm:$0xf] %vm3639, %v4457
        %5140 = vst.msk [vmem:[#allocation2 + $0x4dc] sm:$0xf] %vm3639, %v4467
        %5141 = vst.msk [vmem:[#allocation2 + $0x500] sm:$0xf] %vm3639, %v4477
        %5142 = vst.msk [vmem:[#allocation2 + $0x524] sm:$0xf] %vm3639, %v4487
        %5143 = vst.msk [vmem:[#allocation2 + $0x548] sm:$0xf] %vm3639, %v4497
        %5144 = vst.msk [vmem:[#allocation2 + $0x56c] sm:$0xf] %vm3639, %v4507
        %5145 = vst.msk [vmem:[#allocation2 + $0x590] sm:$0xf] %vm3639, %v4517
        %5146 = vst.msk [vmem:[#allocation2 + $0x5b4] sm:$0xf] %vm3639, %v4527
        %5147 = vst.msk [vmem:[#allocation2 + $0x5d8] sm:$0xf] %vm3639, %v4537
        %5148 = vst.msk [vmem:[#allocation2 + $0x5fc] sm:$0xf] %vm3639, %v4547
        %5149 = vst.msk [vmem:[#allocation2 + $0x620] sm:$0xf] %vm3639, %v4557
        %5150 = vst.msk [vmem:[#allocation2 + $0x644] sm:$0xf] %vm3639, %v4567
        %5151 = vst.msk [vmem:[#allocation2 + $0x668] sm:$0xf] %vm3639, %v4577
        %5152 = vst.msk [vmem:[#allocation2 + $0x68c] sm:$0xf] %vm3639, %v4587
        %5153 = vst.msk [vmem:[#allocation2 + $0x6b0] sm:$0xf] %vm3639, %v4597
        %5154 = vst.msk [vmem:[#allocation2 + $0x6d4] sm:$0xf] %vm3639, %v4607
        %5155 = vst.msk [vmem:[#allocation2 + $0x6f8] sm:$0xf] %vm3639, %v4617
        %5156 = vst.msk [vmem:[#allocation2 + $0x71c] sm:$0xf] %vm3639, %v4627
        %5157 = vst.msk [vmem:[#allocation2 + $0x740] sm:$0xf] %vm3639, %v4637
        %5158 = vst.msk [vmem:[#allocation2 + $0x764] sm:$0xf] %vm3639, %v4647
        %5159 = vst.msk [vmem:[#allocation2 + $0x788] sm:$0xf] %vm3639, %v4657
        %5160 = vst.msk [vmem:[#allocation2 + $0x7ac] sm:$0xf] %vm3639, %v4667
        %5161 = vst.msk [vmem:[#allocation2 + $0x7d0] sm:$0xf] %vm3639, %v4677
        %5162 = vst.msk [vmem:[#allocation2 + $0x7f4] sm:$0xf] %vm3639, %v4687
        %5163 = vst.msk [vmem:[#allocation2 + $0x818] sm:$0xf] %vm3639, %v4697
        %5164 = vst.msk [vmem:[#allocation2 + $0x83c] sm:$0xf] %vm3639, %v4707
        %5165 = vst.msk [vmem:[#allocation2 + $0x860] sm:$0xf] %vm3639, %v4717
        %5166 = vst.msk [vmem:[#allocation2 + $0x884] sm:$0xf] %vm3639, %v4727
        %5167 = vst.msk [vmem:[#allocation2 + $0x8a8] sm:$0xf] %vm3639, %v4737
        %5168 = vst.msk [vmem:[#allocation2 + $0x8cc] sm:$0xf] %vm3639, %v5093
        %v5169 = vld [vmem:[#allocation2 + $0x8f0] sm:$0xf]
        %v5170 = vsel %vm5134, %v5098, %v5169
        %5171 = vst [vmem:[#allocation2 + $0x8f0] sm:$0xf] %v5170
        %v5172 = vrot.slane %v4892, 4
        %v5173 = vrot.slane %v4910, 4
        %5176 = vst.msk [vmem:[#allocation2 + $0x18] sm:$0xf] %vm3639, %v3061
        %5177 = vst.msk [vmem:[#allocation2 + $0x3c] sm:$0xf] %vm3639, %v3070
        %5178 = vst.msk [vmem:[#allocation2 + $0x60] sm:$0xf] %vm3639, %v3079
        %5179 = vst.msk [vmem:[#allocation2 + $0x84] sm:$0xf] %vm3639, %v3088
        %5180 = vst.msk [vmem:[#allocation2 + $0xa8] sm:$0xf] %vm3639, %v3097
        %5181 = vst.msk [vmem:[#allocation2 + $0xcc] sm:$0xf] %vm3639, %v3106
        %5182 = vst.msk [vmem:[#allocation2 + $0xf0] sm:$0xf] %vm3639, %v3115
        %5183 = vst.msk [vmem:[#allocation2 + $0x114] sm:$0xf] %vm3639, %v3124
        %5184 = vst.msk [vmem:[#allocation2 + $0x138] sm:$0xf] %vm3639, %v3133
        %5185 = vst.msk [vmem:[#allocation2 + $0x15c] sm:$0xf] %vm3639, %v3142
        %5186 = vst.msk [vmem:[#allocation2 + $0x180] sm:$0xf] %vm3639, %v3151
        %5187 = vst.msk [vmem:[#allocation2 + $0x1a4] sm:$0xf] %vm3639, %v3160
        %5188 = vst.msk [vmem:[#allocation2 + $0x1c8] sm:$0xf] %vm3639, %v3169
        %5189 = vst.msk [vmem:[#allocation2 + $0x1ec] sm:$0xf] %vm3639, %v3178
        %5190 = vst.msk [vmem:[#allocation2 + $0x210] sm:$0xf] %vm3639, %v3187
        %5191 = vst.msk [vmem:[#allocation2 + $0x234] sm:$0xf] %vm3639, %v3196
        %5192 = vst.msk [vmem:[#allocation2 + $0x258] sm:$0xf] %vm3639, %v3205
        %5193 = vst.msk [vmem:[#allocation2 + $0x27c] sm:$0xf] %vm3639, %v3214
        %5194 = vst.msk [vmem:[#allocation2 + $0x2a0] sm:$0xf] %vm3639, %v3223
        %5195 = vst.msk [vmem:[#allocation2 + $0x2c4] sm:$0xf] %vm3639, %v3232
        %5196 = vst.msk [vmem:[#allocation2 + $0x2e8] sm:$0xf] %vm3639, %v3241
        %5197 = vst.msk [vmem:[#allocation2 + $0x30c] sm:$0xf] %vm3639, %v3250
        %5198 = vst.msk [vmem:[#allocation2 + $0x330] sm:$0xf] %vm3639, %v3259
        %5199 = vst.msk [vmem:[#allocation2 + $0x354] sm:$0xf] %vm3639, %v3268
        %5200 = vst.msk [vmem:[#allocation2 + $0x378] sm:$0xf] %vm3639, %v3277
        %5201 = vst.msk [vmem:[#allocation2 + $0x39c] sm:$0xf] %vm3639, %v3286
        %5202 = vst.msk [vmem:[#allocation2 + $0x3c0] sm:$0xf] %vm3639, %v3295
        %5203 = vst.msk [vmem:[#allocation2 + $0x3e4] sm:$0xf] %vm3639, %v3304
        %5204 = vst.msk [vmem:[#allocation2 + $0x408] sm:$0xf] %vm3639, %v4887
        %5205 = vst.msk [vmem:[#allocation2 + $0x42c] sm:$0xf] %vm3639, %v4896
        %vm5206 = vcmask 253952
        %vm5207 = vmand %vm5206, %vm3034
        %v5208 = vld [vmem:[#allocation2 + $0x450] sm:$0x1]
        %v5209 = vsel %vm5207, %v5172, %v5208
        %5210 = vst [vmem:[#allocation2 + $0x450] sm:$0x1] %v5209
        %5211 = vst.msk [vmem:[#allocation2 + $0x498] sm:$0xf] %vm3639, %v3329
        %5212 = vst.msk [vmem:[#allocation2 + $0x4bc] sm:$0xf] %vm3639, %v3338
        %5213 = vst.msk [vmem:[#allocation2 + $0x4e0] sm:$0xf] %vm3639, %v3347
        %5214 = vst.msk [vmem:[#allocation2 + $0x504] sm:$0xf] %vm3639, %v3356
        %5215 = vst.msk [vmem:[#allocation2 + $0x528] sm:$0xf] %vm3639, %v3365
        %5216 = vst.msk [vmem:[#allocation2 + $0x54c] sm:$0xf] %vm3639, %v3374
        %5217 = vst.msk [vmem:[#allocation2 + $0x570] sm:$0xf] %vm3639, %v3383
        %5218 = vst.msk [vmem:[#allocation2 + $0x594] sm:$0xf] %vm3639, %v3392
        %5219 = vst.msk [vmem:[#allocation2 + $0x5b8] sm:$0xf] %vm3639, %v3401
        %5220 = vst.msk [vmem:[#allocation2 + $0x5dc] sm:$0xf] %vm3639, %v3410
        %5221 = vst.msk [vmem:[#allocation2 + $0x600] sm:$0xf] %vm3639, %v3419
        %5222 = vst.msk [vmem:[#allocation2 + $0x624] sm:$0xf] %vm3639, %v3428
        %5223 = vst.msk [vmem:[#allocation2 + $0x648] sm:$0xf] %vm3639, %v3437
        %5224 = vst.msk [vmem:[#allocation2 + $0x66c] sm:$0xf] %vm3639, %v3446
        %5225 = vst.msk [vmem:[#allocation2 + $0x690] sm:$0xf] %vm3639, %v3455
        %5226 = vst.msk [vmem:[#allocation2 + $0x6b4] sm:$0xf] %vm3639, %v3464
        %5227 = vst.msk [vmem:[#allocation2 + $0x6d8] sm:$0xf] %vm3639, %v3473
        %5228 = vst.msk [vmem:[#allocation2 + $0x6fc] sm:$0xf] %vm3639, %v3482
        %5229 = vst.msk [vmem:[#allocation2 + $0x720] sm:$0xf] %vm3639, %v3491
        %5230 = vst.msk [vmem:[#allocation2 + $0x744] sm:$0xf] %vm3639, %v3500
        %5231 = vst.msk [vmem:[#allocation2 + $0x768] sm:$0xf] %vm3639, %v3509
        %5232 = vst.msk [vmem:[#allocation2 + $0x78c] sm:$0xf] %vm3639, %v3518
        %5233 = vst.msk [vmem:[#allocation2 + $0x7b0] sm:$0xf] %vm3639, %v3527
        %5234 = vst.msk [vmem:[#allocation2 + $0x7d4] sm:$0xf] %vm3639, %v3536
        %5235 = vst.msk [vmem:[#allocation2 + $0x7f8] sm:$0xf] %vm3639, %v3545
        %5236 = vst.msk [vmem:[#allocation2 + $0x81c] sm:$0xf] %vm3639, %v3554
        %5237 = vst.msk [vmem:[#allocation2 + $0x840] sm:$0xf] %vm3639, %v3563
        %5238 = vst.msk [vmem:[#allocation2 + $0x864] sm:$0xf] %vm3639, %v3572
        %5239 = vst.msk [vmem:[#allocation2 + $0x888] sm:$0xf] %vm3639, %v4905
        %5240 = vst.msk [vmem:[#allocation2 + $0x8ac] sm:$0xf] %vm3639, %v4914
        %v5241 = vld [vmem:[#allocation2 + $0x8d0] sm:$0x1]
        %v5242 = vsel %vm5207, %v5173, %v5241
        %5243 = vst [vmem:[#allocation2 + $0x8d0] sm:$0x1] %v5242
        %5244 = vst.msk [vmem:[#allocation2 + $0x1c] sm:$0xf] %vm3639, %v3793
        %5245 = vst.msk [vmem:[#allocation2 + $0x40] sm:$0xf] %vm3639, %v3794
        %5246 = vst.msk [vmem:[#allocation2 + $0x64] sm:$0xf] %vm3639, %v3795
        %5247 = vst.msk [vmem:[#allocation2 + $0x88] sm:$0xf] %vm3639, %v3796
        %5248 = vst.msk [vmem:[#allocation2 + $0xac] sm:$0xf] %vm3639, %v3797
        %5249 = vst.msk [vmem:[#allocation2 + $0xd0] sm:$0xf] %vm3639, %v3798
        %5250 = vst.msk [vmem:[#allocation2 + $0xf4] sm:$0xf] %vm3639, %v3799
        %5251 = vst.msk [vmem:[#allocation2 + $0x118] sm:$0xf] %vm3639, %v3800
        %5252 = vst.msk [vmem:[#allocation2 + $0x13c] sm:$0xf] %vm3639, %v3801
        %5253 = vst.msk [vmem:[#allocation2 + $0x160] sm:$0xf] %vm3639, %v3802
        %5254 = vst.msk [vmem:[#allocation2 + $0x184] sm:$0xf] %vm3639, %v3803
        %5255 = vst.msk [vmem:[#allocation2 + $0x1a8] sm:$0xf] %vm3639, %v3804
        %5256 = vst.msk [vmem:[#allocation2 + $0x1cc] sm:$0xf] %vm3639, %v3805
        %5257 = vst.msk [vmem:[#allocation2 + $0x1f0] sm:$0xf] %vm3639, %v3806
        %5258 = vst.msk [vmem:[#allocation2 + $0x214] sm:$0xf] %vm3639, %v3807
        %5259 = vst.msk [vmem:[#allocation2 + $0x238] sm:$0xf] %vm3639, %v3808
        %5260 = vst.msk [vmem:[#allocation2 + $0x25c] sm:$0xf] %vm3639, %v3809
        %5261 = vst.msk [vmem:[#allocation2 + $0x280] sm:$0xf] %vm3639, %v3810
        %5262 = vst.msk [vmem:[#allocation2 + $0x2a4] sm:$0xf] %vm3639, %v3811
        %5263 = vst.msk [vmem:[#allocation2 + $0x2c8] sm:$0xf] %vm3639, %v3812
        %5264 = vst.msk [vmem:[#allocation2 + $0x2ec] sm:$0xf] %vm3639, %v3813
        %5265 = vst.msk [vmem:[#allocation2 + $0x310] sm:$0xf] %vm3639, %v3814
        %5266 = vst.msk [vmem:[#allocation2 + $0x334] sm:$0xf] %vm3639, %v3815
        %5267 = vst.msk [vmem:[#allocation2 + $0x358] sm:$0xf] %vm3639, %v3816
        %5268 = vst.msk [vmem:[#allocation2 + $0x37c] sm:$0xf] %vm3639, %v3817
        %5269 = vst.msk [vmem:[#allocation2 + $0x3a0] sm:$0xf] %vm3639, %v3818
        %5270 = vst.msk [vmem:[#allocation2 + $0x3c4] sm:$0xf] %vm3639, %v3819
        %5271 = vst.msk [vmem:[#allocation2 + $0x3e8] sm:$0xf] %vm3639, %v3820
        %5272 = vst.msk [vmem:[#allocation2 + $0x40c] sm:$0xf] %vm3639, %v4993
        %5273 = vst.msk [vmem:[#allocation2 + $0x430] sm:$0xf] %vm3639, %v4994
        %5274 = vst.msk [vmem:[#allocation2 + $0x49c] sm:$0xf] %vm3639, %v3823
        %5275 = vst.msk [vmem:[#allocation2 + $0x4c0] sm:$0xf] %vm3639, %v3824
        %5276 = vst.msk [vmem:[#allocation2 + $0x4e4] sm:$0xf] %vm3639, %v3825
        %5277 = vst.msk [vmem:[#allocation2 + $0x508] sm:$0xf] %vm3639, %v3826
        %5278 = vst.msk [vmem:[#allocation2 + $0x52c] sm:$0xf] %vm3639, %v3827
        %5279 = vst.msk [vmem:[#allocation2 + $0x550] sm:$0xf] %vm3639, %v3828
        %5280 = vst.msk [vmem:[#allocation2 + $0x574] sm:$0xf] %vm3639, %v3829
        %5281 = vst.msk [vmem:[#allocation2 + $0x598] sm:$0xf] %vm3639, %v3830
        %5282 = vst.msk [vmem:[#allocation2 + $0x5bc] sm:$0xf] %vm3639, %v3831
        %5283 = vst.msk [vmem:[#allocation2 + $0x5e0] sm:$0xf] %vm3639, %v3832
        %5284 = vst.msk [vmem:[#allocation2 + $0x604] sm:$0xf] %vm3639, %v3833
        %5285 = vst.msk [vmem:[#allocation2 + $0x628] sm:$0xf] %vm3639, %v3834
        %5286 = vst.msk [vmem:[#allocation2 + $0x64c] sm:$0xf] %vm3639, %v3835
        %5287 = vst.msk [vmem:[#allocation2 + $0x670] sm:$0xf] %vm3639, %v3836
        %5288 = vst.msk [vmem:[#allocation2 + $0x694] sm:$0xf] %vm3639, %v3837
        %5289 = vst.msk [vmem:[#allocation2 + $0x6b8] sm:$0xf] %vm3639, %v3838
        %5290 = vst.msk [vmem:[#allocation2 + $0x6dc] sm:$0xf] %vm3639, %v3839
        %5291 = vst.msk [vmem:[#allocation2 + $0x700] sm:$0xf] %vm3639, %v3840
        %5292 = vst.msk [vmem:[#allocation2 + $0x724] sm:$0xf] %vm3639, %v3841
        %5293 = vst.msk [vmem:[#allocation2 + $0x748] sm:$0xf] %vm3639, %v3842
        %5294 = vst.msk [vmem:[#allocation2 + $0x76c] sm:$0xf] %vm3639, %v3843
        %5295 = vst.msk [vmem:[#allocation2 + $0x790] sm:$0xf] %vm3639, %v3844
        %5296 = vst.msk [vmem:[#allocation2 + $0x7b4] sm:$0xf] %vm3639, %v3845
        %5297 = vst.msk [vmem:[#allocation2 + $0x7d8] sm:$0xf] %vm3639, %v3846
        %5298 = vst.msk [vmem:[#allocation2 + $0x7fc] sm:$0xf] %vm3639, %v3847
        %5299 = vst.msk [vmem:[#allocation2 + $0x820] sm:$0xf] %vm3639, %v3848
        %5300 = vst.msk [vmem:[#allocation2 + $0x844] sm:$0xf] %vm3639, %v3849
        %5301 = vst.msk [vmem:[#allocation2 + $0x868] sm:$0xf] %vm3639, %v3850
        %5302 = vst.msk [vmem:[#allocation2 + $0x88c] sm:$0xf] %vm3639, %v4995
        %5303 = vst.msk [vmem:[#allocation2 + $0x8b0] sm:$0xf] %vm3639, %v4996
        %5304 = vst.msk [vmem:[#allocation2 + $0x20] sm:$0xf] %vm3639, %v4163
        %5305 = vst.msk [vmem:[#allocation2 + $0x44] sm:$0xf] %vm3639, %v4173
        %5306 = vst.msk [vmem:[#allocation2 + $0x68] sm:$0xf] %vm3639, %v4183
        %5307 = vst.msk [vmem:[#allocation2 + $0x8c] sm:$0xf] %vm3639, %v4193
        %5308 = vst.msk [vmem:[#allocation2 + $0xb0] sm:$0xf] %vm3639, %v4203
        %5309 = vst.msk [vmem:[#allocation2 + $0xd4] sm:$0xf] %vm3639, %v4213
        %5310 = vst.msk [vmem:[#allocation2 + $0xf8] sm:$0xf] %vm3639, %v4223
        %5311 = vst.msk [vmem:[#allocation2 + $0x11c] sm:$0xf] %vm3639, %v4233
        %5312 = vst.msk [vmem:[#allocation2 + $0x140] sm:$0xf] %vm3639, %v4243
        %5313 = vst.msk [vmem:[#allocation2 + $0x164] sm:$0xf] %vm3639, %v4253
        %5314 = vst.msk [vmem:[#allocation2 + $0x188] sm:$0xf] %vm3639, %v4263
        %5315 = vst.msk [vmem:[#allocation2 + $0x1ac] sm:$0xf] %vm3639, %v4273
        %5316 = vst.msk [vmem:[#allocation2 + $0x1d0] sm:$0xf] %vm3639, %v4283
        %5317 = vst.msk [vmem:[#allocation2 + $0x1f4] sm:$0xf] %vm3639, %v4293
        %5318 = vst.msk [vmem:[#allocation2 + $0x218] sm:$0xf] %vm3639, %v4303
        %5319 = vst.msk [vmem:[#allocation2 + $0x23c] sm:$0xf] %vm3639, %v4313
        %5320 = vst.msk [vmem:[#allocation2 + $0x260] sm:$0xf] %vm3639, %v4323
        %5321 = vst.msk [vmem:[#allocation2 + $0x284] sm:$0xf] %vm3639, %v4333
        %5322 = vst.msk [vmem:[#allocation2 + $0x2a8] sm:$0xf] %vm3639, %v4343
        %5323 = vst.msk [vmem:[#allocation2 + $0x2cc] sm:$0xf] %vm3639, %v4353
        %5324 = vst.msk [vmem:[#allocation2 + $0x2f0] sm:$0xf] %vm3639, %v4363
        %5325 = vst.msk [vmem:[#allocation2 + $0x314] sm:$0xf] %vm3639, %v4373
        %5326 = vst.msk [vmem:[#allocation2 + $0x338] sm:$0xf] %vm3639, %v4383
        %5327 = vst.msk [vmem:[#allocation2 + $0x35c] sm:$0xf] %vm3639, %v4393
        %5328 = vst.msk [vmem:[#allocation2 + $0x380] sm:$0xf] %vm3639, %v4403
        %5329 = vst.msk [vmem:[#allocation2 + $0x3a4] sm:$0xf] %vm3639, %v4413
        %5330 = vst.msk [vmem:[#allocation2 + $0x3c8] sm:$0xf] %vm3639, %v4423
        %5331 = vst.msk [vmem:[#allocation2 + $0x3ec] sm:$0xf] %vm3639, %v4433
        %5332 = vst.msk [vmem:[#allocation2 + $0x410] sm:$0xf] %vm3639, %v5078
        %v5333 = vld [vmem:[#allocation2 + $0x434] sm:$0xf]
        %v5334 = vsel %vm5134, %v5083, %v5333
        %5335 = vst [vmem:[#allocation2 + $0x434] sm:$0xf] %v5334
        %5336 = vst.msk [vmem:[#allocation2 + $0x4a0] sm:$0xf] %vm3639, %v4467
        %5337 = vst.msk [vmem:[#allocation2 + $0x4c4] sm:$0xf] %vm3639, %v4477
        %5338 = vst.msk [vmem:[#allocation2 + $0x4e8] sm:$0xf] %vm3639, %v4487
        %5339 = vst.msk [vmem:[#allocation2 + $0x50c] sm:$0xf] %vm3639, %v4497
        %5340 = vst.msk [vmem:[#allocation2 + $0x530] sm:$0xf] %vm3639, %v4507
        %5341 = vst.msk [vmem:[#allocation2 + $0x554] sm:$0xf] %vm3639, %v4517
        %5342 = vst.msk [vmem:[#allocation2 + $0x578] sm:$0xf] %vm3639, %v4527
        %5343 = vst.msk [vmem:[#allocation2 + $0x59c] sm:$0xf] %vm3639, %v4537
        %5344 = vst.msk [vmem:[#allocation2 + $0x5c0] sm:$0xf] %vm3639, %v4547
        %5345 = vst.msk [vmem:[#allocation2 + $0x5e4] sm:$0xf] %vm3639, %v4557
        %5346 = vst.msk [vmem:[#allocation2 + $0x608] sm:$0xf] %vm3639, %v4567
        %5347 = vst.msk [vmem:[#allocation2 + $0x62c] sm:$0xf] %vm3639, %v4577
        %5348 = vst.msk [vmem:[#allocation2 + $0x650] sm:$0xf] %vm3639, %v4587
        %5349 = vst.msk [vmem:[#allocation2 + $0x674] sm:$0xf] %vm3639, %v4597
        %5350 = vst.msk [vmem:[#allocation2 + $0x698] sm:$0xf] %vm3639, %v4607
        %5351 = vst.msk [vmem:[#allocation2 + $0x6bc] sm:$0xf] %vm3639, %v4617
        %5352 = vst.msk [vmem:[#allocation2 + $0x6e0] sm:$0xf] %vm3639, %v4627
        %5353 = vst.msk [vmem:[#allocation2 + $0x704] sm:$0xf] %vm3639, %v4637
        %5354 = vst.msk [vmem:[#allocation2 + $0x728] sm:$0xf] %vm3639, %v4647
        %5355 = vst.msk [vmem:[#allocation2 + $0x74c] sm:$0xf] %vm3639, %v4657
        %5356 = vst.msk [vmem:[#allocation2 + $0x770] sm:$0xf] %vm3639, %v4667
        %5357 = vst.msk [vmem:[#allocation2 + $0x794] sm:$0xf] %vm3639, %v4677
        %5358 = vst.msk [vmem:[#allocation2 + $0x7b8] sm:$0xf] %vm3639, %v4687
        %5359 = vst.msk [vmem:[#allocation2 + $0x7dc] sm:$0xf] %vm3639, %v4697
        %5360 = vst.msk [vmem:[#allocation2 + $0x800] sm:$0xf] %vm3639, %v4707
        %5361 = vst.msk [vmem:[#allocation2 + $0x824] sm:$0xf] %vm3639, %v4717
        %5362 = vst.msk [vmem:[#allocation2 + $0x848] sm:$0xf] %vm3639, %v4727
        %5363 = vst.msk [vmem:[#allocation2 + $0x86c] sm:$0xf] %vm3639, %v4737
        %5364 = vst.msk [vmem:[#allocation2 + $0x890] sm:$0xf] %vm3639, %v5093
        %v5365 = vld [vmem:[#allocation2 + $0x8b4] sm:$0xf]
        %v5366 = vsel %vm5134, %v5098, %v5365
        %5367 = vst [vmem:[#allocation2 + $0x8b4] sm:$0xf] %v5366
        %v5368 = vld [vmem:[#allocation2] sm:$0xff]
        %v5369 = vld [vmem:[#allocation2 + $0x8] sm:$0xff]
        %v5370 = vld [vmem:[#allocation2 + $0x10] sm:$0xff]
        %v5371 = vld [vmem:[#allocation2 + $0x18] sm:$0xff]
        %v5372 = vld [vmem:[#allocation2 + $0x20] sm:$0xf]
        %v5373 = vld [vmem:[#allocation2 + $0x24] sm:$0xff]
        %v5374 = vld [vmem:[#allocation2 + $0x2c] sm:$0xff]
        %v5375 = vld [vmem:[#allocation2 + $0x34] sm:$0xff]
        %v5376 = vld [vmem:[#allocation2 + $0x3c] sm:$0xff]
        %v5377 = vld [vmem:[#allocation2 + $0x44] sm:$0xf]
        %v5378 = vld [vmem:[#allocation2 + $0x48] sm:$0xff]
        %v5379 = vld [vmem:[#allocation2 + $0x50] sm:$0xff]
        %v5380 = vld [vmem:[#allocation2 + $0x58] sm:$0xff]
        %v5381 = vld [vmem:[#allocation2 + $0x60] sm:$0xff]
        %v5382 = vld [vmem:[#allocation2 + $0x68] sm:$0xf]
        %v5383 = vld [vmem:[#allocation2 + $0x6c] sm:$0xff]
        %v5384 = vld [vmem:[#allocation2 + $0x74] sm:$0xff]
        %v5385 = vld [vmem:[#allocation2 + $0x7c] sm:$0xff]
        %v5386 = vld [vmem:[#allocation2 + $0x84] sm:$0xff]
        %v5387 = vld [vmem:[#allocation2 + $0x8c] sm:$0xf]
        %v5388 = vld [vmem:[#allocation2 + $0x90] sm:$0xff]
        %v5389 = vld [vmem:[#allocation2 + $0x98] sm:$0xff]
        %v5390 = vld [vmem:[#allocation2 + $0xa0] sm:$0xff]
        %v5391 = vld [vmem:[#allocation2 + $0xa8] sm:$0xff]
        %v5392 = vld [vmem:[#allocation2 + $0xb0] sm:$0xf]
        %v5393 = vld [vmem:[#allocation2 + $0xb4] sm:$0xff]
        %v5394 = vld [vmem:[#allocation2 + $0xbc] sm:$0xff]
        %v5395 = vld [vmem:[#allocation2 + $0xc4] sm:$0xff]
        %v5396 = vld [vmem:[#allocation2 + $0xcc] sm:$0xff]
        %v5397 = vld [vmem:[#allocation2 + $0xd4] sm:$0xf]
        %v5398 = vld [vmem:[#allocation2 + $0xd8] sm:$0xff]
        %v5399 = vld [vmem:[#allocation2 + $0xe0] sm:$0xff]
        %v5400 = vld [vmem:[#allocation2 + $0xe8] sm:$0xff]
        %v5401 = vld [vmem:[#allocation2 + $0xf0] sm:$0xff]
        %v5402 = vld [vmem:[#allocation2 + $0xf8] sm:$0xf]
        %v5403 = vld [vmem:[#allocation2 + $0xfc] sm:$0xff]
        %v5404 = vld [vmem:[#allocation2 + $0x104] sm:$0xff]
        %v5405 = vld [vmem:[#allocation2 + $0x10c] sm:$0xff]
        %v5406 = vld [vmem:[#allocation2 + $0x114] sm:$0xff]
        %v5407 = vld [vmem:[#allocation2 + $0x11c] sm:$0xf]
        %v5408 = vld [vmem:[#allocation2 + $0x120] sm:$0xff]
        %v5409 = vld [vmem:[#allocation2 + $0x128] sm:$0xff]
        %v5410 = vld [vmem:[#allocation2 + $0x130] sm:$0xff]
        %v5411 = vld [vmem:[#allocation2 + $0x138] sm:$0xff]
        %v5412 = vld [vmem:[#allocation2 + $0x140] sm:$0xf]
        %v5413 = vld [vmem:[#allocation2 + $0x144] sm:$0xff]
        %v5414 = vld [vmem:[#allocation2 + $0x14c] sm:$0xff]
        %v5415 = vld [vmem:[#allocation2 + $0x154] sm:$0xff]
        %v5416 = vld [vmem:[#allocation2 + $0x15c] sm:$0xff]
        %v5417 = vld [vmem:[#allocation2 + $0x164] sm:$0xf]
        %v5418 = vld [vmem:[#allocation2 + $0x168] sm:$0xff]
        %v5419 = vld [vmem:[#allocation2 + $0x170] sm:$0xff]
        %v5420 = vld [vmem:[#allocation2 + $0x178] sm:$0xff]
        %v5421 = vld [vmem:[#allocation2 + $0x180] sm:$0xff]
        %v5422 = vld [vmem:[#allocation2 + $0x188] sm:$0xf]
        %v5423 = vld [vmem:[#allocation2 + $0x18c] sm:$0xff]
        %v5424 = vld [vmem:[#allocation2 + $0x194] sm:$0xff]
        %v5425 = vld [vmem:[#allocation2 + $0x19c] sm:$0xff]
        %v5426 = vld [vmem:[#allocation2 + $0x1a4] sm:$0xff]
        %v5427 = vld [vmem:[#allocation2 + $0x1ac] sm:$0xf]
        %v5428 = vld [vmem:[#allocation2 + $0x1b0] sm:$0xff]
        %v5429 = vld [vmem:[#allocation2 + $0x1b8] sm:$0xff]
        %v5430 = vld [vmem:[#allocation2 + $0x1c0] sm:$0xff]
        %v5431 = vld [vmem:[#allocation2 + $0x1c8] sm:$0xff]
        %v5432 = vld [vmem:[#allocation2 + $0x1d0] sm:$0xf]
        %v5433 = vld [vmem:[#allocation2 + $0x1d4] sm:$0xff]
        %v5434 = vld [vmem:[#allocation2 + $0x1dc] sm:$0xff]
        %v5435 = vld [vmem:[#allocation2 + $0x1e4] sm:$0xff]
        %v5436 = vld [vmem:[#allocation2 + $0x1ec] sm:$0xff]
        %v5437 = vld [vmem:[#allocation2 + $0x1f4] sm:$0xf]
        %v5438 = vld [vmem:[#allocation2 + $0x1f8] sm:$0xff]
        %v5439 = vld [vmem:[#allocation2 + $0x200] sm:$0xff]
        %v5440 = vld [vmem:[#allocation2 + $0x208] sm:$0xff]
        %v5441 = vld [vmem:[#allocation2 + $0x210] sm:$0xff]
        %v5442 = vld [vmem:[#allocation2 + $0x218] sm:$0xf]
        %v5443 = vld [vmem:[#allocation2 + $0x21c] sm:$0xff]
        %v5444 = vld [vmem:[#allocation2 + $0x224] sm:$0xff]
        %v5445 = vld [vmem:[#allocation2 + $0x22c] sm:$0xff]
        %v5446 = vld [vmem:[#allocation2 + $0x234] sm:$0xff]
        %v5447 = vld [vmem:[#allocation2 + $0x23c] sm:$0xf]
        %v5448 = vld [vmem:[#allocation2 + $0x240] sm:$0xff]
        %v5449 = vld [vmem:[#allocation2 + $0x248] sm:$0xff]
        %v5450 = vld [vmem:[#allocation2 + $0x250] sm:$0xff]
        %v5451 = vld [vmem:[#allocation2 + $0x258] sm:$0xff]
        %v5452 = vld [vmem:[#allocation2 + $0x260] sm:$0xf]
        %v5453 = vld [vmem:[#allocation2 + $0x264] sm:$0xff]
        %v5454 = vld [vmem:[#allocation2 + $0x26c] sm:$0xff]
        %v5455 = vld [vmem:[#allocation2 + $0x274] sm:$0xff]
        %v5456 = vld [vmem:[#allocation2 + $0x27c] sm:$0xff]
        %v5457 = vld [vmem:[#allocation2 + $0x284] sm:$0xf]
        %v5458 = vld [vmem:[#allocation2 + $0x288] sm:$0xff]
        %v5459 = vld [vmem:[#allocation2 + $0x290] sm:$0xff]
        %v5460 = vld [vmem:[#allocation2 + $0x298] sm:$0xff]
        %v5461 = vld [vmem:[#allocation2 + $0x2a0] sm:$0xff]
        %v5462 = vld [vmem:[#allocation2 + $0x2a8] sm:$0xf]
        %v5463 = vld [vmem:[#allocation2 + $0x2ac] sm:$0xff]
        %v5464 = vld [vmem:[#allocation2 + $0x2b4] sm:$0xff]
        %v5465 = vld [vmem:[#allocation2 + $0x2bc] sm:$0xff]
        %v5466 = vld [vmem:[#allocation2 + $0x2c4] sm:$0xff]
        %v5467 = vld [vmem:[#allocation2 + $0x2cc] sm:$0xf]
        %v5468 = vld [vmem:[#allocation2 + $0x2d0] sm:$0xff]
        %v5469 = vld [vmem:[#allocation2 + $0x2d8] sm:$0xff]
        %v5470 = vld [vmem:[#allocation2 + $0x2e0] sm:$0xff]
        %v5471 = vld [vmem:[#allocation2 + $0x2e8] sm:$0xff]
        %v5472 = vld [vmem:[#allocation2 + $0x2f0] sm:$0xf]
        %v5473 = vld [vmem:[#allocation2 + $0x2f4] sm:$0xff]
        %v5474 = vld [vmem:[#allocation2 + $0x2fc] sm:$0xff]
        %v5475 = vld [vmem:[#allocation2 + $0x304] sm:$0xff]
        %v5476 = vld [vmem:[#allocation2 + $0x30c] sm:$0xff]
        %v5477 = vld [vmem:[#allocation2 + $0x314] sm:$0xf]
        %v5478 = vld [vmem:[#allocation2 + $0x318] sm:$0xff]
        %v5479 = vld [vmem:[#allocation2 + $0x320] sm:$0xff]
        %v5480 = vld [vmem:[#allocation2 + $0x328] sm:$0xff]
        %v5481 = vld [vmem:[#allocation2 + $0x330] sm:$0xff]
        %v5482 = vld [vmem:[#allocation2 + $0x338] sm:$0xf]
        %v5483 = vld [vmem:[#allocation2 + $0x33c] sm:$0xff]
        %v5484 = vld [vmem:[#allocation2 + $0x344] sm:$0xff]
        %v5485 = vld [vmem:[#allocation2 + $0x34c] sm:$0xff]
        %v5486 = vld [vmem:[#allocation2 + $0x354] sm:$0xff]
        %v5487 = vld [vmem:[#allocation2 + $0x35c] sm:$0xf]
        %v5488 = vld [vmem:[#allocation2 + $0x360] sm:$0xff]
        %v5489 = vld [vmem:[#allocation2 + $0x368] sm:$0xff]
        %v5490 = vld [vmem:[#allocation2 + $0x370] sm:$0xff]
        %v5491 = vld [vmem:[#allocation2 + $0x378] sm:$0xff]
        %v5492 = vld [vmem:[#allocation2 + $0x380] sm:$0xf]
        %v5493 = vld [vmem:[#allocation2 + $0x384] sm:$0xff]
        %v5494 = vld [vmem:[#allocation2 + $0x38c] sm:$0xff]
        %v5495 = vld [vmem:[#allocation2 + $0x394] sm:$0xff]
        %v5496 = vld [vmem:[#allocation2 + $0x39c] sm:$0xff]
        %v5497 = vld [vmem:[#allocation2 + $0x3a4] sm:$0xf]
        %v5498 = vld [vmem:[#allocation2 + $0x3a8] sm:$0xff]
        %v5499 = vld [vmem:[#allocation2 + $0x3b0] sm:$0xff]
        %v5500 = vld [vmem:[#allocation2 + $0x3b8] sm:$0xff]
        %v5501 = vld [vmem:[#allocation2 + $0x3c0] sm:$0xff]
        %v5502 = vld [vmem:[#allocation2 + $0x3c8] sm:$0xf]
        %v5503 = vld [vmem:[#allocation2 + $0x3cc] sm:$0xff]
        %v5504 = vld [vmem:[#allocation2 + $0x3d4] sm:$0xff]
        %v5505 = vld [vmem:[#allocation2 + $0x3dc] sm:$0xff]
        %v5506 = vld [vmem:[#allocation2 + $0x3e4] sm:$0xff]
        %v5507 = vld [vmem:[#allocation2 + $0x3ec] sm:$0xf]
        %v5508 = vld [vmem:[#allocation2 + $0x3f0] sm:$0xff]
        %v5509 = vld [vmem:[#allocation2 + $0x3f8] sm:$0xff]
        %v5510 = vld [vmem:[#allocation2 + $0x400] sm:$0xff]
        %v5511 = vld [vmem:[#allocation2 + $0x408] sm:$0xff]
        %v5512 = vld [vmem:[#allocation2 + $0x410] sm:$0xf]
        %v5513 = vld [vmem:[#allocation2 + $0x414] sm:$0xff]
        %v5514 = vld [vmem:[#allocation2 + $0x41c] sm:$0xff]
        %v5515 = vld [vmem:[#allocation2 + $0x424] sm:$0xff]
        %v5516 = vld [vmem:[#allocation2 + $0x42c] sm:$0xff]
        %v5517 = vld [vmem:[#allocation2 + $0x434] sm:$0xf]
        %v5518 = vld [vmem:[#allocation2 + $0x438] sm:$0xff]
        %v5519 = vld [vmem:[#allocation2 + $0x440] sm:$0xff]
        %v5520 = vld [vmem:[#allocation2 + $0x448] sm:$0xff]
        %v5521 = vld [vmem:[#allocation2 + $0x450] sm:$0xff]
        %v5522 = vld [vmem:[#allocation2 + $0x458] sm:$0xf]
        %v5523 = vld [vmem:[#allocation2 + $0x45c] sm:$0xff]
        %v5524 = vld [vmem:[#allocation2 + $0x464] sm:$0xff]
        %v5525 = vld [vmem:[#allocation2 + $0x46c] sm:$0xff]
        %v5526 = vld [vmem:[#allocation2 + $0x474] sm:$0xff]
        %v5527 = vld [vmem:[#allocation2 + $0x47c] sm:$0xf]
        %v5528 = vld [vmem:[#allocation2 + $0x480] sm:$0xff]
        %v5529 = vld [vmem:[#allocation2 + $0x488] sm:$0xff]
        %v5530 = vld [vmem:[#allocation2 + $0x490] sm:$0xff]
        %v5531 = vld [vmem:[#allocation2 + $0x498] sm:$0xff]
        %v5532 = vld [vmem:[#allocation2 + $0x4a0] sm:$0xf]
        %v5533 = vld [vmem:[#allocation2 + $0x4a4] sm:$0xff]
        %v5534 = vld [vmem:[#allocation2 + $0x4ac] sm:$0xff]
        %v5535 = vld [vmem:[#allocation2 + $0x4b4] sm:$0xff]
        %v5536 = vld [vmem:[#allocation2 + $0x4bc] sm:$0xff]
        %v5537 = vld [vmem:[#allocation2 + $0x4c4] sm:$0xf]
        %v5538 = vld [vmem:[#allocation2 + $0x4c8] sm:$0xff]
        %v5539 = vld [vmem:[#allocation2 + $0x4d0] sm:$0xff]
        %v5540 = vld [vmem:[#allocation2 + $0x4d8] sm:$0xff]
        %v5541 = vld [vmem:[#allocation2 + $0x4e0] sm:$0xff]
        %v5542 = vld [vmem:[#allocation2 + $0x4e8] sm:$0xf]
        %v5543 = vld [vmem:[#allocation2 + $0x4ec] sm:$0xff]
        %v5544 = vld [vmem:[#allocation2 + $0x4f4] sm:$0xff]
        %v5545 = vld [vmem:[#allocation2 + $0x4fc] sm:$0xff]
        %v5546 = vld [vmem:[#allocation2 + $0x504] sm:$0xff]
        %v5547 = vld [vmem:[#allocation2 + $0x50c] sm:$0xf]
        %v5548 = vld [vmem:[#allocation2 + $0x510] sm:$0xff]
        %v5549 = vld [vmem:[#allocation2 + $0x518] sm:$0xff]
        %v5550 = vld [vmem:[#allocation2 + $0x520] sm:$0xff]
        %v5551 = vld [vmem:[#allocation2 + $0x528] sm:$0xff]
        %v5552 = vld [vmem:[#allocation2 + $0x530] sm:$0xf]
        %v5553 = vld [vmem:[#allocation2 + $0x534] sm:$0xff]
        %v5554 = vld [vmem:[#allocation2 + $0x53c] sm:$0xff]
        %v5555 = vld [vmem:[#allocation2 + $0x544] sm:$0xff]
        %v5556 = vld [vmem:[#allocation2 + $0x54c] sm:$0xff]
        %v5557 = vld [vmem:[#allocation2 + $0x554] sm:$0xf]
        %v5558 = vld [vmem:[#allocation2 + $0x558] sm:$0xff]
        %v5559 = vld [vmem:[#allocation2 + $0x560] sm:$0xff]
        %v5560 = vld [vmem:[#allocation2 + $0x568] sm:$0xff]
        %v5561 = vld [vmem:[#allocation2 + $0x570] sm:$0xff]
        %v5562 = vld [vmem:[#allocation2 + $0x578] sm:$0xf]
        %v5563 = vld [vmem:[#allocation2 + $0x57c] sm:$0xff]
        %v5564 = vld [vmem:[#allocation2 + $0x584] sm:$0xff]
        %v5565 = vld [vmem:[#allocation2 + $0x58c] sm:$0xff]
        %v5566 = vld [vmem:[#allocation2 + $0x594] sm:$0xff]
        %v5567 = vld [vmem:[#allocation2 + $0x59c] sm:$0xf]
        %v5568 = vld [vmem:[#allocation2 + $0x5a0] sm:$0xff]
        %v5569 = vld [vmem:[#allocation2 + $0x5a8] sm:$0xff]
        %v5570 = vld [vmem:[#allocation2 + $0x5b0] sm:$0xff]
        %v5571 = vld [vmem:[#allocation2 + $0x5b8] sm:$0xff]
        %v5572 = vld [vmem:[#allocation2 + $0x5c0] sm:$0xf]
        %v5573 = vld [vmem:[#allocation2 + $0x5c4] sm:$0xff]
        %v5574 = vld [vmem:[#allocation2 + $0x5cc] sm:$0xff]
        %v5575 = vld [vmem:[#allocation2 + $0x5d4] sm:$0xff]
        %v5576 = vld [vmem:[#allocation2 + $0x5dc] sm:$0xff]
        %v5577 = vld [vmem:[#allocation2 + $0x5e4] sm:$0xf]
        %v5578 = vld [vmem:[#allocation2 + $0x5e8] sm:$0xff]
        %v5579 = vld [vmem:[#allocation2 + $0x5f0] sm:$0xff]
        %v5580 = vld [vmem:[#allocation2 + $0x5f8] sm:$0xff]
        %v5581 = vld [vmem:[#allocation2 + $0x600] sm:$0xff]
        %v5582 = vld [vmem:[#allocation2 + $0x608] sm:$0xf]
        %v5583 = vld [vmem:[#allocation2 + $0x60c] sm:$0xff]
        %v5584 = vld [vmem:[#allocation2 + $0x614] sm:$0xff]
        %v5585 = vld [vmem:[#allocation2 + $0x61c] sm:$0xff]
        %v5586 = vld [vmem:[#allocation2 + $0x624] sm:$0xff]
        %v5587 = vld [vmem:[#allocation2 + $0x62c] sm:$0xf]
        %v5588 = vld [vmem:[#allocation2 + $0x630] sm:$0xff]
        %v5589 = vld [vmem:[#allocation2 + $0x638] sm:$0xff]
        %v5590 = vld [vmem:[#allocation2 + $0x640] sm:$0xff]
        %v5591 = vld [vmem:[#allocation2 + $0x648] sm:$0xff]
        %v5592 = vld [vmem:[#allocation2 + $0x650] sm:$0xf]
        %v5593 = vld [vmem:[#allocation2 + $0x654] sm:$0xff]
        %v5594 = vld [vmem:[#allocation2 + $0x65c] sm:$0xff]
        %v5595 = vld [vmem:[#allocation2 + $0x664] sm:$0xff]
        %v5596 = vld [vmem:[#allocation2 + $0x66c] sm:$0xff]
        %v5597 = vld [vmem:[#allocation2 + $0x674] sm:$0xf]
        %v5598 = vld [vmem:[#allocation2 + $0x678] sm:$0xff]
        %v5599 = vld [vmem:[#allocation2 + $0x680] sm:$0xff]
        %v5600 = vld [vmem:[#allocation2 + $0x688] sm:$0xff]
        %v5601 = vld [vmem:[#allocation2 + $0x690] sm:$0xff]
        %v5602 = vld [vmem:[#allocation2 + $0x698] sm:$0xf]
        %v5603 = vld [vmem:[#allocation2 + $0x69c] sm:$0xff]
        %v5604 = vld [vmem:[#allocation2 + $0x6a4] sm:$0xff]
        %v5605 = vld [vmem:[#allocation2 + $0x6ac] sm:$0xff]
        %v5606 = vld [vmem:[#allocation2 + $0x6b4] sm:$0xff]
        %v5607 = vld [vmem:[#allocation2 + $0x6bc] sm:$0xf]
        %v5608 = vld [vmem:[#allocation2 + $0x6c0] sm:$0xff]
        %v5609 = vld [vmem:[#allocation2 + $0x6c8] sm:$0xff]
        %v5610 = vld [vmem:[#allocation2 + $0x6d0] sm:$0xff]
        %v5611 = vld [vmem:[#allocation2 + $0x6d8] sm:$0xff]
        %v5612 = vld [vmem:[#allocation2 + $0x6e0] sm:$0xf]
        %v5613 = vld [vmem:[#allocation2 + $0x6e4] sm:$0xff]
        %v5614 = vld [vmem:[#allocation2 + $0x6ec] sm:$0xff]
        %v5615 = vld [vmem:[#allocation2 + $0x6f4] sm:$0xff]
        %v5616 = vld [vmem:[#allocation2 + $0x6fc] sm:$0xff]
        %v5617 = vld [vmem:[#allocation2 + $0x704] sm:$0xf]
        %v5618 = vld [vmem:[#allocation2 + $0x708] sm:$0xff]
        %v5619 = vld [vmem:[#allocation2 + $0x710] sm:$0xff]
        %v5620 = vld [vmem:[#allocation2 + $0x718] sm:$0xff]
        %v5621 = vld [vmem:[#allocation2 + $0x720] sm:$0xff]
        %v5622 = vld [vmem:[#allocation2 + $0x728] sm:$0xf]
        %v5623 = vld [vmem:[#allocation2 + $0x72c] sm:$0xff]
        %v5624 = vld [vmem:[#allocation2 + $0x734] sm:$0xff]
        %v5625 = vld [vmem:[#allocation2 + $0x73c] sm:$0xff]
        %v5626 = vld [vmem:[#allocation2 + $0x744] sm:$0xff]
        %v5627 = vld [vmem:[#allocation2 + $0x74c] sm:$0xf]
        %v5628 = vld [vmem:[#allocation2 + $0x750] sm:$0xff]
        %v5629 = vld [vmem:[#allocation2 + $0x758] sm:$0xff]
        %v5630 = vld [vmem:[#allocation2 + $0x760] sm:$0xff]
        %v5631 = vld [vmem:[#allocation2 + $0x768] sm:$0xff]
        %v5632 = vld [vmem:[#allocation2 + $0x770] sm:$0xf]
        %v5633 = vld [vmem:[#allocation2 + $0x774] sm:$0xff]
        %v5634 = vld [vmem:[#allocation2 + $0x77c] sm:$0xff]
        %v5635 = vld [vmem:[#allocation2 + $0x784] sm:$0xff]
        %v5636 = vld [vmem:[#allocation2 + $0x78c] sm:$0xff]
        %v5637 = vld [vmem:[#allocation2 + $0x794] sm:$0xf]
        %v5638 = vld [vmem:[#allocation2 + $0x798] sm:$0xff]
        %v5639 = vld [vmem:[#allocation2 + $0x7a0] sm:$0xff]
        %v5640 = vld [vmem:[#allocation2 + $0x7a8] sm:$0xff]
        %v5641 = vld [vmem:[#allocation2 + $0x7b0] sm:$0xff]
        %v5642 = vld [vmem:[#allocation2 + $0x7b8] sm:$0xf]
        %v5643 = vld [vmem:[#allocation2 + $0x7bc] sm:$0xff]
        %v5644 = vld [vmem:[#allocation2 + $0x7c4] sm:$0xff]
        %v5645 = vld [vmem:[#allocation2 + $0x7cc] sm:$0xff]
        %v5646 = vld [vmem:[#allocation2 + $0x7d4] sm:$0xff]
        %v5647 = vld [vmem:[#allocation2 + $0x7dc] sm:$0xf]
        %v5648 = vld [vmem:[#allocation2 + $0x7e0] sm:$0xff]
        %v5649 = vld [vmem:[#allocation2 + $0x7e8] sm:$0xff]
        %v5650 = vld [vmem:[#allocation2 + $0x7f0] sm:$0xff]
        %v5651 = vld [vmem:[#allocation2 + $0x7f8] sm:$0xff]
        %v5652 = vld [vmem:[#allocation2 + $0x800] sm:$0xf]
        %v5653 = vld [vmem:[#allocation2 + $0x804] sm:$0xff]
        %v5654 = vld [vmem:[#allocation2 + $0x80c] sm:$0xff]
        %v5655 = vld [vmem:[#allocation2 + $0x814] sm:$0xff]
        %v5656 = vld [vmem:[#allocation2 + $0x81c] sm:$0xff]
        %v5657 = vld [vmem:[#allocation2 + $0x824] sm:$0xf]
        %v5658 = vld [vmem:[#allocation2 + $0x828] sm:$0xff]
        %v5659 = vld [vmem:[#allocation2 + $0x830] sm:$0xff]
        %v5660 = vld [vmem:[#allocation2 + $0x838] sm:$0xff]
        %v5661 = vld [vmem:[#allocation2 + $0x840] sm:$0xff]
        %v5662 = vld [vmem:[#allocation2 + $0x848] sm:$0xf]
        %v5663 = vld [vmem:[#allocation2 + $0x84c] sm:$0xff]
        %v5664 = vld [vmem:[#allocation2 + $0x854] sm:$0xff]
        %v5665 = vld [vmem:[#allocation2 + $0x85c] sm:$0xff]
        %v5666 = vld [vmem:[#allocation2 + $0x864] sm:$0xff]
        %v5667 = vld [vmem:[#allocation2 + $0x86c] sm:$0xf]
        %v5668 = vld [vmem:[#allocation2 + $0x870] sm:$0xff]
        %v5669 = vld [vmem:[#allocation2 + $0x878] sm:$0xff]
        %v5670 = vld [vmem:[#allocation2 + $0x880] sm:$0xff]
        %v5671 = vld [vmem:[#allocation2 + $0x888] sm:$0xff]
        %v5672 = vld [vmem:[#allocation2 + $0x890] sm:$0xf]
        %v5673 = vld [vmem:[#allocation2 + $0x894] sm:$0xff]
        %v5674 = vld [vmem:[#allocation2 + $0x89c] sm:$0xff]
        %v5675 = vld [vmem:[#allocation2 + $0x8a4] sm:$0xff]
        %v5676 = vld [vmem:[#allocation2 + $0x8ac] sm:$0xff]
        %v5677 = vld [vmem:[#allocation2 + $0x8b4] sm:$0xf]
        %v5678 = vld [vmem:[#allocation2 + $0x8b8] sm:$0xff]
        %v5679 = vld [vmem:[#allocation2 + $0x8c0] sm:$0xff]
        %v5680 = vld [vmem:[#allocation2 + $0x8c8] sm:$0xff]
        %v5681 = vld [vmem:[#allocation2 + $0x8d0] sm:$0xff]
        %v5682 = vld [vmem:[#allocation2 + $0x8d8] sm:$0xf]
        %v5683 = vld [vmem:[#allocation2 + $0x8dc] sm:$0xff]
        %v5684 = vld [vmem:[#allocation2 + $0x8e4] sm:$0xff]
        %v5685 = vld [vmem:[#allocation2 + $0x8ec] sm:$0xff]
        %v5686 = vld [vmem:[#allocation2 + $0x8f4] sm:$0xff]
        %v5687 = vld [vmem:[#allocation2 + $0x8fc] sm:$0xf]
        %v5688 = vld [vmem:[%s2] sm:$0xf]
        %v5689 = vld [vmem:[%s2 + $0x4] sm:$0xf]
        %v5690 = vld [vmem:[%s2 + $0x8] sm:$0xf]
        %v5691 = vld [vmem:[%s2 + $0xc] sm:$0xf]
        %v5692 = vld [vmem:[%s2 + $0x10] sm:$0xf]
        %v5693 = vld [vmem:[%s2 + $0x14] sm:$0xf]
        %v5694 = vld [vmem:[%s2 + $0x18] sm:$0xf]
        %v5695 = vld [vmem:[%s2 + $0x1c] sm:$0xf]
        %v5696 = vld [vmem:[%s2 + $0x20] sm:$0xf]
        %v5697 = vld [vmem:[%s2 + $0x24] sm:$0xf]
        %v5698 = vld [vmem:[%s2 + $0x28] sm:$0xf]
        %v5699 = vld [vmem:[%s2 + $0x2c] sm:$0xf]
        %v5700 = vld [vmem:[%s2 + $0x30] sm:$0xf]
        %v5701 = vld [vmem:[%s2 + $0x34] sm:$0xf]
        %v5702 = vld [vmem:[%s2 + $0x38] sm:$0xf]
        %v5703 = vld [vmem:[%s2 + $0x3c] sm:$0xf]
        %v5704 = vld [vmem:[%s2 + $0x40] sm:$0xf]
        %v5705 = vld [vmem:[%s2 + $0x44] sm:$0xf]
        %v5706 = vld [vmem:[%s2 + $0x48] sm:$0xf]
        %v5707 = vld [vmem:[%s2 + $0x4c] sm:$0xf]
        %v5708 = vld [vmem:[%s2 + $0x50] sm:$0xf]
        %v5709 = vld [vmem:[%s2 + $0x54] sm:$0xf]
        %v5710 = vld [vmem:[%s2 + $0x58] sm:$0xf]
        %v5711 = vld [vmem:[%s2 + $0x5c] sm:$0xf]
        %v5712 = vld [vmem:[%s2 + $0x60] sm:$0xf]
        %v5713 = vld [vmem:[%s2 + $0x64] sm:$0xf]
        %v5714 = vld [vmem:[%s2 + $0x68] sm:$0xf]
        %v5715 = vld [vmem:[%s2 + $0x6c] sm:$0xf]
        %v5716 = vld [vmem:[%s2 + $0x70] sm:$0xf]
        %v5717 = vld [vmem:[%s2 + $0x74] sm:$0xf]
        %v5718 = vld [vmem:[%s2 + $0x78] sm:$0xf]
        %v5719 = vld [vmem:[%s2 + $0x7c] sm:$0xf]
        %v5720 = vld [vmem:[%s2 + $0x80] sm:$0xf]
        %v5721 = vld [vmem:[%s2 + $0x84] sm:$0xf]
        %v5722 = vld [vmem:[%s2 + $0x88] sm:$0xf]
        %v5723 = vld [vmem:[%s2 + $0x8c] sm:$0xf]
        %v5724 = vld [vmem:[%s2 + $0x90] sm:$0xf]
        %v5725 = vld [vmem:[%s2 + $0x94] sm:$0xf]
        %v5726 = vld [vmem:[%s2 + $0x98] sm:$0xf]
        %v5727 = vld [vmem:[%s2 + $0x9c] sm:$0xf]
        %v5728 = vld [vmem:[%s2 + $0xa0] sm:$0xf]
        %v5729 = vld [vmem:[%s2 + $0xa4] sm:$0xf]
        %v5730 = vld [vmem:[%s2 + $0xa8] sm:$0xf]
        %v5731 = vld [vmem:[%s2 + $0xac] sm:$0xf]
        %v5732 = vld [vmem:[%s2 + $0xb0] sm:$0xf]
        %v5733 = vld [vmem:[%s2 + $0xb4] sm:$0xf]
        %v5734 = vld [vmem:[%s2 + $0xb8] sm:$0xf]
        %v5735 = vld [vmem:[%s2 + $0xbc] sm:$0xf]
        %v5736 = vld [vmem:[%s2 + $0xc0] sm:$0xf]
        %v5737 = vld [vmem:[%s2 + $0xc4] sm:$0xf]
        %v5738 = vld [vmem:[%s2 + $0xc8] sm:$0xf]
        %v5739 = vld [vmem:[%s2 + $0xcc] sm:$0xf]
        %v5740 = vld [vmem:[%s2 + $0xd0] sm:$0xf]
        %v5741 = vld [vmem:[%s2 + $0xd4] sm:$0xf]
        %v5742 = vld [vmem:[%s2 + $0xd8] sm:$0xf]
        %v5743 = vld [vmem:[%s2 + $0xdc] sm:$0xf]
        %v5744 = vld [vmem:[%s2 + $0xe0] sm:$0xf]
        %v5745 = vld [vmem:[%s2 + $0xe4] sm:$0xf]
        %v5746 = vld [vmem:[%s2 + $0xe8] sm:$0xf]
        %v5747 = vld [vmem:[%s2 + $0xec] sm:$0xf]
        %v5748 = vld [vmem:[%s2 + $0xf0] sm:$0xf]
        %v5749 = vld [vmem:[%s2 + $0xf4] sm:$0xf]
        %v5750 = vld [vmem:[%s2 + $0xf8] sm:$0xf]
        %v5751 = vld [vmem:[%s2 + $0xfc] sm:$0xf]
        %v5752 = vld [vmem:[%s2 + $0x100] sm:$0xf]
        %v5753 = vld [vmem:[%s2 + $0x104] sm:$0xf]
        %v5754 = vld [vmem:[%s2 + $0x108] sm:$0xf]
        %v5755 = vld [vmem:[%s2 + $0x10c] sm:$0xf]
        %v5756 = vld [vmem:[%s2 + $0x110] sm:$0xf]
        %v5757 = vld [vmem:[%s2 + $0x114] sm:$0xf]
        %v5758 = vld [vmem:[%s2 + $0x118] sm:$0xf]
        %v5759 = vld [vmem:[%s2 + $0x11c] sm:$0xf]
        %v5760 = vld [vmem:[%s2 + $0x120] sm:$0xf]
        %v5761 = vld [vmem:[%s2 + $0x124] sm:$0xf]
        %v5762 = vld [vmem:[%s2 + $0x128] sm:$0xf]
        %v5763 = vld [vmem:[%s2 + $0x12c] sm:$0xf]
        %v5764 = vld [vmem:[%s2 + $0x130] sm:$0xf]
        %v5765 = vld [vmem:[%s2 + $0x134] sm:$0xf]
        %v5766 = vld [vmem:[%s2 + $0x138] sm:$0xf]
        %v5767 = vld [vmem:[%s2 + $0x13c] sm:$0xf]
        %v5768 = vld [vmem:[%s2 + $0x140] sm:$0xf]
        %v5769 = vld [vmem:[%s2 + $0x144] sm:$0xf]
        %v5770 = vld [vmem:[%s2 + $0x148] sm:$0xf]
        %v5771 = vld [vmem:[%s2 + $0x14c] sm:$0xf]
        %v5772 = vld [vmem:[%s2 + $0x150] sm:$0xf]
        %v5773 = vld [vmem:[%s2 + $0x154] sm:$0xf]
        %v5774 = vld [vmem:[%s2 + $0x158] sm:$0xf]
        %v5775 = vld [vmem:[%s2 + $0x15c] sm:$0xf]
        %v5776 = vld [vmem:[%s2 + $0x160] sm:$0xf]
        %v5777 = vld [vmem:[%s2 + $0x164] sm:$0xf]
        %v5778 = vld [vmem:[%s2 + $0x168] sm:$0xf]
        %v5779 = vld [vmem:[%s2 + $0x16c] sm:$0xf]
        %v5780 = vld [vmem:[%s2 + $0x170] sm:$0xf]
        %v5781 = vld [vmem:[%s2 + $0x174] sm:$0xf]
        %v5782 = vld [vmem:[%s2 + $0x178] sm:$0xf]
        %v5783 = vld [vmem:[%s2 + $0x17c] sm:$0xf]
        %v5784 = vld [vmem:[%s2 + $0x180] sm:$0xf]
        %v5785 = vld [vmem:[%s2 + $0x184] sm:$0xf]
        %v5786 = vld [vmem:[%s2 + $0x188] sm:$0xf]
        %v5787 = vld [vmem:[%s2 + $0x18c] sm:$0xf]
        %v5788 = vld [vmem:[%s2 + $0x190] sm:$0xf]
        %v5789 = vld [vmem:[%s2 + $0x194] sm:$0xf]
        %v5790 = vld [vmem:[%s2 + $0x198] sm:$0xf]
        %v5791 = vld [vmem:[%s2 + $0x19c] sm:$0xf]
        %v5792 = vld [vmem:[%s2 + $0x1a0] sm:$0xf]
        %v5793 = vld [vmem:[%s2 + $0x1a4] sm:$0xf]
        %v5794 = vld [vmem:[%s2 + $0x1a8] sm:$0xf]
        %v5795 = vld [vmem:[%s2 + $0x1ac] sm:$0xf]
        %v5796 = vld [vmem:[%s2 + $0x1b0] sm:$0xf]
        %v5797 = vld [vmem:[%s2 + $0x1b4] sm:$0xf]
        %v5798 = vld [vmem:[%s2 + $0x1b8] sm:$0xf]
        %v5799 = vld [vmem:[%s2 + $0x1bc] sm:$0xf]
        %v5800 = vld [vmem:[%s2 + $0x1c0] sm:$0xf]
        %v5801 = vld [vmem:[%s2 + $0x1c4] sm:$0xf]
        %v5802 = vld [vmem:[%s2 + $0x1c8] sm:$0xf]
        %v5803 = vld [vmem:[%s2 + $0x1cc] sm:$0xf]
        %v5804 = vld [vmem:[%s2 + $0x1d0] sm:$0xf]
        %v5805 = vld [vmem:[%s2 + $0x1d4] sm:$0xf]
        %v5806 = vld [vmem:[%s2 + $0x1d8] sm:$0xf]
        %v5807 = vld [vmem:[%s2 + $0x1dc] sm:$0xf]
        %v5808 = vld [vmem:[%s2 + $0x1e0] sm:$0xf]
        %v5809 = vld [vmem:[%s2 + $0x1e4] sm:$0xf]
        %v5810 = vld [vmem:[%s2 + $0x1e8] sm:$0xf]
        %v5811 = vld [vmem:[%s2 + $0x1ec] sm:$0xf]
        %v5812 = vld [vmem:[%s2 + $0x1f0] sm:$0xf]
        %v5813 = vld [vmem:[%s2 + $0x1f4] sm:$0xf]
        %v5814 = vld [vmem:[%s2 + $0x1f8] sm:$0xf]
        %v5815 = vld [vmem:[%s2 + $0x1fc] sm:$0xf]
        %v5816 = vld [vmem:[%s2 + $0x200] sm:$0xf]
        %v5817 = vld [vmem:[%s2 + $0x204] sm:$0xf]
        %v5818 = vld [vmem:[%s2 + $0x208] sm:$0xf]
        %v5819 = vld [vmem:[%s2 + $0x20c] sm:$0xf]
        %v5820 = vld [vmem:[%s2 + $0x210] sm:$0xf]
        %v5821 = vld [vmem:[%s2 + $0x214] sm:$0xf]
        %v5822 = vld [vmem:[%s2 + $0x218] sm:$0xf]
        %v5823 = vld [vmem:[%s2 + $0x21c] sm:$0xf]
        %v5824 = vld [vmem:[%s2 + $0x220] sm:$0xf]
        %v5825 = vld [vmem:[%s2 + $0x224] sm:$0xf]
        %v5826 = vld [vmem:[%s2 + $0x228] sm:$0xf]
        %v5827 = vld [vmem:[%s2 + $0x22c] sm:$0xf]
        %v5828 = vld [vmem:[%s2 + $0x230] sm:$0xf]
        %v5829 = vld [vmem:[%s2 + $0x234] sm:$0xf]
        %v5830 = vld [vmem:[%s2 + $0x238] sm:$0xf]
        %v5831 = vld [vmem:[%s2 + $0x23c] sm:$0xf]
        %v6152 = vunpack.c.l.b16 %v5368
        %v6153 = vunpack.c.h.b16 %v5368
        %v6154 = vunpack.c.l.b16 %v5369
        %v6155 = vunpack.c.h.b16 %v5369
        %v6156 = vunpack.c.l.b16 %v5370
        %v6157 = vunpack.c.h.b16 %v5370
        %v6158 = vunpack.c.l.b16 %v5371
        %v6159 = vunpack.c.h.b16 %v5371
        %v6160 = vunpack.c.l.b16 %v5372
        %v6161 = vunpack.c.l.b16 %v5373
        %v6162 = vunpack.c.h.b16 %v5373
        %v6163 = vunpack.c.l.b16 %v5374
        %v6164 = vunpack.c.h.b16 %v5374
        %v6165 = vunpack.c.l.b16 %v5375
        %v6166 = vunpack.c.h.b16 %v5375
        %v6167 = vunpack.c.l.b16 %v5376
        %v6168 = vunpack.c.h.b16 %v5376
        %v6169 = vunpack.c.l.b16 %v5377
        %v6170 = vunpack.c.l.b16 %v5378
        %v6171 = vunpack.c.h.b16 %v5378
        %v6172 = vunpack.c.l.b16 %v5379
        %v6173 = vunpack.c.h.b16 %v5379
        %v6174 = vunpack.c.l.b16 %v5380
        %v6175 = vunpack.c.h.b16 %v5380
        %v6176 = vunpack.c.l.b16 %v5381
        %v6177 = vunpack.c.h.b16 %v5381
        %v6178 = vunpack.c.l.b16 %v5382
        %v6179 = vunpack.c.l.b16 %v5383
        %v6180 = vunpack.c.h.b16 %v5383
        %v6181 = vunpack.c.l.b16 %v5384
        %v6182 = vunpack.c.h.b16 %v5384
        %v6183 = vunpack.c.l.b16 %v5385
        %v6184 = vunpack.c.h.b16 %v5385
        %v6185 = vunpack.c.l.b16 %v5386
        %v6186 = vunpack.c.h.b16 %v5386
        %v6187 = vunpack.c.l.b16 %v5387
        %v6188 = vunpack.c.l.b16 %v5388
        %v6189 = vunpack.c.h.b16 %v5388
        %v6190 = vunpack.c.l.b16 %v5389
        %v6191 = vunpack.c.h.b16 %v5389
        %v6192 = vunpack.c.l.b16 %v5390
        %v6193 = vunpack.c.h.b16 %v5390
        %v6194 = vunpack.c.l.b16 %v5391
        %v6195 = vunpack.c.h.b16 %v5391
        %v6196 = vunpack.c.l.b16 %v5392
        %v6197 = vunpack.c.l.b16 %v5393
        %v6198 = vunpack.c.h.b16 %v5393
        %v6199 = vunpack.c.l.b16 %v5394
        %v6200 = vunpack.c.h.b16 %v5394
        %v6201 = vunpack.c.l.b16 %v5395
        %v6202 = vunpack.c.h.b16 %v5395
        %v6203 = vunpack.c.l.b16 %v5396
        %v6204 = vunpack.c.h.b16 %v5396
        %v6205 = vunpack.c.l.b16 %v5397
        %v6206 = vunpack.c.l.b16 %v5398
        %v6207 = vunpack.c.h.b16 %v5398
        %v6208 = vunpack.c.l.b16 %v5399
        %v6209 = vunpack.c.h.b16 %v5399
        %v6210 = vunpack.c.l.b16 %v5400
        %v6211 = vunpack.c.h.b16 %v5400
        %v6212 = vunpack.c.l.b16 %v5401
        %v6213 = vunpack.c.h.b16 %v5401
        %v6214 = vunpack.c.l.b16 %v5402
        %v6215 = vunpack.c.l.b16 %v5403
        %v6216 = vunpack.c.h.b16 %v5403
        %v6217 = vunpack.c.l.b16 %v5404
        %v6218 = vunpack.c.h.b16 %v5404
        %v6219 = vunpack.c.l.b16 %v5405
        %v6220 = vunpack.c.h.b16 %v5405
        %v6221 = vunpack.c.l.b16 %v5406
        %v6222 = vunpack.c.h.b16 %v5406
        %v6223 = vunpack.c.l.b16 %v5407
        %v6224 = vunpack.c.l.b16 %v5408
        %v6225 = vunpack.c.h.b16 %v5408
        %v6226 = vunpack.c.l.b16 %v5409
        %v6227 = vunpack.c.h.b16 %v5409
        %v6228 = vunpack.c.l.b16 %v5410
        %v6229 = vunpack.c.h.b16 %v5410
        %v6230 = vunpack.c.l.b16 %v5411
        %v6231 = vunpack.c.h.b16 %v5411
        %v6232 = vunpack.c.l.b16 %v5412
        %v6233 = vunpack.c.l.b16 %v5413
        %v6234 = vunpack.c.h.b16 %v5413
        %v6235 = vunpack.c.l.b16 %v5414
        %v6236 = vunpack.c.h.b16 %v5414
        %v6237 = vunpack.c.l.b16 %v5415
        %v6238 = vunpack.c.h.b16 %v5415
        %v6239 = vunpack.c.l.b16 %v5416
        %v6240 = vunpack.c.h.b16 %v5416
        %v6241 = vunpack.c.l.b16 %v5417
        %v6242 = vunpack.c.l.b16 %v5418
        %v6243 = vunpack.c.h.b16 %v5418
        %v6244 = vunpack.c.l.b16 %v5419
        %v6245 = vunpack.c.h.b16 %v5419
        %v6246 = vunpack.c.l.b16 %v5420
        %v6247 = vunpack.c.h.b16 %v5420
        %v6248 = vunpack.c.l.b16 %v5421
        %v6249 = vunpack.c.h.b16 %v5421
        %v6250 = vunpack.c.l.b16 %v5422
        %v6251 = vunpack.c.l.b16 %v5423
        %v6252 = vunpack.c.h.b16 %v5423
        %v6253 = vunpack.c.l.b16 %v5424
        %v6254 = vunpack.c.h.b16 %v5424
        %v6255 = vunpack.c.l.b16 %v5425
        %v6256 = vunpack.c.h.b16 %v5425
        %v6257 = vunpack.c.l.b16 %v5426
        %v6258 = vunpack.c.h.b16 %v5426
        %v6259 = vunpack.c.l.b16 %v5427
        %v6260 = vunpack.c.l.b16 %v5428
        %v6261 = vunpack.c.h.b16 %v5428
        %v6262 = vunpack.c.l.b16 %v5429
        %v6263 = vunpack.c.h.b16 %v5429
        %v6264 = vunpack.c.l.b16 %v5430
        %v6265 = vunpack.c.h.b16 %v5430
        %v6266 = vunpack.c.l.b16 %v5431
        %v6267 = vunpack.c.h.b16 %v5431
        %v6268 = vunpack.c.l.b16 %v5432
        %v6269 = vunpack.c.l.b16 %v5433
        %v6270 = vunpack.c.h.b16 %v5433
        %v6271 = vunpack.c.l.b16 %v5434
        %v6272 = vunpack.c.h.b16 %v5434
        %v6273 = vunpack.c.l.b16 %v5435
        %v6274 = vunpack.c.h.b16 %v5435
        %v6275 = vunpack.c.l.b16 %v5436
        %v6276 = vunpack.c.h.b16 %v5436
        %v6277 = vunpack.c.l.b16 %v5437
        %v6278 = vunpack.c.l.b16 %v5438
        %v6279 = vunpack.c.h.b16 %v5438
        %v6280 = vunpack.c.l.b16 %v5439
        %v6281 = vunpack.c.h.b16 %v5439
        %v6282 = vunpack.c.l.b16 %v5440
        %v6283 = vunpack.c.h.b16 %v5440
        %v6284 = vunpack.c.l.b16 %v5441
        %v6285 = vunpack.c.h.b16 %v5441
        %v6286 = vunpack.c.l.b16 %v5442
        %v6287 = vunpack.c.l.b16 %v5443
        %v6288 = vunpack.c.h.b16 %v5443
        %v6289 = vunpack.c.l.b16 %v5444
        %v6290 = vunpack.c.h.b16 %v5444
        %v6291 = vunpack.c.l.b16 %v5445
        %v6292 = vunpack.c.h.b16 %v5445
        %v6293 = vunpack.c.l.b16 %v5446
        %v6294 = vunpack.c.h.b16 %v5446
        %v6295 = vunpack.c.l.b16 %v5447
        %v6296 = vunpack.c.l.b16 %v5448
        %v6297 = vunpack.c.h.b16 %v5448
        %v6298 = vunpack.c.l.b16 %v5449
        %v6299 = vunpack.c.h.b16 %v5449
        %v6300 = vunpack.c.l.b16 %v5450
        %v6301 = vunpack.c.h.b16 %v5450
        %v6302 = vunpack.c.l.b16 %v5451
        %v6303 = vunpack.c.h.b16 %v5451
        %v6304 = vunpack.c.l.b16 %v5452
        %v6305 = vunpack.c.l.b16 %v5453
        %v6306 = vunpack.c.h.b16 %v5453
        %v6307 = vunpack.c.l.b16 %v5454
        %v6308 = vunpack.c.h.b16 %v5454
        %v6309 = vunpack.c.l.b16 %v5455
        %v6310 = vunpack.c.h.b16 %v5455
        %v6311 = vunpack.c.l.b16 %v5456
        %v6312 = vunpack.c.h.b16 %v5456
        %v6313 = vunpack.c.l.b16 %v5457
        %v6314 = vunpack.c.l.b16 %v5458
        %v6315 = vunpack.c.h.b16 %v5458
        %v6316 = vunpack.c.l.b16 %v5459
        %v6317 = vunpack.c.h.b16 %v5459
        %v6318 = vunpack.c.l.b16 %v5460
        %v6319 = vunpack.c.h.b16 %v5460
        %v6320 = vunpack.c.l.b16 %v5461
        %v6321 = vunpack.c.h.b16 %v5461
        %v6322 = vunpack.c.l.b16 %v5462
        %v6323 = vunpack.c.l.b16 %v5463
        %v6324 = vunpack.c.h.b16 %v5463
        %v6325 = vunpack.c.l.b16 %v5464
        %v6326 = vunpack.c.h.b16 %v5464
        %v6327 = vunpack.c.l.b16 %v5465
        %v6328 = vunpack.c.h.b16 %v5465
        %v6329 = vunpack.c.l.b16 %v5466
        %v6330 = vunpack.c.h.b16 %v5466
        %v6331 = vunpack.c.l.b16 %v5467
        %v6332 = vunpack.c.l.b16 %v5468
        %v6333 = vunpack.c.h.b16 %v5468
        %v6334 = vunpack.c.l.b16 %v5469
        %v6335 = vunpack.c.h.b16 %v5469
        %v6336 = vunpack.c.l.b16 %v5470
        %v6337 = vunpack.c.h.b16 %v5470
        %v6338 = vunpack.c.l.b16 %v5471
        %v6339 = vunpack.c.h.b16 %v5471
        %v6340 = vunpack.c.l.b16 %v5472
        %v6341 = vunpack.c.l.b16 %v5473
        %v6342 = vunpack.c.h.b16 %v5473
        %v6343 = vunpack.c.l.b16 %v5474
        %v6344 = vunpack.c.h.b16 %v5474
        %v6345 = vunpack.c.l.b16 %v5475
        %v6346 = vunpack.c.h.b16 %v5475
        %v6347 = vunpack.c.l.b16 %v5476
        %v6348 = vunpack.c.h.b16 %v5476
        %v6349 = vunpack.c.l.b16 %v5477
        %v6350 = vunpack.c.l.b16 %v5478
        %v6351 = vunpack.c.h.b16 %v5478
        %v6352 = vunpack.c.l.b16 %v5479
        %v6353 = vunpack.c.h.b16 %v5479
        %v6354 = vunpack.c.l.b16 %v5480
        %v6355 = vunpack.c.h.b16 %v5480
        %v6356 = vunpack.c.l.b16 %v5481
        %v6357 = vunpack.c.h.b16 %v5481
        %v6358 = vunpack.c.l.b16 %v5482
        %v6359 = vunpack.c.l.b16 %v5483
        %v6360 = vunpack.c.h.b16 %v5483
        %v6361 = vunpack.c.l.b16 %v5484
        %v6362 = vunpack.c.h.b16 %v5484
        %v6363 = vunpack.c.l.b16 %v5485
        %v6364 = vunpack.c.h.b16 %v5485
        %v6365 = vunpack.c.l.b16 %v5486
        %v6366 = vunpack.c.h.b16 %v5486
        %v6367 = vunpack.c.l.b16 %v5487
        %v6368 = vunpack.c.l.b16 %v5488
        %v6369 = vunpack.c.h.b16 %v5488
        %v6370 = vunpack.c.l.b16 %v5489
        %v6371 = vunpack.c.h.b16 %v5489
        %v6372 = vunpack.c.l.b16 %v5490
        %v6373 = vunpack.c.h.b16 %v5490
        %v6374 = vunpack.c.l.b16 %v5491
        %v6375 = vunpack.c.h.b16 %v5491
        %v6376 = vunpack.c.l.b16 %v5492
        %v6377 = vunpack.c.l.b16 %v5493
        %v6378 = vunpack.c.h.b16 %v5493
        %v6379 = vunpack.c.l.b16 %v5494
        %v6380 = vunpack.c.h.b16 %v5494
        %v6381 = vunpack.c.l.b16 %v5495
        %v6382 = vunpack.c.h.b16 %v5495
        %v6383 = vunpack.c.l.b16 %v5496
        %v6384 = vunpack.c.h.b16 %v5496
        %v6385 = vunpack.c.l.b16 %v5497
        %v6386 = vunpack.c.l.b16 %v5498
        %v6387 = vunpack.c.h.b16 %v5498
        %v6388 = vunpack.c.l.b16 %v5499
        %v6389 = vunpack.c.h.b16 %v5499
        %v6390 = vunpack.c.l.b16 %v5500
        %v6391 = vunpack.c.h.b16 %v5500
        %v6392 = vunpack.c.l.b16 %v5501
        %v6393 = vunpack.c.h.b16 %v5501
        %v6394 = vunpack.c.l.b16 %v5502
        %v6395 = vunpack.c.l.b16 %v5503
        %v6396 = vunpack.c.h.b16 %v5503
        %v6397 = vunpack.c.l.b16 %v5504
        %v6398 = vunpack.c.h.b16 %v5504
        %v6399 = vunpack.c.l.b16 %v5505
        %v6400 = vunpack.c.h.b16 %v5505
        %v6401 = vunpack.c.l.b16 %v5506
        %v6402 = vunpack.c.h.b16 %v5506
        %v6403 = vunpack.c.l.b16 %v5507
        %v6404 = vunpack.c.l.b16 %v5508
        %v6405 = vunpack.c.h.b16 %v5508
        %v6406 = vunpack.c.l.b16 %v5509
        %v6407 = vunpack.c.h.b16 %v5509
        %v6408 = vunpack.c.l.b16 %v5510
        %v6409 = vunpack.c.h.b16 %v5510
        %v6410 = vunpack.c.l.b16 %v5511
        %v6411 = vunpack.c.h.b16 %v5511
        %v6412 = vunpack.c.l.b16 %v5512
        %v6413 = vunpack.c.l.b16 %v5513
        %v6414 = vunpack.c.h.b16 %v5513
        %v6415 = vunpack.c.l.b16 %v5514
        %v6416 = vunpack.c.h.b16 %v5514
        %v6417 = vunpack.c.l.b16 %v5515
        %v6418 = vunpack.c.h.b16 %v5515
        %v6419 = vunpack.c.l.b16 %v5516
        %v6420 = vunpack.c.h.b16 %v5516
        %v6421 = vunpack.c.l.b16 %v5517
        %v6422 = vunpack.c.l.b16 %v5518
        %v6423 = vunpack.c.h.b16 %v5518
        %v6424 = vunpack.c.l.b16 %v5519
        %v6425 = vunpack.c.h.b16 %v5519
        %v6426 = vunpack.c.l.b16 %v5520
        %v6427 = vunpack.c.h.b16 %v5520
        %v6428 = vunpack.c.l.b16 %v5521
        %v6429 = vunpack.c.h.b16 %v5521
        %v6430 = vunpack.c.l.b16 %v5522
        %v6431 = vunpack.c.l.b16 %v5523
        %v6432 = vunpack.c.h.b16 %v5523
        %v6433 = vunpack.c.l.b16 %v5524
        %v6434 = vunpack.c.h.b16 %v5524
        %v6435 = vunpack.c.l.b16 %v5525
        %v6436 = vunpack.c.h.b16 %v5525
        %v6437 = vunpack.c.l.b16 %v5526
        %v6438 = vunpack.c.h.b16 %v5526
        %v6439 = vunpack.c.l.b16 %v5527
        %v6440 = vunpack.c.l.b16 %v5528
        %v6441 = vunpack.c.h.b16 %v5528
        %v6442 = vunpack.c.l.b16 %v5529
        %v6443 = vunpack.c.h.b16 %v5529
        %v6444 = vunpack.c.l.b16 %v5530
        %v6445 = vunpack.c.h.b16 %v5530
        %v6446 = vunpack.c.l.b16 %v5531
        %v6447 = vunpack.c.h.b16 %v5531
        %v6448 = vunpack.c.l.b16 %v5532
        %v6449 = vunpack.c.l.b16 %v5533
        %v6450 = vunpack.c.h.b16 %v5533
        %v6451 = vunpack.c.l.b16 %v5534
        %v6452 = vunpack.c.h.b16 %v5534
        %v6453 = vunpack.c.l.b16 %v5535
        %v6454 = vunpack.c.h.b16 %v5535
        %v6455 = vunpack.c.l.b16 %v5536
        %v6456 = vunpack.c.h.b16 %v5536
        %v6457 = vunpack.c.l.b16 %v5537
        %v6458 = vunpack.c.l.b16 %v5538
        %v6459 = vunpack.c.h.b16 %v5538
        %v6460 = vunpack.c.l.b16 %v5539
        %v6461 = vunpack.c.h.b16 %v5539
        %v6462 = vunpack.c.l.b16 %v5540
        %v6463 = vunpack.c.h.b16 %v5540
        %v6464 = vunpack.c.l.b16 %v5541
        %v6465 = vunpack.c.h.b16 %v5541
        %v6466 = vunpack.c.l.b16 %v5542
        %v6467 = vunpack.c.l.b16 %v5543
        %v6468 = vunpack.c.h.b16 %v5543
        %v6469 = vunpack.c.l.b16 %v5544
        %v6470 = vunpack.c.h.b16 %v5544
        %v6471 = vunpack.c.l.b16 %v5545
        %v6472 = vunpack.c.h.b16 %v5545
        %v6473 = vunpack.c.l.b16 %v5546
        %v6474 = vunpack.c.h.b16 %v5546
        %v6475 = vunpack.c.l.b16 %v5547
        %v6476 = vunpack.c.l.b16 %v5548
        %v6477 = vunpack.c.h.b16 %v5548
        %v6478 = vunpack.c.l.b16 %v5549
        %v6479 = vunpack.c.h.b16 %v5549
        %v6480 = vunpack.c.l.b16 %v5550
        %v6481 = vunpack.c.h.b16 %v5550
        %v6482 = vunpack.c.l.b16 %v5551
        %v6483 = vunpack.c.h.b16 %v5551
        %v6484 = vunpack.c.l.b16 %v5552
        %v6485 = vunpack.c.l.b16 %v5553
        %v6486 = vunpack.c.h.b16 %v5553
        %v6487 = vunpack.c.l.b16 %v5554
        %v6488 = vunpack.c.h.b16 %v5554
        %v6489 = vunpack.c.l.b16 %v5555
        %v6490 = vunpack.c.h.b16 %v5555
        %v6491 = vunpack.c.l.b16 %v5556
        %v6492 = vunpack.c.h.b16 %v5556
        %v6493 = vunpack.c.l.b16 %v5557
        %v6494 = vunpack.c.l.b16 %v5558
        %v6495 = vunpack.c.h.b16 %v5558
        %v6496 = vunpack.c.l.b16 %v5559
        %v6497 = vunpack.c.h.b16 %v5559
        %v6498 = vunpack.c.l.b16 %v5560
        %v6499 = vunpack.c.h.b16 %v5560
        %v6500 = vunpack.c.l.b16 %v5561
        %v6501 = vunpack.c.h.b16 %v5561
        %v6502 = vunpack.c.l.b16 %v5562
        %v6503 = vunpack.c.l.b16 %v5563
        %v6504 = vunpack.c.h.b16 %v5563
        %v6505 = vunpack.c.l.b16 %v5564
        %v6506 = vunpack.c.h.b16 %v5564
        %v6507 = vunpack.c.l.b16 %v5565
        %v6508 = vunpack.c.h.b16 %v5565
        %v6509 = vunpack.c.l.b16 %v5566
        %v6510 = vunpack.c.h.b16 %v5566
        %v6511 = vunpack.c.l.b16 %v5567
        %v6512 = vunpack.c.l.b16 %v5568
        %v6513 = vunpack.c.h.b16 %v5568
        %v6514 = vunpack.c.l.b16 %v5569
        %v6515 = vunpack.c.h.b16 %v5569
        %v6516 = vunpack.c.l.b16 %v5570
        %v6517 = vunpack.c.h.b16 %v5570
        %v6518 = vunpack.c.l.b16 %v5571
        %v6519 = vunpack.c.h.b16 %v5571
        %v6520 = vunpack.c.l.b16 %v5572
        %v6521 = vunpack.c.l.b16 %v5573
        %v6522 = vunpack.c.h.b16 %v5573
        %v6523 = vunpack.c.l.b16 %v5574
        %v6524 = vunpack.c.h.b16 %v5574
        %v6525 = vunpack.c.l.b16 %v5575
        %v6526 = vunpack.c.h.b16 %v5575
        %v6527 = vunpack.c.l.b16 %v5576
        %v6528 = vunpack.c.h.b16 %v5576
        %v6529 = vunpack.c.l.b16 %v5577
        %v6530 = vunpack.c.l.b16 %v5578
        %v6531 = vunpack.c.h.b16 %v5578
        %v6532 = vunpack.c.l.b16 %v5579
        %v6533 = vunpack.c.h.b16 %v5579
        %v6534 = vunpack.c.l.b16 %v5580
        %v6535 = vunpack.c.h.b16 %v5580
        %v6536 = vunpack.c.l.b16 %v5581
        %v6537 = vunpack.c.h.b16 %v5581
        %v6538 = vunpack.c.l.b16 %v5582
        %v6539 = vunpack.c.l.b16 %v5583
        %v6540 = vunpack.c.h.b16 %v5583
        %v6541 = vunpack.c.l.b16 %v5584
        %v6542 = vunpack.c.h.b16 %v5584
        %v6543 = vunpack.c.l.b16 %v5585
        %v6544 = vunpack.c.h.b16 %v5585
        %v6545 = vunpack.c.l.b16 %v5586
        %v6546 = vunpack.c.h.b16 %v5586
        %v6547 = vunpack.c.l.b16 %v5587
        %v6548 = vunpack.c.l.b16 %v5588
        %v6549 = vunpack.c.h.b16 %v5588
        %v6550 = vunpack.c.l.b16 %v5589
        %v6551 = vunpack.c.h.b16 %v5589
        %v6552 = vunpack.c.l.b16 %v5590
        %v6553 = vunpack.c.h.b16 %v5590
        %v6554 = vunpack.c.l.b16 %v5591
        %v6555 = vunpack.c.h.b16 %v5591
        %v6556 = vunpack.c.l.b16 %v5592
        %v6557 = vunpack.c.l.b16 %v5593
        %v6558 = vunpack.c.h.b16 %v5593
        %v6559 = vunpack.c.l.b16 %v5594
        %v6560 = vunpack.c.h.b16 %v5594
        %v6561 = vunpack.c.l.b16 %v5595
        %v6562 = vunpack.c.h.b16 %v5595
        %v6563 = vunpack.c.l.b16 %v5596
        %v6564 = vunpack.c.h.b16 %v5596
        %v6565 = vunpack.c.l.b16 %v5597
        %v6566 = vunpack.c.l.b16 %v5598
        %v6567 = vunpack.c.h.b16 %v5598
        %v6568 = vunpack.c.l.b16 %v5599
        %v6569 = vunpack.c.h.b16 %v5599
        %v6570 = vunpack.c.l.b16 %v5600
        %v6571 = vunpack.c.h.b16 %v5600
        %v6572 = vunpack.c.l.b16 %v5601
        %v6573 = vunpack.c.h.b16 %v5601
        %v6574 = vunpack.c.l.b16 %v5602
        %v6575 = vunpack.c.l.b16 %v5603
        %v6576 = vunpack.c.h.b16 %v5603
        %v6577 = vunpack.c.l.b16 %v5604
        %v6578 = vunpack.c.h.b16 %v5604
        %v6579 = vunpack.c.l.b16 %v5605
        %v6580 = vunpack.c.h.b16 %v5605
        %v6581 = vunpack.c.l.b16 %v5606
        %v6582 = vunpack.c.h.b16 %v5606
        %v6583 = vunpack.c.l.b16 %v5607
        %v6584 = vunpack.c.l.b16 %v5608
        %v6585 = vunpack.c.h.b16 %v5608
        %v6586 = vunpack.c.l.b16 %v5609
        %v6587 = vunpack.c.h.b16 %v5609
        %v6588 = vunpack.c.l.b16 %v5610
        %v6589 = vunpack.c.h.b16 %v5610
        %v6590 = vunpack.c.l.b16 %v5611
        %v6591 = vunpack.c.h.b16 %v5611
        %v6592 = vunpack.c.l.b16 %v5612
        %v6593 = vunpack.c.l.b16 %v5613
        %v6594 = vunpack.c.h.b16 %v5613
        %v6595 = vunpack.c.l.b16 %v5614
        %v6596 = vunpack.c.h.b16 %v5614
        %v6597 = vunpack.c.l.b16 %v5615
        %v6598 = vunpack.c.h.b16 %v5615
        %v6599 = vunpack.c.l.b16 %v5616
        %v6600 = vunpack.c.h.b16 %v5616
        %v6601 = vunpack.c.l.b16 %v5617
        %v6602 = vunpack.c.l.b16 %v5618
        %v6603 = vunpack.c.h.b16 %v5618
        %v6604 = vunpack.c.l.b16 %v5619
        %v6605 = vunpack.c.h.b16 %v5619
        %v6606 = vunpack.c.l.b16 %v5620
        %v6607 = vunpack.c.h.b16 %v5620
        %v6608 = vunpack.c.l.b16 %v5621
        %v6609 = vunpack.c.h.b16 %v5621
        %v6610 = vunpack.c.l.b16 %v5622
        %v6611 = vunpack.c.l.b16 %v5623
        %v6612 = vunpack.c.h.b16 %v5623
        %v6613 = vunpack.c.l.b16 %v5624
        %v6614 = vunpack.c.h.b16 %v5624
        %v6615 = vunpack.c.l.b16 %v5625
        %v6616 = vunpack.c.h.b16 %v5625
        %v6617 = vunpack.c.l.b16 %v5626
        %v6618 = vunpack.c.h.b16 %v5626
        %v6619 = vunpack.c.l.b16 %v5627
        %v6620 = vunpack.c.l.b16 %v5628
        %v6621 = vunpack.c.h.b16 %v5628
        %v6622 = vunpack.c.l.b16 %v5629
        %v6623 = vunpack.c.h.b16 %v5629
        %v6624 = vunpack.c.l.b16 %v5630
        %v6625 = vunpack.c.h.b16 %v5630
        %v6626 = vunpack.c.l.b16 %v5631
        %v6627 = vunpack.c.h.b16 %v5631
        %v6628 = vunpack.c.l.b16 %v5632
        %v6629 = vunpack.c.l.b16 %v5633
        %v6630 = vunpack.c.h.b16 %v5633
        %v6631 = vunpack.c.l.b16 %v5634
        %v6632 = vunpack.c.h.b16 %v5634
        %v6633 = vunpack.c.l.b16 %v5635
        %v6634 = vunpack.c.h.b16 %v5635
        %v6635 = vunpack.c.l.b16 %v5636
        %v6636 = vunpack.c.h.b16 %v5636
        %v6637 = vunpack.c.l.b16 %v5637
        %v6638 = vunpack.c.l.b16 %v5638
        %v6639 = vunpack.c.h.b16 %v5638
        %v6640 = vunpack.c.l.b16 %v5639
        %v6641 = vunpack.c.h.b16 %v5639
        %v6642 = vunpack.c.l.b16 %v5640
        %v6643 = vunpack.c.h.b16 %v5640
        %v6644 = vunpack.c.l.b16 %v5641
        %v6645 = vunpack.c.h.b16 %v5641
        %v6646 = vunpack.c.l.b16 %v5642
        %v6647 = vunpack.c.l.b16 %v5643
        %v6648 = vunpack.c.h.b16 %v5643
        %v6649 = vunpack.c.l.b16 %v5644
        %v6650 = vunpack.c.h.b16 %v5644
        %v6651 = vunpack.c.l.b16 %v5645
        %v6652 = vunpack.c.h.b16 %v5645
        %v6653 = vunpack.c.l.b16 %v5646
        %v6654 = vunpack.c.h.b16 %v5646
        %v6655 = vunpack.c.l.b16 %v5647
        %v6656 = vunpack.c.l.b16 %v5648
        %v6657 = vunpack.c.h.b16 %v5648
        %v6658 = vunpack.c.l.b16 %v5649
        %v6659 = vunpack.c.h.b16 %v5649
        %v6660 = vunpack.c.l.b16 %v5650
        %v6661 = vunpack.c.h.b16 %v5650
        %v6662 = vunpack.c.l.b16 %v5651
        %v6663 = vunpack.c.h.b16 %v5651
        %v6664 = vunpack.c.l.b16 %v5652
        %v6665 = vunpack.c.l.b16 %v5653
        %v6666 = vunpack.c.h.b16 %v5653
        %v6667 = vunpack.c.l.b16 %v5654
        %v6668 = vunpack.c.h.b16 %v5654
        %v6669 = vunpack.c.l.b16 %v5655
        %v6670 = vunpack.c.h.b16 %v5655
        %v6671 = vunpack.c.l.b16 %v5656
        %v6672 = vunpack.c.h.b16 %v5656
        %v6673 = vunpack.c.l.b16 %v5657
        %v6674 = vunpack.c.l.b16 %v5658
        %v6675 = vunpack.c.h.b16 %v5658
        %v6676 = vunpack.c.l.b16 %v5659
        %v6677 = vunpack.c.h.b16 %v5659
        %v6678 = vunpack.c.l.b16 %v5660
        %v6679 = vunpack.c.h.b16 %v5660
        %v6680 = vunpack.c.l.b16 %v5661
        %v6681 = vunpack.c.h.b16 %v5661
        %v6682 = vunpack.c.l.b16 %v5662
        %v6683 = vunpack.c.l.b16 %v5663
        %v6684 = vunpack.c.h.b16 %v5663
        %v6685 = vunpack.c.l.b16 %v5664
        %v6686 = vunpack.c.h.b16 %v5664
        %v6687 = vunpack.c.l.b16 %v5665
        %v6688 = vunpack.c.h.b16 %v5665
        %v6689 = vunpack.c.l.b16 %v5666
        %v6690 = vunpack.c.h.b16 %v5666
        %v6691 = vunpack.c.l.b16 %v5667
        %v6692 = vunpack.c.l.b16 %v5668
        %v6693 = vunpack.c.h.b16 %v5668
        %v6694 = vunpack.c.l.b16 %v5669
        %v6695 = vunpack.c.h.b16 %v5669
        %v6696 = vunpack.c.l.b16 %v5670
        %v6697 = vunpack.c.h.b16 %v5670
        %v6698 = vunpack.c.l.b16 %v5671
        %v6699 = vunpack.c.h.b16 %v5671
        %v6700 = vunpack.c.l.b16 %v5672
        %v6701 = vunpack.c.l.b16 %v5673
        %v6702 = vunpack.c.h.b16 %v5673
        %v6703 = vunpack.c.l.b16 %v5674
        %v6704 = vunpack.c.h.b16 %v5674
        %v6705 = vunpack.c.l.b16 %v5675
        %v6706 = vunpack.c.h.b16 %v5675
        %v6707 = vunpack.c.l.b16 %v5676
        %v6708 = vunpack.c.h.b16 %v5676
        %v6709 = vunpack.c.l.b16 %v5677
        %v6710 = vunpack.c.l.b16 %v5678
        %v6711 = vunpack.c.h.b16 %v5678
        %v6712 = vunpack.c.l.b16 %v5679
        %v6713 = vunpack.c.h.b16 %v5679
        %v6714 = vunpack.c.l.b16 %v5680
        %v6715 = vunpack.c.h.b16 %v5680
        %v6716 = vunpack.c.l.b16 %v5681
        %v6717 = vunpack.c.h.b16 %v5681
        %v6718 = vunpack.c.l.b16 %v5682
        %v6719 = vunpack.c.l.b16 %v5683
        %v6720 = vunpack.c.h.b16 %v5683
        %v6721 = vunpack.c.l.b16 %v5684
        %v6722 = vunpack.c.h.b16 %v5684
        %v6723 = vunpack.c.l.b16 %v5685
        %v6724 = vunpack.c.h.b16 %v5685
        %v6725 = vunpack.c.l.b16 %v5686
        %v6726 = vunpack.c.h.b16 %v5686
        %v6727 = vunpack.c.l.b16 %v5687
        %v6728 = vpack.c.b16 %v6161, %v6152
        %v6729 = vpack.c.b16 %v6162, %v6153
        %v6730 = vpack.c.b16 %v6163, %v6154
        %v6731 = vpack.c.b16 %v6164, %v6155
        %v6732 = vpack.c.b16 %v6165, %v6156
        %v6733 = vpack.c.b16 %v6166, %v6157
        %v6734 = vpack.c.b16 %v6167, %v6158
        %v6735 = vpack.c.b16 %v6168, %v6159
        %v6736 = vpack.c.b16 %v6169, %v6160
        %v6737 = vpack.c.b16 %v6179, %v6170
        %v6738 = vpack.c.b16 %v6180, %v6171
        %v6739 = vpack.c.b16 %v6181, %v6172
        %v6740 = vpack.c.b16 %v6182, %v6173
        %v6741 = vpack.c.b16 %v6183, %v6174
        %v6742 = vpack.c.b16 %v6184, %v6175
        %v6743 = vpack.c.b16 %v6185, %v6176
        %v6744 = vpack.c.b16 %v6186, %v6177
        %v6745 = vpack.c.b16 %v6187, %v6178
        %v6746 = vpack.c.b16 %v6197, %v6188
        %v6747 = vpack.c.b16 %v6198, %v6189
        %v6748 = vpack.c.b16 %v6199, %v6190
        %v6749 = vpack.c.b16 %v6200, %v6191
        %v6750 = vpack.c.b16 %v6201, %v6192
        %v6751 = vpack.c.b16 %v6202, %v6193
        %v6752 = vpack.c.b16 %v6203, %v6194
        %v6753 = vpack.c.b16 %v6204, %v6195
        %v6754 = vpack.c.b16 %v6205, %v6196
        %v6755 = vpack.c.b16 %v6215, %v6206
        %v6756 = vpack.c.b16 %v6216, %v6207
        %v6757 = vpack.c.b16 %v6217, %v6208
        %v6758 = vpack.c.b16 %v6218, %v6209
        %v6759 = vpack.c.b16 %v6219, %v6210
        %v6760 = vpack.c.b16 %v6220, %v6211
        %v6761 = vpack.c.b16 %v6221, %v6212
        %v6762 = vpack.c.b16 %v6222, %v6213
        %v6763 = vpack.c.b16 %v6223, %v6214
        %v6764 = vpack.c.b16 %v6233, %v6224
        %v6765 = vpack.c.b16 %v6234, %v6225
        %v6766 = vpack.c.b16 %v6235, %v6226
        %v6767 = vpack.c.b16 %v6236, %v6227
        %v6768 = vpack.c.b16 %v6237, %v6228
        %v6769 = vpack.c.b16 %v6238, %v6229
        %v6770 = vpack.c.b16 %v6239, %v6230
        %v6771 = vpack.c.b16 %v6240, %v6231
        %v6772 = vpack.c.b16 %v6241, %v6232
        %v6773 = vpack.c.b16 %v6251, %v6242
        %v6774 = vpack.c.b16 %v6252, %v6243
        %v6775 = vpack.c.b16 %v6253, %v6244
        %v6776 = vpack.c.b16 %v6254, %v6245
        %v6777 = vpack.c.b16 %v6255, %v6246
        %v6778 = vpack.c.b16 %v6256, %v6247
        %v6779 = vpack.c.b16 %v6257, %v6248
        %v6780 = vpack.c.b16 %v6258, %v6249
        %v6781 = vpack.c.b16 %v6259, %v6250
        %v6782 = vpack.c.b16 %v6269, %v6260
        %v6783 = vpack.c.b16 %v6270, %v6261
        %v6784 = vpack.c.b16 %v6271, %v6262
        %v6785 = vpack.c.b16 %v6272, %v6263
        %v6786 = vpack.c.b16 %v6273, %v6264
        %v6787 = vpack.c.b16 %v6274, %v6265
        %v6788 = vpack.c.b16 %v6275, %v6266
        %v6789 = vpack.c.b16 %v6276, %v6267
        %v6790 = vpack.c.b16 %v6277, %v6268
        %v6791 = vpack.c.b16 %v6287, %v6278
        %v6792 = vpack.c.b16 %v6288, %v6279
        %v6793 = vpack.c.b16 %v6289, %v6280
        %v6794 = vpack.c.b16 %v6290, %v6281
        %v6795 = vpack.c.b16 %v6291, %v6282
        %v6796 = vpack.c.b16 %v6292, %v6283
        %v6797 = vpack.c.b16 %v6293, %v6284
        %v6798 = vpack.c.b16 %v6294, %v6285
        %v6799 = vpack.c.b16 %v6295, %v6286
        %v6800 = vpack.c.b16 %v6305, %v6296
        %v6801 = vpack.c.b16 %v6306, %v6297
        %v6802 = vpack.c.b16 %v6307, %v6298
        %v6803 = vpack.c.b16 %v6308, %v6299
        %v6804 = vpack.c.b16 %v6309, %v6300
        %v6805 = vpack.c.b16 %v6310, %v6301
        %v6806 = vpack.c.b16 %v6311, %v6302
        %v6807 = vpack.c.b16 %v6312, %v6303
        %v6808 = vpack.c.b16 %v6313, %v6304
        %v6809 = vpack.c.b16 %v6323, %v6314
        %v6810 = vpack.c.b16 %v6324, %v6315
        %v6811 = vpack.c.b16 %v6325, %v6316
        %v6812 = vpack.c.b16 %v6326, %v6317
        %v6813 = vpack.c.b16 %v6327, %v6318
        %v6814 = vpack.c.b16 %v6328, %v6319
        %v6815 = vpack.c.b16 %v6329, %v6320
        %v6816 = vpack.c.b16 %v6330, %v6321
        %v6817 = vpack.c.b16 %v6331, %v6322
        %v6818 = vpack.c.b16 %v6341, %v6332
        %v6819 = vpack.c.b16 %v6342, %v6333
        %v6820 = vpack.c.b16 %v6343, %v6334
        %v6821 = vpack.c.b16 %v6344, %v6335
        %v6822 = vpack.c.b16 %v6345, %v6336
        %v6823 = vpack.c.b16 %v6346, %v6337
        %v6824 = vpack.c.b16 %v6347, %v6338
        %v6825 = vpack.c.b16 %v6348, %v6339
        %v6826 = vpack.c.b16 %v6349, %v6340
        %v6827 = vpack.c.b16 %v6359, %v6350
        %v6828 = vpack.c.b16 %v6360, %v6351
        %v6829 = vpack.c.b16 %v6361, %v6352
        %v6830 = vpack.c.b16 %v6362, %v6353
        %v6831 = vpack.c.b16 %v6363, %v6354
        %v6832 = vpack.c.b16 %v6364, %v6355
        %v6833 = vpack.c.b16 %v6365, %v6356
        %v6834 = vpack.c.b16 %v6366, %v6357
        %v6835 = vpack.c.b16 %v6367, %v6358
        %v6836 = vpack.c.b16 %v6377, %v6368
        %v6837 = vpack.c.b16 %v6378, %v6369
        %v6838 = vpack.c.b16 %v6379, %v6370
        %v6839 = vpack.c.b16 %v6380, %v6371
        %v6840 = vpack.c.b16 %v6381, %v6372
        %v6841 = vpack.c.b16 %v6382, %v6373
        %v6842 = vpack.c.b16 %v6383, %v6374
        %v6843 = vpack.c.b16 %v6384, %v6375
        %v6844 = vpack.c.b16 %v6385, %v6376
        %v6845 = vpack.c.b16 %v6395, %v6386
        %v6846 = vpack.c.b16 %v6396, %v6387
        %v6847 = vpack.c.b16 %v6397, %v6388
        %v6848 = vpack.c.b16 %v6398, %v6389
        %v6849 = vpack.c.b16 %v6399, %v6390
        %v6850 = vpack.c.b16 %v6400, %v6391
        %v6851 = vpack.c.b16 %v6401, %v6392
        %v6852 = vpack.c.b16 %v6402, %v6393
        %v6853 = vpack.c.b16 %v6403, %v6394
        %v6854 = vpack.c.b16 %v6413, %v6404
        %v6855 = vpack.c.b16 %v6414, %v6405
        %v6856 = vpack.c.b16 %v6415, %v6406
        %v6857 = vpack.c.b16 %v6416, %v6407
        %v6858 = vpack.c.b16 %v6417, %v6408
        %v6859 = vpack.c.b16 %v6418, %v6409
        %v6860 = vpack.c.b16 %v6419, %v6410
        %v6861 = vpack.c.b16 %v6420, %v6411
        %v6862 = vpack.c.b16 %v6421, %v6412
        %v6863 = vpack.c.b16 %v6431, %v6422
        %v6864 = vpack.c.b16 %v6432, %v6423
        %v6865 = vpack.c.b16 %v6433, %v6424
        %v6866 = vpack.c.b16 %v6434, %v6425
        %v6867 = vpack.c.b16 %v6435, %v6426
        %v6868 = vpack.c.b16 %v6436, %v6427
        %v6869 = vpack.c.b16 %v6437, %v6428
        %v6870 = vpack.c.b16 %v6438, %v6429
        %v6871 = vpack.c.b16 %v6439, %v6430
        %v6872 = vpack.c.b16 %v6449, %v6440
        %v6873 = vpack.c.b16 %v6450, %v6441
        %v6874 = vpack.c.b16 %v6451, %v6442
        %v6875 = vpack.c.b16 %v6452, %v6443
        %v6876 = vpack.c.b16 %v6453, %v6444
        %v6877 = vpack.c.b16 %v6454, %v6445
        %v6878 = vpack.c.b16 %v6455, %v6446
        %v6879 = vpack.c.b16 %v6456, %v6447
        %v6880 = vpack.c.b16 %v6457, %v6448
        %v6881 = vpack.c.b16 %v6467, %v6458
        %v6882 = vpack.c.b16 %v6468, %v6459
        %v6883 = vpack.c.b16 %v6469, %v6460
        %v6884 = vpack.c.b16 %v6470, %v6461
        %v6885 = vpack.c.b16 %v6471, %v6462
        %v6886 = vpack.c.b16 %v6472, %v6463
        %v6887 = vpack.c.b16 %v6473, %v6464
        %v6888 = vpack.c.b16 %v6474, %v6465
        %v6889 = vpack.c.b16 %v6475, %v6466
        %v6890 = vpack.c.b16 %v6485, %v6476
        %v6891 = vpack.c.b16 %v6486, %v6477
        %v6892 = vpack.c.b16 %v6487, %v6478
        %v6893 = vpack.c.b16 %v6488, %v6479
        %v6894 = vpack.c.b16 %v6489, %v6480
        %v6895 = vpack.c.b16 %v6490, %v6481
        %v6896 = vpack.c.b16 %v6491, %v6482
        %v6897 = vpack.c.b16 %v6492, %v6483
        %v6898 = vpack.c.b16 %v6493, %v6484
        %v6899 = vpack.c.b16 %v6503, %v6494
        %v6900 = vpack.c.b16 %v6504, %v6495
        %v6901 = vpack.c.b16 %v6505, %v6496
        %v6902 = vpack.c.b16 %v6506, %v6497
        %v6903 = vpack.c.b16 %v6507, %v6498
        %v6904 = vpack.c.b16 %v6508, %v6499
        %v6905 = vpack.c.b16 %v6509, %v6500
        %v6906 = vpack.c.b16 %v6510, %v6501
        %v6907 = vpack.c.b16 %v6511, %v6502
        %v6908 = vpack.c.b16 %v6521, %v6512
        %v6909 = vpack.c.b16 %v6522, %v6513
        %v6910 = vpack.c.b16 %v6523, %v6514
        %v6911 = vpack.c.b16 %v6524, %v6515
        %v6912 = vpack.c.b16 %v6525, %v6516
        %v6913 = vpack.c.b16 %v6526, %v6517
        %v6914 = vpack.c.b16 %v6527, %v6518
        %v6915 = vpack.c.b16 %v6528, %v6519
        %v6916 = vpack.c.b16 %v6529, %v6520
        %v6917 = vpack.c.b16 %v6539, %v6530
        %v6918 = vpack.c.b16 %v6540, %v6531
        %v6919 = vpack.c.b16 %v6541, %v6532
        %v6920 = vpack.c.b16 %v6542, %v6533
        %v6921 = vpack.c.b16 %v6543, %v6534
        %v6922 = vpack.c.b16 %v6544, %v6535
        %v6923 = vpack.c.b16 %v6545, %v6536
        %v6924 = vpack.c.b16 %v6546, %v6537
        %v6925 = vpack.c.b16 %v6547, %v6538
        %v6926 = vpack.c.b16 %v6557, %v6548
        %v6927 = vpack.c.b16 %v6558, %v6549
        %v6928 = vpack.c.b16 %v6559, %v6550
        %v6929 = vpack.c.b16 %v6560, %v6551
        %v6930 = vpack.c.b16 %v6561, %v6552
        %v6931 = vpack.c.b16 %v6562, %v6553
        %v6932 = vpack.c.b16 %v6563, %v6554
        %v6933 = vpack.c.b16 %v6564, %v6555
        %v6934 = vpack.c.b16 %v6565, %v6556
        %v6935 = vpack.c.b16 %v6575, %v6566
        %v6936 = vpack.c.b16 %v6576, %v6567
        %v6937 = vpack.c.b16 %v6577, %v6568
        %v6938 = vpack.c.b16 %v6578, %v6569
        %v6939 = vpack.c.b16 %v6579, %v6570
        %v6940 = vpack.c.b16 %v6580, %v6571
        %v6941 = vpack.c.b16 %v6581, %v6572
        %v6942 = vpack.c.b16 %v6582, %v6573
        %v6943 = vpack.c.b16 %v6583, %v6574
        %v6944 = vpack.c.b16 %v6593, %v6584
        %v6945 = vpack.c.b16 %v6594, %v6585
        %v6946 = vpack.c.b16 %v6595, %v6586
        %v6947 = vpack.c.b16 %v6596, %v6587
        %v6948 = vpack.c.b16 %v6597, %v6588
        %v6949 = vpack.c.b16 %v6598, %v6589
        %v6950 = vpack.c.b16 %v6599, %v6590
        %v6951 = vpack.c.b16 %v6600, %v6591
        %v6952 = vpack.c.b16 %v6601, %v6592
        %v6953 = vpack.c.b16 %v6611, %v6602
        %v6954 = vpack.c.b16 %v6612, %v6603
        %v6955 = vpack.c.b16 %v6613, %v6604
        %v6956 = vpack.c.b16 %v6614, %v6605
        %v6957 = vpack.c.b16 %v6615, %v6606
        %v6958 = vpack.c.b16 %v6616, %v6607
        %v6959 = vpack.c.b16 %v6617, %v6608
        %v6960 = vpack.c.b16 %v6618, %v6609
        %v6961 = vpack.c.b16 %v6619, %v6610
        %v6962 = vpack.c.b16 %v6629, %v6620
        %v6963 = vpack.c.b16 %v6630, %v6621
        %v6964 = vpack.c.b16 %v6631, %v6622
        %v6965 = vpack.c.b16 %v6632, %v6623
        %v6966 = vpack.c.b16 %v6633, %v6624
        %v6967 = vpack.c.b16 %v6634, %v6625
        %v6968 = vpack.c.b16 %v6635, %v6626
        %v6969 = vpack.c.b16 %v6636, %v6627
        %v6970 = vpack.c.b16 %v6637, %v6628
        %v6971 = vpack.c.b16 %v6647, %v6638
        %v6972 = vpack.c.b16 %v6648, %v6639
        %v6973 = vpack.c.b16 %v6649, %v6640
        %v6974 = vpack.c.b16 %v6650, %v6641
        %v6975 = vpack.c.b16 %v6651, %v6642
        %v6976 = vpack.c.b16 %v6652, %v6643
        %v6977 = vpack.c.b16 %v6653, %v6644
        %v6978 = vpack.c.b16 %v6654, %v6645
        %v6979 = vpack.c.b16 %v6655, %v6646
        %v6980 = vpack.c.b16 %v6665, %v6656
        %v6981 = vpack.c.b16 %v6666, %v6657
        %v6982 = vpack.c.b16 %v6667, %v6658
        %v6983 = vpack.c.b16 %v6668, %v6659
        %v6984 = vpack.c.b16 %v6669, %v6660
        %v6985 = vpack.c.b16 %v6670, %v6661
        %v6986 = vpack.c.b16 %v6671, %v6662
        %v6987 = vpack.c.b16 %v6672, %v6663
        %v6988 = vpack.c.b16 %v6673, %v6664
        %v6989 = vpack.c.b16 %v6683, %v6674
        %v6990 = vpack.c.b16 %v6684, %v6675
        %v6991 = vpack.c.b16 %v6685, %v6676
        %v6992 = vpack.c.b16 %v6686, %v6677
        %v6993 = vpack.c.b16 %v6687, %v6678
        %v6994 = vpack.c.b16 %v6688, %v6679
        %v6995 = vpack.c.b16 %v6689, %v6680
        %v6996 = vpack.c.b16 %v6690, %v6681
        %v6997 = vpack.c.b16 %v6691, %v6682
        %v6998 = vpack.c.b16 %v6701, %v6692
        %v6999 = vpack.c.b16 %v6702, %v6693
        %v7000 = vpack.c.b16 %v6703, %v6694
        %v7001 = vpack.c.b16 %v6704, %v6695
        %v7002 = vpack.c.b16 %v6705, %v6696
        %v7003 = vpack.c.b16 %v6706, %v6697
        %v7004 = vpack.c.b16 %v6707, %v6698
        %v7005 = vpack.c.b16 %v6708, %v6699
        %v7006 = vpack.c.b16 %v6709, %v6700
        %v7007 = vpack.c.b16 %v6719, %v6710
        %v7008 = vpack.c.b16 %v6720, %v6711
        %v7009 = vpack.c.b16 %v6721, %v6712
        %v7010 = vpack.c.b16 %v6722, %v6713
        %v7011 = vpack.c.b16 %v6723, %v6714
        %v7012 = vpack.c.b16 %v6724, %v6715
        %v7013 = vpack.c.b16 %v6725, %v6716
        %v7014 = vpack.c.b16 %v6726, %v6717
        %v7015 = vpack.c.b16 %v6727, %v6718
        %v7448 = vunpack.c.l.b16 %v5688
        %v7449 = vunpack.c.l.b16 %v5689
        %v7450 = vunpack.c.l.b16 %v5690
        %v7451 = vunpack.c.l.b16 %v5691
        %v7452 = vunpack.c.l.b16 %v5692
        %v7453 = vunpack.c.l.b16 %v5693
        %v7454 = vunpack.c.l.b16 %v5694
        %v7455 = vunpack.c.l.b16 %v5695
        %v7456 = vunpack.c.l.b16 %v5696
        %v7457 = vunpack.c.l.b16 %v5697
        %v7458 = vunpack.c.l.b16 %v5698
        %v7459 = vunpack.c.l.b16 %v5699
        %v7460 = vunpack.c.l.b16 %v5700
        %v7461 = vunpack.c.l.b16 %v5701
        %v7462 = vunpack.c.l.b16 %v5702
        %v7463 = vunpack.c.l.b16 %v5703
        %v7464 = vunpack.c.l.b16 %v5704
        %v7465 = vunpack.c.l.b16 %v5705
        %v7466 = vunpack.c.l.b16 %v5706
        %v7467 = vunpack.c.l.b16 %v5707
        %v7468 = vunpack.c.l.b16 %v5708
        %v7469 = vunpack.c.l.b16 %v5709
        %v7470 = vunpack.c.l.b16 %v5710
        %v7471 = vunpack.c.l.b16 %v5711
        %v7472 = vunpack.c.l.b16 %v5712
        %v7473 = vunpack.c.l.b16 %v5713
        %v7474 = vunpack.c.l.b16 %v5714
        %v7475 = vunpack.c.l.b16 %v5715
        %v7476 = vunpack.c.l.b16 %v5716
        %v7477 = vunpack.c.l.b16 %v5717
        %v7478 = vunpack.c.l.b16 %v5718
        %v7479 = vunpack.c.l.b16 %v5719
        %v7480 = vunpack.c.l.b16 %v5720
        %v7481 = vunpack.c.l.b16 %v5721
        %v7482 = vunpack.c.l.b16 %v5722
        %v7483 = vunpack.c.l.b16 %v5723
        %v7484 = vunpack.c.l.b16 %v5724
        %v7485 = vunpack.c.l.b16 %v5725
        %v7486 = vunpack.c.l.b16 %v5726
        %v7487 = vunpack.c.l.b16 %v5727
        %v7488 = vunpack.c.l.b16 %v5728
        %v7489 = vunpack.c.l.b16 %v5729
        %v7490 = vunpack.c.l.b16 %v5730
        %v7491 = vunpack.c.l.b16 %v5731
        %v7492 = vunpack.c.l.b16 %v5732
        %v7493 = vunpack.c.l.b16 %v5733
        %v7494 = vunpack.c.l.b16 %v5734
        %v7495 = vunpack.c.l.b16 %v5735
        %v7496 = vunpack.c.l.b16 %v5736
        %v7497 = vunpack.c.l.b16 %v5737
        %v7498 = vunpack.c.l.b16 %v5738
        %v7499 = vunpack.c.l.b16 %v5739
        %v7500 = vunpack.c.l.b16 %v5740
        %v7501 = vunpack.c.l.b16 %v5741
        %v7502 = vunpack.c.l.b16 %v5742
        %v7503 = vunpack.c.l.b16 %v5743
        %v7504 = vunpack.c.l.b16 %v5744
        %v7505 = vunpack.c.l.b16 %v5745
        %v7506 = vunpack.c.l.b16 %v5746
        %v7507 = vunpack.c.l.b16 %v5747
        %v7508 = vunpack.c.l.b16 %v5748
        %v7509 = vunpack.c.l.b16 %v5749
        %v7510 = vunpack.c.l.b16 %v5750
        %v7511 = vunpack.c.l.b16 %v5751
        %v7512 = vunpack.c.l.b16 %v5752
        %v7513 = vunpack.c.l.b16 %v5753
        %v7514 = vunpack.c.l.b16 %v5754
        %v7515 = vunpack.c.l.b16 %v5755
        %v7516 = vunpack.c.l.b16 %v5756
        %v7517 = vunpack.c.l.b16 %v5757
        %v7518 = vunpack.c.l.b16 %v5758
        %v7519 = vunpack.c.l.b16 %v5759
        %v7520 = vunpack.c.l.b16 %v5760
        %v7521 = vunpack.c.l.b16 %v5761
        %v7522 = vunpack.c.l.b16 %v5762
        %v7523 = vunpack.c.l.b16 %v5763
        %v7524 = vunpack.c.l.b16 %v5764
        %v7525 = vunpack.c.l.b16 %v5765
        %v7526 = vunpack.c.l.b16 %v5766
        %v7527 = vunpack.c.l.b16 %v5767
        %v7528 = vunpack.c.l.b16 %v5768
        %v7529 = vunpack.c.l.b16 %v5769
        %v7530 = vunpack.c.l.b16 %v5770
        %v7531 = vunpack.c.l.b16 %v5771
        %v7532 = vunpack.c.l.b16 %v5772
        %v7533 = vunpack.c.l.b16 %v5773
        %v7534 = vunpack.c.l.b16 %v5774
        %v7535 = vunpack.c.l.b16 %v5775
        %v7536 = vunpack.c.l.b16 %v5776
        %v7537 = vunpack.c.l.b16 %v5777
        %v7538 = vunpack.c.l.b16 %v5778
        %v7539 = vunpack.c.l.b16 %v5779
        %v7540 = vunpack.c.l.b16 %v5780
        %v7541 = vunpack.c.l.b16 %v5781
        %v7542 = vunpack.c.l.b16 %v5782
        %v7543 = vunpack.c.l.b16 %v5783
        %v7544 = vunpack.c.l.b16 %v5784
        %v7545 = vunpack.c.l.b16 %v5785
        %v7546 = vunpack.c.l.b16 %v5786
        %v7547 = vunpack.c.l.b16 %v5787
        %v7548 = vunpack.c.l.b16 %v5788
        %v7549 = vunpack.c.l.b16 %v5789
        %v7550 = vunpack.c.l.b16 %v5790
        %v7551 = vunpack.c.l.b16 %v5791
        %v7552 = vunpack.c.l.b16 %v5792
        %v7553 = vunpack.c.l.b16 %v5793
        %v7554 = vunpack.c.l.b16 %v5794
        %v7555 = vunpack.c.l.b16 %v5795
        %v7556 = vunpack.c.l.b16 %v5796
        %v7557 = vunpack.c.l.b16 %v5797
        %v7558 = vunpack.c.l.b16 %v5798
        %v7559 = vunpack.c.l.b16 %v5799
        %v7560 = vunpack.c.l.b16 %v5800
        %v7561 = vunpack.c.l.b16 %v5801
        %v7562 = vunpack.c.l.b16 %v5802
        %v7563 = vunpack.c.l.b16 %v5803
        %v7564 = vunpack.c.l.b16 %v5804
        %v7565 = vunpack.c.l.b16 %v5805
        %v7566 = vunpack.c.l.b16 %v5806
        %v7567 = vunpack.c.l.b16 %v5807
        %v7568 = vunpack.c.l.b16 %v5808
        %v7569 = vunpack.c.l.b16 %v5809
        %v7570 = vunpack.c.l.b16 %v5810
        %v7571 = vunpack.c.l.b16 %v5811
        %v7572 = vunpack.c.l.b16 %v5812
        %v7573 = vunpack.c.l.b16 %v5813
        %v7574 = vunpack.c.l.b16 %v5814
        %v7575 = vunpack.c.l.b16 %v5815
        %v7576 = vunpack.c.l.b16 %v5816
        %v7577 = vunpack.c.l.b16 %v5817
        %v7578 = vunpack.c.l.b16 %v5818
        %v7579 = vunpack.c.l.b16 %v5819
        %v7580 = vunpack.c.l.b16 %v5820
        %v7581 = vunpack.c.l.b16 %v5821
        %v7582 = vunpack.c.l.b16 %v5822
        %v7583 = vunpack.c.l.b16 %v5823
        %v7584 = vunpack.c.l.b16 %v5824
        %v7585 = vunpack.c.l.b16 %v5825
        %v7586 = vunpack.c.l.b16 %v5826
        %v7587 = vunpack.c.l.b16 %v5827
        %v7588 = vunpack.c.l.b16 %v5828
        %v7589 = vunpack.c.l.b16 %v5829
        %v7590 = vunpack.c.l.b16 %v5830
        %v7591 = vunpack.c.l.b16 %v5831
        %v7592 = vpack.c.b16 %v7449, %v7448
        %v7593 = vpack.c.b16 %v7451, %v7450
        %v7594 = vpack.c.b16 %v7453, %v7452
        %v7595 = vpack.c.b16 %v7455, %v7454
        %v7596 = vpack.c.b16 %v7457, %v7456
        %v7597 = vpack.c.b16 %v7459, %v7458
        %v7598 = vpack.c.b16 %v7461, %v7460
        %v7599 = vpack.c.b16 %v7463, %v7462
        %v7600 = vpack.c.b16 %v7465, %v7464
        %v7601 = vpack.c.b16 %v7467, %v7466
        %v7602 = vpack.c.b16 %v7469, %v7468
        %v7603 = vpack.c.b16 %v7471, %v7470
        %v7604 = vpack.c.b16 %v7473, %v7472
        %v7605 = vpack.c.b16 %v7475, %v7474
        %v7606 = vpack.c.b16 %v7477, %v7476
        %v7607 = vpack.c.b16 %v7479, %v7478
        %v7608 = vpack.c.b16 %v7481, %v7480
        %v7609 = vpack.c.b16 %v7483, %v7482
        %v7610 = vpack.c.b16 %v7485, %v7484
        %v7611 = vpack.c.b16 %v7487, %v7486
        %v7612 = vpack.c.b16 %v7489, %v7488
        %v7613 = vpack.c.b16 %v7491, %v7490
        %v7614 = vpack.c.b16 %v7493, %v7492
        %v7615 = vpack.c.b16 %v7495, %v7494
        %v7616 = vpack.c.b16 %v7497, %v7496
        %v7617 = vpack.c.b16 %v7499, %v7498
        %v7618 = vpack.c.b16 %v7501, %v7500
        %v7619 = vpack.c.b16 %v7503, %v7502
        %v7620 = vpack.c.b16 %v7505, %v7504
        %v7621 = vpack.c.b16 %v7507, %v7506
        %v7622 = vpack.c.b16 %v7509, %v7508
        %v7623 = vpack.c.b16 %v7511, %v7510
        %v7624 = vpack.c.b16 %v7513, %v7512
        %v7625 = vpack.c.b16 %v7515, %v7514
        %v7626 = vpack.c.b16 %v7517, %v7516
        %v7627 = vpack.c.b16 %v7519, %v7518
        %v7628 = vpack.c.b16 %v7521, %v7520
        %v7629 = vpack.c.b16 %v7523, %v7522
        %v7630 = vpack.c.b16 %v7525, %v7524
        %v7631 = vpack.c.b16 %v7527, %v7526
        %v7632 = vpack.c.b16 %v7529, %v7528
        %v7633 = vpack.c.b16 %v7531, %v7530
        %v7634 = vpack.c.b16 %v7533, %v7532
        %v7635 = vpack.c.b16 %v7535, %v7534
        %v7636 = vpack.c.b16 %v7537, %v7536
        %v7637 = vpack.c.b16 %v7539, %v7538
        %v7638 = vpack.c.b16 %v7541, %v7540
        %v7639 = vpack.c.b16 %v7543, %v7542
        %v7640 = vpack.c.b16 %v7545, %v7544
        %v7641 = vpack.c.b16 %v7547, %v7546
        %v7642 = vpack.c.b16 %v7549, %v7548
        %v7643 = vpack.c.b16 %v7551, %v7550
        %v7644 = vpack.c.b16 %v7553, %v7552
        %v7645 = vpack.c.b16 %v7555, %v7554
        %v7646 = vpack.c.b16 %v7557, %v7556
        %v7647 = vpack.c.b16 %v7559, %v7558
        %v7648 = vpack.c.b16 %v7561, %v7560
        %v7649 = vpack.c.b16 %v7563, %v7562
        %v7650 = vpack.c.b16 %v7565, %v7564
        %v7651 = vpack.c.b16 %v7567, %v7566
        %v7652 = vpack.c.b16 %v7569, %v7568
        %v7653 = vpack.c.b16 %v7571, %v7570
        %v7654 = vpack.c.b16 %v7573, %v7572
        %v7655 = vpack.c.b16 %v7575, %v7574
        %v7656 = vpack.c.b16 %v7577, %v7576
        %v7657 = vpack.c.b16 %v7579, %v7578
        %v7658 = vpack.c.b16 %v7581, %v7580
        %v7659 = vpack.c.b16 %v7583, %v7582
        %v7660 = vpack.c.b16 %v7585, %v7584
        %v7661 = vpack.c.b16 %v7587, %v7586
        %v7662 = vpack.c.b16 %v7589, %v7588
        %v7663 = vpack.c.b16 %v7591, %v7590
        %7736 = vmatprep.subr.bf16.mxu0 0
        %7737 = vmatpush1.bf16.msra.mxu0 %v7599
        %7738 = vmatprep.subr.bf16.mxu0 0
        %7739 = vmatpush1.bf16.msra.mxu0 %v7598
        %7740 = vmatprep.subr.bf16.mxu0 0
        %7741 = vmatpush1.bf16.msra.mxu0 %v7597
        %7742 = vmatprep.subr.bf16.mxu0 0
        %7743 = vmatpush1.bf16.msra.mxu0 %v7596
        %7744 = vmatprep.subr.bf16.mxu0 0
        %7745 = vmatpush1.bf16.msra.mxu0 %v7595
        %7746 = vmatprep.subr.bf16.mxu0 0
        %7747 = vmatpush1.bf16.msra.mxu0 %v7594
        %7748 = vmatprep.subr.bf16.mxu0 0
        %7749 = vmatpush1.bf16.msra.mxu0 %v7593
        %7750 = vmatprep.subr.bf16.mxu0 0
        %7751 = vmatpush1.bf16.msra.mxu0 %v7592
        %7752 = vmatprep.subr.bf16.mxu0 0
        %7753 = vmatpush2.bf16.msra.mxu0 %v7607
        %7754 = vmatprep.subr.bf16.mxu0 0
        %7755 = vmatpush2.bf16.msra.mxu0 %v7606
        %7756 = vmatprep.subr.bf16.mxu0 0
        %7757 = vmatpush2.bf16.msra.mxu0 %v7605
        %7758 = vmatprep.subr.bf16.mxu0 0
        %7759 = vmatpush2.bf16.msra.mxu0 %v7604
        %7760 = vmatprep.subr.bf16.mxu0 0
        %7761 = vmatpush2.bf16.msra.mxu0 %v7603
        %7762 = vmatprep.subr.bf16.mxu0 0
        %7763 = vmatpush2.bf16.msra.mxu0 %v7602
        %7764 = vmatprep.subr.bf16.mxu0 0
        %7765 = vmatpush2.bf16.msra.mxu0 %v7601
        %7766 = vmatprep.subr.bf16.mxu0 0
        %7767 = vmatpush2.bf16.msra.mxu0 %v7600
        %7768 = vmatprep.mubr.bf16.mxu0 %v6729
        %7769 = vmatmul.mubr.bf16.gmra.mxu0 %v6728
        %v7770 = vpop.f32.mrf.mxu0
        %v7771 = vadd.f32 0.0, %v7770
        %v7772 = vpop.f32.mrf.mxu0
        %v7773 = vpop.f32.mrf.mxu0
        %v7774 = vadd.f32 0.0, %v7773
        %v7775 = vpop.f32.mrf.mxu0
        %7776 = vmatprep.mubr.bf16.mxu0 %v6738
        %7777 = vmatmul.mubr.bf16.gmra.mxu0 %v6737
        %v7778 = vpop.f32.mrf.mxu0
        %v7779 = vadd.f32 0.0, %v7778
        %v7780 = vpop.f32.mrf.mxu0
        %v7781 = vpop.f32.mrf.mxu0
        %v7782 = vadd.f32 0.0, %v7781
        %v7783 = vpop.f32.mrf.mxu0
        %7784 = vmatprep.mubr.bf16.mxu0 %v6747
        %7785 = vmatmul.mubr.bf16.gmra.mxu0 %v6746
        %v7786 = vpop.f32.mrf.mxu0
        %v7787 = vadd.f32 0.0, %v7786
        %v7788 = vpop.f32.mrf.mxu0
        %v7789 = vpop.f32.mrf.mxu0
        %v7790 = vadd.f32 0.0, %v7789
        %v7791 = vpop.f32.mrf.mxu0
        %7792 = vmatprep.mubr.bf16.mxu0 %v6756
        %7793 = vmatmul.mubr.bf16.gmra.mxu0 %v6755
        %v7794 = vpop.f32.mrf.mxu0
        %v7795 = vadd.f32 0.0, %v7794
        %v7796 = vpop.f32.mrf.mxu0
        %v7797 = vpop.f32.mrf.mxu0
        %v7798 = vadd.f32 0.0, %v7797
        %v7799 = vpop.f32.mrf.mxu0
        %7800 = vmatprep.mubr.bf16.mxu0 %v6765
        %7801 = vmatmul.mubr.bf16.gmra.mxu0 %v6764
        %v7802 = vpop.f32.mrf.mxu0
        %v7803 = vadd.f32 0.0, %v7802
        %v7804 = vpop.f32.mrf.mxu0
        %v7805 = vpop.f32.mrf.mxu0
        %v7806 = vadd.f32 0.0, %v7805
        %v7807 = vpop.f32.mrf.mxu0
        %7808 = vmatprep.mubr.bf16.mxu0 %v6774
        %7809 = vmatmul.mubr.bf16.gmra.mxu0 %v6773
        %v7810 = vpop.f32.mrf.mxu0
        %v7811 = vadd.f32 0.0, %v7810
        %v7812 = vpop.f32.mrf.mxu0
        %v7813 = vpop.f32.mrf.mxu0
        %v7814 = vadd.f32 0.0, %v7813
        %v7815 = vpop.f32.mrf.mxu0
        %7816 = vmatprep.mubr.bf16.mxu0 %v6783
        %7817 = vmatmul.mubr.bf16.gmra.mxu0 %v6782
        %v7818 = vpop.f32.mrf.mxu0
        %v7819 = vadd.f32 0.0, %v7818
        %v7820 = vpop.f32.mrf.mxu0
        %v7821 = vpop.f32.mrf.mxu0
        %v7822 = vadd.f32 0.0, %v7821
        %v7823 = vpop.f32.mrf.mxu0
        %7824 = vmatprep.mubr.bf16.mxu0 %v6792
        %7825 = vmatmul.mubr.bf16.gmra.mxu0 %v6791
        %v7826 = vpop.f32.mrf.mxu0
        %v7827 = vadd.f32 0.0, %v7826
        %v7828 = vpop.f32.mrf.mxu0
        %v7829 = vpop.f32.mrf.mxu0
        %v7830 = vadd.f32 0.0, %v7829
        %v7831 = vpop.f32.mrf.mxu0
        %7832 = vmatprep.mubr.bf16.mxu0 %v6801
        %7833 = vmatmul.mubr.bf16.gmra.mxu0 %v6800
        %v7834 = vpop.f32.mrf.mxu0
        %v7835 = vadd.f32 0.0, %v7834
        %v7836 = vpop.f32.mrf.mxu0
        %v7837 = vpop.f32.mrf.mxu0
        %v7838 = vadd.f32 0.0, %v7837
        %v7839 = vpop.f32.mrf.mxu0
        %7840 = vmatprep.mubr.bf16.mxu0 %v6810
        %7841 = vmatmul.mubr.bf16.gmra.mxu0 %v6809
        %v7842 = vpop.f32.mrf.mxu0
        %v7843 = vadd.f32 0.0, %v7842
        %v7844 = vpop.f32.mrf.mxu0
        %v7845 = vpop.f32.mrf.mxu0
        %v7846 = vadd.f32 0.0, %v7845
        %v7847 = vpop.f32.mrf.mxu0
        %7848 = vmatprep.mubr.bf16.mxu0 %v6819
        %7849 = vmatmul.mubr.bf16.gmra.mxu0 %v6818
        %v7850 = vpop.f32.mrf.mxu0
        %v7851 = vadd.f32 0.0, %v7850
        %v7852 = vpop.f32.mrf.mxu0
        %v7853 = vpop.f32.mrf.mxu0
        %v7854 = vadd.f32 0.0, %v7853
        %v7855 = vpop.f32.mrf.mxu0
        %7856 = vmatprep.mubr.bf16.mxu0 %v6828
        %7857 = vmatmul.mubr.bf16.gmra.mxu0 %v6827
        %v7858 = vpop.f32.mrf.mxu0
        %v7859 = vadd.f32 0.0, %v7858
        %v7860 = vpop.f32.mrf.mxu0
        %v7861 = vpop.f32.mrf.mxu0
        %v7862 = vadd.f32 0.0, %v7861
        %v7863 = vpop.f32.mrf.mxu0
        %7864 = vmatprep.mubr.bf16.mxu0 %v6837
        %7865 = vmatmul.mubr.bf16.gmra.mxu0 %v6836
        %v7866 = vpop.f32.mrf.mxu0
        %v7867 = vadd.f32 0.0, %v7866
        %v7868 = vpop.f32.mrf.mxu0
        %v7869 = vpop.f32.mrf.mxu0
        %v7870 = vadd.f32 0.0, %v7869
        %v7871 = vpop.f32.mrf.mxu0
        %7872 = vmatprep.mubr.bf16.mxu0 %v6846
        %7873 = vmatmul.mubr.bf16.gmra.mxu0 %v6845
        %v7874 = vpop.f32.mrf.mxu0
        %v7875 = vadd.f32 0.0, %v7874
        %v7876 = vpop.f32.mrf.mxu0
        %v7877 = vpop.f32.mrf.mxu0
        %v7878 = vadd.f32 0.0, %v7877
        %v7879 = vpop.f32.mrf.mxu0
        %7880 = vmatprep.mubr.bf16.mxu0 %v6855
        %7881 = vmatmul.mubr.bf16.gmra.mxu0 %v6854
        %v7882 = vpop.f32.mrf.mxu0
        %v7883 = vadd.f32 0.0, %v7882
        %v7884 = vpop.f32.mrf.mxu0
        %v7885 = vpop.f32.mrf.mxu0
        %v7886 = vadd.f32 0.0, %v7885
        %v7887 = vpop.f32.mrf.mxu0
        %7888 = vmatprep.mubr.bf16.mxu0 %v6864
        %7889 = vmatmul.mubr.bf16.gmra.mxu0 %v6863
        %v7890 = vpop.f32.mrf.mxu0
        %v7891 = vadd.f32 0.0, %v7890
        %v7892 = vpop.f32.mrf.mxu0
        %v7893 = vpop.f32.mrf.mxu0
        %v7894 = vadd.f32 0.0, %v7893
        %v7895 = vpop.f32.mrf.mxu0
        %7896 = vmatprep.mubr.bf16.mxu0 %v6873
        %7897 = vmatmul.mubr.bf16.gmra.mxu0 %v6872
        %v7898 = vpop.f32.mrf.mxu0
        %v7899 = vadd.f32 0.0, %v7898
        %v7900 = vpop.f32.mrf.mxu0
        %v7901 = vpop.f32.mrf.mxu0
        %v7902 = vadd.f32 0.0, %v7901
        %v7903 = vpop.f32.mrf.mxu0
        %7904 = vmatprep.mubr.bf16.mxu0 %v6882
        %7905 = vmatmul.mubr.bf16.gmra.mxu0 %v6881
        %v7906 = vpop.f32.mrf.mxu0
        %v7907 = vadd.f32 0.0, %v7906
        %v7908 = vpop.f32.mrf.mxu0
        %v7909 = vpop.f32.mrf.mxu0
        %v7910 = vadd.f32 0.0, %v7909
        %v7911 = vpop.f32.mrf.mxu0
        %7912 = vmatprep.mubr.bf16.mxu0 %v6891
        %7913 = vmatmul.mubr.bf16.gmra.mxu0 %v6890
        %v7914 = vpop.f32.mrf.mxu0
        %v7915 = vadd.f32 0.0, %v7914
        %v7916 = vpop.f32.mrf.mxu0
        %v7917 = vpop.f32.mrf.mxu0
        %v7918 = vadd.f32 0.0, %v7917
        %v7919 = vpop.f32.mrf.mxu0
        %7920 = vmatprep.mubr.bf16.mxu0 %v6900
        %7921 = vmatmul.mubr.bf16.gmra.mxu0 %v6899
        %v7922 = vpop.f32.mrf.mxu0
        %v7923 = vadd.f32 0.0, %v7922
        %v7924 = vpop.f32.mrf.mxu0
        %v7925 = vpop.f32.mrf.mxu0
        %v7926 = vadd.f32 0.0, %v7925
        %v7927 = vpop.f32.mrf.mxu0
        %7928 = vmatprep.mubr.bf16.mxu0 %v6909
        %7929 = vmatmul.mubr.bf16.gmra.mxu0 %v6908
        %v7930 = vpop.f32.mrf.mxu0
        %v7931 = vadd.f32 0.0, %v7930
        %v7932 = vpop.f32.mrf.mxu0
        %v7933 = vpop.f32.mrf.mxu0
        %v7934 = vadd.f32 0.0, %v7933
        %v7935 = vpop.f32.mrf.mxu0
        %7936 = vmatprep.mubr.bf16.mxu0 %v6918
        %7937 = vmatmul.mubr.bf16.gmra.mxu0 %v6917
        %v7938 = vpop.f32.mrf.mxu0
        %v7939 = vadd.f32 0.0, %v7938
        %v7940 = vpop.f32.mrf.mxu0
        %v7941 = vpop.f32.mrf.mxu0
        %v7942 = vadd.f32 0.0, %v7941
        %v7943 = vpop.f32.mrf.mxu0
        %7944 = vmatprep.mubr.bf16.mxu0 %v6927
        %7945 = vmatmul.mubr.bf16.gmra.mxu0 %v6926
        %v7946 = vpop.f32.mrf.mxu0
        %v7947 = vadd.f32 0.0, %v7946
        %v7948 = vpop.f32.mrf.mxu0
        %v7949 = vpop.f32.mrf.mxu0
        %v7950 = vadd.f32 0.0, %v7949
        %v7951 = vpop.f32.mrf.mxu0
        %7952 = vmatprep.mubr.bf16.mxu0 %v6936
        %7953 = vmatmul.mubr.bf16.gmra.mxu0 %v6935
        %v7954 = vpop.f32.mrf.mxu0
        %v7955 = vadd.f32 0.0, %v7954
        %v7956 = vpop.f32.mrf.mxu0
        %v7957 = vpop.f32.mrf.mxu0
        %v7958 = vadd.f32 0.0, %v7957
        %v7959 = vpop.f32.mrf.mxu0
        %7960 = vmatprep.mubr.bf16.mxu0 %v6945
        %7961 = vmatmul.mubr.bf16.gmra.mxu0 %v6944
        %v7962 = vpop.f32.mrf.mxu0
        %v7963 = vadd.f32 0.0, %v7962
        %v7964 = vpop.f32.mrf.mxu0
        %v7965 = vpop.f32.mrf.mxu0
        %v7966 = vadd.f32 0.0, %v7965
        %v7967 = vpop.f32.mrf.mxu0
        %7968 = vmatprep.mubr.bf16.mxu0 %v6954
        %7969 = vmatmul.mubr.bf16.gmra.mxu0 %v6953
        %v7970 = vpop.f32.mrf.mxu0
        %v7971 = vadd.f32 0.0, %v7970
        %v7972 = vpop.f32.mrf.mxu0
        %v7973 = vpop.f32.mrf.mxu0
        %v7974 = vadd.f32 0.0, %v7973
        %v7975 = vpop.f32.mrf.mxu0
        %7976 = vmatprep.mubr.bf16.mxu0 %v6963
        %7977 = vmatmul.mubr.bf16.gmra.mxu0 %v6962
        %v7978 = vpop.f32.mrf.mxu0
        %v7979 = vadd.f32 0.0, %v7978
        %v7980 = vpop.f32.mrf.mxu0
        %v7981 = vpop.f32.mrf.mxu0
        %v7982 = vadd.f32 0.0, %v7981
        %v7983 = vpop.f32.mrf.mxu0
        %7984 = vmatprep.mubr.bf16.mxu0 %v6972
        %7985 = vmatmul.mubr.bf16.gmra.mxu0 %v6971
        %v7986 = vpop.f32.mrf.mxu0
        %v7987 = vadd.f32 0.0, %v7986
        %v7988 = vpop.f32.mrf.mxu0
        %v7989 = vpop.f32.mrf.mxu0
        %v7990 = vadd.f32 0.0, %v7989
        %v7991 = vpop.f32.mrf.mxu0
        %7992 = vmatprep.mubr.bf16.mxu0 %v6981
        %7993 = vmatmul.mubr.bf16.gmra.mxu0 %v6980
        %v7994 = vpop.f32.mrf.mxu0
        %v7995 = vadd.f32 0.0, %v7994
        %v7996 = vpop.f32.mrf.mxu0
        %v7997 = vpop.f32.mrf.mxu0
        %v7998 = vadd.f32 0.0, %v7997
        %v7999 = vpop.f32.mrf.mxu0
        %8000 = vmatprep.mubr.bf16.mxu0 %v6990
        %8001 = vmatmul.mubr.bf16.gmra.mxu0 %v6989
        %v8002 = vpop.f32.mrf.mxu0
        %v8003 = vadd.f32 0.0, %v8002
        %v8004 = vpop.f32.mrf.mxu0
        %v8005 = vpop.f32.mrf.mxu0
        %v8006 = vadd.f32 0.0, %v8005
        %v8007 = vpop.f32.mrf.mxu0
        %8008 = vmatprep.mubr.bf16.mxu0 %v6999
        %8009 = vmatmul.mubr.bf16.gmra.mxu0 %v6998
        %v8010 = vpop.f32.mrf.mxu0
        %v8011 = vadd.f32 0.0, %v8010
        %v8012 = vpop.f32.mrf.mxu0
        %v8013 = vpop.f32.mrf.mxu0
        %v8014 = vadd.f32 0.0, %v8013
        %v8015 = vpop.f32.mrf.mxu0
        %8016 = vmatprep.mubr.bf16.mxu0 %v7008
        %8017 = vmatmul.mubr.bf16.gmra.mxu0 %v7007
        %v8018 = vpop.f32.mrf.mxu0
        %v8019 = vadd.f32 0.0, %v8018
        %v8020 = vpop.f32.mrf.mxu0
        %v8021 = vpop.f32.mrf.mxu0
        %v8022 = vadd.f32 0.0, %v8021
        %v8023 = vpop.f32.mrf.mxu0
        %8024 = vdwg.mxu0
        %8025 = vmatprep.subr.bf16.mxu0 0
        %8026 = vmatpush1.bf16.msra.mxu0 %v7615
        %8027 = vmatprep.subr.bf16.mxu0 0
        %8028 = vmatpush1.bf16.msra.mxu0 %v7614
        %8029 = vmatprep.subr.bf16.mxu0 0
        %8030 = vmatpush1.bf16.msra.mxu0 %v7613
        %8031 = vmatprep.subr.bf16.mxu0 0
        %8032 = vmatpush1.bf16.msra.mxu0 %v7612
        %8033 = vmatprep.subr.bf16.mxu0 0
        %8034 = vmatpush1.bf16.msra.mxu0 %v7611
        %8035 = vmatprep.subr.bf16.mxu0 0
        %8036 = vmatpush1.bf16.msra.mxu0 %v7610
        %8037 = vmatprep.subr.bf16.mxu0 0
        %8038 = vmatpush1.bf16.msra.mxu0 %v7609
        %8039 = vmatprep.subr.bf16.mxu0 0
        %8040 = vmatpush1.bf16.msra.mxu0 %v7608
        %8041 = vmatprep.subr.bf16.mxu0 0
        %8042 = vmatpush2.bf16.msra.mxu0 %v7623
        %8043 = vmatprep.subr.bf16.mxu0 0
        %8044 = vmatpush2.bf16.msra.mxu0 %v7622
        %8045 = vmatprep.subr.bf16.mxu0 0
        %8046 = vmatpush2.bf16.msra.mxu0 %v7621
        %8047 = vmatprep.subr.bf16.mxu0 0
        %8048 = vmatpush2.bf16.msra.mxu0 %v7620
        %8049 = vmatprep.subr.bf16.mxu0 0
        %8050 = vmatpush2.bf16.msra.mxu0 %v7619
        %8051 = vmatprep.subr.bf16.mxu0 0
        %8052 = vmatpush2.bf16.msra.mxu0 %v7618
        %8053 = vmatprep.subr.bf16.mxu0 0
        %8054 = vmatpush2.bf16.msra.mxu0 %v7617
        %8055 = vmatprep.subr.bf16.mxu0 0
        %8056 = vmatpush2.bf16.msra.mxu0 %v7616
        %8057 = vmatprep.mubr.bf16.mxu0 %v6731
        %8058 = vmatmul.mubr.bf16.gmra.mxu0 %v6730
        %v8059 = vpop.f32.mrf.mxu0
        %v8060 = vadd.f32 %v7771, %v8059
        %v8061 = vpop.f32.mrf.mxu0
        %v8062 = vpop.f32.mrf.mxu0
        %v8063 = vadd.f32 %v7774, %v8062
        %v8064 = vpop.f32.mrf.mxu0
        %8065 = vmatprep.mubr.bf16.mxu0 %v6740
        %8066 = vmatmul.mubr.bf16.gmra.mxu0 %v6739
        %v8067 = vpop.f32.mrf.mxu0
        %v8068 = vadd.f32 %v7779, %v8067
        %v8069 = vpop.f32.mrf.mxu0
        %v8070 = vpop.f32.mrf.mxu0
        %v8071 = vadd.f32 %v7782, %v8070
        %v8072 = vpop.f32.mrf.mxu0
        %8073 = vmatprep.mubr.bf16.mxu0 %v6749
        %8074 = vmatmul.mubr.bf16.gmra.mxu0 %v6748
        %v8075 = vpop.f32.mrf.mxu0
        %v8076 = vadd.f32 %v7787, %v8075
        %v8077 = vpop.f32.mrf.mxu0
        %v8078 = vpop.f32.mrf.mxu0
        %v8079 = vadd.f32 %v7790, %v8078
        %v8080 = vpop.f32.mrf.mxu0
        %8081 = vmatprep.mubr.bf16.mxu0 %v6758
        %8082 = vmatmul.mubr.bf16.gmra.mxu0 %v6757
        %v8083 = vpop.f32.mrf.mxu0
        %v8084 = vadd.f32 %v7795, %v8083
        %v8085 = vpop.f32.mrf.mxu0
        %v8086 = vpop.f32.mrf.mxu0
        %v8087 = vadd.f32 %v7798, %v8086
        %v8088 = vpop.f32.mrf.mxu0
        %8089 = vmatprep.mubr.bf16.mxu0 %v6767
        %8090 = vmatmul.mubr.bf16.gmra.mxu0 %v6766
        %v8091 = vpop.f32.mrf.mxu0
        %v8092 = vadd.f32 %v7803, %v8091
        %v8093 = vpop.f32.mrf.mxu0
        %v8094 = vpop.f32.mrf.mxu0
        %v8095 = vadd.f32 %v7806, %v8094
        %v8096 = vpop.f32.mrf.mxu0
        %8097 = vmatprep.mubr.bf16.mxu0 %v6776
        %8098 = vmatmul.mubr.bf16.gmra.mxu0 %v6775
        %v8099 = vpop.f32.mrf.mxu0
        %v8100 = vadd.f32 %v7811, %v8099
        %v8101 = vpop.f32.mrf.mxu0
        %v8102 = vpop.f32.mrf.mxu0
        %v8103 = vadd.f32 %v7814, %v8102
        %v8104 = vpop.f32.mrf.mxu0
        %8105 = vmatprep.mubr.bf16.mxu0 %v6785
        %8106 = vmatmul.mubr.bf16.gmra.mxu0 %v6784
        %v8107 = vpop.f32.mrf.mxu0
        %v8108 = vadd.f32 %v7819, %v8107
        %v8109 = vpop.f32.mrf.mxu0
        %v8110 = vpop.f32.mrf.mxu0
        %v8111 = vadd.f32 %v7822, %v8110
        %v8112 = vpop.f32.mrf.mxu0
        %8113 = vmatprep.mubr.bf16.mxu0 %v6794
        %8114 = vmatmul.mubr.bf16.gmra.mxu0 %v6793
        %v8115 = vpop.f32.mrf.mxu0
        %v8116 = vadd.f32 %v7827, %v8115
        %v8117 = vpop.f32.mrf.mxu0
        %v8118 = vpop.f32.mrf.mxu0
        %v8119 = vadd.f32 %v7830, %v8118
        %v8120 = vpop.f32.mrf.mxu0
        %8121 = vmatprep.mubr.bf16.mxu0 %v6803
        %8122 = vmatmul.mubr.bf16.gmra.mxu0 %v6802
        %v8123 = vpop.f32.mrf.mxu0
        %v8124 = vadd.f32 %v7835, %v8123
        %v8125 = vpop.f32.mrf.mxu0
        %v8126 = vpop.f32.mrf.mxu0
        %v8127 = vadd.f32 %v7838, %v8126
        %v8128 = vpop.f32.mrf.mxu0
        %8129 = vmatprep.mubr.bf16.mxu0 %v6812
        %8130 = vmatmul.mubr.bf16.gmra.mxu0 %v6811
        %v8131 = vpop.f32.mrf.mxu0
        %v8132 = vadd.f32 %v7843, %v8131
        %v8133 = vpop.f32.mrf.mxu0
        %v8134 = vpop.f32.mrf.mxu0
        %v8135 = vadd.f32 %v7846, %v8134
        %v8136 = vpop.f32.mrf.mxu0
        %8137 = vmatprep.mubr.bf16.mxu0 %v6821
        %8138 = vmatmul.mubr.bf16.gmra.mxu0 %v6820
        %v8139 = vpop.f32.mrf.mxu0
        %v8140 = vadd.f32 %v7851, %v8139
        %v8141 = vpop.f32.mrf.mxu0
        %v8142 = vpop.f32.mrf.mxu0
        %v8143 = vadd.f32 %v7854, %v8142
        %v8144 = vpop.f32.mrf.mxu0
        %8145 = vmatprep.mubr.bf16.mxu0 %v6830
        %8146 = vmatmul.mubr.bf16.gmra.mxu0 %v6829
        %v8147 = vpop.f32.mrf.mxu0
        %v8148 = vadd.f32 %v7859, %v8147
        %v8149 = vpop.f32.mrf.mxu0
        %v8150 = vpop.f32.mrf.mxu0
        %v8151 = vadd.f32 %v7862, %v8150
        %v8152 = vpop.f32.mrf.mxu0
        %8153 = vmatprep.mubr.bf16.mxu0 %v6839
        %8154 = vmatmul.mubr.bf16.gmra.mxu0 %v6838
        %v8155 = vpop.f32.mrf.mxu0
        %v8156 = vadd.f32 %v7867, %v8155
        %v8157 = vpop.f32.mrf.mxu0
        %v8158 = vpop.f32.mrf.mxu0
        %v8159 = vadd.f32 %v7870, %v8158
        %v8160 = vpop.f32.mrf.mxu0
        %8161 = vmatprep.mubr.bf16.mxu0 %v6848
        %8162 = vmatmul.mubr.bf16.gmra.mxu0 %v6847
        %v8163 = vpop.f32.mrf.mxu0
        %v8164 = vadd.f32 %v7875, %v8163
        %v8165 = vpop.f32.mrf.mxu0
        %v8166 = vpop.f32.mrf.mxu0
        %v8167 = vadd.f32 %v7878, %v8166
        %v8168 = vpop.f32.mrf.mxu0
        %8169 = vmatprep.mubr.bf16.mxu0 %v6857
        %8170 = vmatmul.mubr.bf16.gmra.mxu0 %v6856
        %v8171 = vpop.f32.mrf.mxu0
        %v8172 = vadd.f32 %v7883, %v8171
        %v8173 = vpop.f32.mrf.mxu0
        %v8174 = vpop.f32.mrf.mxu0
        %v8175 = vadd.f32 %v7886, %v8174
        %v8176 = vpop.f32.mrf.mxu0
        %8177 = vmatprep.mubr.bf16.mxu0 %v6866
        %8178 = vmatmul.mubr.bf16.gmra.mxu0 %v6865
        %v8179 = vpop.f32.mrf.mxu0
        %v8180 = vadd.f32 %v7891, %v8179
        %v8181 = vpop.f32.mrf.mxu0
        %v8182 = vpop.f32.mrf.mxu0
        %v8183 = vadd.f32 %v7894, %v8182
        %v8184 = vpop.f32.mrf.mxu0
        %8185 = vmatprep.mubr.bf16.mxu0 %v6875
        %8186 = vmatmul.mubr.bf16.gmra.mxu0 %v6874
        %v8187 = vpop.f32.mrf.mxu0
        %v8188 = vadd.f32 %v7899, %v8187
        %v8189 = vpop.f32.mrf.mxu0
        %v8190 = vpop.f32.mrf.mxu0
        %v8191 = vadd.f32 %v7902, %v8190
        %v8192 = vpop.f32.mrf.mxu0
        %8193 = vmatprep.mubr.bf16.mxu0 %v6884
        %8194 = vmatmul.mubr.bf16.gmra.mxu0 %v6883
        %v8195 = vpop.f32.mrf.mxu0
        %v8196 = vadd.f32 %v7907, %v8195
        %v8197 = vpop.f32.mrf.mxu0
        %v8198 = vpop.f32.mrf.mxu0
        %v8199 = vadd.f32 %v7910, %v8198
        %v8200 = vpop.f32.mrf.mxu0
        %8201 = vmatprep.mubr.bf16.mxu0 %v6893
        %8202 = vmatmul.mubr.bf16.gmra.mxu0 %v6892
        %v8203 = vpop.f32.mrf.mxu0
        %v8204 = vadd.f32 %v7915, %v8203
        %v8205 = vpop.f32.mrf.mxu0
        %v8206 = vpop.f32.mrf.mxu0
        %v8207 = vadd.f32 %v7918, %v8206
        %v8208 = vpop.f32.mrf.mxu0
        %8209 = vmatprep.mubr.bf16.mxu0 %v6902
        %8210 = vmatmul.mubr.bf16.gmra.mxu0 %v6901
        %v8211 = vpop.f32.mrf.mxu0
        %v8212 = vadd.f32 %v7923, %v8211
        %v8213 = vpop.f32.mrf.mxu0
        %v8214 = vpop.f32.mrf.mxu0
        %v8215 = vadd.f32 %v7926, %v8214
        %v8216 = vpop.f32.mrf.mxu0
        %8217 = vmatprep.mubr.bf16.mxu0 %v6911
        %8218 = vmatmul.mubr.bf16.gmra.mxu0 %v6910
        %v8219 = vpop.f32.mrf.mxu0
        %v8220 = vadd.f32 %v7931, %v8219
        %v8221 = vpop.f32.mrf.mxu0
        %v8222 = vpop.f32.mrf.mxu0
        %v8223 = vadd.f32 %v7934, %v8222
        %v8224 = vpop.f32.mrf.mxu0
        %8225 = vmatprep.mubr.bf16.mxu0 %v6920
        %8226 = vmatmul.mubr.bf16.gmra.mxu0 %v6919
        %v8227 = vpop.f32.mrf.mxu0
        %v8228 = vadd.f32 %v7939, %v8227
        %v8229 = vpop.f32.mrf.mxu0
        %v8230 = vpop.f32.mrf.mxu0
        %v8231 = vadd.f32 %v7942, %v8230
        %v8232 = vpop.f32.mrf.mxu0
        %8233 = vmatprep.mubr.bf16.mxu0 %v6929
        %8234 = vmatmul.mubr.bf16.gmra.mxu0 %v6928
        %v8235 = vpop.f32.mrf.mxu0
        %v8236 = vadd.f32 %v7947, %v8235
        %v8237 = vpop.f32.mrf.mxu0
        %v8238 = vpop.f32.mrf.mxu0
        %v8239 = vadd.f32 %v7950, %v8238
        %v8240 = vpop.f32.mrf.mxu0
        %8241 = vmatprep.mubr.bf16.mxu0 %v6938
        %8242 = vmatmul.mubr.bf16.gmra.mxu0 %v6937
        %v8243 = vpop.f32.mrf.mxu0
        %v8244 = vadd.f32 %v7955, %v8243
        %v8245 = vpop.f32.mrf.mxu0
        %v8246 = vpop.f32.mrf.mxu0
        %v8247 = vadd.f32 %v7958, %v8246
        %v8248 = vpop.f32.mrf.mxu0
        %8249 = vmatprep.mubr.bf16.mxu0 %v6947
        %8250 = vmatmul.mubr.bf16.gmra.mxu0 %v6946
        %v8251 = vpop.f32.mrf.mxu0
        %v8252 = vadd.f32 %v7963, %v8251
        %v8253 = vpop.f32.mrf.mxu0
        %v8254 = vpop.f32.mrf.mxu0
        %v8255 = vadd.f32 %v7966, %v8254
        %v8256 = vpop.f32.mrf.mxu0
        %8257 = vmatprep.mubr.bf16.mxu0 %v6956
        %8258 = vmatmul.mubr.bf16.gmra.mxu0 %v6955
        %v8259 = vpop.f32.mrf.mxu0
        %v8260 = vadd.f32 %v7971, %v8259
        %v8261 = vpop.f32.mrf.mxu0
        %v8262 = vpop.f32.mrf.mxu0
        %v8263 = vadd.f32 %v7974, %v8262
        %v8264 = vpop.f32.mrf.mxu0
        %8265 = vmatprep.mubr.bf16.mxu0 %v6965
        %8266 = vmatmul.mubr.bf16.gmra.mxu0 %v6964
        %v8267 = vpop.f32.mrf.mxu0
        %v8268 = vadd.f32 %v7979, %v8267
        %v8269 = vpop.f32.mrf.mxu0
        %v8270 = vpop.f32.mrf.mxu0
        %v8271 = vadd.f32 %v7982, %v8270
        %v8272 = vpop.f32.mrf.mxu0
        %8273 = vmatprep.mubr.bf16.mxu0 %v6974
        %8274 = vmatmul.mubr.bf16.gmra.mxu0 %v6973
        %v8275 = vpop.f32.mrf.mxu0
        %v8276 = vadd.f32 %v7987, %v8275
        %v8277 = vpop.f32.mrf.mxu0
        %v8278 = vpop.f32.mrf.mxu0
        %v8279 = vadd.f32 %v7990, %v8278
        %v8280 = vpop.f32.mrf.mxu0
        %8281 = vmatprep.mubr.bf16.mxu0 %v6983
        %8282 = vmatmul.mubr.bf16.gmra.mxu0 %v6982
        %v8283 = vpop.f32.mrf.mxu0
        %v8284 = vadd.f32 %v7995, %v8283
        %v8285 = vpop.f32.mrf.mxu0
        %v8286 = vpop.f32.mrf.mxu0
        %v8287 = vadd.f32 %v7998, %v8286
        %v8288 = vpop.f32.mrf.mxu0
        %8289 = vmatprep.mubr.bf16.mxu0 %v6992
        %8290 = vmatmul.mubr.bf16.gmra.mxu0 %v6991
        %v8291 = vpop.f32.mrf.mxu0
        %v8292 = vadd.f32 %v8003, %v8291
        %v8293 = vpop.f32.mrf.mxu0
        %v8294 = vpop.f32.mrf.mxu0
        %v8295 = vadd.f32 %v8006, %v8294
        %v8296 = vpop.f32.mrf.mxu0
        %8297 = vmatprep.mubr.bf16.mxu0 %v7001
        %8298 = vmatmul.mubr.bf16.gmra.mxu0 %v7000
        %v8299 = vpop.f32.mrf.mxu0
        %v8300 = vadd.f32 %v8011, %v8299
        %v8301 = vpop.f32.mrf.mxu0
        %v8302 = vpop.f32.mrf.mxu0
        %v8303 = vadd.f32 %v8014, %v8302
        %v8304 = vpop.f32.mrf.mxu0
        %8305 = vmatprep.mubr.bf16.mxu0 %v7010
        %8306 = vmatmul.mubr.bf16.gmra.mxu0 %v7009
        %v8307 = vpop.f32.mrf.mxu0
        %v8308 = vadd.f32 %v8019, %v8307
        %v8309 = vpop.f32.mrf.mxu0
        %v8310 = vpop.f32.mrf.mxu0
        %v8311 = vadd.f32 %v8022, %v8310
        %v8312 = vpop.f32.mrf.mxu0
        %8313 = vdwg.mxu0
        %8314 = vmatprep.subr.bf16.mxu0 0
        %8315 = vmatpush1.bf16.msra.mxu0 %v7631
        %8316 = vmatprep.subr.bf16.mxu0 0
        %8317 = vmatpush1.bf16.msra.mxu0 %v7630
        %8318 = vmatprep.subr.bf16.mxu0 0
        %8319 = vmatpush1.bf16.msra.mxu0 %v7629
        %8320 = vmatprep.subr.bf16.mxu0 0
        %8321 = vmatpush1.bf16.msra.mxu0 %v7628
        %8322 = vmatprep.subr.bf16.mxu0 0
        %8323 = vmatpush1.bf16.msra.mxu0 %v7627
        %8324 = vmatprep.subr.bf16.mxu0 0
        %8325 = vmatpush1.bf16.msra.mxu0 %v7626
        %8326 = vmatprep.subr.bf16.mxu0 0
        %8327 = vmatpush1.bf16.msra.mxu0 %v7625
        %8328 = vmatprep.subr.bf16.mxu0 0
        %8329 = vmatpush1.bf16.msra.mxu0 %v7624
        %8330 = vmatprep.subr.bf16.mxu0 0
        %8331 = vmatpush2.bf16.msra.mxu0 %v7639
        %8332 = vmatprep.subr.bf16.mxu0 0
        %8333 = vmatpush2.bf16.msra.mxu0 %v7638
        %8334 = vmatprep.subr.bf16.mxu0 0
        %8335 = vmatpush2.bf16.msra.mxu0 %v7637
        %8336 = vmatprep.subr.bf16.mxu0 0
        %8337 = vmatpush2.bf16.msra.mxu0 %v7636
        %8338 = vmatprep.subr.bf16.mxu0 0
        %8339 = vmatpush2.bf16.msra.mxu0 %v7635
        %8340 = vmatprep.subr.bf16.mxu0 0
        %8341 = vmatpush2.bf16.msra.mxu0 %v7634
        %8342 = vmatprep.subr.bf16.mxu0 0
        %8343 = vmatpush2.bf16.msra.mxu0 %v7633
        %8344 = vmatprep.subr.bf16.mxu0 0
        %8345 = vmatpush2.bf16.msra.mxu0 %v7632
        %8346 = vmatprep.mubr.bf16.mxu0 %v6733
        %8347 = vmatmul.mubr.bf16.gmra.mxu0 %v6732
        %v8348 = vpop.f32.mrf.mxu0
        %v8349 = vadd.f32 %v8060, %v8348
        %v8350 = vpop.f32.mrf.mxu0
        %v8351 = vpop.f32.mrf.mxu0
        %v8352 = vadd.f32 %v8063, %v8351
        %v8353 = vpop.f32.mrf.mxu0
        %8354 = vmatprep.mubr.bf16.mxu0 %v6742
        %8355 = vmatmul.mubr.bf16.gmra.mxu0 %v6741
        %v8356 = vpop.f32.mrf.mxu0
        %v8357 = vadd.f32 %v8068, %v8356
        %v8358 = vpop.f32.mrf.mxu0
        %v8359 = vpop.f32.mrf.mxu0
        %v8360 = vadd.f32 %v8071, %v8359
        %v8361 = vpop.f32.mrf.mxu0
        %8362 = vmatprep.mubr.bf16.mxu0 %v6751
        %8363 = vmatmul.mubr.bf16.gmra.mxu0 %v6750
        %v8364 = vpop.f32.mrf.mxu0
        %v8365 = vadd.f32 %v8076, %v8364
        %v8366 = vpop.f32.mrf.mxu0
        %v8367 = vpop.f32.mrf.mxu0
        %v8368 = vadd.f32 %v8079, %v8367
        %v8369 = vpop.f32.mrf.mxu0
        %8370 = vmatprep.mubr.bf16.mxu0 %v6760
        %8371 = vmatmul.mubr.bf16.gmra.mxu0 %v6759
        %v8372 = vpop.f32.mrf.mxu0
        %v8373 = vadd.f32 %v8084, %v8372
        %v8374 = vpop.f32.mrf.mxu0
        %v8375 = vpop.f32.mrf.mxu0
        %v8376 = vadd.f32 %v8087, %v8375
        %v8377 = vpop.f32.mrf.mxu0
        %8378 = vmatprep.mubr.bf16.mxu0 %v6769
        %8379 = vmatmul.mubr.bf16.gmra.mxu0 %v6768
        %v8380 = vpop.f32.mrf.mxu0
        %v8381 = vadd.f32 %v8092, %v8380
        %v8382 = vpop.f32.mrf.mxu0
        %v8383 = vpop.f32.mrf.mxu0
        %v8384 = vadd.f32 %v8095, %v8383
        %v8385 = vpop.f32.mrf.mxu0
        %8386 = vmatprep.mubr.bf16.mxu0 %v6778
        %8387 = vmatmul.mubr.bf16.gmra.mxu0 %v6777
        %v8388 = vpop.f32.mrf.mxu0
        %v8389 = vadd.f32 %v8100, %v8388
        %v8390 = vpop.f32.mrf.mxu0
        %v8391 = vpop.f32.mrf.mxu0
        %v8392 = vadd.f32 %v8103, %v8391
        %v8393 = vpop.f32.mrf.mxu0
        %8394 = vmatprep.mubr.bf16.mxu0 %v6787
        %8395 = vmatmul.mubr.bf16.gmra.mxu0 %v6786
        %v8396 = vpop.f32.mrf.mxu0
        %v8397 = vadd.f32 %v8108, %v8396
        %v8398 = vpop.f32.mrf.mxu0
        %v8399 = vpop.f32.mrf.mxu0
        %v8400 = vadd.f32 %v8111, %v8399
        %v8401 = vpop.f32.mrf.mxu0
        %8402 = vmatprep.mubr.bf16.mxu0 %v6796
        %8403 = vmatmul.mubr.bf16.gmra.mxu0 %v6795
        %v8404 = vpop.f32.mrf.mxu0
        %v8405 = vadd.f32 %v8116, %v8404
        %v8406 = vpop.f32.mrf.mxu0
        %v8407 = vpop.f32.mrf.mxu0
        %v8408 = vadd.f32 %v8119, %v8407
        %v8409 = vpop.f32.mrf.mxu0
        %8410 = vmatprep.mubr.bf16.mxu0 %v6805
        %8411 = vmatmul.mubr.bf16.gmra.mxu0 %v6804
        %v8412 = vpop.f32.mrf.mxu0
        %v8413 = vadd.f32 %v8124, %v8412
        %v8414 = vpop.f32.mrf.mxu0
        %v8415 = vpop.f32.mrf.mxu0
        %v8416 = vadd.f32 %v8127, %v8415
        %v8417 = vpop.f32.mrf.mxu0
        %8418 = vmatprep.mubr.bf16.mxu0 %v6814
        %8419 = vmatmul.mubr.bf16.gmra.mxu0 %v6813
        %v8420 = vpop.f32.mrf.mxu0
        %v8421 = vadd.f32 %v8132, %v8420
        %v8422 = vpop.f32.mrf.mxu0
        %v8423 = vpop.f32.mrf.mxu0
        %v8424 = vadd.f32 %v8135, %v8423
        %v8425 = vpop.f32.mrf.mxu0
        %8426 = vmatprep.mubr.bf16.mxu0 %v6823
        %8427 = vmatmul.mubr.bf16.gmra.mxu0 %v6822
        %v8428 = vpop.f32.mrf.mxu0
        %v8429 = vadd.f32 %v8140, %v8428
        %v8430 = vpop.f32.mrf.mxu0
        %v8431 = vpop.f32.mrf.mxu0
        %v8432 = vadd.f32 %v8143, %v8431
        %v8433 = vpop.f32.mrf.mxu0
        %8434 = vmatprep.mubr.bf16.mxu0 %v6832
        %8435 = vmatmul.mubr.bf16.gmra.mxu0 %v6831
        %v8436 = vpop.f32.mrf.mxu0
        %v8437 = vadd.f32 %v8148, %v8436
        %v8438 = vpop.f32.mrf.mxu0
        %v8439 = vpop.f32.mrf.mxu0
        %v8440 = vadd.f32 %v8151, %v8439
        %v8441 = vpop.f32.mrf.mxu0
        %8442 = vmatprep.mubr.bf16.mxu0 %v6841
        %8443 = vmatmul.mubr.bf16.gmra.mxu0 %v6840
        %v8444 = vpop.f32.mrf.mxu0
        %v8445 = vadd.f32 %v8156, %v8444
        %v8446 = vpop.f32.mrf.mxu0
        %v8447 = vpop.f32.mrf.mxu0
        %v8448 = vadd.f32 %v8159, %v8447
        %v8449 = vpop.f32.mrf.mxu0
        %8450 = vmatprep.mubr.bf16.mxu0 %v6850
        %8451 = vmatmul.mubr.bf16.gmra.mxu0 %v6849
        %v8452 = vpop.f32.mrf.mxu0
        %v8453 = vadd.f32 %v8164, %v8452
        %v8454 = vpop.f32.mrf.mxu0
        %v8455 = vpop.f32.mrf.mxu0
        %v8456 = vadd.f32 %v8167, %v8455
        %v8457 = vpop.f32.mrf.mxu0
        %8458 = vmatprep.mubr.bf16.mxu0 %v6859
        %8459 = vmatmul.mubr.bf16.gmra.mxu0 %v6858
        %v8460 = vpop.f32.mrf.mxu0
        %v8461 = vadd.f32 %v8172, %v8460
        %v8462 = vpop.f32.mrf.mxu0
        %v8463 = vpop.f32.mrf.mxu0
        %v8464 = vadd.f32 %v8175, %v8463
        %v8465 = vpop.f32.mrf.mxu0
        %8466 = vmatprep.mubr.bf16.mxu0 %v6868
        %8467 = vmatmul.mubr.bf16.gmra.mxu0 %v6867
        %v8468 = vpop.f32.mrf.mxu0
        %v8469 = vadd.f32 %v8180, %v8468
        %v8470 = vpop.f32.mrf.mxu0
        %v8471 = vpop.f32.mrf.mxu0
        %v8472 = vadd.f32 %v8183, %v8471
        %v8473 = vpop.f32.mrf.mxu0
        %8474 = vmatprep.mubr.bf16.mxu0 %v6877
        %8475 = vmatmul.mubr.bf16.gmra.mxu0 %v6876
        %v8476 = vpop.f32.mrf.mxu0
        %v8477 = vadd.f32 %v8188, %v8476
        %v8478 = vpop.f32.mrf.mxu0
        %v8479 = vpop.f32.mrf.mxu0
        %v8480 = vadd.f32 %v8191, %v8479
        %v8481 = vpop.f32.mrf.mxu0
        %8482 = vmatprep.mubr.bf16.mxu0 %v6886
        %8483 = vmatmul.mubr.bf16.gmra.mxu0 %v6885
        %v8484 = vpop.f32.mrf.mxu0
        %v8485 = vadd.f32 %v8196, %v8484
        %v8486 = vpop.f32.mrf.mxu0
        %v8487 = vpop.f32.mrf.mxu0
        %v8488 = vadd.f32 %v8199, %v8487
        %v8489 = vpop.f32.mrf.mxu0
        %8490 = vmatprep.mubr.bf16.mxu0 %v6895
        %8491 = vmatmul.mubr.bf16.gmra.mxu0 %v6894
        %v8492 = vpop.f32.mrf.mxu0
        %v8493 = vadd.f32 %v8204, %v8492
        %v8494 = vpop.f32.mrf.mxu0
        %v8495 = vpop.f32.mrf.mxu0
        %v8496 = vadd.f32 %v8207, %v8495
        %v8497 = vpop.f32.mrf.mxu0
        %8498 = vmatprep.mubr.bf16.mxu0 %v6904
        %8499 = vmatmul.mubr.bf16.gmra.mxu0 %v6903
        %v8500 = vpop.f32.mrf.mxu0
        %v8501 = vadd.f32 %v8212, %v8500
        %v8502 = vpop.f32.mrf.mxu0
        %v8503 = vpop.f32.mrf.mxu0
        %v8504 = vadd.f32 %v8215, %v8503
        %v8505 = vpop.f32.mrf.mxu0
        %8506 = vmatprep.mubr.bf16.mxu0 %v6913
        %8507 = vmatmul.mubr.bf16.gmra.mxu0 %v6912
        %v8508 = vpop.f32.mrf.mxu0
        %v8509 = vadd.f32 %v8220, %v8508
        %v8510 = vpop.f32.mrf.mxu0
        %v8511 = vpop.f32.mrf.mxu0
        %v8512 = vadd.f32 %v8223, %v8511
        %v8513 = vpop.f32.mrf.mxu0
        %8514 = vmatprep.mubr.bf16.mxu0 %v6922
        %8515 = vmatmul.mubr.bf16.gmra.mxu0 %v6921
        %v8516 = vpop.f32.mrf.mxu0
        %v8517 = vadd.f32 %v8228, %v8516
        %v8518 = vpop.f32.mrf.mxu0
        %v8519 = vpop.f32.mrf.mxu0
        %v8520 = vadd.f32 %v8231, %v8519
        %v8521 = vpop.f32.mrf.mxu0
        %8522 = vmatprep.mubr.bf16.mxu0 %v6931
        %8523 = vmatmul.mubr.bf16.gmra.mxu0 %v6930
        %v8524 = vpop.f32.mrf.mxu0
        %v8525 = vadd.f32 %v8236, %v8524
        %v8526 = vpop.f32.mrf.mxu0
        %v8527 = vpop.f32.mrf.mxu0
        %v8528 = vadd.f32 %v8239, %v8527
        %v8529 = vpop.f32.mrf.mxu0
        %8530 = vmatprep.mubr.bf16.mxu0 %v6940
        %8531 = vmatmul.mubr.bf16.gmra.mxu0 %v6939
        %v8532 = vpop.f32.mrf.mxu0
        %v8533 = vadd.f32 %v8244, %v8532
        %v8534 = vpop.f32.mrf.mxu0
        %v8535 = vpop.f32.mrf.mxu0
        %v8536 = vadd.f32 %v8247, %v8535
        %v8537 = vpop.f32.mrf.mxu0
        %8538 = vmatprep.mubr.bf16.mxu0 %v6949
        %8539 = vmatmul.mubr.bf16.gmra.mxu0 %v6948
        %v8540 = vpop.f32.mrf.mxu0
        %v8541 = vadd.f32 %v8252, %v8540
        %v8542 = vpop.f32.mrf.mxu0
        %v8543 = vpop.f32.mrf.mxu0
        %v8544 = vadd.f32 %v8255, %v8543
        %v8545 = vpop.f32.mrf.mxu0
        %8546 = vmatprep.mubr.bf16.mxu0 %v6958
        %8547 = vmatmul.mubr.bf16.gmra.mxu0 %v6957
        %v8548 = vpop.f32.mrf.mxu0
        %v8549 = vadd.f32 %v8260, %v8548
        %v8550 = vpop.f32.mrf.mxu0
        %v8551 = vpop.f32.mrf.mxu0
        %v8552 = vadd.f32 %v8263, %v8551
        %v8553 = vpop.f32.mrf.mxu0
        %8554 = vmatprep.mubr.bf16.mxu0 %v6967
        %8555 = vmatmul.mubr.bf16.gmra.mxu0 %v6966
        %v8556 = vpop.f32.mrf.mxu0
        %v8557 = vadd.f32 %v8268, %v8556
        %v8558 = vpop.f32.mrf.mxu0
        %v8559 = vpop.f32.mrf.mxu0
        %v8560 = vadd.f32 %v8271, %v8559
        %v8561 = vpop.f32.mrf.mxu0
        %8562 = vmatprep.mubr.bf16.mxu0 %v6976
        %8563 = vmatmul.mubr.bf16.gmra.mxu0 %v6975
        %v8564 = vpop.f32.mrf.mxu0
        %v8565 = vadd.f32 %v8276, %v8564
        %v8566 = vpop.f32.mrf.mxu0
        %v8567 = vpop.f32.mrf.mxu0
        %v8568 = vadd.f32 %v8279, %v8567
        %v8569 = vpop.f32.mrf.mxu0
        %8570 = vmatprep.mubr.bf16.mxu0 %v6985
        %8571 = vmatmul.mubr.bf16.gmra.mxu0 %v6984
        %v8572 = vpop.f32.mrf.mxu0
        %v8573 = vadd.f32 %v8284, %v8572
        %v8574 = vpop.f32.mrf.mxu0
        %v8575 = vpop.f32.mrf.mxu0
        %v8576 = vadd.f32 %v8287, %v8575
        %v8577 = vpop.f32.mrf.mxu0
        %8578 = vmatprep.mubr.bf16.mxu0 %v6994
        %8579 = vmatmul.mubr.bf16.gmra.mxu0 %v6993
        %v8580 = vpop.f32.mrf.mxu0
        %v8581 = vadd.f32 %v8292, %v8580
        %v8582 = vpop.f32.mrf.mxu0
        %v8583 = vpop.f32.mrf.mxu0
        %v8584 = vadd.f32 %v8295, %v8583
        %v8585 = vpop.f32.mrf.mxu0
        %8586 = vmatprep.mubr.bf16.mxu0 %v7003
        %8587 = vmatmul.mubr.bf16.gmra.mxu0 %v7002
        %v8588 = vpop.f32.mrf.mxu0
        %v8589 = vadd.f32 %v8300, %v8588
        %v8590 = vpop.f32.mrf.mxu0
        %v8591 = vpop.f32.mrf.mxu0
        %v8592 = vadd.f32 %v8303, %v8591
        %v8593 = vpop.f32.mrf.mxu0
        %8594 = vmatprep.mubr.bf16.mxu0 %v7012
        %8595 = vmatmul.mubr.bf16.gmra.mxu0 %v7011
        %v8596 = vpop.f32.mrf.mxu0
        %v8597 = vadd.f32 %v8308, %v8596
        %v8598 = vpop.f32.mrf.mxu0
        %v8599 = vpop.f32.mrf.mxu0
        %v8600 = vadd.f32 %v8311, %v8599
        %v8601 = vpop.f32.mrf.mxu0
        %8602 = vdwg.mxu0
        %8603 = vmatprep.subr.bf16.mxu0 0
        %8604 = vmatpush1.bf16.msra.mxu0 %v7647
        %8605 = vmatprep.subr.bf16.mxu0 0
        %8606 = vmatpush1.bf16.msra.mxu0 %v7646
        %8607 = vmatprep.subr.bf16.mxu0 0
        %8608 = vmatpush1.bf16.msra.mxu0 %v7645
        %8609 = vmatprep.subr.bf16.mxu0 0
        %8610 = vmatpush1.bf16.msra.mxu0 %v7644
        %8611 = vmatprep.subr.bf16.mxu0 0
        %8612 = vmatpush1.bf16.msra.mxu0 %v7643
        %8613 = vmatprep.subr.bf16.mxu0 0
        %8614 = vmatpush1.bf16.msra.mxu0 %v7642
        %8615 = vmatprep.subr.bf16.mxu0 0
        %8616 = vmatpush1.bf16.msra.mxu0 %v7641
        %8617 = vmatprep.subr.bf16.mxu0 0
        %8618 = vmatpush1.bf16.msra.mxu0 %v7640
        %8619 = vmatprep.subr.bf16.mxu0 0
        %8620 = vmatpush2.bf16.msra.mxu0 %v7655
        %8621 = vmatprep.subr.bf16.mxu0 0
        %8622 = vmatpush2.bf16.msra.mxu0 %v7654
        %8623 = vmatprep.subr.bf16.mxu0 0
        %8624 = vmatpush2.bf16.msra.mxu0 %v7653
        %8625 = vmatprep.subr.bf16.mxu0 0
        %8626 = vmatpush2.bf16.msra.mxu0 %v7652
        %8627 = vmatprep.subr.bf16.mxu0 0
        %8628 = vmatpush2.bf16.msra.mxu0 %v7651
        %8629 = vmatprep.subr.bf16.mxu0 0
        %8630 = vmatpush2.bf16.msra.mxu0 %v7650
        %8631 = vmatprep.subr.bf16.mxu0 0
        %8632 = vmatpush2.bf16.msra.mxu0 %v7649
        %8633 = vmatprep.subr.bf16.mxu0 0
        %8634 = vmatpush2.bf16.msra.mxu0 %v7648
        %8635 = vmatprep.mubr.bf16.mxu0 %v6735
        %8636 = vmatmul.mubr.bf16.gmra.mxu0 %v6734
        %v8637 = vpop.f32.mrf.mxu0
        %v8638 = vadd.f32 %v8349, %v8637
        %v8639 = vpop.f32.mrf.mxu0
        %v8640 = vpop.f32.mrf.mxu0
        %v8641 = vadd.f32 %v8352, %v8640
        %v8642 = vpop.f32.mrf.mxu0
        %8643 = vmatprep.mubr.bf16.mxu0 %v6744
        %8644 = vmatmul.mubr.bf16.gmra.mxu0 %v6743
        %v8645 = vpop.f32.mrf.mxu0
        %v8646 = vadd.f32 %v8357, %v8645
        %v8647 = vpop.f32.mrf.mxu0
        %v8648 = vpop.f32.mrf.mxu0
        %v8649 = vadd.f32 %v8360, %v8648
        %v8650 = vpop.f32.mrf.mxu0
        %8651 = vmatprep.mubr.bf16.mxu0 %v6753
        %8652 = vmatmul.mubr.bf16.gmra.mxu0 %v6752
        %v8653 = vpop.f32.mrf.mxu0
        %v8654 = vadd.f32 %v8365, %v8653
        %v8655 = vpop.f32.mrf.mxu0
        %v8656 = vpop.f32.mrf.mxu0
        %v8657 = vadd.f32 %v8368, %v8656
        %v8658 = vpop.f32.mrf.mxu0
        %8659 = vmatprep.mubr.bf16.mxu0 %v6762
        %8660 = vmatmul.mubr.bf16.gmra.mxu0 %v6761
        %v8661 = vpop.f32.mrf.mxu0
        %v8662 = vadd.f32 %v8373, %v8661
        %v8663 = vpop.f32.mrf.mxu0
        %v8664 = vpop.f32.mrf.mxu0
        %v8665 = vadd.f32 %v8376, %v8664
        %v8666 = vpop.f32.mrf.mxu0
        %8667 = vmatprep.mubr.bf16.mxu0 %v6771
        %8668 = vmatmul.mubr.bf16.gmra.mxu0 %v6770
        %v8669 = vpop.f32.mrf.mxu0
        %v8670 = vadd.f32 %v8381, %v8669
        %v8671 = vpop.f32.mrf.mxu0
        %v8672 = vpop.f32.mrf.mxu0
        %v8673 = vadd.f32 %v8384, %v8672
        %v8674 = vpop.f32.mrf.mxu0
        %8675 = vmatprep.mubr.bf16.mxu0 %v6780
        %8676 = vmatmul.mubr.bf16.gmra.mxu0 %v6779
        %v8677 = vpop.f32.mrf.mxu0
        %v8678 = vadd.f32 %v8389, %v8677
        %v8679 = vpop.f32.mrf.mxu0
        %v8680 = vpop.f32.mrf.mxu0
        %v8681 = vadd.f32 %v8392, %v8680
        %v8682 = vpop.f32.mrf.mxu0
        %8683 = vmatprep.mubr.bf16.mxu0 %v6789
        %8684 = vmatmul.mubr.bf16.gmra.mxu0 %v6788
        %v8685 = vpop.f32.mrf.mxu0
        %v8686 = vadd.f32 %v8397, %v8685
        %v8687 = vpop.f32.mrf.mxu0
        %v8688 = vpop.f32.mrf.mxu0
        %v8689 = vadd.f32 %v8400, %v8688
        %v8690 = vpop.f32.mrf.mxu0
        %8691 = vmatprep.mubr.bf16.mxu0 %v6798
        %8692 = vmatmul.mubr.bf16.gmra.mxu0 %v6797
        %v8693 = vpop.f32.mrf.mxu0
        %v8694 = vadd.f32 %v8405, %v8693
        %v8695 = vpop.f32.mrf.mxu0
        %v8696 = vpop.f32.mrf.mxu0
        %v8697 = vadd.f32 %v8408, %v8696
        %v8698 = vpop.f32.mrf.mxu0
        %8699 = vmatprep.mubr.bf16.mxu0 %v6807
        %8700 = vmatmul.mubr.bf16.gmra.mxu0 %v6806
        %v8701 = vpop.f32.mrf.mxu0
        %v8702 = vadd.f32 %v8413, %v8701
        %v8703 = vpop.f32.mrf.mxu0
        %v8704 = vpop.f32.mrf.mxu0
        %v8705 = vadd.f32 %v8416, %v8704
        %v8706 = vpop.f32.mrf.mxu0
        %8707 = vmatprep.mubr.bf16.mxu0 %v6816
        %8708 = vmatmul.mubr.bf16.gmra.mxu0 %v6815
        %v8709 = vpop.f32.mrf.mxu0
        %v8710 = vadd.f32 %v8421, %v8709
        %v8711 = vpop.f32.mrf.mxu0
        %v8712 = vpop.f32.mrf.mxu0
        %v8713 = vadd.f32 %v8424, %v8712
        %v8714 = vpop.f32.mrf.mxu0
        %8715 = vmatprep.mubr.bf16.mxu0 %v6825
        %8716 = vmatmul.mubr.bf16.gmra.mxu0 %v6824
        %v8717 = vpop.f32.mrf.mxu0
        %v8718 = vadd.f32 %v8429, %v8717
        %v8719 = vpop.f32.mrf.mxu0
        %v8720 = vpop.f32.mrf.mxu0
        %v8721 = vadd.f32 %v8432, %v8720
        %v8722 = vpop.f32.mrf.mxu0
        %8723 = vmatprep.mubr.bf16.mxu0 %v6834
        %8724 = vmatmul.mubr.bf16.gmra.mxu0 %v6833
        %v8725 = vpop.f32.mrf.mxu0
        %v8726 = vadd.f32 %v8437, %v8725
        %v8727 = vpop.f32.mrf.mxu0
        %v8728 = vpop.f32.mrf.mxu0
        %v8729 = vadd.f32 %v8440, %v8728
        %v8730 = vpop.f32.mrf.mxu0
        %8731 = vmatprep.mubr.bf16.mxu0 %v6843
        %8732 = vmatmul.mubr.bf16.gmra.mxu0 %v6842
        %v8733 = vpop.f32.mrf.mxu0
        %v8734 = vadd.f32 %v8445, %v8733
        %v8735 = vpop.f32.mrf.mxu0
        %v8736 = vpop.f32.mrf.mxu0
        %v8737 = vadd.f32 %v8448, %v8736
        %v8738 = vpop.f32.mrf.mxu0
        %8739 = vmatprep.mubr.bf16.mxu0 %v6852
        %8740 = vmatmul.mubr.bf16.gmra.mxu0 %v6851
        %v8741 = vpop.f32.mrf.mxu0
        %v8742 = vadd.f32 %v8453, %v8741
        %v8743 = vpop.f32.mrf.mxu0
        %v8744 = vpop.f32.mrf.mxu0
        %v8745 = vadd.f32 %v8456, %v8744
        %v8746 = vpop.f32.mrf.mxu0
        %8747 = vmatprep.mubr.bf16.mxu0 %v6861
        %8748 = vmatmul.mubr.bf16.gmra.mxu0 %v6860
        %v8749 = vpop.f32.mrf.mxu0
        %v8750 = vadd.f32 %v8461, %v8749
        %v8751 = vpop.f32.mrf.mxu0
        %v8752 = vpop.f32.mrf.mxu0
        %v8753 = vadd.f32 %v8464, %v8752
        %v8754 = vpop.f32.mrf.mxu0
        %8755 = vmatprep.mubr.bf16.mxu0 %v6870
        %8756 = vmatmul.mubr.bf16.gmra.mxu0 %v6869
        %v8757 = vpop.f32.mrf.mxu0
        %v8758 = vadd.f32 %v8469, %v8757
        %v8759 = vpop.f32.mrf.mxu0
        %v8760 = vpop.f32.mrf.mxu0
        %v8761 = vadd.f32 %v8472, %v8760
        %v8762 = vpop.f32.mrf.mxu0
        %8763 = vmatprep.mubr.bf16.mxu0 %v6879
        %8764 = vmatmul.mubr.bf16.gmra.mxu0 %v6878
        %v8765 = vpop.f32.mrf.mxu0
        %v8766 = vadd.f32 %v8477, %v8765
        %v8767 = vpop.f32.mrf.mxu0
        %v8768 = vpop.f32.mrf.mxu0
        %v8769 = vadd.f32 %v8480, %v8768
        %v8770 = vpop.f32.mrf.mxu0
        %8771 = vmatprep.mubr.bf16.mxu0 %v6888
        %8772 = vmatmul.mubr.bf16.gmra.mxu0 %v6887
        %v8773 = vpop.f32.mrf.mxu0
        %v8774 = vadd.f32 %v8485, %v8773
        %v8775 = vpop.f32.mrf.mxu0
        %v8776 = vpop.f32.mrf.mxu0
        %v8777 = vadd.f32 %v8488, %v8776
        %v8778 = vpop.f32.mrf.mxu0
        %8779 = vmatprep.mubr.bf16.mxu0 %v6897
        %8780 = vmatmul.mubr.bf16.gmra.mxu0 %v6896
        %v8781 = vpop.f32.mrf.mxu0
        %v8782 = vadd.f32 %v8493, %v8781
        %v8783 = vpop.f32.mrf.mxu0
        %v8784 = vpop.f32.mrf.mxu0
        %v8785 = vadd.f32 %v8496, %v8784
        %v8786 = vpop.f32.mrf.mxu0
        %8787 = vmatprep.mubr.bf16.mxu0 %v6906
        %8788 = vmatmul.mubr.bf16.gmra.mxu0 %v6905
        %v8789 = vpop.f32.mrf.mxu0
        %v8790 = vadd.f32 %v8501, %v8789
        %v8791 = vpop.f32.mrf.mxu0
        %v8792 = vpop.f32.mrf.mxu0
        %v8793 = vadd.f32 %v8504, %v8792
        %v8794 = vpop.f32.mrf.mxu0
        %8795 = vmatprep.mubr.bf16.mxu0 %v6915
        %8796 = vmatmul.mubr.bf16.gmra.mxu0 %v6914
        %v8797 = vpop.f32.mrf.mxu0
        %v8798 = vadd.f32 %v8509, %v8797
        %v8799 = vpop.f32.mrf.mxu0
        %v8800 = vpop.f32.mrf.mxu0
        %v8801 = vadd.f32 %v8512, %v8800
        %v8802 = vpop.f32.mrf.mxu0
        %8803 = vmatprep.mubr.bf16.mxu0 %v6924
        %8804 = vmatmul.mubr.bf16.gmra.mxu0 %v6923
        %v8805 = vpop.f32.mrf.mxu0
        %v8806 = vadd.f32 %v8517, %v8805
        %v8807 = vpop.f32.mrf.mxu0
        %v8808 = vpop.f32.mrf.mxu0
        %v8809 = vadd.f32 %v8520, %v8808
        %v8810 = vpop.f32.mrf.mxu0
        %8811 = vmatprep.mubr.bf16.mxu0 %v6933
        %8812 = vmatmul.mubr.bf16.gmra.mxu0 %v6932
        %v8813 = vpop.f32.mrf.mxu0
        %v8814 = vadd.f32 %v8525, %v8813
        %v8815 = vpop.f32.mrf.mxu0
        %v8816 = vpop.f32.mrf.mxu0
        %v8817 = vadd.f32 %v8528, %v8816
        %v8818 = vpop.f32.mrf.mxu0
        %8819 = vmatprep.mubr.bf16.mxu0 %v6942
        %8820 = vmatmul.mubr.bf16.gmra.mxu0 %v6941
        %v8821 = vpop.f32.mrf.mxu0
        %v8822 = vadd.f32 %v8533, %v8821
        %v8823 = vpop.f32.mrf.mxu0
        %v8824 = vpop.f32.mrf.mxu0
        %v8825 = vadd.f32 %v8536, %v8824
        %v8826 = vpop.f32.mrf.mxu0
        %8827 = vmatprep.mubr.bf16.mxu0 %v6951
        %8828 = vmatmul.mubr.bf16.gmra.mxu0 %v6950
        %v8829 = vpop.f32.mrf.mxu0
        %v8830 = vadd.f32 %v8541, %v8829
        %v8831 = vpop.f32.mrf.mxu0
        %v8832 = vpop.f32.mrf.mxu0
        %v8833 = vadd.f32 %v8544, %v8832
        %v8834 = vpop.f32.mrf.mxu0
        %8835 = vmatprep.mubr.bf16.mxu0 %v6960
        %8836 = vmatmul.mubr.bf16.gmra.mxu0 %v6959
        %v8837 = vpop.f32.mrf.mxu0
        %v8838 = vadd.f32 %v8549, %v8837
        %v8839 = vpop.f32.mrf.mxu0
        %v8840 = vpop.f32.mrf.mxu0
        %v8841 = vadd.f32 %v8552, %v8840
        %v8842 = vpop.f32.mrf.mxu0
        %8843 = vmatprep.mubr.bf16.mxu0 %v6969
        %8844 = vmatmul.mubr.bf16.gmra.mxu0 %v6968
        %v8845 = vpop.f32.mrf.mxu0
        %v8846 = vadd.f32 %v8557, %v8845
        %v8847 = vpop.f32.mrf.mxu0
        %v8848 = vpop.f32.mrf.mxu0
        %v8849 = vadd.f32 %v8560, %v8848
        %v8850 = vpop.f32.mrf.mxu0
        %8851 = vmatprep.mubr.bf16.mxu0 %v6978
        %8852 = vmatmul.mubr.bf16.gmra.mxu0 %v6977
        %v8853 = vpop.f32.mrf.mxu0
        %v8854 = vadd.f32 %v8565, %v8853
        %v8855 = vpop.f32.mrf.mxu0
        %v8856 = vpop.f32.mrf.mxu0
        %v8857 = vadd.f32 %v8568, %v8856
        %v8858 = vpop.f32.mrf.mxu0
        %8859 = vmatprep.mubr.bf16.mxu0 %v6987
        %8860 = vmatmul.mubr.bf16.gmra.mxu0 %v6986
        %v8861 = vpop.f32.mrf.mxu0
        %v8862 = vadd.f32 %v8573, %v8861
        %v8863 = vpop.f32.mrf.mxu0
        %v8864 = vpop.f32.mrf.mxu0
        %v8865 = vadd.f32 %v8576, %v8864
        %v8866 = vpop.f32.mrf.mxu0
        %8867 = vmatprep.mubr.bf16.mxu0 %v6996
        %8868 = vmatmul.mubr.bf16.gmra.mxu0 %v6995
        %v8869 = vpop.f32.mrf.mxu0
        %v8870 = vadd.f32 %v8581, %v8869
        %v8871 = vpop.f32.mrf.mxu0
        %v8872 = vpop.f32.mrf.mxu0
        %v8873 = vadd.f32 %v8584, %v8872
        %v8874 = vpop.f32.mrf.mxu0
        %8875 = vmatprep.mubr.bf16.mxu0 %v7005
        %8876 = vmatmul.mubr.bf16.gmra.mxu0 %v7004
        %v8877 = vpop.f32.mrf.mxu0
        %v8878 = vadd.f32 %v8589, %v8877
        %v8879 = vpop.f32.mrf.mxu0
        %v8880 = vpop.f32.mrf.mxu0
        %v8881 = vadd.f32 %v8592, %v8880
        %v8882 = vpop.f32.mrf.mxu0
        %8883 = vmatprep.mubr.bf16.mxu0 %v7014
        %8884 = vmatmul.mubr.bf16.gmra.mxu0 %v7013
        %v8885 = vpop.f32.mrf.mxu0
        %v8886 = vadd.f32 %v8597, %v8885
        %v8887 = vpop.f32.mrf.mxu0
        %v8888 = vpop.f32.mrf.mxu0
        %v8889 = vadd.f32 %v8600, %v8888
        %v8890 = vpop.f32.mrf.mxu0
        %8891 = vdwg.mxu0
        %8892 = vmatprep.subr.bf16.mxu0 0
        %8893 = vmatpush1.bf16.msra.mxu0 %v7663
        %8894 = vmatprep.subr.bf16.mxu0 0
        %8895 = vmatpush1.bf16.msra.mxu0 %v7662
        %8896 = vmatprep.subr.bf16.mxu0 0
        %8897 = vmatpush1.bf16.msra.mxu0 %v7661
        %8898 = vmatprep.subr.bf16.mxu0 0
        %8899 = vmatpush1.bf16.msra.mxu0 %v7660
        %8900 = vmatprep.subr.bf16.mxu0 0
        %8901 = vmatpush1.bf16.msra.mxu0 %v7659
        %8902 = vmatprep.subr.bf16.mxu0 0
        %8903 = vmatpush1.bf16.msra.mxu0 %v7658
        %8904 = vmatprep.subr.bf16.mxu0 0
        %8905 = vmatpush1.bf16.msra.mxu0 %v7657
        %8906 = vmatprep.subr.bf16.mxu0 0
        %8907 = vmatpush1.bf16.msra.mxu0 %v7656
        %8908 = vmatprep.subr.bf16.mxu0 0
        %8909 = vmatpush2.bf16.msra.mxu0 0
        %8910 = vmatprep.subr.bf16.mxu0 0
        %8911 = vmatpush2.bf16.msra.mxu0 0
        %8912 = vmatprep.subr.bf16.mxu0 0
        %8913 = vmatpush2.bf16.msra.mxu0 0
        %8914 = vmatprep.subr.bf16.mxu0 0
        %8915 = vmatpush2.bf16.msra.mxu0 0
        %8916 = vmatprep.subr.bf16.mxu0 0
        %8917 = vmatpush2.bf16.msra.mxu0 0
        %8918 = vmatprep.subr.bf16.mxu0 0
        %8919 = vmatpush2.bf16.msra.mxu0 0
        %8920 = vmatprep.subr.bf16.mxu0 0
        %8921 = vmatpush2.bf16.msra.mxu0 0
        %8922 = vmatprep.subr.bf16.mxu0 0
        %8923 = vmatpush2.bf16.msra.mxu0 0
        %8924 = vmatprep.mubr.bf16.mxu0 0
        %8925 = vmatmul.mubr.bf16.gmra.mxu0 %v6736
        %v8926 = vpop.f32.mrf.mxu0
        %v8927 = vadd.f32 %v8638, %v8926
        %v8928 = vpop.f32.mrf.mxu0
        %v8929 = vpop.f32.mrf.mxu0
        %v8930 = vadd.f32 %v8641, %v8929
        %v8931 = vpop.f32.mrf.mxu0
        %8932 = vmatprep.mubr.bf16.mxu0 0
        %8933 = vmatmul.mubr.bf16.gmra.mxu0 %v6745
        %v8934 = vpop.f32.mrf.mxu0
        %v8935 = vadd.f32 %v8646, %v8934
        %v8936 = vpop.f32.mrf.mxu0
        %v8937 = vpop.f32.mrf.mxu0
        %v8938 = vadd.f32 %v8649, %v8937
        %v8939 = vpop.f32.mrf.mxu0
        %8940 = vmatprep.mubr.bf16.mxu0 0
        %8941 = vmatmul.mubr.bf16.gmra.mxu0 %v6754
        %v8942 = vpop.f32.mrf.mxu0
        %v8943 = vadd.f32 %v8654, %v8942
        %v8944 = vpop.f32.mrf.mxu0
        %v8945 = vpop.f32.mrf.mxu0
        %v8946 = vadd.f32 %v8657, %v8945
        %v8947 = vpop.f32.mrf.mxu0
        %8948 = vmatprep.mubr.bf16.mxu0 0
        %8949 = vmatmul.mubr.bf16.gmra.mxu0 %v6763
        %v8950 = vpop.f32.mrf.mxu0
        %v8951 = vadd.f32 %v8662, %v8950
        %v8952 = vpop.f32.mrf.mxu0
        %v8953 = vpop.f32.mrf.mxu0
        %v8954 = vadd.f32 %v8665, %v8953
        %v8955 = vpop.f32.mrf.mxu0
        %8956 = vmatprep.mubr.bf16.mxu0 0
        %8957 = vmatmul.mubr.bf16.gmra.mxu0 %v6772
        %v8958 = vpop.f32.mrf.mxu0
        %v8959 = vadd.f32 %v8670, %v8958
        %v8960 = vpop.f32.mrf.mxu0
        %v8961 = vpop.f32.mrf.mxu0
        %v8962 = vadd.f32 %v8673, %v8961
        %v8963 = vpop.f32.mrf.mxu0
        %8964 = vmatprep.mubr.bf16.mxu0 0
        %8965 = vmatmul.mubr.bf16.gmra.mxu0 %v6781
        %v8966 = vpop.f32.mrf.mxu0
        %v8967 = vadd.f32 %v8678, %v8966
        %v8968 = vpop.f32.mrf.mxu0
        %v8969 = vpop.f32.mrf.mxu0
        %v8970 = vadd.f32 %v8681, %v8969
        %v8971 = vpop.f32.mrf.mxu0
        %8972 = vmatprep.mubr.bf16.mxu0 0
        %8973 = vmatmul.mubr.bf16.gmra.mxu0 %v6790
        %v8974 = vpop.f32.mrf.mxu0
        %v8975 = vadd.f32 %v8686, %v8974
        %v8976 = vpop.f32.mrf.mxu0
        %v8977 = vpop.f32.mrf.mxu0
        %v8978 = vadd.f32 %v8689, %v8977
        %v8979 = vpop.f32.mrf.mxu0
        %8980 = vmatprep.mubr.bf16.mxu0 0
        %8981 = vmatmul.mubr.bf16.gmra.mxu0 %v6799
        %v8982 = vpop.f32.mrf.mxu0
        %v8983 = vadd.f32 %v8694, %v8982
        %v8984 = vpop.f32.mrf.mxu0
        %v8985 = vpop.f32.mrf.mxu0
        %v8986 = vadd.f32 %v8697, %v8985
        %v8987 = vpop.f32.mrf.mxu0
        %8988 = vmatprep.mubr.bf16.mxu0 0
        %8989 = vmatmul.mubr.bf16.gmra.mxu0 %v6808
        %v8990 = vpop.f32.mrf.mxu0
        %v8991 = vadd.f32 %v8702, %v8990
        %v8992 = vpop.f32.mrf.mxu0
        %v8993 = vpop.f32.mrf.mxu0
        %v8994 = vadd.f32 %v8705, %v8993
        %v8995 = vpop.f32.mrf.mxu0
        %8996 = vmatprep.mubr.bf16.mxu0 0
        %8997 = vmatmul.mubr.bf16.gmra.mxu0 %v6817
        %v8998 = vpop.f32.mrf.mxu0
        %v8999 = vadd.f32 %v8710, %v8998
        %v9000 = vpop.f32.mrf.mxu0
        %v9001 = vpop.f32.mrf.mxu0
        %v9002 = vadd.f32 %v8713, %v9001
        %v9003 = vpop.f32.mrf.mxu0
        %9004 = vmatprep.mubr.bf16.mxu0 0
        %9005 = vmatmul.mubr.bf16.gmra.mxu0 %v6826
        %v9006 = vpop.f32.mrf.mxu0
        %v9007 = vadd.f32 %v8718, %v9006
        %v9008 = vpop.f32.mrf.mxu0
        %v9009 = vpop.f32.mrf.mxu0
        %v9010 = vadd.f32 %v8721, %v9009
        %v9011 = vpop.f32.mrf.mxu0
        %9012 = vmatprep.mubr.bf16.mxu0 0
        %9013 = vmatmul.mubr.bf16.gmra.mxu0 %v6835
        %v9014 = vpop.f32.mrf.mxu0
        %v9015 = vadd.f32 %v8726, %v9014
        %v9016 = vpop.f32.mrf.mxu0
        %v9017 = vpop.f32.mrf.mxu0
        %v9018 = vadd.f32 %v8729, %v9017
        %v9019 = vpop.f32.mrf.mxu0
        %9020 = vmatprep.mubr.bf16.mxu0 0
        %9021 = vmatmul.mubr.bf16.gmra.mxu0 %v6844
        %v9022 = vpop.f32.mrf.mxu0
        %v9023 = vadd.f32 %v8734, %v9022
        %v9024 = vpop.f32.mrf.mxu0
        %v9025 = vpop.f32.mrf.mxu0
        %v9026 = vadd.f32 %v8737, %v9025
        %v9027 = vpop.f32.mrf.mxu0
        %9028 = vmatprep.mubr.bf16.mxu0 0
        %9029 = vmatmul.mubr.bf16.gmra.mxu0 %v6853
        %v9030 = vpop.f32.mrf.mxu0
        %v9031 = vadd.f32 %v8742, %v9030
        %v9032 = vpop.f32.mrf.mxu0
        %v9033 = vpop.f32.mrf.mxu0
        %v9034 = vadd.f32 %v8745, %v9033
        %v9035 = vpop.f32.mrf.mxu0
        %9036 = vmatprep.mubr.bf16.mxu0 0
        %9037 = vmatmul.mubr.bf16.gmra.mxu0 %v6862
        %v9038 = vpop.f32.mrf.mxu0
        %v9039 = vadd.f32 %v8750, %v9038
        %v9040 = vpop.f32.mrf.mxu0
        %v9041 = vpop.f32.mrf.mxu0
        %v9042 = vadd.f32 %v8753, %v9041
        %v9043 = vpop.f32.mrf.mxu0
        %9044 = vmatprep.mubr.bf16.mxu0 0
        %9045 = vmatmul.mubr.bf16.gmra.mxu0 %v6871
        %v9046 = vpop.f32.mrf.mxu0
        %v9047 = vadd.f32 %v8758, %v9046
        %v9048 = vpop.f32.mrf.mxu0
        %v9049 = vpop.f32.mrf.mxu0
        %v9050 = vadd.f32 %v8761, %v9049
        %v9051 = vpop.f32.mrf.mxu0
        %9052 = vmatprep.mubr.bf16.mxu0 0
        %9053 = vmatmul.mubr.bf16.gmra.mxu0 %v6880
        %v9054 = vpop.f32.mrf.mxu0
        %v9055 = vadd.f32 %v8766, %v9054
        %v9056 = vpop.f32.mrf.mxu0
        %v9057 = vpop.f32.mrf.mxu0
        %v9058 = vadd.f32 %v8769, %v9057
        %v9059 = vpop.f32.mrf.mxu0
        %9060 = vmatprep.mubr.bf16.mxu0 0
        %9061 = vmatmul.mubr.bf16.gmra.mxu0 %v6889
        %v9062 = vpop.f32.mrf.mxu0
        %v9063 = vadd.f32 %v8774, %v9062
        %v9064 = vpop.f32.mrf.mxu0
        %v9065 = vpop.f32.mrf.mxu0
        %v9066 = vadd.f32 %v8777, %v9065
        %v9067 = vpop.f32.mrf.mxu0
        %9068 = vmatprep.mubr.bf16.mxu0 0
        %9069 = vmatmul.mubr.bf16.gmra.mxu0 %v6898
        %v9070 = vpop.f32.mrf.mxu0
        %v9071 = vadd.f32 %v8782, %v9070
        %v9072 = vpop.f32.mrf.mxu0
        %v9073 = vpop.f32.mrf.mxu0
        %v9074 = vadd.f32 %v8785, %v9073
        %v9075 = vpop.f32.mrf.mxu0
        %9076 = vmatprep.mubr.bf16.mxu0 0
        %9077 = vmatmul.mubr.bf16.gmra.mxu0 %v6907
        %v9078 = vpop.f32.mrf.mxu0
        %v9079 = vadd.f32 %v8790, %v9078
        %v9080 = vpop.f32.mrf.mxu0
        %v9081 = vpop.f32.mrf.mxu0
        %v9082 = vadd.f32 %v8793, %v9081
        %v9083 = vpop.f32.mrf.mxu0
        %9084 = vmatprep.mubr.bf16.mxu0 0
        %9085 = vmatmul.mubr.bf16.gmra.mxu0 %v6916
        %v9086 = vpop.f32.mrf.mxu0
        %v9087 = vadd.f32 %v8798, %v9086
        %v9088 = vpop.f32.mrf.mxu0
        %v9089 = vpop.f32.mrf.mxu0
        %v9090 = vadd.f32 %v8801, %v9089
        %v9091 = vpop.f32.mrf.mxu0
        %9092 = vmatprep.mubr.bf16.mxu0 0
        %9093 = vmatmul.mubr.bf16.gmra.mxu0 %v6925
        %v9094 = vpop.f32.mrf.mxu0
        %v9095 = vadd.f32 %v8806, %v9094
        %v9096 = vpop.f32.mrf.mxu0
        %v9097 = vpop.f32.mrf.mxu0
        %v9098 = vadd.f32 %v8809, %v9097
        %v9099 = vpop.f32.mrf.mxu0
        %9100 = vmatprep.mubr.bf16.mxu0 0
        %9101 = vmatmul.mubr.bf16.gmra.mxu0 %v6934
        %v9102 = vpop.f32.mrf.mxu0
        %v9103 = vadd.f32 %v8814, %v9102
        %v9104 = vpop.f32.mrf.mxu0
        %v9105 = vpop.f32.mrf.mxu0
        %v9106 = vadd.f32 %v8817, %v9105
        %v9107 = vpop.f32.mrf.mxu0
        %9108 = vmatprep.mubr.bf16.mxu0 0
        %9109 = vmatmul.mubr.bf16.gmra.mxu0 %v6943
        %v9110 = vpop.f32.mrf.mxu0
        %v9111 = vadd.f32 %v8822, %v9110
        %v9112 = vpop.f32.mrf.mxu0
        %v9113 = vpop.f32.mrf.mxu0
        %v9114 = vadd.f32 %v8825, %v9113
        %v9115 = vpop.f32.mrf.mxu0
        %9116 = vmatprep.mubr.bf16.mxu0 0
        %9117 = vmatmul.mubr.bf16.gmra.mxu0 %v6952
        %v9118 = vpop.f32.mrf.mxu0
        %v9119 = vadd.f32 %v8830, %v9118
        %v9120 = vpop.f32.mrf.mxu0
        %v9121 = vpop.f32.mrf.mxu0
        %v9122 = vadd.f32 %v8833, %v9121
        %v9123 = vpop.f32.mrf.mxu0
        %9124 = vmatprep.mubr.bf16.mxu0 0
        %9125 = vmatmul.mubr.bf16.gmra.mxu0 %v6961
        %v9126 = vpop.f32.mrf.mxu0
        %v9127 = vadd.f32 %v8838, %v9126
        %v9128 = vpop.f32.mrf.mxu0
        %v9129 = vpop.f32.mrf.mxu0
        %v9130 = vadd.f32 %v8841, %v9129
        %v9131 = vpop.f32.mrf.mxu0
        %9132 = vmatprep.mubr.bf16.mxu0 0
        %9133 = vmatmul.mubr.bf16.gmra.mxu0 %v6970
        %v9134 = vpop.f32.mrf.mxu0
        %v9135 = vadd.f32 %v8846, %v9134
        %v9136 = vpop.f32.mrf.mxu0
        %v9137 = vpop.f32.mrf.mxu0
        %v9138 = vadd.f32 %v8849, %v9137
        %v9139 = vpop.f32.mrf.mxu0
        %9140 = vmatprep.mubr.bf16.mxu0 0
        %9141 = vmatmul.mubr.bf16.gmra.mxu0 %v6979
        %v9142 = vpop.f32.mrf.mxu0
        %v9143 = vadd.f32 %v8854, %v9142
        %v9144 = vpop.f32.mrf.mxu0
        %v9145 = vpop.f32.mrf.mxu0
        %v9146 = vadd.f32 %v8857, %v9145
        %v9147 = vpop.f32.mrf.mxu0
        %9148 = vmatprep.mubr.bf16.mxu0 0
        %9149 = vmatmul.mubr.bf16.gmra.mxu0 %v6988
        %v9150 = vpop.f32.mrf.mxu0
        %v9151 = vadd.f32 %v8862, %v9150
        %v9152 = vpop.f32.mrf.mxu0
        %v9153 = vpop.f32.mrf.mxu0
        %v9154 = vadd.f32 %v8865, %v9153
        %v9155 = vpop.f32.mrf.mxu0
        %9156 = vmatprep.mubr.bf16.mxu0 0
        %9157 = vmatmul.mubr.bf16.gmra.mxu0 %v6997
        %v9158 = vpop.f32.mrf.mxu0
        %v9159 = vadd.f32 %v8870, %v9158
        %v9160 = vpop.f32.mrf.mxu0
        %v9161 = vpop.f32.mrf.mxu0
        %v9162 = vadd.f32 %v8873, %v9161
        %v9163 = vpop.f32.mrf.mxu0
        %9164 = vmatprep.mubr.bf16.mxu0 0
        %9165 = vmatmul.mubr.bf16.gmra.mxu0 %v7006
        %v9166 = vpop.f32.mrf.mxu0
        %v9167 = vadd.f32 %v8878, %v9166
        %v9168 = vpop.f32.mrf.mxu0
        %v9169 = vpop.f32.mrf.mxu0
        %v9170 = vadd.f32 %v8881, %v9169
        %v9171 = vpop.f32.mrf.mxu0
        %9172 = vmatprep.mubr.bf16.mxu0 0
        %9173 = vmatmul.mubr.bf16.gmra.mxu0 %v7015
        %v9174 = vpop.f32.mrf.mxu0
        %v9175 = vadd.f32 %v8886, %v9174
        %v9176 = vpop.f32.mrf.mxu0
        %v9177 = vpop.f32.mrf.mxu0
        %v9178 = vadd.f32 %v8889, %v9177
        %v9179 = vpop.f32.mrf.mxu0
        %9180 = vdwg.mxu0
        %v9181 = vld [vmem:[%s6] sm:$0x1]
        %v9182 = vld [vmem:[%s7] sm:$0x1]
        %v9183 = vsel %vm978, %v8927, 0.0
        %v9184 = vsel %vm978, %v8930, 0.0
        %v9185 = vadd.f32 %v9183, %v9184
        %v9186 = vsel %vm978, %v8935, 0.0
        %v9187 = vadd.f32 %v9185, %v9186
        %v9188 = vsel %vm978, %v8938, 0.0
        %v9189 = vadd.f32 %v9187, %v9188
        %v9190 = vsel %vm978, %v8943, 0.0
        %v9191 = vadd.f32 %v9189, %v9190
        %v9192 = vsel %vm978, %v8946, 0.0
        %v9193 = vadd.f32 %v9191, %v9192
        %v9194 = vsel %vm978, %v8951, 0.0
        %v9195 = vadd.f32 %v9193, %v9194
        %v9196 = vsel %vm978, %v8954, 0.0
        %v9197 = vadd.f32 %v9195, %v9196
        %v9198 = vsel %vm978, %v8959, 0.0
        %v9199 = vadd.f32 %v9197, %v9198
        %v9200 = vsel %vm978, %v8962, 0.0
        %v9201 = vadd.f32 %v9199, %v9200
        %v9202 = vsel %vm978, %v8967, 0.0
        %v9203 = vadd.f32 %v9201, %v9202
        %v9204 = vsel %vm978, %v8970, 0.0
        %v9205 = vadd.f32 %v9203, %v9204
        %v9206 = vsel %vm978, %v8975, 0.0
        %v9207 = vadd.f32 %v9205, %v9206
        %v9208 = vsel %vm978, %v8978, 0.0
        %v9209 = vadd.f32 %v9207, %v9208
        %v9210 = vsel %vm978, %v8983, 0.0
        %v9211 = vadd.f32 %v9209, %v9210
        %v9212 = vsel %vm978, %v8986, 0.0
        %v9213 = vadd.f32 %v9211, %v9212
        %v9214 = vsel %vm978, %v8991, 0.0
        %v9215 = vadd.f32 %v9213, %v9214
        %v9216 = vsel %vm978, %v8994, 0.0
        %v9217 = vadd.f32 %v9215, %v9216
        %v9218 = vsel %vm978, %v8999, 0.0
        %v9219 = vadd.f32 %v9217, %v9218
        %v9220 = vsel %vm978, %v9002, 0.0
        %v9221 = vadd.f32 %v9219, %v9220
        %v9222 = vsel %vm978, %v9007, 0.0
        %v9223 = vadd.f32 %v9221, %v9222
        %v9224 = vsel %vm978, %v9010, 0.0
        %v9225 = vadd.f32 %v9223, %v9224
        %v9226 = vsel %vm978, %v9015, 0.0
        %v9227 = vadd.f32 %v9225, %v9226
        %v9228 = vsel %vm978, %v9018, 0.0
        %v9229 = vadd.f32 %v9227, %v9228
        %v9230 = vsel %vm978, %v9023, 0.0
        %v9231 = vadd.f32 %v9229, %v9230
        %v9232 = vsel %vm978, %v9026, 0.0
        %v9233 = vadd.f32 %v9231, %v9232
        %v9234 = vsel %vm978, %v9031, 0.0
        %v9235 = vadd.f32 %v9233, %v9234
        %v9236 = vsel %vm978, %v9034, 0.0
        %v9237 = vadd.f32 %v9235, %v9236
        %v9238 = vsel %vm978, %v9039, 0.0
        %v9239 = vadd.f32 %v9237, %v9238
        %v9240 = vsel %vm978, %v9042, 0.0
        %v9241 = vadd.f32 %v9239, %v9240
        %v9242 = vsel %vm978, %v9047, 0.0
        %v9243 = vadd.f32 %v9241, %v9242
        %v9244 = vsel %vm978, %v9050, 0.0
        %v9245 = vadd.f32 %v9243, %v9244
        %v9246 = vrot.slane %v9245, 4
        %v9247 = vadd.f32 %v9245, %v9246
        %v9248 = vrot.slane %v9247, 2
        %v9249 = vadd.f32 %v9247, %v9248
        %v9250 = vrot.slane %v9249, 1
        %v9251 = vadd.f32 %v9249, %v9250
        %v9252 = vsel %vm978, %v9055, 0.0
        %v9253 = vsel %vm978, %v9058, 0.0
        %v9254 = vadd.f32 %v9252, %v9253
        %v9255 = vsel %vm978, %v9063, 0.0
        %v9256 = vadd.f32 %v9254, %v9255
        %v9257 = vsel %vm978, %v9066, 0.0
        %v9258 = vadd.f32 %v9256, %v9257
        %v9259 = vsel %vm978, %v9071, 0.0
        %v9260 = vadd.f32 %v9258, %v9259
        %v9261 = vsel %vm978, %v9074, 0.0
        %v9262 = vadd.f32 %v9260, %v9261
        %v9263 = vsel %vm978, %v9079, 0.0
        %v9264 = vadd.f32 %v9262, %v9263
        %v9265 = vsel %vm978, %v9082, 0.0
        %v9266 = vadd.f32 %v9264, %v9265
        %v9267 = vsel %vm978, %v9087, 0.0
        %v9268 = vadd.f32 %v9266, %v9267
        %v9269 = vsel %vm978, %v9090, 0.0
        %v9270 = vadd.f32 %v9268, %v9269
        %v9271 = vsel %vm978, %v9095, 0.0
        %v9272 = vadd.f32 %v9270, %v9271
        %v9273 = vsel %vm978, %v9098, 0.0
        %v9274 = vadd.f32 %v9272, %v9273
        %v9275 = vsel %vm978, %v9103, 0.0
        %v9276 = vadd.f32 %v9274, %v9275
        %v9277 = vsel %vm978, %v9106, 0.0
        %v9278 = vadd.f32 %v9276, %v9277
        %v9279 = vsel %vm978, %v9111, 0.0
        %v9280 = vadd.f32 %v9278, %v9279
        %v9281 = vsel %vm978, %v9114, 0.0
        %v9282 = vadd.f32 %v9280, %v9281
        %v9283 = vsel %vm978, %v9119, 0.0
        %v9284 = vadd.f32 %v9282, %v9283
        %v9285 = vsel %vm978, %v9122, 0.0
        %v9286 = vadd.f32 %v9284, %v9285
        %v9287 = vsel %vm978, %v9127, 0.0
        %v9288 = vadd.f32 %v9286, %v9287
        %v9289 = vsel %vm978, %v9130, 0.0
        %v9290 = vadd.f32 %v9288, %v9289
        %v9291 = vsel %vm978, %v9135, 0.0
        %v9292 = vadd.f32 %v9290, %v9291
        %v9293 = vsel %vm978, %v9138, 0.0
        %v9294 = vadd.f32 %v9292, %v9293
        %v9295 = vsel %vm978, %v9143, 0.0
        %v9296 = vadd.f32 %v9294, %v9295
        %v9297 = vsel %vm978, %v9146, 0.0
        %v9298 = vadd.f32 %v9296, %v9297
        %v9299 = vsel %vm978, %v9151, 0.0
        %v9300 = vadd.f32 %v9298, %v9299
        %v9301 = vsel %vm978, %v9154, 0.0
        %v9302 = vadd.f32 %v9300, %v9301
        %v9303 = vsel %vm978, %v9159, 0.0
        %v9304 = vadd.f32 %v9302, %v9303
        %v9305 = vsel %vm978, %v9162, 0.0
        %v9306 = vadd.f32 %v9304, %v9305
        %v9307 = vsel %vm978, %v9167, 0.0
        %v9308 = vadd.f32 %v9306, %v9307
        %v9309 = vsel %vm978, %v9170, 0.0
        %v9310 = vadd.f32 %v9308, %v9309
        %v9311 = vsel %vm978, %v9175, 0.0
        %v9312 = vadd.f32 %v9310, %v9311
        %v9313 = vsel %vm978, %v9178, 0.0
        %v9314 = vadd.f32 %v9312, %v9313
        %v9315 = vrot.slane %v9314, 4
        %v9316 = vadd.f32 %v9314, %v9315
        %v9317 = vrot.slane %v9316, 2
        %v9318 = vadd.f32 %v9316, %v9317
        %v9319 = vrot.slane %v9318, 1
        %v9320 = vadd.f32 %v9318, %v9319
        %v9321 = vmul.f32 %v9251, 0.00390625
        %v9322 = vmul.f32 %v9320, 0.00390625
        %v9323 = vsub.f32 %v8927, %v9321
        %v9324 = vsub.f32 %v8930, %v9321
        %v9325 = vsub.f32 %v8935, %v9321
        %v9326 = vsub.f32 %v8938, %v9321
        %v9327 = vsub.f32 %v8943, %v9321
        %v9328 = vsub.f32 %v8946, %v9321
        %v9329 = vsub.f32 %v8951, %v9321
        %v9330 = vsub.f32 %v8954, %v9321
        %v9331 = vsub.f32 %v8959, %v9321
        %v9332 = vsub.f32 %v8962, %v9321
        %v9333 = vsub.f32 %v8967, %v9321
        %v9334 = vsub.f32 %v8970, %v9321
        %v9335 = vsub.f32 %v8975, %v9321
        %v9336 = vsub.f32 %v8978, %v9321
        %v9337 = vsub.f32 %v8983, %v9321
        %v9338 = vsub.f32 %v8986, %v9321
        %v9339 = vsub.f32 %v8991, %v9321
        %v9340 = vsub.f32 %v8994, %v9321
        %v9341 = vsub.f32 %v8999, %v9321
        %v9342 = vsub.f32 %v9002, %v9321
        %v9343 = vsub.f32 %v9007, %v9321
        %v9344 = vsub.f32 %v9010, %v9321
        %v9345 = vsub.f32 %v9015, %v9321
        %v9346 = vsub.f32 %v9018, %v9321
        %v9347 = vsub.f32 %v9023, %v9321
        %v9348 = vsub.f32 %v9026, %v9321
        %v9349 = vsub.f32 %v9031, %v9321
        %v9350 = vsub.f32 %v9034, %v9321
        %v9351 = vsub.f32 %v9039, %v9321
        %v9352 = vsub.f32 %v9042, %v9321
        %v9353 = vsub.f32 %v9047, %v9321
        %v9354 = vsub.f32 %v9050, %v9321
        %v9355 = vsub.f32 %v9055, %v9322
        %v9356 = vsub.f32 %v9058, %v9322
        %v9357 = vsub.f32 %v9063, %v9322
        %v9358 = vsub.f32 %v9066, %v9322
        %v9359 = vsub.f32 %v9071, %v9322
        %v9360 = vsub.f32 %v9074, %v9322
        %v9361 = vsub.f32 %v9079, %v9322
        %v9362 = vsub.f32 %v9082, %v9322
        %v9363 = vsub.f32 %v9087, %v9322
        %v9364 = vsub.f32 %v9090, %v9322
        %v9365 = vsub.f32 %v9095, %v9322
        %v9366 = vsub.f32 %v9098, %v9322
        %v9367 = vsub.f32 %v9103, %v9322
        %v9368 = vsub.f32 %v9106, %v9322
        %v9369 = vsub.f32 %v9111, %v9322
        %v9370 = vsub.f32 %v9114, %v9322
        %v9371 = vsub.f32 %v9119, %v9322
        %v9372 = vsub.f32 %v9122, %v9322
        %v9373 = vsub.f32 %v9127, %v9322
        %v9374 = vsub.f32 %v9130, %v9322
        %v9375 = vsub.f32 %v9135, %v9322
        %v9376 = vsub.f32 %v9138, %v9322
        %v9377 = vsub.f32 %v9143, %v9322
        %v9378 = vsub.f32 %v9146, %v9322
        %v9379 = vsub.f32 %v9151, %v9322
        %v9380 = vsub.f32 %v9154, %v9322
        %v9381 = vsub.f32 %v9159, %v9322
        %v9382 = vsub.f32 %v9162, %v9322
        %v9383 = vsub.f32 %v9167, %v9322
        %v9384 = vsub.f32 %v9170, %v9322
        %v9385 = vsub.f32 %v9175, %v9322
        %v9386 = vsub.f32 %v9178, %v9322
        %v9387 = vmul.f32 %v9323, %v9323
        %v9388 = vmul.f32 %v9324, %v9324
        %v9389 = vmul.f32 %v9325, %v9325
        %v9390 = vmul.f32 %v9326, %v9326
        %v9391 = vmul.f32 %v9327, %v9327
        %v9392 = vmul.f32 %v9328, %v9328
        %v9393 = vmul.f32 %v9329, %v9329
        %v9394 = vmul.f32 %v9330, %v9330
        %v9395 = vmul.f32 %v9331, %v9331
        %v9396 = vmul.f32 %v9332, %v9332
        %v9397 = vmul.f32 %v9333, %v9333
        %v9398 = vmul.f32 %v9334, %v9334
        %v9399 = vmul.f32 %v9335, %v9335
        %v9400 = vmul.f32 %v9336, %v9336
        %v9401 = vmul.f32 %v9337, %v9337
        %v9402 = vmul.f32 %v9338, %v9338
        %v9403 = vmul.f32 %v9339, %v9339
        %v9404 = vmul.f32 %v9340, %v9340
        %v9405 = vmul.f32 %v9341, %v9341
        %v9406 = vmul.f32 %v9342, %v9342
        %v9407 = vmul.f32 %v9343, %v9343
        %v9408 = vmul.f32 %v9344, %v9344
        %v9409 = vmul.f32 %v9345, %v9345
        %v9410 = vmul.f32 %v9346, %v9346
        %v9411 = vmul.f32 %v9347, %v9347
        %v9412 = vmul.f32 %v9348, %v9348
        %v9413 = vmul.f32 %v9349, %v9349
        %v9414 = vmul.f32 %v9350, %v9350
        %v9415 = vmul.f32 %v9351, %v9351
        %v9416 = vmul.f32 %v9352, %v9352
        %v9417 = vmul.f32 %v9353, %v9353
        %v9418 = vmul.f32 %v9354, %v9354
        %v9419 = vmul.f32 %v9355, %v9355
        %v9420 = vmul.f32 %v9356, %v9356
        %v9421 = vmul.f32 %v9357, %v9357
        %v9422 = vmul.f32 %v9358, %v9358
        %v9423 = vmul.f32 %v9359, %v9359
        %v9424 = vmul.f32 %v9360, %v9360
        %v9425 = vmul.f32 %v9361, %v9361
        %v9426 = vmul.f32 %v9362, %v9362
        %v9427 = vmul.f32 %v9363, %v9363
        %v9428 = vmul.f32 %v9364, %v9364
        %v9429 = vmul.f32 %v9365, %v9365
        %v9430 = vmul.f32 %v9366, %v9366
        %v9431 = vmul.f32 %v9367, %v9367
        %v9432 = vmul.f32 %v9368, %v9368
        %v9433 = vmul.f32 %v9369, %v9369
        %v9434 = vmul.f32 %v9370, %v9370
        %v9435 = vmul.f32 %v9371, %v9371
        %v9436 = vmul.f32 %v9372, %v9372
        %v9437 = vmul.f32 %v9373, %v9373
        %v9438 = vmul.f32 %v9374, %v9374
        %v9439 = vmul.f32 %v9375, %v9375
        %v9440 = vmul.f32 %v9376, %v9376
        %v9441 = vmul.f32 %v9377, %v9377
        %v9442 = vmul.f32 %v9378, %v9378
        %v9443 = vmul.f32 %v9379, %v9379
        %v9444 = vmul.f32 %v9380, %v9380
        %v9445 = vmul.f32 %v9381, %v9381
        %v9446 = vmul.f32 %v9382, %v9382
        %v9447 = vmul.f32 %v9383, %v9383
        %v9448 = vmul.f32 %v9384, %v9384
        %v9449 = vmul.f32 %v9385, %v9385
        %v9450 = vmul.f32 %v9386, %v9386
        %v9451 = vsel %vm978, %v9387, 0.0
        %v9452 = vsel %vm978, %v9388, 0.0
        %v9453 = vadd.f32 %v9451, %v9452
        %v9454 = vsel %vm978, %v9389, 0.0
        %v9455 = vadd.f32 %v9453, %v9454
        %v9456 = vsel %vm978, %v9390, 0.0
        %v9457 = vadd.f32 %v9455, %v9456
        %v9458 = vsel %vm978, %v9391, 0.0
        %v9459 = vadd.f32 %v9457, %v9458
        %v9460 = vsel %vm978, %v9392, 0.0
        %v9461 = vadd.f32 %v9459, %v9460
        %v9462 = vsel %vm978, %v9393, 0.0
        %v9463 = vadd.f32 %v9461, %v9462
        %v9464 = vsel %vm978, %v9394, 0.0
        %v9465 = vadd.f32 %v9463, %v9464
        %v9466 = vsel %vm978, %v9395, 0.0
        %v9467 = vadd.f32 %v9465, %v9466
        %v9468 = vsel %vm978, %v9396, 0.0
        %v9469 = vadd.f32 %v9467, %v9468
        %v9470 = vsel %vm978, %v9397, 0.0
        %v9471 = vadd.f32 %v9469, %v9470
        %v9472 = vsel %vm978, %v9398, 0.0
        %v9473 = vadd.f32 %v9471, %v9472
        %v9474 = vsel %vm978, %v9399, 0.0
        %v9475 = vadd.f32 %v9473, %v9474
        %v9476 = vsel %vm978, %v9400, 0.0
        %v9477 = vadd.f32 %v9475, %v9476
        %v9478 = vsel %vm978, %v9401, 0.0
        %v9479 = vadd.f32 %v9477, %v9478
        %v9480 = vsel %vm978, %v9402, 0.0
        %v9481 = vadd.f32 %v9479, %v9480
        %v9482 = vsel %vm978, %v9403, 0.0
        %v9483 = vadd.f32 %v9481, %v9482
        %v9484 = vsel %vm978, %v9404, 0.0
        %v9485 = vadd.f32 %v9483, %v9484
        %v9486 = vsel %vm978, %v9405, 0.0
        %v9487 = vadd.f32 %v9485, %v9486
        %v9488 = vsel %vm978, %v9406, 0.0
        %v9489 = vadd.f32 %v9487, %v9488
        %v9490 = vsel %vm978, %v9407, 0.0
        %v9491 = vadd.f32 %v9489, %v9490
        %v9492 = vsel %vm978, %v9408, 0.0
        %v9493 = vadd.f32 %v9491, %v9492
        %v9494 = vsel %vm978, %v9409, 0.0
        %v9495 = vadd.f32 %v9493, %v9494
        %v9496 = vsel %vm978, %v9410, 0.0
        %v9497 = vadd.f32 %v9495, %v9496
        %v9498 = vsel %vm978, %v9411, 0.0
        %v9499 = vadd.f32 %v9497, %v9498
        %v9500 = vsel %vm978, %v9412, 0.0
        %v9501 = vadd.f32 %v9499, %v9500
        %v9502 = vsel %vm978, %v9413, 0.0
        %v9503 = vadd.f32 %v9501, %v9502
        %v9504 = vsel %vm978, %v9414, 0.0
        %v9505 = vadd.f32 %v9503, %v9504
        %v9506 = vsel %vm978, %v9415, 0.0
        %v9507 = vadd.f32 %v9505, %v9506
        %v9508 = vsel %vm978, %v9416, 0.0
        %v9509 = vadd.f32 %v9507, %v9508
        %v9510 = vsel %vm978, %v9417, 0.0
        %v9511 = vadd.f32 %v9509, %v9510
        %v9512 = vsel %vm978, %v9418, 0.0
        %v9513 = vadd.f32 %v9511, %v9512
        %v9514 = vrot.slane %v9513, 4
        %v9515 = vadd.f32 %v9513, %v9514
        %v9516 = vrot.slane %v9515, 2
        %v9517 = vadd.f32 %v9515, %v9516
        %v9518 = vrot.slane %v9517, 1
        %v9519 = vadd.f32 %v9517, %v9518
        %v9520 = vsel %vm978, %v9419, 0.0
        %v9521 = vsel %vm978, %v9420, 0.0
        %v9522 = vadd.f32 %v9520, %v9521
        %v9523 = vsel %vm978, %v9421, 0.0
        %v9524 = vadd.f32 %v9522, %v9523
        %v9525 = vsel %vm978, %v9422, 0.0
        %v9526 = vadd.f32 %v9524, %v9525
        %v9527 = vsel %vm978, %v9423, 0.0
        %v9528 = vadd.f32 %v9526, %v9527
        %v9529 = vsel %vm978, %v9424, 0.0
        %v9530 = vadd.f32 %v9528, %v9529
        %v9531 = vsel %vm978, %v9425, 0.0
        %v9532 = vadd.f32 %v9530, %v9531
        %v9533 = vsel %vm978, %v9426, 0.0
        %v9534 = vadd.f32 %v9532, %v9533
        %v9535 = vsel %vm978, %v9427, 0.0
        %v9536 = vadd.f32 %v9534, %v9535
        %v9537 = vsel %vm978, %v9428, 0.0
        %v9538 = vadd.f32 %v9536, %v9537
        %v9539 = vsel %vm978, %v9429, 0.0
        %v9540 = vadd.f32 %v9538, %v9539
        %v9541 = vsel %vm978, %v9430, 0.0
        %v9542 = vadd.f32 %v9540, %v9541
        %v9543 = vsel %vm978, %v9431, 0.0
        %v9544 = vadd.f32 %v9542, %v9543
        %v9545 = vsel %vm978, %v9432, 0.0
        %v9546 = vadd.f32 %v9544, %v9545
        %v9547 = vsel %vm978, %v9433, 0.0
        %v9548 = vadd.f32 %v9546, %v9547
        %v9549 = vsel %vm978, %v9434, 0.0
        %v9550 = vadd.f32 %v9548, %v9549
        %v9551 = vsel %vm978, %v9435, 0.0
        %v9552 = vadd.f32 %v9550, %v9551
        %v9553 = vsel %vm978, %v9436, 0.0
        %v9554 = vadd.f32 %v9552, %v9553
        %v9555 = vsel %vm978, %v9437, 0.0
        %v9556 = vadd.f32 %v9554, %v9555
        %v9557 = vsel %vm978, %v9438, 0.0
        %v9558 = vadd.f32 %v9556, %v9557
        %v9559 = vsel %vm978, %v9439, 0.0
        %v9560 = vadd.f32 %v9558, %v9559
        %v9561 = vsel %vm978, %v9440, 0.0
        %v9562 = vadd.f32 %v9560, %v9561
        %v9563 = vsel %vm978, %v9441, 0.0
        %v9564 = vadd.f32 %v9562, %v9563
        %v9565 = vsel %vm978, %v9442, 0.0
        %v9566 = vadd.f32 %v9564, %v9565
        %v9567 = vsel %vm978, %v9443, 0.0
        %v9568 = vadd.f32 %v9566, %v9567
        %v9569 = vsel %vm978, %v9444, 0.0
        %v9570 = vadd.f32 %v9568, %v9569
        %v9571 = vsel %vm978, %v9445, 0.0
        %v9572 = vadd.f32 %v9570, %v9571
        %v9573 = vsel %vm978, %v9446, 0.0
        %v9574 = vadd.f32 %v9572, %v9573
        %v9575 = vsel %vm978, %v9447, 0.0
        %v9576 = vadd.f32 %v9574, %v9575
        %v9577 = vsel %vm978, %v9448, 0.0
        %v9578 = vadd.f32 %v9576, %v9577
        %v9579 = vsel %vm978, %v9449, 0.0
        %v9580 = vadd.f32 %v9578, %v9579
        %v9581 = vsel %vm978, %v9450, 0.0
        %v9582 = vadd.f32 %v9580, %v9581
        %v9583 = vrot.slane %v9582, 4
        %v9584 = vadd.f32 %v9582, %v9583
        %v9585 = vrot.slane %v9584, 2
        %v9586 = vadd.f32 %v9584, %v9585
        %v9587 = vrot.slane %v9586, 1
        %v9588 = vadd.f32 %v9586, %v9587
        %v9589 = vmul.f32 %v9519, 0.00390625
        %v9590 = vmul.f32 %v9588, 0.00390625
        %v9591 = vadd.f32 %v9589, 1e-05
        %v9592 = vadd.f32 %v9590, 1e-05
        %v9593 = vrsqrt.pop %v9591
        %v9594 = vrsqrt.pop %v9592
        %v9595 = vmul.f32 %v9181, %v9593
        %v9596 = vmul.f32 %v9181, %v9594
        %v9599 = vlaneseq
        %v9600 = vshrl.u32 %v9599, 7
        %v9601 = vsub.s32 0, %v9600
        %v9602 = vrot.slane %v9595, %v9601
        %v9603 = vlaneseq
        %v9604 = vshrl.u32 %v9603, 7
        %v9605 = vsub.s32 0, %v9604
        %v9606 = vrot.slane %v9596, %v9605
        %v9609 = vmul.f32 %v9323, %v9602
        %v9610 = vmul.f32 %v9324, %v9602
        %v9611 = vmul.f32 %v9325, %v9602
        %v9612 = vmul.f32 %v9326, %v9602
        %v9613 = vmul.f32 %v9327, %v9602
        %v9614 = vmul.f32 %v9328, %v9602
        %v9615 = vmul.f32 %v9329, %v9602
        %v9616 = vmul.f32 %v9330, %v9602
        %v9617 = vmul.f32 %v9331, %v9602
        %v9618 = vmul.f32 %v9332, %v9602
        %v9619 = vmul.f32 %v9333, %v9602
        %v9620 = vmul.f32 %v9334, %v9602
        %v9621 = vmul.f32 %v9335, %v9602
        %v9622 = vmul.f32 %v9336, %v9602
        %v9623 = vmul.f32 %v9337, %v9602
        %v9624 = vmul.f32 %v9338, %v9602
        %v9625 = vmul.f32 %v9339, %v9602
        %v9626 = vmul.f32 %v9340, %v9602
        %v9627 = vmul.f32 %v9341, %v9602
        %v9628 = vmul.f32 %v9342, %v9602
        %v9629 = vmul.f32 %v9343, %v9602
        %v9630 = vmul.f32 %v9344, %v9602
        %v9631 = vmul.f32 %v9345, %v9602
        %v9632 = vmul.f32 %v9346, %v9602
        %v9633 = vmul.f32 %v9347, %v9602
        %v9634 = vmul.f32 %v9348, %v9602
        %v9635 = vmul.f32 %v9349, %v9602
        %v9636 = vmul.f32 %v9350, %v9602
        %v9637 = vmul.f32 %v9351, %v9602
        %v9638 = vmul.f32 %v9352, %v9602
        %v9639 = vmul.f32 %v9353, %v9602
        %v9640 = vmul.f32 %v9354, %v9602
        %v9641 = vmul.f32 %v9355, %v9606
        %v9642 = vmul.f32 %v9356, %v9606
        %v9643 = vmul.f32 %v9357, %v9606
        %v9644 = vmul.f32 %v9358, %v9606
        %v9645 = vmul.f32 %v9359, %v9606
        %v9646 = vmul.f32 %v9360, %v9606
        %v9647 = vmul.f32 %v9361, %v9606
        %v9648 = vmul.f32 %v9362, %v9606
        %v9649 = vmul.f32 %v9363, %v9606
        %v9650 = vmul.f32 %v9364, %v9606
        %v9651 = vmul.f32 %v9365, %v9606
        %v9652 = vmul.f32 %v9366, %v9606
        %v9653 = vmul.f32 %v9367, %v9606
        %v9654 = vmul.f32 %v9368, %v9606
        %v9655 = vmul.f32 %v9369, %v9606
        %v9656 = vmul.f32 %v9370, %v9606
        %v9657 = vmul.f32 %v9371, %v9606
        %v9658 = vmul.f32 %v9372, %v9606
        %v9659 = vmul.f32 %v9373, %v9606
        %v9660 = vmul.f32 %v9374, %v9606
        %v9661 = vmul.f32 %v9375, %v9606
        %v9662 = vmul.f32 %v9376, %v9606
        %v9663 = vmul.f32 %v9377, %v9606
        %v9664 = vmul.f32 %v9378, %v9606
        %v9665 = vmul.f32 %v9379, %v9606
        %v9666 = vmul.f32 %v9380, %v9606
        %v9667 = vmul.f32 %v9381, %v9606
        %v9668 = vmul.f32 %v9382, %v9606
        %v9669 = vmul.f32 %v9383, %v9606
        %v9670 = vmul.f32 %v9384, %v9606
        %v9671 = vmul.f32 %v9385, %v9606
        %v9672 = vmul.f32 %v9386, %v9606
        %v9674 = vlaneseq
        %v9675 = vshrl.u32 %v9674, 7
        %v9676 = vsub.s32 0, %v9675
        %v9677 = vrot.slane %v9182, %v9676
        %v9679 = vadd.f32 %v9609, %v9677
        %v9680 = vadd.f32 %v9610, %v9677
        %v9681 = vadd.f32 %v9611, %v9677
        %v9682 = vadd.f32 %v9612, %v9677
        %v9683 = vadd.f32 %v9613, %v9677
        %v9684 = vadd.f32 %v9614, %v9677
        %v9685 = vadd.f32 %v9615, %v9677
        %v9686 = vadd.f32 %v9616, %v9677
        %v9687 = vadd.f32 %v9617, %v9677
        %v9688 = vadd.f32 %v9618, %v9677
        %v9689 = vadd.f32 %v9619, %v9677
        %v9690 = vadd.f32 %v9620, %v9677
        %v9691 = vadd.f32 %v9621, %v9677
        %v9692 = vadd.f32 %v9622, %v9677
        %v9693 = vadd.f32 %v9623, %v9677
        %v9694 = vadd.f32 %v9624, %v9677
        %v9695 = vadd.f32 %v9625, %v9677
        %v9696 = vadd.f32 %v9626, %v9677
        %v9697 = vadd.f32 %v9627, %v9677
        %v9698 = vadd.f32 %v9628, %v9677
        %v9699 = vadd.f32 %v9629, %v9677
        %v9700 = vadd.f32 %v9630, %v9677
        %v9701 = vadd.f32 %v9631, %v9677
        %v9702 = vadd.f32 %v9632, %v9677
        %v9703 = vadd.f32 %v9633, %v9677
        %v9704 = vadd.f32 %v9634, %v9677
        %v9705 = vadd.f32 %v9635, %v9677
        %v9706 = vadd.f32 %v9636, %v9677
        %v9707 = vadd.f32 %v9637, %v9677
        %v9708 = vadd.f32 %v9638, %v9677
        %v9709 = vadd.f32 %v9639, %v9677
        %v9710 = vadd.f32 %v9640, %v9677
        %v9711 = vadd.f32 %v9641, %v9677
        %v9712 = vadd.f32 %v9642, %v9677
        %v9713 = vadd.f32 %v9643, %v9677
        %v9714 = vadd.f32 %v9644, %v9677
        %v9715 = vadd.f32 %v9645, %v9677
        %v9716 = vadd.f32 %v9646, %v9677
        %v9717 = vadd.f32 %v9647, %v9677
        %v9718 = vadd.f32 %v9648, %v9677
        %v9719 = vadd.f32 %v9649, %v9677
        %v9720 = vadd.f32 %v9650, %v9677
        %v9721 = vadd.f32 %v9651, %v9677
        %v9722 = vadd.f32 %v9652, %v9677
        %v9723 = vadd.f32 %v9653, %v9677
        %v9724 = vadd.f32 %v9654, %v9677
        %v9725 = vadd.f32 %v9655, %v9677
        %v9726 = vadd.f32 %v9656, %v9677
        %v9727 = vadd.f32 %v9657, %v9677
        %v9728 = vadd.f32 %v9658, %v9677
        %v9729 = vadd.f32 %v9659, %v9677
        %v9730 = vadd.f32 %v9660, %v9677
        %v9731 = vadd.f32 %v9661, %v9677
        %v9732 = vadd.f32 %v9662, %v9677
        %v9733 = vadd.f32 %v9663, %v9677
        %v9734 = vadd.f32 %v9664, %v9677
        %v9735 = vadd.f32 %v9665, %v9677
        %v9736 = vadd.f32 %v9666, %v9677
        %v9737 = vadd.f32 %v9667, %v9677
        %v9738 = vadd.f32 %v9668, %v9677
        %v9739 = vadd.f32 %v9669, %v9677
        %v9740 = vadd.f32 %v9670, %v9677
        %v9741 = vadd.f32 %v9671, %v9677
        %v9742 = vadd.f32 %v9672, %v9677
        %v9743 = vmax.f32 %v9679, 0.0
        %v9744 = vmax.f32 %v9680, 0.0
        %v9745 = vmax.f32 %v9681, 0.0
        %v9746 = vmax.f32 %v9682, 0.0
        %v9747 = vmax.f32 %v9683, 0.0
        %v9748 = vmax.f32 %v9684, 0.0
        %v9749 = vmax.f32 %v9685, 0.0
        %v9750 = vmax.f32 %v9686, 0.0
        %v9751 = vmax.f32 %v9687, 0.0
        %v9752 = vmax.f32 %v9688, 0.0
        %v9753 = vmax.f32 %v9689, 0.0
        %v9754 = vmax.f32 %v9690, 0.0
        %v9755 = vmax.f32 %v9691, 0.0
        %v9756 = vmax.f32 %v9692, 0.0
        %v9757 = vmax.f32 %v9693, 0.0
        %v9758 = vmax.f32 %v9694, 0.0
        %v9759 = vmax.f32 %v9695, 0.0
        %v9760 = vmax.f32 %v9696, 0.0
        %v9761 = vmax.f32 %v9697, 0.0
        %v9762 = vmax.f32 %v9698, 0.0
        %v9763 = vmax.f32 %v9699, 0.0
        %v9764 = vmax.f32 %v9700, 0.0
        %v9765 = vmax.f32 %v9701, 0.0
        %v9766 = vmax.f32 %v9702, 0.0
        %v9767 = vmax.f32 %v9703, 0.0
        %v9768 = vmax.f32 %v9704, 0.0
        %v9769 = vmax.f32 %v9705, 0.0
        %v9770 = vmax.f32 %v9706, 0.0
        %v9771 = vmax.f32 %v9707, 0.0
        %v9772 = vmax.f32 %v9708, 0.0
        %v9773 = vmax.f32 %v9709, 0.0
        %v9774 = vmax.f32 %v9710, 0.0
        %v9775 = vmax.f32 %v9711, 0.0
        %v9776 = vmax.f32 %v9712, 0.0
        %v9777 = vmax.f32 %v9713, 0.0
        %v9778 = vmax.f32 %v9714, 0.0
        %v9779 = vmax.f32 %v9715, 0.0
        %v9780 = vmax.f32 %v9716, 0.0
        %v9781 = vmax.f32 %v9717, 0.0
        %v9782 = vmax.f32 %v9718, 0.0
        %v9783 = vmax.f32 %v9719, 0.0
        %v9784 = vmax.f32 %v9720, 0.0
        %v9785 = vmax.f32 %v9721, 0.0
        %v9786 = vmax.f32 %v9722, 0.0
        %v9787 = vmax.f32 %v9723, 0.0
        %v9788 = vmax.f32 %v9724, 0.0
        %v9789 = vmax.f32 %v9725, 0.0
        %v9790 = vmax.f32 %v9726, 0.0
        %v9791 = vmax.f32 %v9727, 0.0
        %v9792 = vmax.f32 %v9728, 0.0
        %v9793 = vmax.f32 %v9729, 0.0
        %v9794 = vmax.f32 %v9730, 0.0
        %v9795 = vmax.f32 %v9731, 0.0
        %v9796 = vmax.f32 %v9732, 0.0
        %v9797 = vmax.f32 %v9733, 0.0
        %v9798 = vmax.f32 %v9734, 0.0
        %v9799 = vmax.f32 %v9735, 0.0
        %v9800 = vmax.f32 %v9736, 0.0
        %v9801 = vmax.f32 %v9737, 0.0
        %v9802 = vmax.f32 %v9738, 0.0
        %v9803 = vmax.f32 %v9739, 0.0
        %v9804 = vmax.f32 %v9740, 0.0
        %v9805 = vmax.f32 %v9741, 0.0
        %v9806 = vmax.f32 %v9742, 0.0
        %v9807 = vpack.c.bf16 %v9744, %v9743
        %v9808 = vpack.c.bf16 %v9746, %v9745
        %v9809 = vpack.c.bf16 %v9748, %v9747
        %v9810 = vpack.c.bf16 %v9750, %v9749
        %v9811 = vpack.c.bf16 %v9752, %v9751
        %v9812 = vpack.c.bf16 %v9754, %v9753
        %v9813 = vpack.c.bf16 %v9756, %v9755
        %v9814 = vpack.c.bf16 %v9758, %v9757
        %v9815 = vpack.c.bf16 %v9760, %v9759
        %v9816 = vpack.c.bf16 %v9762, %v9761
        %v9817 = vpack.c.bf16 %v9764, %v9763
        %v9818 = vpack.c.bf16 %v9766, %v9765
        %v9819 = vpack.c.bf16 %v9768, %v9767
        %v9820 = vpack.c.bf16 %v9770, %v9769
        %v9821 = vpack.c.bf16 %v9772, %v9771
        %v9822 = vpack.c.bf16 %v9774, %v9773
        %v9823 = vpack.c.bf16 %v9776, %v9775
        %v9824 = vpack.c.bf16 %v9778, %v9777
        %v9825 = vpack.c.bf16 %v9780, %v9779
        %v9826 = vpack.c.bf16 %v9782, %v9781
        %v9827 = vpack.c.bf16 %v9784, %v9783
        %v9828 = vpack.c.bf16 %v9786, %v9785
        %v9829 = vpack.c.bf16 %v9788, %v9787
        %v9830 = vpack.c.bf16 %v9790, %v9789
        %v9831 = vpack.c.bf16 %v9792, %v9791
        %v9832 = vpack.c.bf16 %v9794, %v9793
        %v9833 = vpack.c.bf16 %v9796, %v9795
        %v9834 = vpack.c.bf16 %v9798, %v9797
        %v9835 = vpack.c.bf16 %v9800, %v9799
        %v9836 = vpack.c.bf16 %v9802, %v9801
        %v9837 = vpack.c.bf16 %v9804, %v9803
        %v9838 = vpack.c.bf16 %v9806, %v9805
        %v9839 = vld [vmem:[%s3] sm:$0xf]
        %v9840 = vld [vmem:[%s3 + $0x4] sm:$0xf]
        %v9841 = vld [vmem:[%s3 + $0x8] sm:$0xf]
        %v9842 = vld [vmem:[%s3 + $0xc] sm:$0xf]
        %v9847 = vunpack.c.l.b16 %v9839
        %v9848 = vunpack.c.l.b16 %v9840
        %v9849 = vunpack.c.l.b16 %v9841
        %v9850 = vunpack.c.l.b16 %v9842
        %v9851 = vpack.c.b16 %v9848, %v9847
        %v9852 = vpack.c.b16 %v9850, %v9849
        %v9856 = vsel %vm978, %v9807, 0
        %v9859 = vsel %vm978, %v9808, 0
        %v9862 = vsel %vm978, %v9809, 0
        %v9865 = vsel %vm978, %v9810, 0
        %v9868 = vsel %vm978, %v9811, 0
        %v9871 = vsel %vm978, %v9812, 0
        %v9874 = vsel %vm978, %v9813, 0
        %v9877 = vsel %vm978, %v9814, 0
        %v9880 = vsel %vm978, %v9815, 0
        %v9883 = vsel %vm978, %v9816, 0
        %v9886 = vsel %vm978, %v9817, 0
        %v9889 = vsel %vm978, %v9818, 0
        %v9892 = vsel %vm978, %v9819, 0
        %v9895 = vsel %vm978, %v9820, 0
        %v9898 = vsel %vm978, %v9821, 0
        %v9901 = vsel %vm978, %v9822, 0
        %v9904 = vsel %vm978, %v9823, 0
        %v9907 = vsel %vm978, %v9824, 0
        %v9910 = vsel %vm978, %v9825, 0
        %v9913 = vsel %vm978, %v9826, 0
        %v9916 = vsel %vm978, %v9827, 0
        %v9919 = vsel %vm978, %v9828, 0
        %v9922 = vsel %vm978, %v9829, 0
        %v9925 = vsel %vm978, %v9830, 0
        %v9928 = vsel %vm978, %v9831, 0
        %v9931 = vsel %vm978, %v9832, 0
        %v9934 = vsel %vm978, %v9833, 0
        %v9937 = vsel %vm978, %v9834, 0
        %v9940 = vsel %vm978, %v9835, 0
        %v9943 = vsel %vm978, %v9836, 0
        %v9946 = vsel %vm978, %v9837, 0
        %v9949 = vsel %vm978, %v9838, 0
        %9951 = vmatprep.subr.bf16.mxu0 0
        %9952 = vmatpush1.bf16.msra.mxu0 0
        %9953 = vmatprep.subr.bf16.mxu0 0
        %9954 = vmatpush1.bf16.msra.mxu0 0
        %9955 = vmatprep.subr.bf16.mxu0 0
        %9956 = vmatpush1.bf16.msra.mxu0 0
        %9957 = vmatprep.subr.bf16.mxu0 0
        %9958 = vmatpush1.bf16.msra.mxu0 0
        %9959 = vmatprep.subr.bf16.mxu0 0
        %9960 = vmatpush1.bf16.msra.mxu0 0
        %9961 = vmatprep.subr.bf16.mxu0 0
        %9962 = vmatpush1.bf16.msra.mxu0 0
        %9963 = vmatprep.subr.bf16.mxu0 0
        %9964 = vmatpush1.bf16.msra.mxu0 %v9852
        %9965 = vmatprep.subr.bf16.mxu0 0
        %9966 = vmatpush1.bf16.msra.mxu0 %v9851
        %9967 = vmatprep.subr.bf16.mxu0 0
        %9968 = vmatpush2.bf16.msra.mxu0 0
        %9969 = vmatprep.subr.bf16.mxu0 0
        %9970 = vmatpush2.bf16.msra.mxu0 0
        %9971 = vmatprep.subr.bf16.mxu0 0
        %9972 = vmatpush2.bf16.msra.mxu0 0
        %9973 = vmatprep.subr.bf16.mxu0 0
        %9974 = vmatpush2.bf16.msra.mxu0 0
        %9975 = vmatprep.subr.bf16.mxu0 0
        %9976 = vmatpush2.bf16.msra.mxu0 0
        %9977 = vmatprep.subr.bf16.mxu0 0
        %9978 = vmatpush2.bf16.msra.mxu0 0
        %9979 = vmatprep.subr.bf16.mxu0 0
        %9980 = vmatpush2.bf16.msra.mxu0 0
        %9981 = vmatprep.subr.bf16.mxu0 0
        %9982 = vmatpush2.bf16.msra.mxu0 0
        %9983 = vmatprep.mubr.bf16.mxu0 0
        %9984 = vmatmul.mubr.bf16.gmra.mxu0 %v9856
        %v9985 = vpop.f32.mrf.mxu0
        %v9986 = vadd.f32 0.0, %v9985
        %v9987 = vpop.f32.mrf.mxu0
        %v9988 = vpop.f32.mrf.mxu0
        %v9989 = vadd.f32 0.0, %v9988
        %v9990 = vpop.f32.mrf.mxu0
        %9991 = vmatprep.mubr.bf16.mxu0 0
        %9992 = vmatmul.mubr.bf16.gmra.mxu0 %v9859
        %v9993 = vpop.f32.mrf.mxu0
        %v9994 = vadd.f32 0.0, %v9993
        %v9995 = vpop.f32.mrf.mxu0
        %v9996 = vpop.f32.mrf.mxu0
        %v9997 = vadd.f32 0.0, %v9996
        %v9998 = vpop.f32.mrf.mxu0
        %9999 = vmatprep.mubr.bf16.mxu0 0
        %10000 = vmatmul.mubr.bf16.gmra.mxu0 %v9862
        %v10001 = vpop.f32.mrf.mxu0
        %v10002 = vadd.f32 0.0, %v10001
        %v10003 = vpop.f32.mrf.mxu0
        %v10004 = vpop.f32.mrf.mxu0
        %v10005 = vadd.f32 0.0, %v10004
        %v10006 = vpop.f32.mrf.mxu0
        %10007 = vmatprep.mubr.bf16.mxu0 0
        %10008 = vmatmul.mubr.bf16.gmra.mxu0 %v9865
        %v10009 = vpop.f32.mrf.mxu0
        %v10010 = vadd.f32 0.0, %v10009
        %v10011 = vpop.f32.mrf.mxu0
        %v10012 = vpop.f32.mrf.mxu0
        %v10013 = vadd.f32 0.0, %v10012
        %v10014 = vpop.f32.mrf.mxu0
        %10015 = vmatprep.mubr.bf16.mxu0 0
        %10016 = vmatmul.mubr.bf16.gmra.mxu0 %v9868
        %v10017 = vpop.f32.mrf.mxu0
        %v10018 = vadd.f32 0.0, %v10017
        %v10019 = vpop.f32.mrf.mxu0
        %v10020 = vpop.f32.mrf.mxu0
        %v10021 = vadd.f32 0.0, %v10020
        %v10022 = vpop.f32.mrf.mxu0
        %10023 = vmatprep.mubr.bf16.mxu0 0
        %10024 = vmatmul.mubr.bf16.gmra.mxu0 %v9871
        %v10025 = vpop.f32.mrf.mxu0
        %v10026 = vadd.f32 0.0, %v10025
        %v10027 = vpop.f32.mrf.mxu0
        %v10028 = vpop.f32.mrf.mxu0
        %v10029 = vadd.f32 0.0, %v10028
        %v10030 = vpop.f32.mrf.mxu0
        %10031 = vmatprep.mubr.bf16.mxu0 0
        %10032 = vmatmul.mubr.bf16.gmra.mxu0 %v9874
        %v10033 = vpop.f32.mrf.mxu0
        %v10034 = vadd.f32 0.0, %v10033
        %v10035 = vpop.f32.mrf.mxu0
        %v10036 = vpop.f32.mrf.mxu0
        %v10037 = vadd.f32 0.0, %v10036
        %v10038 = vpop.f32.mrf.mxu0
        %10039 = vmatprep.mubr.bf16.mxu0 0
        %10040 = vmatmul.mubr.bf16.gmra.mxu0 %v9877
        %v10041 = vpop.f32.mrf.mxu0
        %v10042 = vadd.f32 0.0, %v10041
        %v10043 = vpop.f32.mrf.mxu0
        %v10044 = vpop.f32.mrf.mxu0
        %v10045 = vadd.f32 0.0, %v10044
        %v10046 = vpop.f32.mrf.mxu0
        %10047 = vmatprep.mubr.bf16.mxu0 0
        %10048 = vmatmul.mubr.bf16.gmra.mxu0 %v9880
        %v10049 = vpop.f32.mrf.mxu0
        %v10050 = vadd.f32 0.0, %v10049
        %v10051 = vpop.f32.mrf.mxu0
        %v10052 = vpop.f32.mrf.mxu0
        %v10053 = vadd.f32 0.0, %v10052
        %v10054 = vpop.f32.mrf.mxu0
        %10055 = vmatprep.mubr.bf16.mxu0 0
        %10056 = vmatmul.mubr.bf16.gmra.mxu0 %v9883
        %v10057 = vpop.f32.mrf.mxu0
        %v10058 = vadd.f32 0.0, %v10057
        %v10059 = vpop.f32.mrf.mxu0
        %v10060 = vpop.f32.mrf.mxu0
        %v10061 = vadd.f32 0.0, %v10060
        %v10062 = vpop.f32.mrf.mxu0
        %10063 = vmatprep.mubr.bf16.mxu0 0
        %10064 = vmatmul.mubr.bf16.gmra.mxu0 %v9886
        %v10065 = vpop.f32.mrf.mxu0
        %v10066 = vadd.f32 0.0, %v10065
        %v10067 = vpop.f32.mrf.mxu0
        %v10068 = vpop.f32.mrf.mxu0
        %v10069 = vadd.f32 0.0, %v10068
        %v10070 = vpop.f32.mrf.mxu0
        %10071 = vmatprep.mubr.bf16.mxu0 0
        %10072 = vmatmul.mubr.bf16.gmra.mxu0 %v9889
        %v10073 = vpop.f32.mrf.mxu0
        %v10074 = vadd.f32 0.0, %v10073
        %v10075 = vpop.f32.mrf.mxu0
        %v10076 = vpop.f32.mrf.mxu0
        %v10077 = vadd.f32 0.0, %v10076
        %v10078 = vpop.f32.mrf.mxu0
        %10079 = vmatprep.mubr.bf16.mxu0 0
        %10080 = vmatmul.mubr.bf16.gmra.mxu0 %v9892
        %v10081 = vpop.f32.mrf.mxu0
        %v10082 = vadd.f32 0.0, %v10081
        %v10083 = vpop.f32.mrf.mxu0
        %v10084 = vpop.f32.mrf.mxu0
        %v10085 = vadd.f32 0.0, %v10084
        %v10086 = vpop.f32.mrf.mxu0
        %10087 = vmatprep.mubr.bf16.mxu0 0
        %10088 = vmatmul.mubr.bf16.gmra.mxu0 %v9895
        %v10089 = vpop.f32.mrf.mxu0
        %v10090 = vadd.f32 0.0, %v10089
        %v10091 = vpop.f32.mrf.mxu0
        %v10092 = vpop.f32.mrf.mxu0
        %v10093 = vadd.f32 0.0, %v10092
        %v10094 = vpop.f32.mrf.mxu0
        %10095 = vmatprep.mubr.bf16.mxu0 0
        %10096 = vmatmul.mubr.bf16.gmra.mxu0 %v9898
        %v10097 = vpop.f32.mrf.mxu0
        %v10098 = vadd.f32 0.0, %v10097
        %v10099 = vpop.f32.mrf.mxu0
        %v10100 = vpop.f32.mrf.mxu0
        %v10101 = vadd.f32 0.0, %v10100
        %v10102 = vpop.f32.mrf.mxu0
        %10103 = vmatprep.mubr.bf16.mxu0 0
        %10104 = vmatmul.mubr.bf16.gmra.mxu0 %v9901
        %v10105 = vpop.f32.mrf.mxu0
        %v10106 = vadd.f32 0.0, %v10105
        %v10107 = vpop.f32.mrf.mxu0
        %v10108 = vpop.f32.mrf.mxu0
        %v10109 = vadd.f32 0.0, %v10108
        %v10110 = vpop.f32.mrf.mxu0
        %10111 = vmatprep.mubr.bf16.mxu0 0
        %10112 = vmatmul.mubr.bf16.gmra.mxu0 %v9904
        %v10113 = vpop.f32.mrf.mxu0
        %v10114 = vadd.f32 0.0, %v10113
        %v10115 = vpop.f32.mrf.mxu0
        %v10116 = vpop.f32.mrf.mxu0
        %v10117 = vadd.f32 0.0, %v10116
        %v10118 = vpop.f32.mrf.mxu0
        %10119 = vmatprep.mubr.bf16.mxu0 0
        %10120 = vmatmul.mubr.bf16.gmra.mxu0 %v9907
        %v10121 = vpop.f32.mrf.mxu0
        %v10122 = vadd.f32 0.0, %v10121
        %v10123 = vpop.f32.mrf.mxu0
        %v10124 = vpop.f32.mrf.mxu0
        %v10125 = vadd.f32 0.0, %v10124
        %v10126 = vpop.f32.mrf.mxu0
        %10127 = vmatprep.mubr.bf16.mxu0 0
        %10128 = vmatmul.mubr.bf16.gmra.mxu0 %v9910
        %v10129 = vpop.f32.mrf.mxu0
        %v10130 = vadd.f32 0.0, %v10129
        %v10131 = vpop.f32.mrf.mxu0
        %v10132 = vpop.f32.mrf.mxu0
        %v10133 = vadd.f32 0.0, %v10132
        %v10134 = vpop.f32.mrf.mxu0
        %10135 = vmatprep.mubr.bf16.mxu0 0
        %10136 = vmatmul.mubr.bf16.gmra.mxu0 %v9913
        %v10137 = vpop.f32.mrf.mxu0
        %v10138 = vadd.f32 0.0, %v10137
        %v10139 = vpop.f32.mrf.mxu0
        %v10140 = vpop.f32.mrf.mxu0
        %v10141 = vadd.f32 0.0, %v10140
        %v10142 = vpop.f32.mrf.mxu0
        %10143 = vmatprep.mubr.bf16.mxu0 0
        %10144 = vmatmul.mubr.bf16.gmra.mxu0 %v9916
        %v10145 = vpop.f32.mrf.mxu0
        %v10146 = vadd.f32 0.0, %v10145
        %v10147 = vpop.f32.mrf.mxu0
        %v10148 = vpop.f32.mrf.mxu0
        %v10149 = vadd.f32 0.0, %v10148
        %v10150 = vpop.f32.mrf.mxu0
        %10151 = vmatprep.mubr.bf16.mxu0 0
        %10152 = vmatmul.mubr.bf16.gmra.mxu0 %v9919
        %v10153 = vpop.f32.mrf.mxu0
        %v10154 = vadd.f32 0.0, %v10153
        %v10155 = vpop.f32.mrf.mxu0
        %v10156 = vpop.f32.mrf.mxu0
        %v10157 = vadd.f32 0.0, %v10156
        %v10158 = vpop.f32.mrf.mxu0
        %10159 = vmatprep.mubr.bf16.mxu0 0
        %10160 = vmatmul.mubr.bf16.gmra.mxu0 %v9922
        %v10161 = vpop.f32.mrf.mxu0
        %v10162 = vadd.f32 0.0, %v10161
        %v10163 = vpop.f32.mrf.mxu0
        %v10164 = vpop.f32.mrf.mxu0
        %v10165 = vadd.f32 0.0, %v10164
        %v10166 = vpop.f32.mrf.mxu0
        %10167 = vmatprep.mubr.bf16.mxu0 0
        %10168 = vmatmul.mubr.bf16.gmra.mxu0 %v9925
        %v10169 = vpop.f32.mrf.mxu0
        %v10170 = vadd.f32 0.0, %v10169
        %v10171 = vpop.f32.mrf.mxu0
        %v10172 = vpop.f32.mrf.mxu0
        %v10173 = vadd.f32 0.0, %v10172
        %v10174 = vpop.f32.mrf.mxu0
        %10175 = vmatprep.mubr.bf16.mxu0 0
        %10176 = vmatmul.mubr.bf16.gmra.mxu0 %v9928
        %v10177 = vpop.f32.mrf.mxu0
        %v10178 = vadd.f32 0.0, %v10177
        %v10179 = vpop.f32.mrf.mxu0
        %v10180 = vpop.f32.mrf.mxu0
        %v10181 = vadd.f32 0.0, %v10180
        %v10182 = vpop.f32.mrf.mxu0
        %10183 = vmatprep.mubr.bf16.mxu0 0
        %10184 = vmatmul.mubr.bf16.gmra.mxu0 %v9931
        %v10185 = vpop.f32.mrf.mxu0
        %v10186 = vadd.f32 0.0, %v10185
        %v10187 = vpop.f32.mrf.mxu0
        %v10188 = vpop.f32.mrf.mxu0
        %v10189 = vadd.f32 0.0, %v10188
        %v10190 = vpop.f32.mrf.mxu0
        %10191 = vmatprep.mubr.bf16.mxu0 0
        %10192 = vmatmul.mubr.bf16.gmra.mxu0 %v9934
        %v10193 = vpop.f32.mrf.mxu0
        %v10194 = vadd.f32 0.0, %v10193
        %v10195 = vpop.f32.mrf.mxu0
        %v10196 = vpop.f32.mrf.mxu0
        %v10197 = vadd.f32 0.0, %v10196
        %v10198 = vpop.f32.mrf.mxu0
        %10199 = vmatprep.mubr.bf16.mxu0 0
        %10200 = vmatmul.mubr.bf16.gmra.mxu0 %v9937
        %v10201 = vpop.f32.mrf.mxu0
        %v10202 = vadd.f32 0.0, %v10201
        %v10203 = vpop.f32.mrf.mxu0
        %v10204 = vpop.f32.mrf.mxu0
        %v10205 = vadd.f32 0.0, %v10204
        %v10206 = vpop.f32.mrf.mxu0
        %10207 = vmatprep.mubr.bf16.mxu0 0
        %10208 = vmatmul.mubr.bf16.gmra.mxu0 %v9940
        %v10209 = vpop.f32.mrf.mxu0
        %v10210 = vadd.f32 0.0, %v10209
        %v10211 = vpop.f32.mrf.mxu0
        %v10212 = vpop.f32.mrf.mxu0
        %v10213 = vadd.f32 0.0, %v10212
        %v10214 = vpop.f32.mrf.mxu0
        %10215 = vmatprep.mubr.bf16.mxu0 0
        %10216 = vmatmul.mubr.bf16.gmra.mxu0 %v9943
        %v10217 = vpop.f32.mrf.mxu0
        %v10218 = vadd.f32 0.0, %v10217
        %v10219 = vpop.f32.mrf.mxu0
        %v10220 = vpop.f32.mrf.mxu0
        %v10221 = vadd.f32 0.0, %v10220
        %v10222 = vpop.f32.mrf.mxu0
        %10223 = vmatprep.mubr.bf16.mxu0 0
        %10224 = vmatmul.mubr.bf16.gmra.mxu0 %v9946
        %v10225 = vpop.f32.mrf.mxu0
        %v10226 = vadd.f32 0.0, %v10225
        %v10227 = vpop.f32.mrf.mxu0
        %v10228 = vpop.f32.mrf.mxu0
        %v10229 = vadd.f32 0.0, %v10228
        %v10230 = vpop.f32.mrf.mxu0
        %10231 = vmatprep.mubr.bf16.mxu0 0
        %10232 = vmatmul.mubr.bf16.gmra.mxu0 %v9949
        %v10233 = vpop.f32.mrf.mxu0
        %v10234 = vadd.f32 0.0, %v10233
        %v10235 = vpop.f32.mrf.mxu0
        %v10236 = vpop.f32.mrf.mxu0
        %v10237 = vadd.f32 0.0, %v10236
        %v10238 = vpop.f32.mrf.mxu0
        %10239 = vdwg.mxu0
        %v10240 = vld [vmem:[%s8] sm:$0x1]
        %v10241 = vld [vmem:[%s9] sm:$0x1]
        %v10242 = vadd.f32 %v9986, %v9989
        %v10243 = vadd.f32 %v10242, %v9994
        %v10244 = vadd.f32 %v10243, %v9997
        %v10245 = vadd.f32 %v10244, %v10002
        %v10246 = vadd.f32 %v10245, %v10005
        %v10247 = vadd.f32 %v10246, %v10010
        %v10248 = vadd.f32 %v10247, %v10013
        %v10249 = vadd.f32 %v10248, %v10018
        %v10250 = vadd.f32 %v10249, %v10021
        %v10251 = vadd.f32 %v10250, %v10026
        %v10252 = vadd.f32 %v10251, %v10029
        %v10253 = vadd.f32 %v10252, %v10034
        %v10254 = vadd.f32 %v10253, %v10037
        %v10255 = vadd.f32 %v10254, %v10042
        %v10256 = vadd.f32 %v10255, %v10045
        %v10257 = vadd.f32 %v10256, %v10050
        %v10258 = vadd.f32 %v10257, %v10053
        %v10259 = vadd.f32 %v10258, %v10058
        %v10260 = vadd.f32 %v10259, %v10061
        %v10261 = vadd.f32 %v10260, %v10066
        %v10262 = vadd.f32 %v10261, %v10069
        %v10263 = vadd.f32 %v10262, %v10074
        %v10264 = vadd.f32 %v10263, %v10077
        %v10265 = vadd.f32 %v10264, %v10082
        %v10266 = vadd.f32 %v10265, %v10085
        %v10267 = vadd.f32 %v10266, %v10090
        %v10268 = vadd.f32 %v10267, %v10093
        %v10269 = vadd.f32 %v10268, %v10098
        %v10270 = vadd.f32 %v10269, %v10101
        %v10271 = vadd.f32 %v10270, %v10106
        %v10272 = vadd.f32 %v10271, %v10109
        %v10273 = vrot.slane %v10272, 4
        %v10274 = vadd.f32 %v10272, %v10273
        %v10275 = vrot.slane %v10274, 2
        %v10276 = vadd.f32 %v10274, %v10275
        %v10277 = vrot.slane %v10276, 1
        %v10278 = vadd.f32 %v10276, %v10277
        %v10279 = vadd.f32 %v10114, %v10117
        %v10280 = vadd.f32 %v10279, %v10122
        %v10281 = vadd.f32 %v10280, %v10125
        %v10282 = vadd.f32 %v10281, %v10130
        %v10283 = vadd.f32 %v10282, %v10133
        %v10284 = vadd.f32 %v10283, %v10138
        %v10285 = vadd.f32 %v10284, %v10141
        %v10286 = vadd.f32 %v10285, %v10146
        %v10287 = vadd.f32 %v10286, %v10149
        %v10288 = vadd.f32 %v10287, %v10154
        %v10289 = vadd.f32 %v10288, %v10157
        %v10290 = vadd.f32 %v10289, %v10162
        %v10291 = vadd.f32 %v10290, %v10165
        %v10292 = vadd.f32 %v10291, %v10170
        %v10293 = vadd.f32 %v10292, %v10173
        %v10294 = vadd.f32 %v10293, %v10178
        %v10295 = vadd.f32 %v10294, %v10181
        %v10296 = vadd.f32 %v10295, %v10186
        %v10297 = vadd.f32 %v10296, %v10189
        %v10298 = vadd.f32 %v10297, %v10194
        %v10299 = vadd.f32 %v10298, %v10197
        %v10300 = vadd.f32 %v10299, %v10202
        %v10301 = vadd.f32 %v10300, %v10205
        %v10302 = vadd.f32 %v10301, %v10210
        %v10303 = vadd.f32 %v10302, %v10213
        %v10304 = vadd.f32 %v10303, %v10218
        %v10305 = vadd.f32 %v10304, %v10221
        %v10306 = vadd.f32 %v10305, %v10226
        %v10307 = vadd.f32 %v10306, %v10229
        %v10308 = vadd.f32 %v10307, %v10234
        %v10309 = vadd.f32 %v10308, %v10237
        %v10310 = vrot.slane %v10309, 4
        %v10311 = vadd.f32 %v10309, %v10310
        %v10312 = vrot.slane %v10311, 2
        %v10313 = vadd.f32 %v10311, %v10312
        %v10314 = vrot.slane %v10313, 1
        %v10315 = vadd.f32 %v10313, %v10314
        %v10316 = vmul.f32 %v10278, 0.00390625
        %v10317 = vmul.f32 %v10315, 0.00390625
        %v10318 = vsub.f32 %v9986, %v10316
        %v10319 = vsub.f32 %v9989, %v10316
        %v10320 = vsub.f32 %v9994, %v10316
        %v10321 = vsub.f32 %v9997, %v10316
        %v10322 = vsub.f32 %v10002, %v10316
        %v10323 = vsub.f32 %v10005, %v10316
        %v10324 = vsub.f32 %v10010, %v10316
        %v10325 = vsub.f32 %v10013, %v10316
        %v10326 = vsub.f32 %v10018, %v10316
        %v10327 = vsub.f32 %v10021, %v10316
        %v10328 = vsub.f32 %v10026, %v10316
        %v10329 = vsub.f32 %v10029, %v10316
        %v10330 = vsub.f32 %v10034, %v10316
        %v10331 = vsub.f32 %v10037, %v10316
        %v10332 = vsub.f32 %v10042, %v10316
        %v10333 = vsub.f32 %v10045, %v10316
        %v10334 = vsub.f32 %v10050, %v10316
        %v10335 = vsub.f32 %v10053, %v10316
        %v10336 = vsub.f32 %v10058, %v10316
        %v10337 = vsub.f32 %v10061, %v10316
        %v10338 = vsub.f32 %v10066, %v10316
        %v10339 = vsub.f32 %v10069, %v10316
        %v10340 = vsub.f32 %v10074, %v10316
        %v10341 = vsub.f32 %v10077, %v10316
        %v10342 = vsub.f32 %v10082, %v10316
        %v10343 = vsub.f32 %v10085, %v10316
        %v10344 = vsub.f32 %v10090, %v10316
        %v10345 = vsub.f32 %v10093, %v10316
        %v10346 = vsub.f32 %v10098, %v10316
        %v10347 = vsub.f32 %v10101, %v10316
        %v10348 = vsub.f32 %v10106, %v10316
        %v10349 = vsub.f32 %v10109, %v10316
        %v10350 = vsub.f32 %v10114, %v10317
        %v10351 = vsub.f32 %v10117, %v10317
        %v10352 = vsub.f32 %v10122, %v10317
        %v10353 = vsub.f32 %v10125, %v10317
        %v10354 = vsub.f32 %v10130, %v10317
        %v10355 = vsub.f32 %v10133, %v10317
        %v10356 = vsub.f32 %v10138, %v10317
        %v10357 = vsub.f32 %v10141, %v10317
        %v10358 = vsub.f32 %v10146, %v10317
        %v10359 = vsub.f32 %v10149, %v10317
        %v10360 = vsub.f32 %v10154, %v10317
        %v10361 = vsub.f32 %v10157, %v10317
        %v10362 = vsub.f32 %v10162, %v10317
        %v10363 = vsub.f32 %v10165, %v10317
        %v10364 = vsub.f32 %v10170, %v10317
        %v10365 = vsub.f32 %v10173, %v10317
        %v10366 = vsub.f32 %v10178, %v10317
        %v10367 = vsub.f32 %v10181, %v10317
        %v10368 = vsub.f32 %v10186, %v10317
        %v10369 = vsub.f32 %v10189, %v10317
        %v10370 = vsub.f32 %v10194, %v10317
        %v10371 = vsub.f32 %v10197, %v10317
        %v10372 = vsub.f32 %v10202, %v10317
        %v10373 = vsub.f32 %v10205, %v10317
        %v10374 = vsub.f32 %v10210, %v10317
        %v10375 = vsub.f32 %v10213, %v10317
        %v10376 = vsub.f32 %v10218, %v10317
        %v10377 = vsub.f32 %v10221, %v10317
        %v10378 = vsub.f32 %v10226, %v10317
        %v10379 = vsub.f32 %v10229, %v10317
        %v10380 = vsub.f32 %v10234, %v10317
        %v10381 = vsub.f32 %v10237, %v10317
        %v10382 = vmul.f32 %v10318, %v10318
        %v10383 = vmul.f32 %v10319, %v10319
        %v10384 = vmul.f32 %v10320, %v10320
        %v10385 = vmul.f32 %v10321, %v10321
        %v10386 = vmul.f32 %v10322, %v10322
        %v10387 = vmul.f32 %v10323, %v10323
        %v10388 = vmul.f32 %v10324, %v10324
        %v10389 = vmul.f32 %v10325, %v10325
        %v10390 = vmul.f32 %v10326, %v10326
        %v10391 = vmul.f32 %v10327, %v10327
        %v10392 = vmul.f32 %v10328, %v10328
        %v10393 = vmul.f32 %v10329, %v10329
        %v10394 = vmul.f32 %v10330, %v10330
        %v10395 = vmul.f32 %v10331, %v10331
        %v10396 = vmul.f32 %v10332, %v10332
        %v10397 = vmul.f32 %v10333, %v10333
        %v10398 = vmul.f32 %v10334, %v10334
        %v10399 = vmul.f32 %v10335, %v10335
        %v10400 = vmul.f32 %v10336, %v10336
        %v10401 = vmul.f32 %v10337, %v10337
        %v10402 = vmul.f32 %v10338, %v10338
        %v10403 = vmul.f32 %v10339, %v10339
        %v10404 = vmul.f32 %v10340, %v10340
        %v10405 = vmul.f32 %v10341, %v10341
        %v10406 = vmul.f32 %v10342, %v10342
        %v10407 = vmul.f32 %v10343, %v10343
        %v10408 = vmul.f32 %v10344, %v10344
        %v10409 = vmul.f32 %v10345, %v10345
        %v10410 = vmul.f32 %v10346, %v10346
        %v10411 = vmul.f32 %v10347, %v10347
        %v10412 = vmul.f32 %v10348, %v10348
        %v10413 = vmul.f32 %v10349, %v10349
        %v10414 = vmul.f32 %v10350, %v10350
        %v10415 = vmul.f32 %v10351, %v10351
        %v10416 = vmul.f32 %v10352, %v10352
        %v10417 = vmul.f32 %v10353, %v10353
        %v10418 = vmul.f32 %v10354, %v10354
        %v10419 = vmul.f32 %v10355, %v10355
        %v10420 = vmul.f32 %v10356, %v10356
        %v10421 = vmul.f32 %v10357, %v10357
        %v10422 = vmul.f32 %v10358, %v10358
        %v10423 = vmul.f32 %v10359, %v10359
        %v10424 = vmul.f32 %v10360, %v10360
        %v10425 = vmul.f32 %v10361, %v10361
        %v10426 = vmul.f32 %v10362, %v10362
        %v10427 = vmul.f32 %v10363, %v10363
        %v10428 = vmul.f32 %v10364, %v10364
        %v10429 = vmul.f32 %v10365, %v10365
        %v10430 = vmul.f32 %v10366, %v10366
        %v10431 = vmul.f32 %v10367, %v10367
        %v10432 = vmul.f32 %v10368, %v10368
        %v10433 = vmul.f32 %v10369, %v10369
        %v10434 = vmul.f32 %v10370, %v10370
        %v10435 = vmul.f32 %v10371, %v10371
        %v10436 = vmul.f32 %v10372, %v10372
        %v10437 = vmul.f32 %v10373, %v10373
        %v10438 = vmul.f32 %v10374, %v10374
        %v10439 = vmul.f32 %v10375, %v10375
        %v10440 = vmul.f32 %v10376, %v10376
        %v10441 = vmul.f32 %v10377, %v10377
        %v10442 = vmul.f32 %v10378, %v10378
        %v10443 = vmul.f32 %v10379, %v10379
        %v10444 = vmul.f32 %v10380, %v10380
        %v10445 = vmul.f32 %v10381, %v10381
        %v10446 = vadd.f32 %v10382, %v10383
        %v10447 = vadd.f32 %v10446, %v10384
        %v10448 = vadd.f32 %v10447, %v10385
        %v10449 = vadd.f32 %v10448, %v10386
        %v10450 = vadd.f32 %v10449, %v10387
        %v10451 = vadd.f32 %v10450, %v10388
        %v10452 = vadd.f32 %v10451, %v10389
        %v10453 = vadd.f32 %v10452, %v10390
        %v10454 = vadd.f32 %v10453, %v10391
        %v10455 = vadd.f32 %v10454, %v10392
        %v10456 = vadd.f32 %v10455, %v10393
        %v10457 = vadd.f32 %v10456, %v10394
        %v10458 = vadd.f32 %v10457, %v10395
        %v10459 = vadd.f32 %v10458, %v10396
        %v10460 = vadd.f32 %v10459, %v10397
        %v10461 = vadd.f32 %v10460, %v10398
        %v10462 = vadd.f32 %v10461, %v10399
        %v10463 = vadd.f32 %v10462, %v10400
        %v10464 = vadd.f32 %v10463, %v10401
        %v10465 = vadd.f32 %v10464, %v10402
        %v10466 = vadd.f32 %v10465, %v10403
        %v10467 = vadd.f32 %v10466, %v10404
        %v10468 = vadd.f32 %v10467, %v10405
        %v10469 = vadd.f32 %v10468, %v10406
        %v10470 = vadd.f32 %v10469, %v10407
        %v10471 = vadd.f32 %v10470, %v10408
        %v10472 = vadd.f32 %v10471, %v10409
        %v10473 = vadd.f32 %v10472, %v10410
        %v10474 = vadd.f32 %v10473, %v10411
        %v10475 = vadd.f32 %v10474, %v10412
        %v10476 = vadd.f32 %v10475, %v10413
        %v10477 = vrot.slane %v10476, 4
        %v10478 = vadd.f32 %v10476, %v10477
        %v10479 = vrot.slane %v10478, 2
        %v10480 = vadd.f32 %v10478, %v10479
        %v10481 = vrot.slane %v10480, 1
        %v10482 = vadd.f32 %v10480, %v10481
        %v10483 = vadd.f32 %v10414, %v10415
        %v10484 = vadd.f32 %v10483, %v10416
        %v10485 = vadd.f32 %v10484, %v10417
        %v10486 = vadd.f32 %v10485, %v10418
        %v10487 = vadd.f32 %v10486, %v10419
        %v10488 = vadd.f32 %v10487, %v10420
        %v10489 = vadd.f32 %v10488, %v10421
        %v10490 = vadd.f32 %v10489, %v10422
        %v10491 = vadd.f32 %v10490, %v10423
        %v10492 = vadd.f32 %v10491, %v10424
        %v10493 = vadd.f32 %v10492, %v10425
        %v10494 = vadd.f32 %v10493, %v10426
        %v10495 = vadd.f32 %v10494, %v10427
        %v10496 = vadd.f32 %v10495, %v10428
        %v10497 = vadd.f32 %v10496, %v10429
        %v10498 = vadd.f32 %v10497, %v10430
        %v10499 = vadd.f32 %v10498, %v10431
        %v10500 = vadd.f32 %v10499, %v10432
        %v10501 = vadd.f32 %v10500, %v10433
        %v10502 = vadd.f32 %v10501, %v10434
        %v10503 = vadd.f32 %v10502, %v10435
        %v10504 = vadd.f32 %v10503, %v10436
        %v10505 = vadd.f32 %v10504, %v10437
        %v10506 = vadd.f32 %v10505, %v10438
        %v10507 = vadd.f32 %v10506, %v10439
        %v10508 = vadd.f32 %v10507, %v10440
        %v10509 = vadd.f32 %v10508, %v10441
        %v10510 = vadd.f32 %v10509, %v10442
        %v10511 = vadd.f32 %v10510, %v10443
        %v10512 = vadd.f32 %v10511, %v10444
        %v10513 = vadd.f32 %v10512, %v10445
        %v10514 = vrot.slane %v10513, 4
        %v10515 = vadd.f32 %v10513, %v10514
        %v10516 = vrot.slane %v10515, 2
        %v10517 = vadd.f32 %v10515, %v10516
        %v10518 = vrot.slane %v10517, 1
        %v10519 = vadd.f32 %v10517, %v10518
        %v10520 = vmul.f32 %v10482, 0.00390625
        %v10521 = vmul.f32 %v10519, 0.00390625
        %v10522 = vadd.f32 %v10520, 1e-05
        %v10523 = vadd.f32 %v10521, 1e-05
        %v10524 = vrsqrt.pop %v10522
        %v10525 = vrsqrt.pop %v10523
        %v10526 = vmul.f32 %v10240, %v10524
        %v10527 = vmul.f32 %v10240, %v10525
        %v10530 = vlaneseq
        %v10531 = vshrl.u32 %v10530, 7
        %v10532 = vsub.s32 0, %v10531
        %v10533 = vrot.slane %v10526, %v10532
        %v10534 = vlaneseq
        %v10535 = vshrl.u32 %v10534, 7
        %v10536 = vsub.s32 0, %v10535
        %v10537 = vrot.slane %v10527, %v10536
        %v10540 = vmul.f32 %v10318, %v10533
        %v10541 = vmul.f32 %v10319, %v10533
        %v10542 = vmul.f32 %v10320, %v10533
        %v10543 = vmul.f32 %v10321, %v10533
        %v10544 = vmul.f32 %v10322, %v10533
        %v10545 = vmul.f32 %v10323, %v10533
        %v10546 = vmul.f32 %v10324, %v10533
        %v10547 = vmul.f32 %v10325, %v10533
        %v10548 = vmul.f32 %v10326, %v10533
        %v10549 = vmul.f32 %v10327, %v10533
        %v10550 = vmul.f32 %v10328, %v10533
        %v10551 = vmul.f32 %v10329, %v10533
        %v10552 = vmul.f32 %v10330, %v10533
        %v10553 = vmul.f32 %v10331, %v10533
        %v10554 = vmul.f32 %v10332, %v10533
        %v10555 = vmul.f32 %v10333, %v10533
        %v10556 = vmul.f32 %v10334, %v10533
        %v10557 = vmul.f32 %v10335, %v10533
        %v10558 = vmul.f32 %v10336, %v10533
        %v10559 = vmul.f32 %v10337, %v10533
        %v10560 = vmul.f32 %v10338, %v10533
        %v10561 = vmul.f32 %v10339, %v10533
        %v10562 = vmul.f32 %v10340, %v10533
        %v10563 = vmul.f32 %v10341, %v10533
        %v10564 = vmul.f32 %v10342, %v10533
        %v10565 = vmul.f32 %v10343, %v10533
        %v10566 = vmul.f32 %v10344, %v10533
        %v10567 = vmul.f32 %v10345, %v10533
        %v10568 = vmul.f32 %v10346, %v10533
        %v10569 = vmul.f32 %v10347, %v10533
        %v10570 = vmul.f32 %v10348, %v10533
        %v10571 = vmul.f32 %v10349, %v10533
        %v10572 = vmul.f32 %v10350, %v10537
        %v10573 = vmul.f32 %v10351, %v10537
        %v10574 = vmul.f32 %v10352, %v10537
        %v10575 = vmul.f32 %v10353, %v10537
        %v10576 = vmul.f32 %v10354, %v10537
        %v10577 = vmul.f32 %v10355, %v10537
        %v10578 = vmul.f32 %v10356, %v10537
        %v10579 = vmul.f32 %v10357, %v10537
        %v10580 = vmul.f32 %v10358, %v10537
        %v10581 = vmul.f32 %v10359, %v10537
        %v10582 = vmul.f32 %v10360, %v10537
        %v10583 = vmul.f32 %v10361, %v10537
        %v10584 = vmul.f32 %v10362, %v10537
        %v10585 = vmul.f32 %v10363, %v10537
        %v10586 = vmul.f32 %v10364, %v10537
        %v10587 = vmul.f32 %v10365, %v10537
        %v10588 = vmul.f32 %v10366, %v10537
        %v10589 = vmul.f32 %v10367, %v10537
        %v10590 = vmul.f32 %v10368, %v10537
        %v10591 = vmul.f32 %v10369, %v10537
        %v10592 = vmul.f32 %v10370, %v10537
        %v10593 = vmul.f32 %v10371, %v10537
        %v10594 = vmul.f32 %v10372, %v10537
        %v10595 = vmul.f32 %v10373, %v10537
        %v10596 = vmul.f32 %v10374, %v10537
        %v10597 = vmul.f32 %v10375, %v10537
        %v10598 = vmul.f32 %v10376, %v10537
        %v10599 = vmul.f32 %v10377, %v10537
        %v10600 = vmul.f32 %v10378, %v10537
        %v10601 = vmul.f32 %v10379, %v10537
        %v10602 = vmul.f32 %v10380, %v10537
        %v10603 = vmul.f32 %v10381, %v10537
        %v10605 = vlaneseq
        %v10606 = vshrl.u32 %v10605, 7
        %v10607 = vsub.s32 0, %v10606
        %v10608 = vrot.slane %v10241, %v10607
        %v10610 = vadd.f32 %v10540, %v10608
        %v10611 = vadd.f32 %v10541, %v10608
        %v10612 = vadd.f32 %v10542, %v10608
        %v10613 = vadd.f32 %v10543, %v10608
        %v10614 = vadd.f32 %v10544, %v10608
        %v10615 = vadd.f32 %v10545, %v10608
        %v10616 = vadd.f32 %v10546, %v10608
        %v10617 = vadd.f32 %v10547, %v10608
        %v10618 = vadd.f32 %v10548, %v10608
        %v10619 = vadd.f32 %v10549, %v10608
        %v10620 = vadd.f32 %v10550, %v10608
        %v10621 = vadd.f32 %v10551, %v10608
        %v10622 = vadd.f32 %v10552, %v10608
        %v10623 = vadd.f32 %v10553, %v10608
        %v10624 = vadd.f32 %v10554, %v10608
        %v10625 = vadd.f32 %v10555, %v10608
        %v10626 = vadd.f32 %v10556, %v10608
        %v10627 = vadd.f32 %v10557, %v10608
        %v10628 = vadd.f32 %v10558, %v10608
        %v10629 = vadd.f32 %v10559, %v10608
        %v10630 = vadd.f32 %v10560, %v10608
        %v10631 = vadd.f32 %v10561, %v10608
        %v10632 = vadd.f32 %v10562, %v10608
        %v10633 = vadd.f32 %v10563, %v10608
        %v10634 = vadd.f32 %v10564, %v10608
        %v10635 = vadd.f32 %v10565, %v10608
        %v10636 = vadd.f32 %v10566, %v10608
        %v10637 = vadd.f32 %v10567, %v10608
        %v10638 = vadd.f32 %v10568, %v10608
        %v10639 = vadd.f32 %v10569, %v10608
        %v10640 = vadd.f32 %v10570, %v10608
        %v10641 = vadd.f32 %v10571, %v10608
        %v10642 = vadd.f32 %v10572, %v10608
        %v10643 = vadd.f32 %v10573, %v10608
        %v10644 = vadd.f32 %v10574, %v10608
        %v10645 = vadd.f32 %v10575, %v10608
        %v10646 = vadd.f32 %v10576, %v10608
        %v10647 = vadd.f32 %v10577, %v10608
        %v10648 = vadd.f32 %v10578, %v10608
        %v10649 = vadd.f32 %v10579, %v10608
        %v10650 = vadd.f32 %v10580, %v10608
        %v10651 = vadd.f32 %v10581, %v10608
        %v10652 = vadd.f32 %v10582, %v10608
        %v10653 = vadd.f32 %v10583, %v10608
        %v10654 = vadd.f32 %v10584, %v10608
        %v10655 = vadd.f32 %v10585, %v10608
        %v10656 = vadd.f32 %v10586, %v10608
        %v10657 = vadd.f32 %v10587, %v10608
        %v10658 = vadd.f32 %v10588, %v10608
        %v10659 = vadd.f32 %v10589, %v10608
        %v10660 = vadd.f32 %v10590, %v10608
        %v10661 = vadd.f32 %v10591, %v10608
        %v10662 = vadd.f32 %v10592, %v10608
        %v10663 = vadd.f32 %v10593, %v10608
        %v10664 = vadd.f32 %v10594, %v10608
        %v10665 = vadd.f32 %v10595, %v10608
        %v10666 = vadd.f32 %v10596, %v10608
        %v10667 = vadd.f32 %v10597, %v10608
        %v10668 = vadd.f32 %v10598, %v10608
        %v10669 = vadd.f32 %v10599, %v10608
        %v10670 = vadd.f32 %v10600, %v10608
        %v10671 = vadd.f32 %v10601, %v10608
        %v10672 = vadd.f32 %v10602, %v10608
        %v10673 = vadd.f32 %v10603, %v10608
        %v10674 = vld [vmem:[%s361] sm:$0xf]
        %v10675 = vld [vmem:[%s361 + $0x4] sm:$0xf]
        %v10676 = vld [vmem:[%s361 + $0x8] sm:$0xf]
        %v10677 = vld [vmem:[%s361 + $0xc] sm:$0xf]
        %v10678 = vld [vmem:[%s361 + $0x10] sm:$0xf]
        %v10679 = vld [vmem:[%s361 + $0x14] sm:$0xf]
        %v10680 = vld [vmem:[%s361 + $0x18] sm:$0xf]
        %v10681 = vld [vmem:[%s361 + $0x1c] sm:$0xf]
        %v10682 = vld [vmem:[%s361 + $0x20] sm:$0xf]
        %v10683 = vld [vmem:[%s361 + $0x24] sm:$0xf]
        %v10684 = vld [vmem:[%s361 + $0x28] sm:$0xf]
        %v10685 = vld [vmem:[%s361 + $0x2c] sm:$0xf]
        %v10686 = vld [vmem:[%s361 + $0x30] sm:$0xf]
        %v10687 = vld [vmem:[%s361 + $0x34] sm:$0xf]
        %v10688 = vld [vmem:[%s361 + $0x38] sm:$0xf]
        %v10689 = vld [vmem:[%s361 + $0x3c] sm:$0xf]
        %v10690 = vld [vmem:[%s361 + $0x40] sm:$0xf]
        %v10691 = vld [vmem:[%s361 + $0x44] sm:$0xf]
        %v10692 = vld [vmem:[%s361 + $0x48] sm:$0xf]
        %v10693 = vld [vmem:[%s361 + $0x4c] sm:$0xf]
        %v10694 = vld [vmem:[%s361 + $0x50] sm:$0xf]
        %v10695 = vld [vmem:[%s361 + $0x54] sm:$0xf]
        %v10696 = vld [vmem:[%s361 + $0x58] sm:$0xf]
        %v10697 = vld [vmem:[%s361 + $0x5c] sm:$0xf]
        %v10698 = vld [vmem:[%s361 + $0x60] sm:$0xf]
        %v10699 = vld [vmem:[%s361 + $0x64] sm:$0xf]
        %v10700 = vld [vmem:[%s361 + $0x68] sm:$0xf]
        %v10701 = vld [vmem:[%s361 + $0x6c] sm:$0xf]
        %v10702 = vld [vmem:[%s361 + $0x70] sm:$0xf]
        %v10703 = vld [vmem:[%s361 + $0x74] sm:$0xf]
        %v10704 = vld [vmem:[%s361 + $0x78] sm:$0xf]
        %v10705 = vld [vmem:[%s361 + $0x7c] sm:$0xf]
        %v10706 = vld [vmem:[%s361 + $0x80] sm:$0xf]
        %v10707 = vld [vmem:[%s361 + $0x84] sm:$0xf]
        %v10708 = vld [vmem:[%s361 + $0x88] sm:$0xf]
        %v10709 = vld [vmem:[%s361 + $0x8c] sm:$0xf]
        %v10710 = vld [vmem:[%s361 + $0x90] sm:$0xf]
        %v10711 = vld [vmem:[%s361 + $0x94] sm:$0xf]
        %v10712 = vld [vmem:[%s361 + $0x98] sm:$0xf]
        %v10713 = vld [vmem:[%s361 + $0x9c] sm:$0xf]
        %v10714 = vld [vmem:[%s361 + $0xa0] sm:$0xf]
        %v10715 = vld [vmem:[%s361 + $0xa4] sm:$0xf]
        %v10716 = vld [vmem:[%s361 + $0xa8] sm:$0xf]
        %v10717 = vld [vmem:[%s361 + $0xac] sm:$0xf]
        %v10718 = vld [vmem:[%s361 + $0xb0] sm:$0xf]
        %v10719 = vld [vmem:[%s361 + $0xb4] sm:$0xf]
        %v10720 = vld [vmem:[%s361 + $0xb8] sm:$0xf]
        %v10721 = vld [vmem:[%s361 + $0xbc] sm:$0xf]
        %v10722 = vld [vmem:[%s361 + $0xc0] sm:$0xf]
        %v10723 = vld [vmem:[%s361 + $0xc4] sm:$0xf]
        %v10724 = vld [vmem:[%s361 + $0xc8] sm:$0xf]
        %v10725 = vld [vmem:[%s361 + $0xcc] sm:$0xf]
        %v10726 = vld [vmem:[%s361 + $0xd0] sm:$0xf]
        %v10727 = vld [vmem:[%s361 + $0xd4] sm:$0xf]
        %v10728 = vld [vmem:[%s361 + $0xd8] sm:$0xf]
        %v10729 = vld [vmem:[%s361 + $0xdc] sm:$0xf]
        %v10730 = vld [vmem:[%s361 + $0xe0] sm:$0xf]
        %v10731 = vld [vmem:[%s361 + $0xe4] sm:$0xf]
        %v10732 = vld [vmem:[%s361 + $0xe8] sm:$0xf]
        %v10733 = vld [vmem:[%s361 + $0xec] sm:$0xf]
        %v10734 = vld [vmem:[%s361 + $0xf0] sm:$0xf]
        %v10735 = vld [vmem:[%s361 + $0xf4] sm:$0xf]
        %v10736 = vld [vmem:[%s361 + $0xf8] sm:$0xf]
        %v10737 = vld [vmem:[%s361 + $0xfc] sm:$0xf]
        %v10738 = vunpack.c.l.bf16 %v10674
        %v10739 = vunpack.c.l.bf16 %v10675
        %v10740 = vunpack.c.l.bf16 %v10676
        %v10741 = vunpack.c.l.bf16 %v10677
        %v10742 = vunpack.c.l.bf16 %v10678
        %v10743 = vunpack.c.l.bf16 %v10679
        %v10744 = vunpack.c.l.bf16 %v10680
        %v10745 = vunpack.c.l.bf16 %v10681
        %v10746 = vunpack.c.l.bf16 %v10682
        %v10747 = vunpack.c.l.bf16 %v10683
        %v10748 = vunpack.c.l.bf16 %v10684
        %v10749 = vunpack.c.l.bf16 %v10685
        %v10750 = vunpack.c.l.bf16 %v10686
        %v10751 = vunpack.c.l.bf16 %v10687
        %v10752 = vunpack.c.l.bf16 %v10688
        %v10753 = vunpack.c.l.bf16 %v10689
        %v10754 = vunpack.c.l.bf16 %v10690
        %v10755 = vunpack.c.l.bf16 %v10691
        %v10756 = vunpack.c.l.bf16 %v10692
        %v10757 = vunpack.c.l.bf16 %v10693
        %v10758 = vunpack.c.l.bf16 %v10694
        %v10759 = vunpack.c.l.bf16 %v10695
        %v10760 = vunpack.c.l.bf16 %v10696
        %v10761 = vunpack.c.l.bf16 %v10697
        %v10762 = vunpack.c.l.bf16 %v10698
        %v10763 = vunpack.c.l.bf16 %v10699
        %v10764 = vunpack.c.l.bf16 %v10700
        %v10765 = vunpack.c.l.bf16 %v10701
        %v10766 = vunpack.c.l.bf16 %v10702
        %v10767 = vunpack.c.l.bf16 %v10703
        %v10768 = vunpack.c.l.bf16 %v10704
        %v10769 = vunpack.c.l.bf16 %v10705
        %v10770 = vunpack.c.l.bf16 %v10706
        %v10771 = vunpack.c.l.bf16 %v10707
        %v10772 = vunpack.c.l.bf16 %v10708
        %v10773 = vunpack.c.l.bf16 %v10709
        %v10774 = vunpack.c.l.bf16 %v10710
        %v10775 = vunpack.c.l.bf16 %v10711
        %v10776 = vunpack.c.l.bf16 %v10712
        %v10777 = vunpack.c.l.bf16 %v10713
        %v10778 = vunpack.c.l.bf16 %v10714
        %v10779 = vunpack.c.l.bf16 %v10715
        %v10780 = vunpack.c.l.bf16 %v10716
        %v10781 = vunpack.c.l.bf16 %v10717
        %v10782 = vunpack.c.l.bf16 %v10718
        %v10783 = vunpack.c.l.bf16 %v10719
        %v10784 = vunpack.c.l.bf16 %v10720
        %v10785 = vunpack.c.l.bf16 %v10721
        %v10786 = vunpack.c.l.bf16 %v10722
        %v10787 = vunpack.c.l.bf16 %v10723
        %v10788 = vunpack.c.l.bf16 %v10724
        %v10789 = vunpack.c.l.bf16 %v10725
        %v10790 = vunpack.c.l.bf16 %v10726
        %v10791 = vunpack.c.l.bf16 %v10727
        %v10792 = vunpack.c.l.bf16 %v10728
        %v10793 = vunpack.c.l.bf16 %v10729
        %v10794 = vunpack.c.l.bf16 %v10730
        %v10795 = vunpack.c.l.bf16 %v10731
        %v10796 = vunpack.c.l.bf16 %v10732
        %v10797 = vunpack.c.l.bf16 %v10733
        %v10798 = vunpack.c.l.bf16 %v10734
        %v10799 = vunpack.c.l.bf16 %v10735
        %v10800 = vunpack.c.l.bf16 %v10736
        %v10801 = vunpack.c.l.bf16 %v10737
        %v10802 = vadd.f32 %v10610, %v10738
        %v10803 = vadd.f32 %v10611, %v10739
        %v10804 = vadd.f32 %v10612, %v10740
        %v10805 = vadd.f32 %v10613, %v10741
        %v10806 = vadd.f32 %v10614, %v10742
        %v10807 = vadd.f32 %v10615, %v10743
        %v10808 = vadd.f32 %v10616, %v10744
        %v10809 = vadd.f32 %v10617, %v10745
        %v10810 = vadd.f32 %v10618, %v10746
        %v10811 = vadd.f32 %v10619, %v10747
        %v10812 = vadd.f32 %v10620, %v10748
        %v10813 = vadd.f32 %v10621, %v10749
        %v10814 = vadd.f32 %v10622, %v10750
        %v10815 = vadd.f32 %v10623, %v10751
        %v10816 = vadd.f32 %v10624, %v10752
        %v10817 = vadd.f32 %v10625, %v10753
        %v10818 = vadd.f32 %v10626, %v10754
        %v10819 = vadd.f32 %v10627, %v10755
        %v10820 = vadd.f32 %v10628, %v10756
        %v10821 = vadd.f32 %v10629, %v10757
        %v10822 = vadd.f32 %v10630, %v10758
        %v10823 = vadd.f32 %v10631, %v10759
        %v10824 = vadd.f32 %v10632, %v10760
        %v10825 = vadd.f32 %v10633, %v10761
        %v10826 = vadd.f32 %v10634, %v10762
        %v10827 = vadd.f32 %v10635, %v10763
        %v10828 = vadd.f32 %v10636, %v10764
        %v10829 = vadd.f32 %v10637, %v10765
        %v10830 = vadd.f32 %v10638, %v10766
        %v10831 = vadd.f32 %v10639, %v10767
        %v10832 = vadd.f32 %v10640, %v10768
        %v10833 = vadd.f32 %v10641, %v10769
        %v10834 = vadd.f32 %v10642, %v10770
        %v10835 = vadd.f32 %v10643, %v10771
        %v10836 = vadd.f32 %v10644, %v10772
        %v10837 = vadd.f32 %v10645, %v10773
        %v10838 = vadd.f32 %v10646, %v10774
        %v10839 = vadd.f32 %v10647, %v10775
        %v10840 = vadd.f32 %v10648, %v10776
        %v10841 = vadd.f32 %v10649, %v10777
        %v10842 = vadd.f32 %v10650, %v10778
        %v10843 = vadd.f32 %v10651, %v10779
        %v10844 = vadd.f32 %v10652, %v10780
        %v10845 = vadd.f32 %v10653, %v10781
        %v10846 = vadd.f32 %v10654, %v10782
        %v10847 = vadd.f32 %v10655, %v10783
        %v10848 = vadd.f32 %v10656, %v10784
        %v10849 = vadd.f32 %v10657, %v10785
        %v10850 = vadd.f32 %v10658, %v10786
        %v10851 = vadd.f32 %v10659, %v10787
        %v10852 = vadd.f32 %v10660, %v10788
        %v10853 = vadd.f32 %v10661, %v10789
        %v10854 = vadd.f32 %v10662, %v10790
        %v10855 = vadd.f32 %v10663, %v10791
        %v10856 = vadd.f32 %v10664, %v10792
        %v10857 = vadd.f32 %v10665, %v10793
        %v10858 = vadd.f32 %v10666, %v10794
        %v10859 = vadd.f32 %v10667, %v10795
        %v10860 = vadd.f32 %v10668, %v10796
        %v10861 = vadd.f32 %v10669, %v10797
        %v10862 = vadd.f32 %v10670, %v10798
        %v10863 = vadd.f32 %v10671, %v10799
        %v10864 = vadd.f32 %v10672, %v10800
        %v10865 = vadd.f32 %v10673, %v10801
        %v10866 = vmax.f32 %v10802, 0.0
        %v10867 = vmax.f32 %v10803, 0.0
        %v10868 = vmax.f32 %v10804, 0.0
        %v10869 = vmax.f32 %v10805, 0.0
        %v10870 = vmax.f32 %v10806, 0.0
        %v10871 = vmax.f32 %v10807, 0.0
        %v10872 = vmax.f32 %v10808, 0.0
        %v10873 = vmax.f32 %v10809, 0.0
        %v10874 = vmax.f32 %v10810, 0.0
        %v10875 = vmax.f32 %v10811, 0.0
        %v10876 = vmax.f32 %v10812, 0.0
        %v10877 = vmax.f32 %v10813, 0.0
        %v10878 = vmax.f32 %v10814, 0.0
        %v10879 = vmax.f32 %v10815, 0.0
        %v10880 = vmax.f32 %v10816, 0.0
        %v10881 = vmax.f32 %v10817, 0.0
        %v10882 = vmax.f32 %v10818, 0.0
        %v10883 = vmax.f32 %v10819, 0.0
        %v10884 = vmax.f32 %v10820, 0.0
        %v10885 = vmax.f32 %v10821, 0.0
        %v10886 = vmax.f32 %v10822, 0.0
        %v10887 = vmax.f32 %v10823, 0.0
        %v10888 = vmax.f32 %v10824, 0.0
        %v10889 = vmax.f32 %v10825, 0.0
        %v10890 = vmax.f32 %v10826, 0.0
        %v10891 = vmax.f32 %v10827, 0.0
        %v10892 = vmax.f32 %v10828, 0.0
        %v10893 = vmax.f32 %v10829, 0.0
        %v10894 = vmax.f32 %v10830, 0.0
        %v10895 = vmax.f32 %v10831, 0.0
        %v10896 = vmax.f32 %v10832, 0.0
        %v10897 = vmax.f32 %v10833, 0.0
        %v10898 = vmax.f32 %v10834, 0.0
        %v10899 = vmax.f32 %v10835, 0.0
        %v10900 = vmax.f32 %v10836, 0.0
        %v10901 = vmax.f32 %v10837, 0.0
        %v10902 = vmax.f32 %v10838, 0.0
        %v10903 = vmax.f32 %v10839, 0.0
        %v10904 = vmax.f32 %v10840, 0.0
        %v10905 = vmax.f32 %v10841, 0.0
        %v10906 = vmax.f32 %v10842, 0.0
        %v10907 = vmax.f32 %v10843, 0.0
        %v10908 = vmax.f32 %v10844, 0.0
        %v10909 = vmax.f32 %v10845, 0.0
        %v10910 = vmax.f32 %v10846, 0.0
        %v10911 = vmax.f32 %v10847, 0.0
        %v10912 = vmax.f32 %v10848, 0.0
        %v10913 = vmax.f32 %v10849, 0.0
        %v10914 = vmax.f32 %v10850, 0.0
        %v10915 = vmax.f32 %v10851, 0.0
        %v10916 = vmax.f32 %v10852, 0.0
        %v10917 = vmax.f32 %v10853, 0.0
        %v10918 = vmax.f32 %v10854, 0.0
        %v10919 = vmax.f32 %v10855, 0.0
        %v10920 = vmax.f32 %v10856, 0.0
        %v10921 = vmax.f32 %v10857, 0.0
        %v10922 = vmax.f32 %v10858, 0.0
        %v10923 = vmax.f32 %v10859, 0.0
        %v10924 = vmax.f32 %v10860, 0.0
        %v10925 = vmax.f32 %v10861, 0.0
        %v10926 = vmax.f32 %v10862, 0.0
        %v10927 = vmax.f32 %v10863, 0.0
        %v10928 = vmax.f32 %v10864, 0.0
        %v10929 = vmax.f32 %v10865, 0.0
        %10930 = vst [vmem:[%s355] sm:$0xff] %v10866
        %10931 = vst [vmem:[%s355 + $0x8] sm:$0xff] %v10867
        %10932 = vst [vmem:[%s355 + $0x10] sm:$0xff] %v10868
        %10933 = vst [vmem:[%s355 + $0x18] sm:$0xff] %v10869
        %10934 = vst [vmem:[%s355 + $0x20] sm:$0xff] %v10870
        %10935 = vst [vmem:[%s355 + $0x28] sm:$0xff] %v10871
        %10936 = vst [vmem:[%s355 + $0x30] sm:$0xff] %v10872
        %10937 = vst [vmem:[%s355 + $0x38] sm:$0xff] %v10873
        %10938 = vst [vmem:[%s355 + $0x40] sm:$0xff] %v10874
        %10939 = vst [vmem:[%s355 + $0x48] sm:$0xff] %v10875
        %10940 = vst [vmem:[%s355 + $0x50] sm:$0xff] %v10876
        %10941 = vst [vmem:[%s355 + $0x58] sm:$0xff] %v10877
        %10942 = vst [vmem:[%s355 + $0x60] sm:$0xff] %v10878
        %10943 = vst [vmem:[%s355 + $0x68] sm:$0xff] %v10879
        %10944 = vst [vmem:[%s355 + $0x70] sm:$0xff] %v10880
        %10945 = vst [vmem:[%s355 + $0x78] sm:$0xff] %v10881
        %10946 = vst [vmem:[%s355 + $0x80] sm:$0xff] %v10882
        %10947 = vst [vmem:[%s355 + $0x88] sm:$0xff] %v10883
        %10948 = vst [vmem:[%s355 + $0x90] sm:$0xff] %v10884
        %10949 = vst [vmem:[%s355 + $0x98] sm:$0xff] %v10885
        %10950 = vst [vmem:[%s355 + $0xa0] sm:$0xff] %v10886
        %10951 = vst [vmem:[%s355 + $0xa8] sm:$0xff] %v10887
        %10952 = vst [vmem:[%s355 + $0xb0] sm:$0xff] %v10888
        %10953 = vst [vmem:[%s355 + $0xb8] sm:$0xff] %v10889
        %10954 = vst [vmem:[%s355 + $0xc0] sm:$0xff] %v10890
        %10955 = vst [vmem:[%s355 + $0xc8] sm:$0xff] %v10891
        %10956 = vst [vmem:[%s355 + $0xd0] sm:$0xff] %v10892
        %10957 = vst [vmem:[%s355 + $0xd8] sm:$0xff] %v10893
        %10958 = vst [vmem:[%s355 + $0xe0] sm:$0xff] %v10894
        %10959 = vst [vmem:[%s355 + $0xe8] sm:$0xff] %v10895
        %10960 = vst [vmem:[%s355 + $0xf0] sm:$0xff] %v10896
        %10961 = vst [vmem:[%s355 + $0xf8] sm:$0xff] %v10897
        %10962 = vst [vmem:[%s355 + $0x100] sm:$0xff] %v10898
        %10963 = vst [vmem:[%s355 + $0x108] sm:$0xff] %v10899
        %10964 = vst [vmem:[%s355 + $0x110] sm:$0xff] %v10900
        %10965 = vst [vmem:[%s355 + $0x118] sm:$0xff] %v10901
        %10966 = vst [vmem:[%s355 + $0x120] sm:$0xff] %v10902
        %10967 = vst [vmem:[%s355 + $0x128] sm:$0xff] %v10903
        %10968 = vst [vmem:[%s355 + $0x130] sm:$0xff] %v10904
        %10969 = vst [vmem:[%s355 + $0x138] sm:$0xff] %v10905
        %10970 = vst [vmem:[%s355 + $0x140] sm:$0xff] %v10906
        %10971 = vst [vmem:[%s355 + $0x148] sm:$0xff] %v10907
        %10972 = vst [vmem:[%s355 + $0x150] sm:$0xff] %v10908
        %10973 = vst [vmem:[%s355 + $0x158] sm:$0xff] %v10909
        %10974 = vst [vmem:[%s355 + $0x160] sm:$0xff] %v10910
        %10975 = vst [vmem:[%s355 + $0x168] sm:$0xff] %v10911
        %10976 = vst [vmem:[%s355 + $0x170] sm:$0xff] %v10912
        %10977 = vst [vmem:[%s355 + $0x178] sm:$0xff] %v10913
        %10978 = vst [vmem:[%s355 + $0x180] sm:$0xff] %v10914
        %10979 = vst [vmem:[%s355 + $0x188] sm:$0xff] %v10915
        %10980 = vst [vmem:[%s355 + $0x190] sm:$0xff] %v10916
        %10981 = vst [vmem:[%s355 + $0x198] sm:$0xff] %v10917
        %10982 = vst [vmem:[%s355 + $0x1a0] sm:$0xff] %v10918
        %10983 = vst [vmem:[%s355 + $0x1a8] sm:$0xff] %v10919
        %10984 = vst [vmem:[%s355 + $0x1b0] sm:$0xff] %v10920
        %10985 = vst [vmem:[%s355 + $0x1b8] sm:$0xff] %v10921
        %10986 = vst [vmem:[%s355 + $0x1c0] sm:$0xff] %v10922
        %10987 = vst [vmem:[%s355 + $0x1c8] sm:$0xff] %v10923
        %10988 = vst [vmem:[%s355 + $0x1d0] sm:$0xff] %v10924
        %10989 = vst [vmem:[%s355 + $0x1d8] sm:$0xff] %v10925
        %10990 = vst [vmem:[%s355 + $0x1e0] sm:$0xff] %v10926
        %10991 = vst [vmem:[%s355 + $0x1e8] sm:$0xff] %v10927
        %10992 = vst [vmem:[%s355 + $0x1f0] sm:$0xff] %v10928
        %10993 = vst [vmem:[%s355 + $0x1f8] sm:$0xff] %v10929
        %s10994 = sand.u32 %s247, 1
        %s10995 = scalar_lea.sflag [#allocation4], %s10994
        %s10996 = sand.u32 %s247, 1
        %s10997 = smul.addr %s10996, 512
        %s10998 = scalar_lea.vmem [#allocation3], %s10997
        // Predicated region
        $region61: #{tpu_custom_call.1} parent=59 // pred_check
          %p10999 = pneg %p257
        $region62: #{tpu_custom_call.1} parent=59 // pred_check_branch
          %11001 = sbr.rel (%p10999) target = $region64
        $region63: #{tpu_custom_call.1} parent=59 // pred_region
          %s11002 = smul.u32 2, %s24
          %s11004 = ssub.s32 8192, 8192
          %11005 = vsyncadd %s10995, %s11004
          %s11006 = smul.addr %s11002, 32
          %s11007 = smul.addr %s11006, 128
          %s11008 = scalar_lea.hbm %s10, %s11007
          %s11009 = sshll.u32 %s10998, 4
          %s11010 = int_to_ptr.vmem [resolvable:$true] %s11009
          %11015 = dma.vmem_to_hbm [thread:$0]  %s11010, 8192, %s11008, %s10995, 128, 128, 8
        $region64: #{tpu_custom_call.1} parent=59 // pred_fallthru
          _
      $region60: #{tpu_custom_call.1} parent=5 // pred_fallthru
        _
      %p11016 = scmp.le.s32.totalorder 2, %s19
      // Predicated region
      $region65: #{tpu_custom_call.1} parent=5 // pred_check
        %p11017 = pneg %p11016
      $region66: #{tpu_custom_call.1} parent=5 // pred_check_branch
        %11019 = sbr.rel (%p11017) target = $region68
      $region67: #{tpu_custom_call.1} parent=5 // pred_region
        %s11020 = ssub.s32 %s19, 2
        // Predicated region
        $region69: #{tpu_custom_call.1} parent=67 // pred_check
          %p11021 = pneg %p263
        $region70: #{tpu_custom_call.1} parent=67 // pred_check_branch
          %11023 = sbr.rel (%p11021) target = $region72
        $region71: #{tpu_custom_call.1} parent=67 // pred_region
          %s11024 = sand.u32 %s248, 1
          %s11025 = scalar_lea.sflag [#allocation4], %s11024
          %s11026 = sand.u32 %s248, 1
          %s11027 = smul.addr %s11026, 512
          %s11028 = scalar_lea.vmem [#allocation3], %s11027
          %11029 = dma.done %s11025, 8192
        $region72: #{tpu_custom_call.1} parent=67 // pred_fallthru
          _
      $region68: #{tpu_custom_call.1} parent=5 // pred_fallthru
        _
    $region6: #{tpu_custom_call.1} parent=1 // loop_footer
      %s23 = sadd.s32 1, %s19
    $region7: #{tpu_custom_call.1} parent=1 // loop_footer_branch
      %18 = sbr.rel target = $region3
    $region8: #{tpu_custom_call.1} parent=1 // loop_exit
      _
    %11030 = vsyncpa [#allocation4], 1
    %s11031 = scalar_lea.sflag [#allocation4], 1
    %11032 = vsyncpa %s11031, 1

</llo_original>
